<compile_context>
chip_gen: v7x
topology: tpu7x:2x2x1
jax: 0.10.0
libtpu: 0.0.40
codegen_flags: <defaults>
</compile_context>

<pallas_src>
import jax
import jax.numpy as jnp
from jax.experimental import pallas as pl
from jax.experimental.pallas import tpu as pltpu


def _cluster_kernel(x_ref, w_ref, b_ref, o_ref):
    # x_ref: (TILE_N, C, HW) f32 (native NCHW layout, spatial flattened)
    # w_ref: (C, OUT_PAD) bf16   b_ref: (1, OUT_PAD) f32   o_ref: (TILE_N, OUT_PAD) f32
    hw = x_ref.shape[2]
    # Adaptive avg pool to 1x1: lane-axis (XLU) sum over the spatial dim, then a single
    # 1/HW scale on the small (TILE_N, C) result (keeps the divide off the big operand).
    pooled = jnp.sum(x_ref[...].astype(jnp.float32), axis=2) * (1.0 / hw)   # (TILE_N, C)
    # fc: bf16 MXU matmul with f32 accumulation against the VMEM-resident weight.
    out = jnp.dot(pooled.astype(jnp.bfloat16), w_ref[...],
                  preferred_element_type=jnp.float32)                        # (TILE_N, OUT_PAD)
    o_ref[...] = out + b_ref[...]                                            # broadcast bias


def init_fc_params(weight, bias, out_pad=1024):
    """Done ONCE at model init (not in the per-call hot path).

    weight: (OUT, C) PyTorch Linear layout; bias: (OUT,).
    Returns weight transposed to (C, OUT_PAD) bf16 with zero-padded columns and
    bias as (1, OUT_PAD) f32 with zero padding.
    """
    out_dim, c = weight.shape
    assert out_pad >= out_dim and out_pad % 128 == 0
    w_t = jnp.zeros((c, out_pad), jnp.bfloat16)
    w_t = w_t.at[:, :out_dim].set(weight.T.astype(jnp.bfloat16))
    b_p = jnp.zeros((1, out_pad), jnp.float32)
    b_p = b_p.at[:, :out_dim].set(bias.astype(jnp.float32))
    return w_t, b_p


def feature_cluster_forward(x_nchw, w_t, b_p, out_dim):
    """x_nchw: (N, C, H, W); w_t: (C, OUT_PAD) bf16 (pre-transposed); b_p: (1, OUT_PAD) f32."""
    n, c, h, w = x_nchw.shape
    hw = h * w
    c_w, out_pad = w_t.shape
    assert c == c_w, "channel dim must match fc in_features"

    # Free reshape only — no transpose / cast pass over x in the hot path.
    x3 = x_nchw.reshape(n, c, hw)

    # Batch tile sized from the lane-padded VMEM footprint of one x block
    # (minor dim HW pads up to 128 lanes in VMEM); ~12 MiB per buffer, double-buffered.
    pad_hw = ((hw + 127) // 128) * 128
    bytes_per_row = c * pad_hw * x3.dtype.itemsize
    tile_n = (12 * 1024 * 1024) // bytes_per_row
    tile_n = max(8, min(256, (tile_n // 8) * 8))
    tile_n = min(tile_n, ((n + 7) // 8) * 8)       # small batches: one sublane-rounded tile

    n_tiles = pl.cdiv(n, tile_n)
    n_pad = n_tiles * tile_n
    if n_pad != n:
        x3 = jnp.pad(x3, ((0, n_pad - n), (0, 0), (0, 0)))

    out = pl.pallas_call(
        _cluster_kernel,
        out_shape=jax.ShapeDtypeStruct((n_pad, out_pad), jnp.float32),
        grid=(n_tiles,),
        in_specs=[
            # x: tiled over the batch axis, double-buffered by the pipeline.
            pl.BlockSpec((tile_n, c, hw), lambda i: (i, 0, 0)),
            # weight / bias: constant index_map -> VMEM-resident across batch tiles.
            pl.BlockSpec((c, out_pad), lambda i: (0, 0)),
            pl.BlockSpec((1, out_pad), lambda i: (0, 0)),
        ],
        out_specs=pl.BlockSpec((tile_n, out_pad), lambda i: (i, 0)),
        compiler_params=pltpu.CompilerParams(
            dimension_semantics=("parallel",),       # shard batch tiles across TCs (v7x)
            vmem_limit_bytes=48 * 1024 * 1024,       # ~27 MiB actually used; < v7x 64 MiB
        ),
    )(x3, w_t, b_p)

    # Strip batch padding and the OUT 1000 -> 1024 padding.
    return out[:n, :out_dim]


if __name__ == "__main__":
    # Shapes implied by resnet18: fc is Linear(512, 1000); avgpool eats any spatial size.
    N, C, H, W = 2, 512, 4, 4
    OUT = 1000

    key = jax.random.PRNGKey(0)
    kx, kw, kb = jax.random.split(key, 3)

    x = jax.random.normal(kx, (N, C, H, W), dtype=jnp.float32)
    # Deterministic synthetic fc parameters (PyTorch Linear layout: (out, in)).
    fc_weight = jax.random.normal(kw, (OUT, C), dtype=jnp.float32) * 0.02
    fc_bias = jax.random.normal(kb, (OUT,), dtype=jnp.float32) * 0.01

    # One-time parameter preparation (transpose + pad + bf16 cast), outside the hot path.
    w_t, b_p = init_fc_params(fc_weight, fc_bias, out_pad=1024)

    y = feature_cluster_forward(x, w_t, b_p, OUT)
    jax.block_until_ready(y)

    # Pure-JAX f32 reference of the hot path (kernel uses bf16 weights -> looser tolerance).
    ref = jnp.mean(x.reshape(N, C, -1), axis=-1) @ fc_weight.T + fc_bias
    assert y.shape == (N, OUT)
    assert jnp.allclose(y, ref, atol=2e-2, rtol=2e-2)

    print("KERNEL_OK")
</pallas_src>

<mosaic_0001>
module attributes {stable_mosaic.version = 11 : i64} {
  func.func @_cluster_kernel(%arg0: i32, %arg1: memref<8x512x16xf32, #tpu.memory_space<vmem>>, %arg2: memref<512x1024xbf16, #tpu.memory_space<vmem>>, %arg3: memref<1x1024xf32, #tpu.memory_space<vmem>>, %arg4: memref<8x1024xf32, #tpu.memory_space<vmem>>) attributes {dimension_semantics = [#tpu.dimension_semantics<parallel>], iteration_bounds = array<i64: 1>, scalar_prefetch = 0 : i64, scratch_operands = 0 : i64, tpu.core_type = #tpu.core_type<tc>, window_params = [{transform_indices = @transform_0, window_bounds = array<i64: 8, 512, 16>}, {pipeline_mode = #tpu.pipeline_mode<synchronous>, transform_indices = @transform_1, window_bounds = array<i64: 512, 1024>}, {pipeline_mode = #tpu.pipeline_mode<synchronous>, transform_indices = @transform_2, window_bounds = array<i64: 1, 1024>}, {transform_indices = @transform_3, window_bounds = array<i64: 8, 1024>}]} {
    %c0 = arith.constant 0 : index
    %c0_0 = arith.constant 0 : index
    %c0_1 = arith.constant 0 : index
    %0 = vector.load %arg1[%c0, %c0_0, %c0_1] : memref<8x512x16xf32, #tpu.memory_space<vmem>>, vector<8x512x16xf32>
    %cst = arith.constant dense<0.000000e+00> : vector<8x512xf32>
    %1 = vector.multi_reduction <add>, %0, %cst [2] : vector<8x512x16xf32> to vector<8x512xf32>
    %cst_2 = arith.constant 6.250000e-02 : f32
    %2 = vector.broadcast %cst_2 : f32 to vector<8x512xf32>
    %3 = arith.mulf %1, %2 : vector<8x512xf32>
    %4 = arith.truncf %3 : vector<8x512xf32> to vector<8x512xbf16>
    %c0_3 = arith.constant 0 : index
    %c0_4 = arith.constant 0 : index
    %5 = vector.load %arg2[%c0_3, %c0_4] : memref<512x1024xbf16, #tpu.memory_space<vmem>>, vector<512x1024xbf16>
    %cst_5 = arith.constant dense<0.000000e+00> : vector<8x1024xf32>
    %6 = tpu.matmul %4, %5, %cst_5 {dimension_numbers = #tpu.dot_dimension_numbers<[1], [0], [0], [1], [0, 0, 1, 1], [], []>} : vector<8x512xbf16>, vector<512x1024xbf16>, vector<8x1024xf32> -> vector<8x1024xf32>
    %c0_6 = arith.constant 0 : index
    %c0_7 = arith.constant 0 : index
    %7 = vector.load %arg3[%c0_6, %c0_7] : memref<1x1024xf32, #tpu.memory_space<vmem>>, vector<1x1024xf32>
    %8 = vector.broadcast %7 : vector<1x1024xf32> to vector<8x1024xf32>
    %9 = arith.addf %6, %8 : vector<8x1024xf32>
    %c0_8 = arith.constant 0 : index
    %c0_9 = arith.constant 0 : index
    %10 = vector.load %arg4[%c0_8, %c0_9] : memref<8x1024xf32, #tpu.memory_space<vmem>>, vector<8x1024xf32>
    tpu.vector_store %arg4[%c0_8, %c0_9], %9 {strides = array<i32>} : memref<8x1024xf32, #tpu.memory_space<vmem>>, vector<8x1024xf32>,
    return
  }
  func.func @transform_0(%arg0: i32) -> (i32, i32, i32) {
    %c0_i32 = arith.constant 0 : i32
    %c0_i32_0 = arith.constant 0 : i32
    %c0_i32_1 = arith.constant 0 : i32
    return %arg0, %c0_i32, %c0_i32_0 : i32, i32, i32
  }
  func.func @transform_1(%arg0: i32) -> (i32, i32) {
    %c0_i32 = arith.constant 0 : i32
    %c0_i32_0 = arith.constant 0 : i32
    %c0_i32_1 = arith.constant 0 : i32
    return %c0_i32, %c0_i32_0 : i32, i32
  }
  func.func @transform_2(%arg0: i32) -> (i32, i32) {
    %c0_i32 = arith.constant 0 : i32
    %c0_i32_0 = arith.constant 0 : i32
    %c0_i32_1 = arith.constant 0 : i32
    return %c0_i32, %c0_i32_0 : i32, i32
  }
  func.func @transform_3(%arg0: i32) -> (i32, i32) {
    %c0_i32 = arith.constant 0 : i32
    %c0_i32_0 = arith.constant 0 : i32
    return %arg0, %c0_i32 : i32, i32
  }
}

</mosaic_0001>

<llo_original>
// kernel: tpu_custom_call.1
$region0: #{tpu_custom_call.1}
  #allocation0 [shape = 'u32[]', space=smem, size = 0x4, offset = 0x4, fixed_abs, tag = 'smem constant byte address 0x4 - core index']
  #allocation1 [shape = 'u32[144,128]{1,0:T(1,128)}', space=vmem, size = 0x12000, scoped, tag = 'internal scratch']
  %s0 = inlined_call_operand.vmem [shape: f32[8,512,16], index: 0, kind: input, shape index: {}]
  %s1 = inlined_call_operand.vmem [shape: bf16[512,1024], index: 1, kind: input, shape index: {}]
  %s2 = inlined_call_operand.vmem [shape: f32[1,1024], index: 2, kind: input, shape index: {}]
  %s3 = inlined_call_operand.hbm [shape: f32[8,1024], index: 3, kind: output, shape index: {}]
  %s4 = sld [smem:[#allocation0]]
  $region22: #{tpu_custom_call.1} parent=0
    _
  %s6 = ssub.s32 1, %s4
  %s7 = scalar_select 0, %s6, %s4
  $region1: #{tpu_custom_call.1} parent=0
    #allocation2 [shape = 'u8[32768]{0}', space=vmem, size = 0x8000, scoped, tag = 'output window, operand 0, single buffered']
    #allocation3 [shape = 's32[1]{0}', space=sflag, size = 0x4, scoped, tag = 'scoped memory for tpu_custom_call.1']
    %8 = vsyncpa [#allocation3], 0
    // Predicated region
    $region2: #{tpu_custom_call.1} parent=1 // pred_check
      _
    $region3: #{tpu_custom_call.1} parent=1 // pred_check_branch
      %10 = sbr.rel (0) target = $region5
    $region4: #{tpu_custom_call.1} parent=1 // pred_region
      _
    $region5: #{tpu_custom_call.1} parent=1 // pred_fallthru
      _
    // Predicated region
    $region6: #{tpu_custom_call.1} parent=1 // pred_check
      _
    $region7: #{tpu_custom_call.1} parent=1 // pred_check_branch
      %12 = sbr.rel (0) target = $region9
    $region8: #{tpu_custom_call.1} parent=1 // pred_region
      _
    $region9: #{tpu_custom_call.1} parent=1 // pred_fallthru
      _
    // Predicated region
    $region10: #{tpu_custom_call.1} parent=1 // pred_check
      _
    $region11: #{tpu_custom_call.1} parent=1 // pred_check_branch
      %14 = sbr.rel (0) target = $region13
    $region12: #{tpu_custom_call.1} parent=1 // pred_region
      _
    $region13: #{tpu_custom_call.1} parent=1 // pred_fallthru
      _
    %v15 = vld [vmem:[%s0] sm:$0xff]
    %v16 = vld [vmem:[%s0 + $0x8] sm:$0xff]
    %v17 = vld [vmem:[%s0 + $0x10] sm:$0xff]
    %v18 = vld [vmem:[%s0 + $0x18] sm:$0xff]
    %v19 = vld [vmem:[%s0 + $0x20] sm:$0xff]
    %v20 = vld [vmem:[%s0 + $0x28] sm:$0xff]
    %v21 = vld [vmem:[%s0 + $0x30] sm:$0xff]
    %v22 = vld [vmem:[%s0 + $0x38] sm:$0xff]
    %v23 = vld [vmem:[%s0 + $0x40] sm:$0xff]
    %v24 = vld [vmem:[%s0 + $0x48] sm:$0xff]
    %v25 = vld [vmem:[%s0 + $0x50] sm:$0xff]
    %v26 = vld [vmem:[%s0 + $0x58] sm:$0xff]
    %v27 = vld [vmem:[%s0 + $0x60] sm:$0xff]
    %v28 = vld [vmem:[%s0 + $0x68] sm:$0xff]
    %v29 = vld [vmem:[%s0 + $0x70] sm:$0xff]
    %v30 = vld [vmem:[%s0 + $0x78] sm:$0xff]
    %v31 = vld [vmem:[%s0 + $0x80] sm:$0xff]
    %v32 = vld [vmem:[%s0 + $0x88] sm:$0xff]
    %v33 = vld [vmem:[%s0 + $0x90] sm:$0xff]
    %v34 = vld [vmem:[%s0 + $0x98] sm:$0xff]
    %v35 = vld [vmem:[%s0 + $0xa0] sm:$0xff]
    %v36 = vld [vmem:[%s0 + $0xa8] sm:$0xff]
    %v37 = vld [vmem:[%s0 + $0xb0] sm:$0xff]
    %v38 = vld [vmem:[%s0 + $0xb8] sm:$0xff]
    %v39 = vld [vmem:[%s0 + $0xc0] sm:$0xff]
    %v40 = vld [vmem:[%s0 + $0xc8] sm:$0xff]
    %v41 = vld [vmem:[%s0 + $0xd0] sm:$0xff]
    %v42 = vld [vmem:[%s0 + $0xd8] sm:$0xff]
    %v43 = vld [vmem:[%s0 + $0xe0] sm:$0xff]
    %v44 = vld [vmem:[%s0 + $0xe8] sm:$0xff]
    %v45 = vld [vmem:[%s0 + $0xf0] sm:$0xff]
    %v46 = vld [vmem:[%s0 + $0xf8] sm:$0xff]
    %v47 = vld [vmem:[%s0 + $0x100] sm:$0xff]
    %v48 = vld [vmem:[%s0 + $0x108] sm:$0xff]
    %v49 = vld [vmem:[%s0 + $0x110] sm:$0xff]
    %v50 = vld [vmem:[%s0 + $0x118] sm:$0xff]
    %v51 = vld [vmem:[%s0 + $0x120] sm:$0xff]
    %v52 = vld [vmem:[%s0 + $0x128] sm:$0xff]
    %v53 = vld [vmem:[%s0 + $0x130] sm:$0xff]
    %v54 = vld [vmem:[%s0 + $0x138] sm:$0xff]
    %v55 = vld [vmem:[%s0 + $0x140] sm:$0xff]
    %v56 = vld [vmem:[%s0 + $0x148] sm:$0xff]
    %v57 = vld [vmem:[%s0 + $0x150] sm:$0xff]
    %v58 = vld [vmem:[%s0 + $0x158] sm:$0xff]
    %v59 = vld [vmem:[%s0 + $0x160] sm:$0xff]
    %v60 = vld [vmem:[%s0 + $0x168] sm:$0xff]
    %v61 = vld [vmem:[%s0 + $0x170] sm:$0xff]
    %v62 = vld [vmem:[%s0 + $0x178] sm:$0xff]
    %v63 = vld [vmem:[%s0 + $0x180] sm:$0xff]
    %v64 = vld [vmem:[%s0 + $0x188] sm:$0xff]
    %v65 = vld [vmem:[%s0 + $0x190] sm:$0xff]
    %v66 = vld [vmem:[%s0 + $0x198] sm:$0xff]
    %v67 = vld [vmem:[%s0 + $0x1a0] sm:$0xff]
    %v68 = vld [vmem:[%s0 + $0x1a8] sm:$0xff]
    %v69 = vld [vmem:[%s0 + $0x1b0] sm:$0xff]
    %v70 = vld [vmem:[%s0 + $0x1b8] sm:$0xff]
    %v71 = vld [vmem:[%s0 + $0x1c0] sm:$0xff]
    %v72 = vld [vmem:[%s0 + $0x1c8] sm:$0xff]
    %v73 = vld [vmem:[%s0 + $0x1d0] sm:$0xff]
    %v74 = vld [vmem:[%s0 + $0x1d8] sm:$0xff]
    %v75 = vld [vmem:[%s0 + $0x1e0] sm:$0xff]
    %v76 = vld [vmem:[%s0 + $0x1e8] sm:$0xff]
    %v77 = vld [vmem:[%s0 + $0x1f0] sm:$0xff]
    %v78 = vld [vmem:[%s0 + $0x1f8] sm:$0xff]
    %v79 = vld [vmem:[%s0 + $0x200] sm:$0xff]
    %v80 = vld [vmem:[%s0 + $0x208] sm:$0xff]
    %v81 = vld [vmem:[%s0 + $0x210] sm:$0xff]
    %v82 = vld [vmem:[%s0 + $0x218] sm:$0xff]
    %v83 = vld [vmem:[%s0 + $0x220] sm:$0xff]
    %v84 = vld [vmem:[%s0 + $0x228] sm:$0xff]
    %v85 = vld [vmem:[%s0 + $0x230] sm:$0xff]
    %v86 = vld [vmem:[%s0 + $0x238] sm:$0xff]
    %v87 = vld [vmem:[%s0 + $0x240] sm:$0xff]
    %v88 = vld [vmem:[%s0 + $0x248] sm:$0xff]
    %v89 = vld [vmem:[%s0 + $0x250] sm:$0xff]
    %v90 = vld [vmem:[%s0 + $0x258] sm:$0xff]
    %v91 = vld [vmem:[%s0 + $0x260] sm:$0xff]
    %v92 = vld [vmem:[%s0 + $0x268] sm:$0xff]
    %v93 = vld [vmem:[%s0 + $0x270] sm:$0xff]
    %v94 = vld [vmem:[%s0 + $0x278] sm:$0xff]
    %v95 = vld [vmem:[%s0 + $0x280] sm:$0xff]
    %v96 = vld [vmem:[%s0 + $0x288] sm:$0xff]
    %v97 = vld [vmem:[%s0 + $0x290] sm:$0xff]
    %v98 = vld [vmem:[%s0 + $0x298] sm:$0xff]
    %v99 = vld [vmem:[%s0 + $0x2a0] sm:$0xff]
    %v100 = vld [vmem:[%s0 + $0x2a8] sm:$0xff]
    %v101 = vld [vmem:[%s0 + $0x2b0] sm:$0xff]
    %v102 = vld [vmem:[%s0 + $0x2b8] sm:$0xff]
    %v103 = vld [vmem:[%s0 + $0x2c0] sm:$0xff]
    %v104 = vld [vmem:[%s0 + $0x2c8] sm:$0xff]
    %v105 = vld [vmem:[%s0 + $0x2d0] sm:$0xff]
    %v106 = vld [vmem:[%s0 + $0x2d8] sm:$0xff]
    %v107 = vld [vmem:[%s0 + $0x2e0] sm:$0xff]
    %v108 = vld [vmem:[%s0 + $0x2e8] sm:$0xff]
    %v109 = vld [vmem:[%s0 + $0x2f0] sm:$0xff]
    %v110 = vld [vmem:[%s0 + $0x2f8] sm:$0xff]
    %v111 = vld [vmem:[%s0 + $0x300] sm:$0xff]
    %v112 = vld [vmem:[%s0 + $0x308] sm:$0xff]
    %v113 = vld [vmem:[%s0 + $0x310] sm:$0xff]
    %v114 = vld [vmem:[%s0 + $0x318] sm:$0xff]
    %v115 = vld [vmem:[%s0 + $0x320] sm:$0xff]
    %v116 = vld [vmem:[%s0 + $0x328] sm:$0xff]
    %v117 = vld [vmem:[%s0 + $0x330] sm:$0xff]
    %v118 = vld [vmem:[%s0 + $0x338] sm:$0xff]
    %v119 = vld [vmem:[%s0 + $0x340] sm:$0xff]
    %v120 = vld [vmem:[%s0 + $0x348] sm:$0xff]
    %v121 = vld [vmem:[%s0 + $0x350] sm:$0xff]
    %v122 = vld [vmem:[%s0 + $0x358] sm:$0xff]
    %v123 = vld [vmem:[%s0 + $0x360] sm:$0xff]
    %v124 = vld [vmem:[%s0 + $0x368] sm:$0xff]
    %v125 = vld [vmem:[%s0 + $0x370] sm:$0xff]
    %v126 = vld [vmem:[%s0 + $0x378] sm:$0xff]
    %v127 = vld [vmem:[%s0 + $0x380] sm:$0xff]
    %v128 = vld [vmem:[%s0 + $0x388] sm:$0xff]
    %v129 = vld [vmem:[%s0 + $0x390] sm:$0xff]
    %v130 = vld [vmem:[%s0 + $0x398] sm:$0xff]
    %v131 = vld [vmem:[%s0 + $0x3a0] sm:$0xff]
    %v132 = vld [vmem:[%s0 + $0x3a8] sm:$0xff]
    %v133 = vld [vmem:[%s0 + $0x3b0] sm:$0xff]
    %v134 = vld [vmem:[%s0 + $0x3b8] sm:$0xff]
    %v135 = vld [vmem:[%s0 + $0x3c0] sm:$0xff]
    %v136 = vld [vmem:[%s0 + $0x3c8] sm:$0xff]
    %v137 = vld [vmem:[%s0 + $0x3d0] sm:$0xff]
    %v138 = vld [vmem:[%s0 + $0x3d8] sm:$0xff]
    %v139 = vld [vmem:[%s0 + $0x3e0] sm:$0xff]
    %v140 = vld [vmem:[%s0 + $0x3e8] sm:$0xff]
    %v141 = vld [vmem:[%s0 + $0x3f0] sm:$0xff]
    %v142 = vld [vmem:[%s0 + $0x3f8] sm:$0xff]
    %v143 = vld [vmem:[%s0 + $0x400] sm:$0xff]
    %v144 = vld [vmem:[%s0 + $0x408] sm:$0xff]
    %v145 = vld [vmem:[%s0 + $0x410] sm:$0xff]
    %v146 = vld [vmem:[%s0 + $0x418] sm:$0xff]
    %v147 = vld [vmem:[%s0 + $0x420] sm:$0xff]
    %v148 = vld [vmem:[%s0 + $0x428] sm:$0xff]
    %v149 = vld [vmem:[%s0 + $0x430] sm:$0xff]
    %v150 = vld [vmem:[%s0 + $0x438] sm:$0xff]
    %v151 = vld [vmem:[%s0 + $0x440] sm:$0xff]
    %v152 = vld [vmem:[%s0 + $0x448] sm:$0xff]
    %v153 = vld [vmem:[%s0 + $0x450] sm:$0xff]
    %v154 = vld [vmem:[%s0 + $0x458] sm:$0xff]
    %v155 = vld [vmem:[%s0 + $0x460] sm:$0xff]
    %v156 = vld [vmem:[%s0 + $0x468] sm:$0xff]
    %v157 = vld [vmem:[%s0 + $0x470] sm:$0xff]
    %v158 = vld [vmem:[%s0 + $0x478] sm:$0xff]
    %v159 = vld [vmem:[%s0 + $0x480] sm:$0xff]
    %v160 = vld [vmem:[%s0 + $0x488] sm:$0xff]
    %v161 = vld [vmem:[%s0 + $0x490] sm:$0xff]
    %v162 = vld [vmem:[%s0 + $0x498] sm:$0xff]
    %v163 = vld [vmem:[%s0 + $0x4a0] sm:$0xff]
    %v164 = vld [vmem:[%s0 + $0x4a8] sm:$0xff]
    %v165 = vld [vmem:[%s0 + $0x4b0] sm:$0xff]
    %v166 = vld [vmem:[%s0 + $0x4b8] sm:$0xff]
    %v167 = vld [vmem:[%s0 + $0x4c0] sm:$0xff]
    %v168 = vld [vmem:[%s0 + $0x4c8] sm:$0xff]
    %v169 = vld [vmem:[%s0 + $0x4d0] sm:$0xff]
    %v170 = vld [vmem:[%s0 + $0x4d8] sm:$0xff]
    %v171 = vld [vmem:[%s0 + $0x4e0] sm:$0xff]
    %v172 = vld [vmem:[%s0 + $0x4e8] sm:$0xff]
    %v173 = vld [vmem:[%s0 + $0x4f0] sm:$0xff]
    %v174 = vld [vmem:[%s0 + $0x4f8] sm:$0xff]
    %v175 = vld [vmem:[%s0 + $0x500] sm:$0xff]
    %v176 = vld [vmem:[%s0 + $0x508] sm:$0xff]
    %v177 = vld [vmem:[%s0 + $0x510] sm:$0xff]
    %v178 = vld [vmem:[%s0 + $0x518] sm:$0xff]
    %v179 = vld [vmem:[%s0 + $0x520] sm:$0xff]
    %v180 = vld [vmem:[%s0 + $0x528] sm:$0xff]
    %v181 = vld [vmem:[%s0 + $0x530] sm:$0xff]
    %v182 = vld [vmem:[%s0 + $0x538] sm:$0xff]
    %v183 = vld [vmem:[%s0 + $0x540] sm:$0xff]
    %v184 = vld [vmem:[%s0 + $0x548] sm:$0xff]
    %v185 = vld [vmem:[%s0 + $0x550] sm:$0xff]
    %v186 = vld [vmem:[%s0 + $0x558] sm:$0xff]
    %v187 = vld [vmem:[%s0 + $0x560] sm:$0xff]
    %v188 = vld [vmem:[%s0 + $0x568] sm:$0xff]
    %v189 = vld [vmem:[%s0 + $0x570] sm:$0xff]
    %v190 = vld [vmem:[%s0 + $0x578] sm:$0xff]
    %v191 = vld [vmem:[%s0 + $0x580] sm:$0xff]
    %v192 = vld [vmem:[%s0 + $0x588] sm:$0xff]
    %v193 = vld [vmem:[%s0 + $0x590] sm:$0xff]
    %v194 = vld [vmem:[%s0 + $0x598] sm:$0xff]
    %v195 = vld [vmem:[%s0 + $0x5a0] sm:$0xff]
    %v196 = vld [vmem:[%s0 + $0x5a8] sm:$0xff]
    %v197 = vld [vmem:[%s0 + $0x5b0] sm:$0xff]
    %v198 = vld [vmem:[%s0 + $0x5b8] sm:$0xff]
    %v199 = vld [vmem:[%s0 + $0x5c0] sm:$0xff]
    %v200 = vld [vmem:[%s0 + $0x5c8] sm:$0xff]
    %v201 = vld [vmem:[%s0 + $0x5d0] sm:$0xff]
    %v202 = vld [vmem:[%s0 + $0x5d8] sm:$0xff]
    %v203 = vld [vmem:[%s0 + $0x5e0] sm:$0xff]
    %v204 = vld [vmem:[%s0 + $0x5e8] sm:$0xff]
    %v205 = vld [vmem:[%s0 + $0x5f0] sm:$0xff]
    %v206 = vld [vmem:[%s0 + $0x5f8] sm:$0xff]
    %v207 = vld [vmem:[%s0 + $0x600] sm:$0xff]
    %v208 = vld [vmem:[%s0 + $0x608] sm:$0xff]
    %v209 = vld [vmem:[%s0 + $0x610] sm:$0xff]
    %v210 = vld [vmem:[%s0 + $0x618] sm:$0xff]
    %v211 = vld [vmem:[%s0 + $0x620] sm:$0xff]
    %v212 = vld [vmem:[%s0 + $0x628] sm:$0xff]
    %v213 = vld [vmem:[%s0 + $0x630] sm:$0xff]
    %v214 = vld [vmem:[%s0 + $0x638] sm:$0xff]
    %v215 = vld [vmem:[%s0 + $0x640] sm:$0xff]
    %v216 = vld [vmem:[%s0 + $0x648] sm:$0xff]
    %v217 = vld [vmem:[%s0 + $0x650] sm:$0xff]
    %v218 = vld [vmem:[%s0 + $0x658] sm:$0xff]
    %v219 = vld [vmem:[%s0 + $0x660] sm:$0xff]
    %v220 = vld [vmem:[%s0 + $0x668] sm:$0xff]
    %v221 = vld [vmem:[%s0 + $0x670] sm:$0xff]
    %v222 = vld [vmem:[%s0 + $0x678] sm:$0xff]
    %v223 = vld [vmem:[%s0 + $0x680] sm:$0xff]
    %v224 = vld [vmem:[%s0 + $0x688] sm:$0xff]
    %v225 = vld [vmem:[%s0 + $0x690] sm:$0xff]
    %v226 = vld [vmem:[%s0 + $0x698] sm:$0xff]
    %v227 = vld [vmem:[%s0 + $0x6a0] sm:$0xff]
    %v228 = vld [vmem:[%s0 + $0x6a8] sm:$0xff]
    %v229 = vld [vmem:[%s0 + $0x6b0] sm:$0xff]
    %v230 = vld [vmem:[%s0 + $0x6b8] sm:$0xff]
    %v231 = vld [vmem:[%s0 + $0x6c0] sm:$0xff]
    %v232 = vld [vmem:[%s0 + $0x6c8] sm:$0xff]
    %v233 = vld [vmem:[%s0 + $0x6d0] sm:$0xff]
    %v234 = vld [vmem:[%s0 + $0x6d8] sm:$0xff]
    %v235 = vld [vmem:[%s0 + $0x6e0] sm:$0xff]
    %v236 = vld [vmem:[%s0 + $0x6e8] sm:$0xff]
    %v237 = vld [vmem:[%s0 + $0x6f0] sm:$0xff]
    %v238 = vld [vmem:[%s0 + $0x6f8] sm:$0xff]
    %v239 = vld [vmem:[%s0 + $0x700] sm:$0xff]
    %v240 = vld [vmem:[%s0 + $0x708] sm:$0xff]
    %v241 = vld [vmem:[%s0 + $0x710] sm:$0xff]
    %v242 = vld [vmem:[%s0 + $0x718] sm:$0xff]
    %v243 = vld [vmem:[%s0 + $0x720] sm:$0xff]
    %v244 = vld [vmem:[%s0 + $0x728] sm:$0xff]
    %v245 = vld [vmem:[%s0 + $0x730] sm:$0xff]
    %v246 = vld [vmem:[%s0 + $0x738] sm:$0xff]
    %v247 = vld [vmem:[%s0 + $0x740] sm:$0xff]
    %v248 = vld [vmem:[%s0 + $0x748] sm:$0xff]
    %v249 = vld [vmem:[%s0 + $0x750] sm:$0xff]
    %v250 = vld [vmem:[%s0 + $0x758] sm:$0xff]
    %v251 = vld [vmem:[%s0 + $0x760] sm:$0xff]
    %v252 = vld [vmem:[%s0 + $0x768] sm:$0xff]
    %v253 = vld [vmem:[%s0 + $0x770] sm:$0xff]
    %v254 = vld [vmem:[%s0 + $0x778] sm:$0xff]
    %v255 = vld [vmem:[%s0 + $0x780] sm:$0xff]
    %v256 = vld [vmem:[%s0 + $0x788] sm:$0xff]
    %v257 = vld [vmem:[%s0 + $0x790] sm:$0xff]
    %v258 = vld [vmem:[%s0 + $0x798] sm:$0xff]
    %v259 = vld [vmem:[%s0 + $0x7a0] sm:$0xff]
    %v260 = vld [vmem:[%s0 + $0x7a8] sm:$0xff]
    %v261 = vld [vmem:[%s0 + $0x7b0] sm:$0xff]
    %v262 = vld [vmem:[%s0 + $0x7b8] sm:$0xff]
    %v263 = vld [vmem:[%s0 + $0x7c0] sm:$0xff]
    %v264 = vld [vmem:[%s0 + $0x7c8] sm:$0xff]
    %v265 = vld [vmem:[%s0 + $0x7d0] sm:$0xff]
    %v266 = vld [vmem:[%s0 + $0x7d8] sm:$0xff]
    %v267 = vld [vmem:[%s0 + $0x7e0] sm:$0xff]
    %v268 = vld [vmem:[%s0 + $0x7e8] sm:$0xff]
    %v269 = vld [vmem:[%s0 + $0x7f0] sm:$0xff]
    %v270 = vld [vmem:[%s0 + $0x7f8] sm:$0xff]
    %v271 = vld [vmem:[%s0 + $0x800] sm:$0xff]
    %v272 = vld [vmem:[%s0 + $0x808] sm:$0xff]
    %v273 = vld [vmem:[%s0 + $0x810] sm:$0xff]
    %v274 = vld [vmem:[%s0 + $0x818] sm:$0xff]
    %v275 = vld [vmem:[%s0 + $0x820] sm:$0xff]
    %v276 = vld [vmem:[%s0 + $0x828] sm:$0xff]
    %v277 = vld [vmem:[%s0 + $0x830] sm:$0xff]
    %v278 = vld [vmem:[%s0 + $0x838] sm:$0xff]
    %v279 = vld [vmem:[%s0 + $0x840] sm:$0xff]
    %v280 = vld [vmem:[%s0 + $0x848] sm:$0xff]
    %v281 = vld [vmem:[%s0 + $0x850] sm:$0xff]
    %v282 = vld [vmem:[%s0 + $0x858] sm:$0xff]
    %v283 = vld [vmem:[%s0 + $0x860] sm:$0xff]
    %v284 = vld [vmem:[%s0 + $0x868] sm:$0xff]
    %v285 = vld [vmem:[%s0 + $0x870] sm:$0xff]
    %v286 = vld [vmem:[%s0 + $0x878] sm:$0xff]
    %v287 = vld [vmem:[%s0 + $0x880] sm:$0xff]
    %v288 = vld [vmem:[%s0 + $0x888] sm:$0xff]
    %v289 = vld [vmem:[%s0 + $0x890] sm:$0xff]
    %v290 = vld [vmem:[%s0 + $0x898] sm:$0xff]
    %v291 = vld [vmem:[%s0 + $0x8a0] sm:$0xff]
    %v292 = vld [vmem:[%s0 + $0x8a8] sm:$0xff]
    %v293 = vld [vmem:[%s0 + $0x8b0] sm:$0xff]
    %v294 = vld [vmem:[%s0 + $0x8b8] sm:$0xff]
    %v295 = vld [vmem:[%s0 + $0x8c0] sm:$0xff]
    %v296 = vld [vmem:[%s0 + $0x8c8] sm:$0xff]
    %v297 = vld [vmem:[%s0 + $0x8d0] sm:$0xff]
    %v298 = vld [vmem:[%s0 + $0x8d8] sm:$0xff]
    %v299 = vld [vmem:[%s0 + $0x8e0] sm:$0xff]
    %v300 = vld [vmem:[%s0 + $0x8e8] sm:$0xff]
    %v301 = vld [vmem:[%s0 + $0x8f0] sm:$0xff]
    %v302 = vld [vmem:[%s0 + $0x8f8] sm:$0xff]
    %v303 = vld [vmem:[%s0 + $0x900] sm:$0xff]
    %v304 = vld [vmem:[%s0 + $0x908] sm:$0xff]
    %v305 = vld [vmem:[%s0 + $0x910] sm:$0xff]
    %v306 = vld [vmem:[%s0 + $0x918] sm:$0xff]
    %v307 = vld [vmem:[%s0 + $0x920] sm:$0xff]
    %v308 = vld [vmem:[%s0 + $0x928] sm:$0xff]
    %v309 = vld [vmem:[%s0 + $0x930] sm:$0xff]
    %v310 = vld [vmem:[%s0 + $0x938] sm:$0xff]
    %v311 = vld [vmem:[%s0 + $0x940] sm:$0xff]
    %v312 = vld [vmem:[%s0 + $0x948] sm:$0xff]
    %v313 = vld [vmem:[%s0 + $0x950] sm:$0xff]
    %v314 = vld [vmem:[%s0 + $0x958] sm:$0xff]
    %v315 = vld [vmem:[%s0 + $0x960] sm:$0xff]
    %v316 = vld [vmem:[%s0 + $0x968] sm:$0xff]
    %v317 = vld [vmem:[%s0 + $0x970] sm:$0xff]
    %v318 = vld [vmem:[%s0 + $0x978] sm:$0xff]
    %v319 = vld [vmem:[%s0 + $0x980] sm:$0xff]
    %v320 = vld [vmem:[%s0 + $0x988] sm:$0xff]
    %v321 = vld [vmem:[%s0 + $0x990] sm:$0xff]
    %v322 = vld [vmem:[%s0 + $0x998] sm:$0xff]
    %v323 = vld [vmem:[%s0 + $0x9a0] sm:$0xff]
    %v324 = vld [vmem:[%s0 + $0x9a8] sm:$0xff]
    %v325 = vld [vmem:[%s0 + $0x9b0] sm:$0xff]
    %v326 = vld [vmem:[%s0 + $0x9b8] sm:$0xff]
    %v327 = vld [vmem:[%s0 + $0x9c0] sm:$0xff]
    %v328 = vld [vmem:[%s0 + $0x9c8] sm:$0xff]
    %v329 = vld [vmem:[%s0 + $0x9d0] sm:$0xff]
    %v330 = vld [vmem:[%s0 + $0x9d8] sm:$0xff]
    %v331 = vld [vmem:[%s0 + $0x9e0] sm:$0xff]
    %v332 = vld [vmem:[%s0 + $0x9e8] sm:$0xff]
    %v333 = vld [vmem:[%s0 + $0x9f0] sm:$0xff]
    %v334 = vld [vmem:[%s0 + $0x9f8] sm:$0xff]
    %v335 = vld [vmem:[%s0 + $0xa00] sm:$0xff]
    %v336 = vld [vmem:[%s0 + $0xa08] sm:$0xff]
    %v337 = vld [vmem:[%s0 + $0xa10] sm:$0xff]
    %v338 = vld [vmem:[%s0 + $0xa18] sm:$0xff]
    %v339 = vld [vmem:[%s0 + $0xa20] sm:$0xff]
    %v340 = vld [vmem:[%s0 + $0xa28] sm:$0xff]
    %v341 = vld [vmem:[%s0 + $0xa30] sm:$0xff]
    %v342 = vld [vmem:[%s0 + $0xa38] sm:$0xff]
    %v343 = vld [vmem:[%s0 + $0xa40] sm:$0xff]
    %v344 = vld [vmem:[%s0 + $0xa48] sm:$0xff]
    %v345 = vld [vmem:[%s0 + $0xa50] sm:$0xff]
    %v346 = vld [vmem:[%s0 + $0xa58] sm:$0xff]
    %v347 = vld [vmem:[%s0 + $0xa60] sm:$0xff]
    %v348 = vld [vmem:[%s0 + $0xa68] sm:$0xff]
    %v349 = vld [vmem:[%s0 + $0xa70] sm:$0xff]
    %v350 = vld [vmem:[%s0 + $0xa78] sm:$0xff]
    %v351 = vld [vmem:[%s0 + $0xa80] sm:$0xff]
    %v352 = vld [vmem:[%s0 + $0xa88] sm:$0xff]
    %v353 = vld [vmem:[%s0 + $0xa90] sm:$0xff]
    %v354 = vld [vmem:[%s0 + $0xa98] sm:$0xff]
    %v355 = vld [vmem:[%s0 + $0xaa0] sm:$0xff]
    %v356 = vld [vmem:[%s0 + $0xaa8] sm:$0xff]
    %v357 = vld [vmem:[%s0 + $0xab0] sm:$0xff]
    %v358 = vld [vmem:[%s0 + $0xab8] sm:$0xff]
    %v359 = vld [vmem:[%s0 + $0xac0] sm:$0xff]
    %v360 = vld [vmem:[%s0 + $0xac8] sm:$0xff]
    %v361 = vld [vmem:[%s0 + $0xad0] sm:$0xff]
    %v362 = vld [vmem:[%s0 + $0xad8] sm:$0xff]
    %v363 = vld [vmem:[%s0 + $0xae0] sm:$0xff]
    %v364 = vld [vmem:[%s0 + $0xae8] sm:$0xff]
    %v365 = vld [vmem:[%s0 + $0xaf0] sm:$0xff]
    %v366 = vld [vmem:[%s0 + $0xaf8] sm:$0xff]
    %v367 = vld [vmem:[%s0 + $0xb00] sm:$0xff]
    %v368 = vld [vmem:[%s0 + $0xb08] sm:$0xff]
    %v369 = vld [vmem:[%s0 + $0xb10] sm:$0xff]
    %v370 = vld [vmem:[%s0 + $0xb18] sm:$0xff]
    %v371 = vld [vmem:[%s0 + $0xb20] sm:$0xff]
    %v372 = vld [vmem:[%s0 + $0xb28] sm:$0xff]
    %v373 = vld [vmem:[%s0 + $0xb30] sm:$0xff]
    %v374 = vld [vmem:[%s0 + $0xb38] sm:$0xff]
    %v375 = vld [vmem:[%s0 + $0xb40] sm:$0xff]
    %v376 = vld [vmem:[%s0 + $0xb48] sm:$0xff]
    %v377 = vld [vmem:[%s0 + $0xb50] sm:$0xff]
    %v378 = vld [vmem:[%s0 + $0xb58] sm:$0xff]
    %v379 = vld [vmem:[%s0 + $0xb60] sm:$0xff]
    %v380 = vld [vmem:[%s0 + $0xb68] sm:$0xff]
    %v381 = vld [vmem:[%s0 + $0xb70] sm:$0xff]
    %v382 = vld [vmem:[%s0 + $0xb78] sm:$0xff]
    %v383 = vld [vmem:[%s0 + $0xb80] sm:$0xff]
    %v384 = vld [vmem:[%s0 + $0xb88] sm:$0xff]
    %v385 = vld [vmem:[%s0 + $0xb90] sm:$0xff]
    %v386 = vld [vmem:[%s0 + $0xb98] sm:$0xff]
    %v387 = vld [vmem:[%s0 + $0xba0] sm:$0xff]
    %v388 = vld [vmem:[%s0 + $0xba8] sm:$0xff]
    %v389 = vld [vmem:[%s0 + $0xbb0] sm:$0xff]
    %v390 = vld [vmem:[%s0 + $0xbb8] sm:$0xff]
    %v391 = vld [vmem:[%s0 + $0xbc0] sm:$0xff]
    %v392 = vld [vmem:[%s0 + $0xbc8] sm:$0xff]
    %v393 = vld [vmem:[%s0 + $0xbd0] sm:$0xff]
    %v394 = vld [vmem:[%s0 + $0xbd8] sm:$0xff]
    %v395 = vld [vmem:[%s0 + $0xbe0] sm:$0xff]
    %v396 = vld [vmem:[%s0 + $0xbe8] sm:$0xff]
    %v397 = vld [vmem:[%s0 + $0xbf0] sm:$0xff]
    %v398 = vld [vmem:[%s0 + $0xbf8] sm:$0xff]
    %v399 = vld [vmem:[%s0 + $0xc00] sm:$0xff]
    %v400 = vld [vmem:[%s0 + $0xc08] sm:$0xff]
    %v401 = vld [vmem:[%s0 + $0xc10] sm:$0xff]
    %v402 = vld [vmem:[%s0 + $0xc18] sm:$0xff]
    %v403 = vld [vmem:[%s0 + $0xc20] sm:$0xff]
    %v404 = vld [vmem:[%s0 + $0xc28] sm:$0xff]
    %v405 = vld [vmem:[%s0 + $0xc30] sm:$0xff]
    %v406 = vld [vmem:[%s0 + $0xc38] sm:$0xff]
    %v407 = vld [vmem:[%s0 + $0xc40] sm:$0xff]
    %v408 = vld [vmem:[%s0 + $0xc48] sm:$0xff]
    %v409 = vld [vmem:[%s0 + $0xc50] sm:$0xff]
    %v410 = vld [vmem:[%s0 + $0xc58] sm:$0xff]
    %v411 = vld [vmem:[%s0 + $0xc60] sm:$0xff]
    %v412 = vld [vmem:[%s0 + $0xc68] sm:$0xff]
    %v413 = vld [vmem:[%s0 + $0xc70] sm:$0xff]
    %v414 = vld [vmem:[%s0 + $0xc78] sm:$0xff]
    %v415 = vld [vmem:[%s0 + $0xc80] sm:$0xff]
    %v416 = vld [vmem:[%s0 + $0xc88] sm:$0xff]
    %v417 = vld [vmem:[%s0 + $0xc90] sm:$0xff]
    %v418 = vld [vmem:[%s0 + $0xc98] sm:$0xff]
    %v419 = vld [vmem:[%s0 + $0xca0] sm:$0xff]
    %v420 = vld [vmem:[%s0 + $0xca8] sm:$0xff]
    %v421 = vld [vmem:[%s0 + $0xcb0] sm:$0xff]
    %v422 = vld [vmem:[%s0 + $0xcb8] sm:$0xff]
    %v423 = vld [vmem:[%s0 + $0xcc0] sm:$0xff]
    %v424 = vld [vmem:[%s0 + $0xcc8] sm:$0xff]
    %v425 = vld [vmem:[%s0 + $0xcd0] sm:$0xff]
    %v426 = vld [vmem:[%s0 + $0xcd8] sm:$0xff]
    %v427 = vld [vmem:[%s0 + $0xce0] sm:$0xff]
    %v428 = vld [vmem:[%s0 + $0xce8] sm:$0xff]
    %v429 = vld [vmem:[%s0 + $0xcf0] sm:$0xff]
    %v430 = vld [vmem:[%s0 + $0xcf8] sm:$0xff]
    %v431 = vld [vmem:[%s0 + $0xd00] sm:$0xff]
    %v432 = vld [vmem:[%s0 + $0xd08] sm:$0xff]
    %v433 = vld [vmem:[%s0 + $0xd10] sm:$0xff]
    %v434 = vld [vmem:[%s0 + $0xd18] sm:$0xff]
    %v435 = vld [vmem:[%s0 + $0xd20] sm:$0xff]
    %v436 = vld [vmem:[%s0 + $0xd28] sm:$0xff]
    %v437 = vld [vmem:[%s0 + $0xd30] sm:$0xff]
    %v438 = vld [vmem:[%s0 + $0xd38] sm:$0xff]
    %v439 = vld [vmem:[%s0 + $0xd40] sm:$0xff]
    %v440 = vld [vmem:[%s0 + $0xd48] sm:$0xff]
    %v441 = vld [vmem:[%s0 + $0xd50] sm:$0xff]
    %v442 = vld [vmem:[%s0 + $0xd58] sm:$0xff]
    %v443 = vld [vmem:[%s0 + $0xd60] sm:$0xff]
    %v444 = vld [vmem:[%s0 + $0xd68] sm:$0xff]
    %v445 = vld [vmem:[%s0 + $0xd70] sm:$0xff]
    %v446 = vld [vmem:[%s0 + $0xd78] sm:$0xff]
    %v447 = vld [vmem:[%s0 + $0xd80] sm:$0xff]
    %v448 = vld [vmem:[%s0 + $0xd88] sm:$0xff]
    %v449 = vld [vmem:[%s0 + $0xd90] sm:$0xff]
    %v450 = vld [vmem:[%s0 + $0xd98] sm:$0xff]
    %v451 = vld [vmem:[%s0 + $0xda0] sm:$0xff]
    %v452 = vld [vmem:[%s0 + $0xda8] sm:$0xff]
    %v453 = vld [vmem:[%s0 + $0xdb0] sm:$0xff]
    %v454 = vld [vmem:[%s0 + $0xdb8] sm:$0xff]
    %v455 = vld [vmem:[%s0 + $0xdc0] sm:$0xff]
    %v456 = vld [vmem:[%s0 + $0xdc8] sm:$0xff]
    %v457 = vld [vmem:[%s0 + $0xdd0] sm:$0xff]
    %v458 = vld [vmem:[%s0 + $0xdd8] sm:$0xff]
    %v459 = vld [vmem:[%s0 + $0xde0] sm:$0xff]
    %v460 = vld [vmem:[%s0 + $0xde8] sm:$0xff]
    %v461 = vld [vmem:[%s0 + $0xdf0] sm:$0xff]
    %v462 = vld [vmem:[%s0 + $0xdf8] sm:$0xff]
    %v463 = vld [vmem:[%s0 + $0xe00] sm:$0xff]
    %v464 = vld [vmem:[%s0 + $0xe08] sm:$0xff]
    %v465 = vld [vmem:[%s0 + $0xe10] sm:$0xff]
    %v466 = vld [vmem:[%s0 + $0xe18] sm:$0xff]
    %v467 = vld [vmem:[%s0 + $0xe20] sm:$0xff]
    %v468 = vld [vmem:[%s0 + $0xe28] sm:$0xff]
    %v469 = vld [vmem:[%s0 + $0xe30] sm:$0xff]
    %v470 = vld [vmem:[%s0 + $0xe38] sm:$0xff]
    %v471 = vld [vmem:[%s0 + $0xe40] sm:$0xff]
    %v472 = vld [vmem:[%s0 + $0xe48] sm:$0xff]
    %v473 = vld [vmem:[%s0 + $0xe50] sm:$0xff]
    %v474 = vld [vmem:[%s0 + $0xe58] sm:$0xff]
    %v475 = vld [vmem:[%s0 + $0xe60] sm:$0xff]
    %v476 = vld [vmem:[%s0 + $0xe68] sm:$0xff]
    %v477 = vld [vmem:[%s0 + $0xe70] sm:$0xff]
    %v478 = vld [vmem:[%s0 + $0xe78] sm:$0xff]
    %v479 = vld [vmem:[%s0 + $0xe80] sm:$0xff]
    %v480 = vld [vmem:[%s0 + $0xe88] sm:$0xff]
    %v481 = vld [vmem:[%s0 + $0xe90] sm:$0xff]
    %v482 = vld [vmem:[%s0 + $0xe98] sm:$0xff]
    %v483 = vld [vmem:[%s0 + $0xea0] sm:$0xff]
    %v484 = vld [vmem:[%s0 + $0xea8] sm:$0xff]
    %v485 = vld [vmem:[%s0 + $0xeb0] sm:$0xff]
    %v486 = vld [vmem:[%s0 + $0xeb8] sm:$0xff]
    %v487 = vld [vmem:[%s0 + $0xec0] sm:$0xff]
    %v488 = vld [vmem:[%s0 + $0xec8] sm:$0xff]
    %v489 = vld [vmem:[%s0 + $0xed0] sm:$0xff]
    %v490 = vld [vmem:[%s0 + $0xed8] sm:$0xff]
    %v491 = vld [vmem:[%s0 + $0xee0] sm:$0xff]
    %v492 = vld [vmem:[%s0 + $0xee8] sm:$0xff]
    %v493 = vld [vmem:[%s0 + $0xef0] sm:$0xff]
    %v494 = vld [vmem:[%s0 + $0xef8] sm:$0xff]
    %v495 = vld [vmem:[%s0 + $0xf00] sm:$0xff]
    %v496 = vld [vmem:[%s0 + $0xf08] sm:$0xff]
    %v497 = vld [vmem:[%s0 + $0xf10] sm:$0xff]
    %v498 = vld [vmem:[%s0 + $0xf18] sm:$0xff]
    %v499 = vld [vmem:[%s0 + $0xf20] sm:$0xff]
    %v500 = vld [vmem:[%s0 + $0xf28] sm:$0xff]
    %v501 = vld [vmem:[%s0 + $0xf30] sm:$0xff]
    %v502 = vld [vmem:[%s0 + $0xf38] sm:$0xff]
    %v503 = vld [vmem:[%s0 + $0xf40] sm:$0xff]
    %v504 = vld [vmem:[%s0 + $0xf48] sm:$0xff]
    %v505 = vld [vmem:[%s0 + $0xf50] sm:$0xff]
    %v506 = vld [vmem:[%s0 + $0xf58] sm:$0xff]
    %v507 = vld [vmem:[%s0 + $0xf60] sm:$0xff]
    %v508 = vld [vmem:[%s0 + $0xf68] sm:$0xff]
    %v509 = vld [vmem:[%s0 + $0xf70] sm:$0xff]
    %v510 = vld [vmem:[%s0 + $0xf78] sm:$0xff]
    %v511 = vld [vmem:[%s0 + $0xf80] sm:$0xff]
    %v512 = vld [vmem:[%s0 + $0xf88] sm:$0xff]
    %v513 = vld [vmem:[%s0 + $0xf90] sm:$0xff]
    %v514 = vld [vmem:[%s0 + $0xf98] sm:$0xff]
    %v515 = vld [vmem:[%s0 + $0xfa0] sm:$0xff]
    %v516 = vld [vmem:[%s0 + $0xfa8] sm:$0xff]
    %v517 = vld [vmem:[%s0 + $0xfb0] sm:$0xff]
    %v518 = vld [vmem:[%s0 + $0xfb8] sm:$0xff]
    %v519 = vld [vmem:[%s0 + $0xfc0] sm:$0xff]
    %v520 = vld [vmem:[%s0 + $0xfc8] sm:$0xff]
    %v521 = vld [vmem:[%s0 + $0xfd0] sm:$0xff]
    %v522 = vld [vmem:[%s0 + $0xfd8] sm:$0xff]
    %v523 = vld [vmem:[%s0 + $0xfe0] sm:$0xff]
    %v524 = vld [vmem:[%s0 + $0xfe8] sm:$0xff]
    %v525 = vld [vmem:[%s0 + $0xff0] sm:$0xff]
    %v526 = vld [vmem:[%s0 + $0xff8] sm:$0xff]
    %vm527 = vcmask 130048
    %v528 = vsel %vm527, %v15, 0.0
    %529 = vadd.xlane.f32.xlu0 %v528
    %v530 = vpop.xlane.xlu0 %529
    %v531 = vsel %vm527, %v16, 0.0
    %532 = vadd.xlane.f32.xlu0 %v531
    %v533 = vpop.xlane.xlu0 %532
    %v534 = vsel %vm527, %v17, 0.0
    %535 = vadd.xlane.f32.xlu0 %v534
    %v536 = vpop.xlane.xlu0 %535
    %v537 = vsel %vm527, %v18, 0.0
    %538 = vadd.xlane.f32.xlu0 %v537
    %v539 = vpop.xlane.xlu0 %538
    %v540 = vsel %vm527, %v19, 0.0
    %541 = vadd.xlane.f32.xlu0 %v540
    %v542 = vpop.xlane.xlu0 %541
    %v543 = vsel %vm527, %v20, 0.0
    %544 = vadd.xlane.f32.xlu0 %v543
    %v545 = vpop.xlane.xlu0 %544
    %v546 = vsel %vm527, %v21, 0.0
    %547 = vadd.xlane.f32.xlu0 %v546
    %v548 = vpop.xlane.xlu0 %547
    %v549 = vsel %vm527, %v22, 0.0
    %550 = vadd.xlane.f32.xlu0 %v549
    %v551 = vpop.xlane.xlu0 %550
    %v552 = vsel %vm527, %v23, 0.0
    %553 = vadd.xlane.f32.xlu0 %v552
    %v554 = vpop.xlane.xlu0 %553
    %v555 = vsel %vm527, %v24, 0.0
    %556 = vadd.xlane.f32.xlu0 %v555
    %v557 = vpop.xlane.xlu0 %556
    %v558 = vsel %vm527, %v25, 0.0
    %559 = vadd.xlane.f32.xlu0 %v558
    %v560 = vpop.xlane.xlu0 %559
    %v561 = vsel %vm527, %v26, 0.0
    %562 = vadd.xlane.f32.xlu0 %v561
    %v563 = vpop.xlane.xlu0 %562
    %v564 = vsel %vm527, %v27, 0.0
    %565 = vadd.xlane.f32.xlu0 %v564
    %v566 = vpop.xlane.xlu0 %565
    %v567 = vsel %vm527, %v28, 0.0
    %568 = vadd.xlane.f32.xlu0 %v567
    %v569 = vpop.xlane.xlu0 %568
    %v570 = vsel %vm527, %v29, 0.0
    %571 = vadd.xlane.f32.xlu0 %v570
    %v572 = vpop.xlane.xlu0 %571
    %v573 = vsel %vm527, %v30, 0.0
    %574 = vadd.xlane.f32.xlu0 %v573
    %v575 = vpop.xlane.xlu0 %574
    %v576 = vsel %vm527, %v31, 0.0
    %577 = vadd.xlane.f32.xlu0 %v576
    %v578 = vpop.xlane.xlu0 %577
    %v579 = vsel %vm527, %v32, 0.0
    %580 = vadd.xlane.f32.xlu0 %v579
    %v581 = vpop.xlane.xlu0 %580
    %v582 = vsel %vm527, %v33, 0.0
    %583 = vadd.xlane.f32.xlu0 %v582
    %v584 = vpop.xlane.xlu0 %583
    %v585 = vsel %vm527, %v34, 0.0
    %586 = vadd.xlane.f32.xlu0 %v585
    %v587 = vpop.xlane.xlu0 %586
    %v588 = vsel %vm527, %v35, 0.0
    %589 = vadd.xlane.f32.xlu0 %v588
    %v590 = vpop.xlane.xlu0 %589
    %v591 = vsel %vm527, %v36, 0.0
    %592 = vadd.xlane.f32.xlu0 %v591
    %v593 = vpop.xlane.xlu0 %592
    %v594 = vsel %vm527, %v37, 0.0
    %595 = vadd.xlane.f32.xlu0 %v594
    %v596 = vpop.xlane.xlu0 %595
    %v597 = vsel %vm527, %v38, 0.0
    %598 = vadd.xlane.f32.xlu0 %v597
    %v599 = vpop.xlane.xlu0 %598
    %v600 = vsel %vm527, %v39, 0.0
    %601 = vadd.xlane.f32.xlu0 %v600
    %v602 = vpop.xlane.xlu0 %601
    %v603 = vsel %vm527, %v40, 0.0
    %604 = vadd.xlane.f32.xlu0 %v603
    %v605 = vpop.xlane.xlu0 %604
    %v606 = vsel %vm527, %v41, 0.0
    %607 = vadd.xlane.f32.xlu0 %v606
    %v608 = vpop.xlane.xlu0 %607
    %v609 = vsel %vm527, %v42, 0.0
    %610 = vadd.xlane.f32.xlu0 %v609
    %v611 = vpop.xlane.xlu0 %610
    %v612 = vsel %vm527, %v43, 0.0
    %613 = vadd.xlane.f32.xlu0 %v612
    %v614 = vpop.xlane.xlu0 %613
    %v615 = vsel %vm527, %v44, 0.0
    %616 = vadd.xlane.f32.xlu0 %v615
    %v617 = vpop.xlane.xlu0 %616
    %v618 = vsel %vm527, %v45, 0.0
    %619 = vadd.xlane.f32.xlu0 %v618
    %v620 = vpop.xlane.xlu0 %619
    %v621 = vsel %vm527, %v46, 0.0
    %622 = vadd.xlane.f32.xlu0 %v621
    %v623 = vpop.xlane.xlu0 %622
    %v624 = vsel %vm527, %v47, 0.0
    %625 = vadd.xlane.f32.xlu0 %v624
    %v626 = vpop.xlane.xlu0 %625
    %v627 = vsel %vm527, %v48, 0.0
    %628 = vadd.xlane.f32.xlu0 %v627
    %v629 = vpop.xlane.xlu0 %628
    %v630 = vsel %vm527, %v49, 0.0
    %631 = vadd.xlane.f32.xlu0 %v630
    %v632 = vpop.xlane.xlu0 %631
    %v633 = vsel %vm527, %v50, 0.0
    %634 = vadd.xlane.f32.xlu0 %v633
    %v635 = vpop.xlane.xlu0 %634
    %v636 = vsel %vm527, %v51, 0.0
    %637 = vadd.xlane.f32.xlu0 %v636
    %v638 = vpop.xlane.xlu0 %637
    %v639 = vsel %vm527, %v52, 0.0
    %640 = vadd.xlane.f32.xlu0 %v639
    %v641 = vpop.xlane.xlu0 %640
    %v642 = vsel %vm527, %v53, 0.0
    %643 = vadd.xlane.f32.xlu0 %v642
    %v644 = vpop.xlane.xlu0 %643
    %v645 = vsel %vm527, %v54, 0.0
    %646 = vadd.xlane.f32.xlu0 %v645
    %v647 = vpop.xlane.xlu0 %646
    %v648 = vsel %vm527, %v55, 0.0
    %649 = vadd.xlane.f32.xlu0 %v648
    %v650 = vpop.xlane.xlu0 %649
    %v651 = vsel %vm527, %v56, 0.0
    %652 = vadd.xlane.f32.xlu0 %v651
    %v653 = vpop.xlane.xlu0 %652
    %v654 = vsel %vm527, %v57, 0.0
    %655 = vadd.xlane.f32.xlu0 %v654
    %v656 = vpop.xlane.xlu0 %655
    %v657 = vsel %vm527, %v58, 0.0
    %658 = vadd.xlane.f32.xlu0 %v657
    %v659 = vpop.xlane.xlu0 %658
    %v660 = vsel %vm527, %v59, 0.0
    %661 = vadd.xlane.f32.xlu0 %v660
    %v662 = vpop.xlane.xlu0 %661
    %v663 = vsel %vm527, %v60, 0.0
    %664 = vadd.xlane.f32.xlu0 %v663
    %v665 = vpop.xlane.xlu0 %664
    %v666 = vsel %vm527, %v61, 0.0
    %667 = vadd.xlane.f32.xlu0 %v666
    %v668 = vpop.xlane.xlu0 %667
    %v669 = vsel %vm527, %v62, 0.0
    %670 = vadd.xlane.f32.xlu0 %v669
    %v671 = vpop.xlane.xlu0 %670
    %v672 = vsel %vm527, %v63, 0.0
    %673 = vadd.xlane.f32.xlu0 %v672
    %v674 = vpop.xlane.xlu0 %673
    %v675 = vsel %vm527, %v64, 0.0
    %676 = vadd.xlane.f32.xlu0 %v675
    %v677 = vpop.xlane.xlu0 %676
    %v678 = vsel %vm527, %v65, 0.0
    %679 = vadd.xlane.f32.xlu0 %v678
    %v680 = vpop.xlane.xlu0 %679
    %v681 = vsel %vm527, %v66, 0.0
    %682 = vadd.xlane.f32.xlu0 %v681
    %v683 = vpop.xlane.xlu0 %682
    %v684 = vsel %vm527, %v67, 0.0
    %685 = vadd.xlane.f32.xlu0 %v684
    %v686 = vpop.xlane.xlu0 %685
    %v687 = vsel %vm527, %v68, 0.0
    %688 = vadd.xlane.f32.xlu0 %v687
    %v689 = vpop.xlane.xlu0 %688
    %v690 = vsel %vm527, %v69, 0.0
    %691 = vadd.xlane.f32.xlu0 %v690
    %v692 = vpop.xlane.xlu0 %691
    %v693 = vsel %vm527, %v70, 0.0
    %694 = vadd.xlane.f32.xlu0 %v693
    %v695 = vpop.xlane.xlu0 %694
    %v696 = vsel %vm527, %v71, 0.0
    %697 = vadd.xlane.f32.xlu0 %v696
    %v698 = vpop.xlane.xlu0 %697
    %v699 = vsel %vm527, %v72, 0.0
    %700 = vadd.xlane.f32.xlu0 %v699
    %v701 = vpop.xlane.xlu0 %700
    %v702 = vsel %vm527, %v73, 0.0
    %703 = vadd.xlane.f32.xlu0 %v702
    %v704 = vpop.xlane.xlu0 %703
    %v705 = vsel %vm527, %v74, 0.0
    %706 = vadd.xlane.f32.xlu0 %v705
    %v707 = vpop.xlane.xlu0 %706
    %v708 = vsel %vm527, %v75, 0.0
    %709 = vadd.xlane.f32.xlu0 %v708
    %v710 = vpop.xlane.xlu0 %709
    %v711 = vsel %vm527, %v76, 0.0
    %712 = vadd.xlane.f32.xlu0 %v711
    %v713 = vpop.xlane.xlu0 %712
    %v714 = vsel %vm527, %v77, 0.0
    %715 = vadd.xlane.f32.xlu0 %v714
    %v716 = vpop.xlane.xlu0 %715
    %v717 = vsel %vm527, %v78, 0.0
    %718 = vadd.xlane.f32.xlu0 %v717
    %v719 = vpop.xlane.xlu0 %718
    %v720 = vsel %vm527, %v79, 0.0
    %721 = vadd.xlane.f32.xlu0 %v720
    %v722 = vpop.xlane.xlu0 %721
    %v723 = vsel %vm527, %v80, 0.0
    %724 = vadd.xlane.f32.xlu0 %v723
    %v725 = vpop.xlane.xlu0 %724
    %v726 = vsel %vm527, %v81, 0.0
    %727 = vadd.xlane.f32.xlu0 %v726
    %v728 = vpop.xlane.xlu0 %727
    %v729 = vsel %vm527, %v82, 0.0
    %730 = vadd.xlane.f32.xlu0 %v729
    %v731 = vpop.xlane.xlu0 %730
    %v732 = vsel %vm527, %v83, 0.0
    %733 = vadd.xlane.f32.xlu0 %v732
    %v734 = vpop.xlane.xlu0 %733
    %v735 = vsel %vm527, %v84, 0.0
    %736 = vadd.xlane.f32.xlu0 %v735
    %v737 = vpop.xlane.xlu0 %736
    %v738 = vsel %vm527, %v85, 0.0
    %739 = vadd.xlane.f32.xlu0 %v738
    %v740 = vpop.xlane.xlu0 %739
    %v741 = vsel %vm527, %v86, 0.0
    %742 = vadd.xlane.f32.xlu0 %v741
    %v743 = vpop.xlane.xlu0 %742
    %v744 = vsel %vm527, %v87, 0.0
    %745 = vadd.xlane.f32.xlu0 %v744
    %v746 = vpop.xlane.xlu0 %745
    %v747 = vsel %vm527, %v88, 0.0
    %748 = vadd.xlane.f32.xlu0 %v747
    %v749 = vpop.xlane.xlu0 %748
    %v750 = vsel %vm527, %v89, 0.0
    %751 = vadd.xlane.f32.xlu0 %v750
    %v752 = vpop.xlane.xlu0 %751
    %v753 = vsel %vm527, %v90, 0.0
    %754 = vadd.xlane.f32.xlu0 %v753
    %v755 = vpop.xlane.xlu0 %754
    %v756 = vsel %vm527, %v91, 0.0
    %757 = vadd.xlane.f32.xlu0 %v756
    %v758 = vpop.xlane.xlu0 %757
    %v759 = vsel %vm527, %v92, 0.0
    %760 = vadd.xlane.f32.xlu0 %v759
    %v761 = vpop.xlane.xlu0 %760
    %v762 = vsel %vm527, %v93, 0.0
    %763 = vadd.xlane.f32.xlu0 %v762
    %v764 = vpop.xlane.xlu0 %763
    %v765 = vsel %vm527, %v94, 0.0
    %766 = vadd.xlane.f32.xlu0 %v765
    %v767 = vpop.xlane.xlu0 %766
    %v768 = vsel %vm527, %v95, 0.0
    %769 = vadd.xlane.f32.xlu0 %v768
    %v770 = vpop.xlane.xlu0 %769
    %v771 = vsel %vm527, %v96, 0.0
    %772 = vadd.xlane.f32.xlu0 %v771
    %v773 = vpop.xlane.xlu0 %772
    %v774 = vsel %vm527, %v97, 0.0
    %775 = vadd.xlane.f32.xlu0 %v774
    %v776 = vpop.xlane.xlu0 %775
    %v777 = vsel %vm527, %v98, 0.0
    %778 = vadd.xlane.f32.xlu0 %v777
    %v779 = vpop.xlane.xlu0 %778
    %v780 = vsel %vm527, %v99, 0.0
    %781 = vadd.xlane.f32.xlu0 %v780
    %v782 = vpop.xlane.xlu0 %781
    %v783 = vsel %vm527, %v100, 0.0
    %784 = vadd.xlane.f32.xlu0 %v783
    %v785 = vpop.xlane.xlu0 %784
    %v786 = vsel %vm527, %v101, 0.0
    %787 = vadd.xlane.f32.xlu0 %v786
    %v788 = vpop.xlane.xlu0 %787
    %v789 = vsel %vm527, %v102, 0.0
    %790 = vadd.xlane.f32.xlu0 %v789
    %v791 = vpop.xlane.xlu0 %790
    %v792 = vsel %vm527, %v103, 0.0
    %793 = vadd.xlane.f32.xlu0 %v792
    %v794 = vpop.xlane.xlu0 %793
    %v795 = vsel %vm527, %v104, 0.0
    %796 = vadd.xlane.f32.xlu0 %v795
    %v797 = vpop.xlane.xlu0 %796
    %v798 = vsel %vm527, %v105, 0.0
    %799 = vadd.xlane.f32.xlu0 %v798
    %v800 = vpop.xlane.xlu0 %799
    %v801 = vsel %vm527, %v106, 0.0
    %802 = vadd.xlane.f32.xlu0 %v801
    %v803 = vpop.xlane.xlu0 %802
    %v804 = vsel %vm527, %v107, 0.0
    %805 = vadd.xlane.f32.xlu0 %v804
    %v806 = vpop.xlane.xlu0 %805
    %v807 = vsel %vm527, %v108, 0.0
    %808 = vadd.xlane.f32.xlu0 %v807
    %v809 = vpop.xlane.xlu0 %808
    %v810 = vsel %vm527, %v109, 0.0
    %811 = vadd.xlane.f32.xlu0 %v810
    %v812 = vpop.xlane.xlu0 %811
    %v813 = vsel %vm527, %v110, 0.0
    %814 = vadd.xlane.f32.xlu0 %v813
    %v815 = vpop.xlane.xlu0 %814
    %v816 = vsel %vm527, %v111, 0.0
    %817 = vadd.xlane.f32.xlu0 %v816
    %v818 = vpop.xlane.xlu0 %817
    %v819 = vsel %vm527, %v112, 0.0
    %820 = vadd.xlane.f32.xlu0 %v819
    %v821 = vpop.xlane.xlu0 %820
    %v822 = vsel %vm527, %v113, 0.0
    %823 = vadd.xlane.f32.xlu0 %v822
    %v824 = vpop.xlane.xlu0 %823
    %v825 = vsel %vm527, %v114, 0.0
    %826 = vadd.xlane.f32.xlu0 %v825
    %v827 = vpop.xlane.xlu0 %826
    %v828 = vsel %vm527, %v115, 0.0
    %829 = vadd.xlane.f32.xlu0 %v828
    %v830 = vpop.xlane.xlu0 %829
    %v831 = vsel %vm527, %v116, 0.0
    %832 = vadd.xlane.f32.xlu0 %v831
    %v833 = vpop.xlane.xlu0 %832
    %v834 = vsel %vm527, %v117, 0.0
    %835 = vadd.xlane.f32.xlu0 %v834
    %v836 = vpop.xlane.xlu0 %835
    %v837 = vsel %vm527, %v118, 0.0
    %838 = vadd.xlane.f32.xlu0 %v837
    %v839 = vpop.xlane.xlu0 %838
    %v840 = vsel %vm527, %v119, 0.0
    %841 = vadd.xlane.f32.xlu0 %v840
    %v842 = vpop.xlane.xlu0 %841
    %v843 = vsel %vm527, %v120, 0.0
    %844 = vadd.xlane.f32.xlu0 %v843
    %v845 = vpop.xlane.xlu0 %844
    %v846 = vsel %vm527, %v121, 0.0
    %847 = vadd.xlane.f32.xlu0 %v846
    %v848 = vpop.xlane.xlu0 %847
    %v849 = vsel %vm527, %v122, 0.0
    %850 = vadd.xlane.f32.xlu0 %v849
    %v851 = vpop.xlane.xlu0 %850
    %v852 = vsel %vm527, %v123, 0.0
    %853 = vadd.xlane.f32.xlu0 %v852
    %v854 = vpop.xlane.xlu0 %853
    %v855 = vsel %vm527, %v124, 0.0
    %856 = vadd.xlane.f32.xlu0 %v855
    %v857 = vpop.xlane.xlu0 %856
    %v858 = vsel %vm527, %v125, 0.0
    %859 = vadd.xlane.f32.xlu0 %v858
    %v860 = vpop.xlane.xlu0 %859
    %v861 = vsel %vm527, %v126, 0.0
    %862 = vadd.xlane.f32.xlu0 %v861
    %v863 = vpop.xlane.xlu0 %862
    %v864 = vsel %vm527, %v127, 0.0
    %865 = vadd.xlane.f32.xlu0 %v864
    %v866 = vpop.xlane.xlu0 %865
    %v867 = vsel %vm527, %v128, 0.0
    %868 = vadd.xlane.f32.xlu0 %v867
    %v869 = vpop.xlane.xlu0 %868
    %v870 = vsel %vm527, %v129, 0.0
    %871 = vadd.xlane.f32.xlu0 %v870
    %v872 = vpop.xlane.xlu0 %871
    %v873 = vsel %vm527, %v130, 0.0
    %874 = vadd.xlane.f32.xlu0 %v873
    %v875 = vpop.xlane.xlu0 %874
    %v876 = vsel %vm527, %v131, 0.0
    %877 = vadd.xlane.f32.xlu0 %v876
    %v878 = vpop.xlane.xlu0 %877
    %v879 = vsel %vm527, %v132, 0.0
    %880 = vadd.xlane.f32.xlu0 %v879
    %v881 = vpop.xlane.xlu0 %880
    %v882 = vsel %vm527, %v133, 0.0
    %883 = vadd.xlane.f32.xlu0 %v882
    %v884 = vpop.xlane.xlu0 %883
    %v885 = vsel %vm527, %v134, 0.0
    %886 = vadd.xlane.f32.xlu0 %v885
    %v887 = vpop.xlane.xlu0 %886
    %v888 = vsel %vm527, %v135, 0.0
    %889 = vadd.xlane.f32.xlu0 %v888
    %v890 = vpop.xlane.xlu0 %889
    %v891 = vsel %vm527, %v136, 0.0
    %892 = vadd.xlane.f32.xlu0 %v891
    %v893 = vpop.xlane.xlu0 %892
    %v894 = vsel %vm527, %v137, 0.0
    %895 = vadd.xlane.f32.xlu0 %v894
    %v896 = vpop.xlane.xlu0 %895
    %v897 = vsel %vm527, %v138, 0.0
    %898 = vadd.xlane.f32.xlu0 %v897
    %v899 = vpop.xlane.xlu0 %898
    %v900 = vsel %vm527, %v139, 0.0
    %901 = vadd.xlane.f32.xlu0 %v900
    %v902 = vpop.xlane.xlu0 %901
    %v903 = vsel %vm527, %v140, 0.0
    %904 = vadd.xlane.f32.xlu0 %v903
    %v905 = vpop.xlane.xlu0 %904
    %v906 = vsel %vm527, %v141, 0.0
    %907 = vadd.xlane.f32.xlu0 %v906
    %v908 = vpop.xlane.xlu0 %907
    %v909 = vsel %vm527, %v142, 0.0
    %910 = vadd.xlane.f32.xlu0 %v909
    %v911 = vpop.xlane.xlu0 %910
    %v912 = vsel %vm527, %v143, 0.0
    %913 = vadd.xlane.f32.xlu0 %v912
    %v914 = vpop.xlane.xlu0 %913
    %v915 = vsel %vm527, %v144, 0.0
    %916 = vadd.xlane.f32.xlu0 %v915
    %v917 = vpop.xlane.xlu0 %916
    %v918 = vsel %vm527, %v145, 0.0
    %919 = vadd.xlane.f32.xlu0 %v918
    %v920 = vpop.xlane.xlu0 %919
    %v921 = vsel %vm527, %v146, 0.0
    %922 = vadd.xlane.f32.xlu0 %v921
    %v923 = vpop.xlane.xlu0 %922
    %v924 = vsel %vm527, %v147, 0.0
    %925 = vadd.xlane.f32.xlu0 %v924
    %v926 = vpop.xlane.xlu0 %925
    %v927 = vsel %vm527, %v148, 0.0
    %928 = vadd.xlane.f32.xlu0 %v927
    %v929 = vpop.xlane.xlu0 %928
    %v930 = vsel %vm527, %v149, 0.0
    %931 = vadd.xlane.f32.xlu0 %v930
    %v932 = vpop.xlane.xlu0 %931
    %v933 = vsel %vm527, %v150, 0.0
    %934 = vadd.xlane.f32.xlu0 %v933
    %v935 = vpop.xlane.xlu0 %934
    %v936 = vsel %vm527, %v151, 0.0
    %937 = vadd.xlane.f32.xlu0 %v936
    %v938 = vpop.xlane.xlu0 %937
    %v939 = vsel %vm527, %v152, 0.0
    %940 = vadd.xlane.f32.xlu0 %v939
    %v941 = vpop.xlane.xlu0 %940
    %v942 = vsel %vm527, %v153, 0.0
    %943 = vadd.xlane.f32.xlu0 %v942
    %v944 = vpop.xlane.xlu0 %943
    %v945 = vsel %vm527, %v154, 0.0
    %946 = vadd.xlane.f32.xlu0 %v945
    %v947 = vpop.xlane.xlu0 %946
    %v948 = vsel %vm527, %v155, 0.0
    %949 = vadd.xlane.f32.xlu0 %v948
    %v950 = vpop.xlane.xlu0 %949
    %v951 = vsel %vm527, %v156, 0.0
    %952 = vadd.xlane.f32.xlu0 %v951
    %v953 = vpop.xlane.xlu0 %952
    %v954 = vsel %vm527, %v157, 0.0
    %955 = vadd.xlane.f32.xlu0 %v954
    %v956 = vpop.xlane.xlu0 %955
    %v957 = vsel %vm527, %v158, 0.0
    %958 = vadd.xlane.f32.xlu0 %v957
    %v959 = vpop.xlane.xlu0 %958
    %v960 = vsel %vm527, %v159, 0.0
    %961 = vadd.xlane.f32.xlu0 %v960
    %v962 = vpop.xlane.xlu0 %961
    %v963 = vsel %vm527, %v160, 0.0
    %964 = vadd.xlane.f32.xlu0 %v963
    %v965 = vpop.xlane.xlu0 %964
    %v966 = vsel %vm527, %v161, 0.0
    %967 = vadd.xlane.f32.xlu0 %v966
    %v968 = vpop.xlane.xlu0 %967
    %v969 = vsel %vm527, %v162, 0.0
    %970 = vadd.xlane.f32.xlu0 %v969
    %v971 = vpop.xlane.xlu0 %970
    %v972 = vsel %vm527, %v163, 0.0
    %973 = vadd.xlane.f32.xlu0 %v972
    %v974 = vpop.xlane.xlu0 %973
    %v975 = vsel %vm527, %v164, 0.0
    %976 = vadd.xlane.f32.xlu0 %v975
    %v977 = vpop.xlane.xlu0 %976
    %v978 = vsel %vm527, %v165, 0.0
    %979 = vadd.xlane.f32.xlu0 %v978
    %v980 = vpop.xlane.xlu0 %979
    %v981 = vsel %vm527, %v166, 0.0
    %982 = vadd.xlane.f32.xlu0 %v981
    %v983 = vpop.xlane.xlu0 %982
    %v984 = vsel %vm527, %v167, 0.0
    %985 = vadd.xlane.f32.xlu0 %v984
    %v986 = vpop.xlane.xlu0 %985
    %v987 = vsel %vm527, %v168, 0.0
    %988 = vadd.xlane.f32.xlu0 %v987
    %v989 = vpop.xlane.xlu0 %988
    %v990 = vsel %vm527, %v169, 0.0
    %991 = vadd.xlane.f32.xlu0 %v990
    %v992 = vpop.xlane.xlu0 %991
    %v993 = vsel %vm527, %v170, 0.0
    %994 = vadd.xlane.f32.xlu0 %v993
    %v995 = vpop.xlane.xlu0 %994
    %v996 = vsel %vm527, %v171, 0.0
    %997 = vadd.xlane.f32.xlu0 %v996
    %v998 = vpop.xlane.xlu0 %997
    %v999 = vsel %vm527, %v172, 0.0
    %1000 = vadd.xlane.f32.xlu0 %v999
    %v1001 = vpop.xlane.xlu0 %1000
    %v1002 = vsel %vm527, %v173, 0.0
    %1003 = vadd.xlane.f32.xlu0 %v1002
    %v1004 = vpop.xlane.xlu0 %1003
    %v1005 = vsel %vm527, %v174, 0.0
    %1006 = vadd.xlane.f32.xlu0 %v1005
    %v1007 = vpop.xlane.xlu0 %1006
    %v1008 = vsel %vm527, %v175, 0.0
    %1009 = vadd.xlane.f32.xlu0 %v1008
    %v1010 = vpop.xlane.xlu0 %1009
    %v1011 = vsel %vm527, %v176, 0.0
    %1012 = vadd.xlane.f32.xlu0 %v1011
    %v1013 = vpop.xlane.xlu0 %1012
    %v1014 = vsel %vm527, %v177, 0.0
    %1015 = vadd.xlane.f32.xlu0 %v1014
    %v1016 = vpop.xlane.xlu0 %1015
    %v1017 = vsel %vm527, %v178, 0.0
    %1018 = vadd.xlane.f32.xlu0 %v1017
    %v1019 = vpop.xlane.xlu0 %1018
    %v1020 = vsel %vm527, %v179, 0.0
    %1021 = vadd.xlane.f32.xlu0 %v1020
    %v1022 = vpop.xlane.xlu0 %1021
    %v1023 = vsel %vm527, %v180, 0.0
    %1024 = vadd.xlane.f32.xlu0 %v1023
    %v1025 = vpop.xlane.xlu0 %1024
    %v1026 = vsel %vm527, %v181, 0.0
    %1027 = vadd.xlane.f32.xlu0 %v1026
    %v1028 = vpop.xlane.xlu0 %1027
    %v1029 = vsel %vm527, %v182, 0.0
    %1030 = vadd.xlane.f32.xlu0 %v1029
    %v1031 = vpop.xlane.xlu0 %1030
    %v1032 = vsel %vm527, %v183, 0.0
    %1033 = vadd.xlane.f32.xlu0 %v1032
    %v1034 = vpop.xlane.xlu0 %1033
    %v1035 = vsel %vm527, %v184, 0.0
    %1036 = vadd.xlane.f32.xlu0 %v1035
    %v1037 = vpop.xlane.xlu0 %1036
    %v1038 = vsel %vm527, %v185, 0.0
    %1039 = vadd.xlane.f32.xlu0 %v1038
    %v1040 = vpop.xlane.xlu0 %1039
    %v1041 = vsel %vm527, %v186, 0.0
    %1042 = vadd.xlane.f32.xlu0 %v1041
    %v1043 = vpop.xlane.xlu0 %1042
    %v1044 = vsel %vm527, %v187, 0.0
    %1045 = vadd.xlane.f32.xlu0 %v1044
    %v1046 = vpop.xlane.xlu0 %1045
    %v1047 = vsel %vm527, %v188, 0.0
    %1048 = vadd.xlane.f32.xlu0 %v1047
    %v1049 = vpop.xlane.xlu0 %1048
    %v1050 = vsel %vm527, %v189, 0.0
    %1051 = vadd.xlane.f32.xlu0 %v1050
    %v1052 = vpop.xlane.xlu0 %1051
    %v1053 = vsel %vm527, %v190, 0.0
    %1054 = vadd.xlane.f32.xlu0 %v1053
    %v1055 = vpop.xlane.xlu0 %1054
    %v1056 = vsel %vm527, %v191, 0.0
    %1057 = vadd.xlane.f32.xlu0 %v1056
    %v1058 = vpop.xlane.xlu0 %1057
    %v1059 = vsel %vm527, %v192, 0.0
    %1060 = vadd.xlane.f32.xlu0 %v1059
    %v1061 = vpop.xlane.xlu0 %1060
    %v1062 = vsel %vm527, %v193, 0.0
    %1063 = vadd.xlane.f32.xlu0 %v1062
    %v1064 = vpop.xlane.xlu0 %1063
    %v1065 = vsel %vm527, %v194, 0.0
    %1066 = vadd.xlane.f32.xlu0 %v1065
    %v1067 = vpop.xlane.xlu0 %1066
    %v1068 = vsel %vm527, %v195, 0.0
    %1069 = vadd.xlane.f32.xlu0 %v1068
    %v1070 = vpop.xlane.xlu0 %1069
    %v1071 = vsel %vm527, %v196, 0.0
    %1072 = vadd.xlane.f32.xlu0 %v1071
    %v1073 = vpop.xlane.xlu0 %1072
    %v1074 = vsel %vm527, %v197, 0.0
    %1075 = vadd.xlane.f32.xlu0 %v1074
    %v1076 = vpop.xlane.xlu0 %1075
    %v1077 = vsel %vm527, %v198, 0.0
    %1078 = vadd.xlane.f32.xlu0 %v1077
    %v1079 = vpop.xlane.xlu0 %1078
    %v1080 = vsel %vm527, %v199, 0.0
    %1081 = vadd.xlane.f32.xlu0 %v1080
    %v1082 = vpop.xlane.xlu0 %1081
    %v1083 = vsel %vm527, %v200, 0.0
    %1084 = vadd.xlane.f32.xlu0 %v1083
    %v1085 = vpop.xlane.xlu0 %1084
    %v1086 = vsel %vm527, %v201, 0.0
    %1087 = vadd.xlane.f32.xlu0 %v1086
    %v1088 = vpop.xlane.xlu0 %1087
    %v1089 = vsel %vm527, %v202, 0.0
    %1090 = vadd.xlane.f32.xlu0 %v1089
    %v1091 = vpop.xlane.xlu0 %1090
    %v1092 = vsel %vm527, %v203, 0.0
    %1093 = vadd.xlane.f32.xlu0 %v1092
    %v1094 = vpop.xlane.xlu0 %1093
    %v1095 = vsel %vm527, %v204, 0.0
    %1096 = vadd.xlane.f32.xlu0 %v1095
    %v1097 = vpop.xlane.xlu0 %1096
    %v1098 = vsel %vm527, %v205, 0.0
    %1099 = vadd.xlane.f32.xlu0 %v1098
    %v1100 = vpop.xlane.xlu0 %1099
    %v1101 = vsel %vm527, %v206, 0.0
    %1102 = vadd.xlane.f32.xlu0 %v1101
    %v1103 = vpop.xlane.xlu0 %1102
    %v1104 = vsel %vm527, %v207, 0.0
    %1105 = vadd.xlane.f32.xlu0 %v1104
    %v1106 = vpop.xlane.xlu0 %1105
    %v1107 = vsel %vm527, %v208, 0.0
    %1108 = vadd.xlane.f32.xlu0 %v1107
    %v1109 = vpop.xlane.xlu0 %1108
    %v1110 = vsel %vm527, %v209, 0.0
    %1111 = vadd.xlane.f32.xlu0 %v1110
    %v1112 = vpop.xlane.xlu0 %1111
    %v1113 = vsel %vm527, %v210, 0.0
    %1114 = vadd.xlane.f32.xlu0 %v1113
    %v1115 = vpop.xlane.xlu0 %1114
    %v1116 = vsel %vm527, %v211, 0.0
    %1117 = vadd.xlane.f32.xlu0 %v1116
    %v1118 = vpop.xlane.xlu0 %1117
    %v1119 = vsel %vm527, %v212, 0.0
    %1120 = vadd.xlane.f32.xlu0 %v1119
    %v1121 = vpop.xlane.xlu0 %1120
    %v1122 = vsel %vm527, %v213, 0.0
    %1123 = vadd.xlane.f32.xlu0 %v1122
    %v1124 = vpop.xlane.xlu0 %1123
    %v1125 = vsel %vm527, %v214, 0.0
    %1126 = vadd.xlane.f32.xlu0 %v1125
    %v1127 = vpop.xlane.xlu0 %1126
    %v1128 = vsel %vm527, %v215, 0.0
    %1129 = vadd.xlane.f32.xlu0 %v1128
    %v1130 = vpop.xlane.xlu0 %1129
    %v1131 = vsel %vm527, %v216, 0.0
    %1132 = vadd.xlane.f32.xlu0 %v1131
    %v1133 = vpop.xlane.xlu0 %1132
    %v1134 = vsel %vm527, %v217, 0.0
    %1135 = vadd.xlane.f32.xlu0 %v1134
    %v1136 = vpop.xlane.xlu0 %1135
    %v1137 = vsel %vm527, %v218, 0.0
    %1138 = vadd.xlane.f32.xlu0 %v1137
    %v1139 = vpop.xlane.xlu0 %1138
    %v1140 = vsel %vm527, %v219, 0.0
    %1141 = vadd.xlane.f32.xlu0 %v1140
    %v1142 = vpop.xlane.xlu0 %1141
    %v1143 = vsel %vm527, %v220, 0.0
    %1144 = vadd.xlane.f32.xlu0 %v1143
    %v1145 = vpop.xlane.xlu0 %1144
    %v1146 = vsel %vm527, %v221, 0.0
    %1147 = vadd.xlane.f32.xlu0 %v1146
    %v1148 = vpop.xlane.xlu0 %1147
    %v1149 = vsel %vm527, %v222, 0.0
    %1150 = vadd.xlane.f32.xlu0 %v1149
    %v1151 = vpop.xlane.xlu0 %1150
    %v1152 = vsel %vm527, %v223, 0.0
    %1153 = vadd.xlane.f32.xlu0 %v1152
    %v1154 = vpop.xlane.xlu0 %1153
    %v1155 = vsel %vm527, %v224, 0.0
    %1156 = vadd.xlane.f32.xlu0 %v1155
    %v1157 = vpop.xlane.xlu0 %1156
    %v1158 = vsel %vm527, %v225, 0.0
    %1159 = vadd.xlane.f32.xlu0 %v1158
    %v1160 = vpop.xlane.xlu0 %1159
    %v1161 = vsel %vm527, %v226, 0.0
    %1162 = vadd.xlane.f32.xlu0 %v1161
    %v1163 = vpop.xlane.xlu0 %1162
    %v1164 = vsel %vm527, %v227, 0.0
    %1165 = vadd.xlane.f32.xlu0 %v1164
    %v1166 = vpop.xlane.xlu0 %1165
    %v1167 = vsel %vm527, %v228, 0.0
    %1168 = vadd.xlane.f32.xlu0 %v1167
    %v1169 = vpop.xlane.xlu0 %1168
    %v1170 = vsel %vm527, %v229, 0.0
    %1171 = vadd.xlane.f32.xlu0 %v1170
    %v1172 = vpop.xlane.xlu0 %1171
    %v1173 = vsel %vm527, %v230, 0.0
    %1174 = vadd.xlane.f32.xlu0 %v1173
    %v1175 = vpop.xlane.xlu0 %1174
    %v1176 = vsel %vm527, %v231, 0.0
    %1177 = vadd.xlane.f32.xlu0 %v1176
    %v1178 = vpop.xlane.xlu0 %1177
    %v1179 = vsel %vm527, %v232, 0.0
    %1180 = vadd.xlane.f32.xlu0 %v1179
    %v1181 = vpop.xlane.xlu0 %1180
    %v1182 = vsel %vm527, %v233, 0.0
    %1183 = vadd.xlane.f32.xlu0 %v1182
    %v1184 = vpop.xlane.xlu0 %1183
    %v1185 = vsel %vm527, %v234, 0.0
    %1186 = vadd.xlane.f32.xlu0 %v1185
    %v1187 = vpop.xlane.xlu0 %1186
    %v1188 = vsel %vm527, %v235, 0.0
    %1189 = vadd.xlane.f32.xlu0 %v1188
    %v1190 = vpop.xlane.xlu0 %1189
    %v1191 = vsel %vm527, %v236, 0.0
    %1192 = vadd.xlane.f32.xlu0 %v1191
    %v1193 = vpop.xlane.xlu0 %1192
    %v1194 = vsel %vm527, %v237, 0.0
    %1195 = vadd.xlane.f32.xlu0 %v1194
    %v1196 = vpop.xlane.xlu0 %1195
    %v1197 = vsel %vm527, %v238, 0.0
    %1198 = vadd.xlane.f32.xlu0 %v1197
    %v1199 = vpop.xlane.xlu0 %1198
    %v1200 = vsel %vm527, %v239, 0.0
    %1201 = vadd.xlane.f32.xlu0 %v1200
    %v1202 = vpop.xlane.xlu0 %1201
    %v1203 = vsel %vm527, %v240, 0.0
    %1204 = vadd.xlane.f32.xlu0 %v1203
    %v1205 = vpop.xlane.xlu0 %1204
    %v1206 = vsel %vm527, %v241, 0.0
    %1207 = vadd.xlane.f32.xlu0 %v1206
    %v1208 = vpop.xlane.xlu0 %1207
    %v1209 = vsel %vm527, %v242, 0.0
    %1210 = vadd.xlane.f32.xlu0 %v1209
    %v1211 = vpop.xlane.xlu0 %1210
    %v1212 = vsel %vm527, %v243, 0.0
    %1213 = vadd.xlane.f32.xlu0 %v1212
    %v1214 = vpop.xlane.xlu0 %1213
    %v1215 = vsel %vm527, %v244, 0.0
    %1216 = vadd.xlane.f32.xlu0 %v1215
    %v1217 = vpop.xlane.xlu0 %1216
    %v1218 = vsel %vm527, %v245, 0.0
    %1219 = vadd.xlane.f32.xlu0 %v1218
    %v1220 = vpop.xlane.xlu0 %1219
    %v1221 = vsel %vm527, %v246, 0.0
    %1222 = vadd.xlane.f32.xlu0 %v1221
    %v1223 = vpop.xlane.xlu0 %1222
    %v1224 = vsel %vm527, %v247, 0.0
    %1225 = vadd.xlane.f32.xlu0 %v1224
    %v1226 = vpop.xlane.xlu0 %1225
    %v1227 = vsel %vm527, %v248, 0.0
    %1228 = vadd.xlane.f32.xlu0 %v1227
    %v1229 = vpop.xlane.xlu0 %1228
    %v1230 = vsel %vm527, %v249, 0.0
    %1231 = vadd.xlane.f32.xlu0 %v1230
    %v1232 = vpop.xlane.xlu0 %1231
    %v1233 = vsel %vm527, %v250, 0.0
    %1234 = vadd.xlane.f32.xlu0 %v1233
    %v1235 = vpop.xlane.xlu0 %1234
    %v1236 = vsel %vm527, %v251, 0.0
    %1237 = vadd.xlane.f32.xlu0 %v1236
    %v1238 = vpop.xlane.xlu0 %1237
    %v1239 = vsel %vm527, %v252, 0.0
    %1240 = vadd.xlane.f32.xlu0 %v1239
    %v1241 = vpop.xlane.xlu0 %1240
    %v1242 = vsel %vm527, %v253, 0.0
    %1243 = vadd.xlane.f32.xlu0 %v1242
    %v1244 = vpop.xlane.xlu0 %1243
    %v1245 = vsel %vm527, %v254, 0.0
    %1246 = vadd.xlane.f32.xlu0 %v1245
    %v1247 = vpop.xlane.xlu0 %1246
    %v1248 = vsel %vm527, %v255, 0.0
    %1249 = vadd.xlane.f32.xlu0 %v1248
    %v1250 = vpop.xlane.xlu0 %1249
    %v1251 = vsel %vm527, %v256, 0.0
    %1252 = vadd.xlane.f32.xlu0 %v1251
    %v1253 = vpop.xlane.xlu0 %1252
    %v1254 = vsel %vm527, %v257, 0.0
    %1255 = vadd.xlane.f32.xlu0 %v1254
    %v1256 = vpop.xlane.xlu0 %1255
    %v1257 = vsel %vm527, %v258, 0.0
    %1258 = vadd.xlane.f32.xlu0 %v1257
    %v1259 = vpop.xlane.xlu0 %1258
    %v1260 = vsel %vm527, %v259, 0.0
    %1261 = vadd.xlane.f32.xlu0 %v1260
    %v1262 = vpop.xlane.xlu0 %1261
    %v1263 = vsel %vm527, %v260, 0.0
    %1264 = vadd.xlane.f32.xlu0 %v1263
    %v1265 = vpop.xlane.xlu0 %1264
    %v1266 = vsel %vm527, %v261, 0.0
    %1267 = vadd.xlane.f32.xlu0 %v1266
    %v1268 = vpop.xlane.xlu0 %1267
    %v1269 = vsel %vm527, %v262, 0.0
    %1270 = vadd.xlane.f32.xlu0 %v1269
    %v1271 = vpop.xlane.xlu0 %1270
    %v1272 = vsel %vm527, %v263, 0.0
    %1273 = vadd.xlane.f32.xlu0 %v1272
    %v1274 = vpop.xlane.xlu0 %1273
    %v1275 = vsel %vm527, %v264, 0.0
    %1276 = vadd.xlane.f32.xlu0 %v1275
    %v1277 = vpop.xlane.xlu0 %1276
    %v1278 = vsel %vm527, %v265, 0.0
    %1279 = vadd.xlane.f32.xlu0 %v1278
    %v1280 = vpop.xlane.xlu0 %1279
    %v1281 = vsel %vm527, %v266, 0.0
    %1282 = vadd.xlane.f32.xlu0 %v1281
    %v1283 = vpop.xlane.xlu0 %1282
    %v1284 = vsel %vm527, %v267, 0.0
    %1285 = vadd.xlane.f32.xlu0 %v1284
    %v1286 = vpop.xlane.xlu0 %1285
    %v1287 = vsel %vm527, %v268, 0.0
    %1288 = vadd.xlane.f32.xlu0 %v1287
    %v1289 = vpop.xlane.xlu0 %1288
    %v1290 = vsel %vm527, %v269, 0.0
    %1291 = vadd.xlane.f32.xlu0 %v1290
    %v1292 = vpop.xlane.xlu0 %1291
    %v1293 = vsel %vm527, %v270, 0.0
    %1294 = vadd.xlane.f32.xlu0 %v1293
    %v1295 = vpop.xlane.xlu0 %1294
    %v1296 = vsel %vm527, %v271, 0.0
    %1297 = vadd.xlane.f32.xlu0 %v1296
    %v1298 = vpop.xlane.xlu0 %1297
    %v1299 = vsel %vm527, %v272, 0.0
    %1300 = vadd.xlane.f32.xlu0 %v1299
    %v1301 = vpop.xlane.xlu0 %1300
    %v1302 = vsel %vm527, %v273, 0.0
    %1303 = vadd.xlane.f32.xlu0 %v1302
    %v1304 = vpop.xlane.xlu0 %1303
    %v1305 = vsel %vm527, %v274, 0.0
    %1306 = vadd.xlane.f32.xlu0 %v1305
    %v1307 = vpop.xlane.xlu0 %1306
    %v1308 = vsel %vm527, %v275, 0.0
    %1309 = vadd.xlane.f32.xlu0 %v1308
    %v1310 = vpop.xlane.xlu0 %1309
    %v1311 = vsel %vm527, %v276, 0.0
    %1312 = vadd.xlane.f32.xlu0 %v1311
    %v1313 = vpop.xlane.xlu0 %1312
    %v1314 = vsel %vm527, %v277, 0.0
    %1315 = vadd.xlane.f32.xlu0 %v1314
    %v1316 = vpop.xlane.xlu0 %1315
    %v1317 = vsel %vm527, %v278, 0.0
    %1318 = vadd.xlane.f32.xlu0 %v1317
    %v1319 = vpop.xlane.xlu0 %1318
    %v1320 = vsel %vm527, %v279, 0.0
    %1321 = vadd.xlane.f32.xlu0 %v1320
    %v1322 = vpop.xlane.xlu0 %1321
    %v1323 = vsel %vm527, %v280, 0.0
    %1324 = vadd.xlane.f32.xlu0 %v1323
    %v1325 = vpop.xlane.xlu0 %1324
    %v1326 = vsel %vm527, %v281, 0.0
    %1327 = vadd.xlane.f32.xlu0 %v1326
    %v1328 = vpop.xlane.xlu0 %1327
    %v1329 = vsel %vm527, %v282, 0.0
    %1330 = vadd.xlane.f32.xlu0 %v1329
    %v1331 = vpop.xlane.xlu0 %1330
    %v1332 = vsel %vm527, %v283, 0.0
    %1333 = vadd.xlane.f32.xlu0 %v1332
    %v1334 = vpop.xlane.xlu0 %1333
    %v1335 = vsel %vm527, %v284, 0.0
    %1336 = vadd.xlane.f32.xlu0 %v1335
    %v1337 = vpop.xlane.xlu0 %1336
    %v1338 = vsel %vm527, %v285, 0.0
    %1339 = vadd.xlane.f32.xlu0 %v1338
    %v1340 = vpop.xlane.xlu0 %1339
    %v1341 = vsel %vm527, %v286, 0.0
    %1342 = vadd.xlane.f32.xlu0 %v1341
    %v1343 = vpop.xlane.xlu0 %1342
    %v1344 = vsel %vm527, %v287, 0.0
    %1345 = vadd.xlane.f32.xlu0 %v1344
    %v1346 = vpop.xlane.xlu0 %1345
    %v1347 = vsel %vm527, %v288, 0.0
    %1348 = vadd.xlane.f32.xlu0 %v1347
    %v1349 = vpop.xlane.xlu0 %1348
    %v1350 = vsel %vm527, %v289, 0.0
    %1351 = vadd.xlane.f32.xlu0 %v1350
    %v1352 = vpop.xlane.xlu0 %1351
    %v1353 = vsel %vm527, %v290, 0.0
    %1354 = vadd.xlane.f32.xlu0 %v1353
    %v1355 = vpop.xlane.xlu0 %1354
    %v1356 = vsel %vm527, %v291, 0.0
    %1357 = vadd.xlane.f32.xlu0 %v1356
    %v1358 = vpop.xlane.xlu0 %1357
    %v1359 = vsel %vm527, %v292, 0.0
    %1360 = vadd.xlane.f32.xlu0 %v1359
    %v1361 = vpop.xlane.xlu0 %1360
    %v1362 = vsel %vm527, %v293, 0.0
    %1363 = vadd.xlane.f32.xlu0 %v1362
    %v1364 = vpop.xlane.xlu0 %1363
    %v1365 = vsel %vm527, %v294, 0.0
    %1366 = vadd.xlane.f32.xlu0 %v1365
    %v1367 = vpop.xlane.xlu0 %1366
    %v1368 = vsel %vm527, %v295, 0.0
    %1369 = vadd.xlane.f32.xlu0 %v1368
    %v1370 = vpop.xlane.xlu0 %1369
    %v1371 = vsel %vm527, %v296, 0.0
    %1372 = vadd.xlane.f32.xlu0 %v1371
    %v1373 = vpop.xlane.xlu0 %1372
    %v1374 = vsel %vm527, %v297, 0.0
    %1375 = vadd.xlane.f32.xlu0 %v1374
    %v1376 = vpop.xlane.xlu0 %1375
    %v1377 = vsel %vm527, %v298, 0.0
    %1378 = vadd.xlane.f32.xlu0 %v1377
    %v1379 = vpop.xlane.xlu0 %1378
    %v1380 = vsel %vm527, %v299, 0.0
    %1381 = vadd.xlane.f32.xlu0 %v1380
    %v1382 = vpop.xlane.xlu0 %1381
    %v1383 = vsel %vm527, %v300, 0.0
    %1384 = vadd.xlane.f32.xlu0 %v1383
    %v1385 = vpop.xlane.xlu0 %1384
    %v1386 = vsel %vm527, %v301, 0.0
    %1387 = vadd.xlane.f32.xlu0 %v1386
    %v1388 = vpop.xlane.xlu0 %1387
    %v1389 = vsel %vm527, %v302, 0.0
    %1390 = vadd.xlane.f32.xlu0 %v1389
    %v1391 = vpop.xlane.xlu0 %1390
    %v1392 = vsel %vm527, %v303, 0.0
    %1393 = vadd.xlane.f32.xlu0 %v1392
    %v1394 = vpop.xlane.xlu0 %1393
    %v1395 = vsel %vm527, %v304, 0.0
    %1396 = vadd.xlane.f32.xlu0 %v1395
    %v1397 = vpop.xlane.xlu0 %1396
    %v1398 = vsel %vm527, %v305, 0.0
    %1399 = vadd.xlane.f32.xlu0 %v1398
    %v1400 = vpop.xlane.xlu0 %1399
    %v1401 = vsel %vm527, %v306, 0.0
    %1402 = vadd.xlane.f32.xlu0 %v1401
    %v1403 = vpop.xlane.xlu0 %1402
    %v1404 = vsel %vm527, %v307, 0.0
    %1405 = vadd.xlane.f32.xlu0 %v1404
    %v1406 = vpop.xlane.xlu0 %1405
    %v1407 = vsel %vm527, %v308, 0.0
    %1408 = vadd.xlane.f32.xlu0 %v1407
    %v1409 = vpop.xlane.xlu0 %1408
    %v1410 = vsel %vm527, %v309, 0.0
    %1411 = vadd.xlane.f32.xlu0 %v1410
    %v1412 = vpop.xlane.xlu0 %1411
    %v1413 = vsel %vm527, %v310, 0.0
    %1414 = vadd.xlane.f32.xlu0 %v1413
    %v1415 = vpop.xlane.xlu0 %1414
    %v1416 = vsel %vm527, %v311, 0.0
    %1417 = vadd.xlane.f32.xlu0 %v1416
    %v1418 = vpop.xlane.xlu0 %1417
    %v1419 = vsel %vm527, %v312, 0.0
    %1420 = vadd.xlane.f32.xlu0 %v1419
    %v1421 = vpop.xlane.xlu0 %1420
    %v1422 = vsel %vm527, %v313, 0.0
    %1423 = vadd.xlane.f32.xlu0 %v1422
    %v1424 = vpop.xlane.xlu0 %1423
    %v1425 = vsel %vm527, %v314, 0.0
    %1426 = vadd.xlane.f32.xlu0 %v1425
    %v1427 = vpop.xlane.xlu0 %1426
    %v1428 = vsel %vm527, %v315, 0.0
    %1429 = vadd.xlane.f32.xlu0 %v1428
    %v1430 = vpop.xlane.xlu0 %1429
    %v1431 = vsel %vm527, %v316, 0.0
    %1432 = vadd.xlane.f32.xlu0 %v1431
    %v1433 = vpop.xlane.xlu0 %1432
    %v1434 = vsel %vm527, %v317, 0.0
    %1435 = vadd.xlane.f32.xlu0 %v1434
    %v1436 = vpop.xlane.xlu0 %1435
    %v1437 = vsel %vm527, %v318, 0.0
    %1438 = vadd.xlane.f32.xlu0 %v1437
    %v1439 = vpop.xlane.xlu0 %1438
    %v1440 = vsel %vm527, %v319, 0.0
    %1441 = vadd.xlane.f32.xlu0 %v1440
    %v1442 = vpop.xlane.xlu0 %1441
    %v1443 = vsel %vm527, %v320, 0.0
    %1444 = vadd.xlane.f32.xlu0 %v1443
    %v1445 = vpop.xlane.xlu0 %1444
    %v1446 = vsel %vm527, %v321, 0.0
    %1447 = vadd.xlane.f32.xlu0 %v1446
    %v1448 = vpop.xlane.xlu0 %1447
    %v1449 = vsel %vm527, %v322, 0.0
    %1450 = vadd.xlane.f32.xlu0 %v1449
    %v1451 = vpop.xlane.xlu0 %1450
    %v1452 = vsel %vm527, %v323, 0.0
    %1453 = vadd.xlane.f32.xlu0 %v1452
    %v1454 = vpop.xlane.xlu0 %1453
    %v1455 = vsel %vm527, %v324, 0.0
    %1456 = vadd.xlane.f32.xlu0 %v1455
    %v1457 = vpop.xlane.xlu0 %1456
    %v1458 = vsel %vm527, %v325, 0.0
    %1459 = vadd.xlane.f32.xlu0 %v1458
    %v1460 = vpop.xlane.xlu0 %1459
    %v1461 = vsel %vm527, %v326, 0.0
    %1462 = vadd.xlane.f32.xlu0 %v1461
    %v1463 = vpop.xlane.xlu0 %1462
    %v1464 = vsel %vm527, %v327, 0.0
    %1465 = vadd.xlane.f32.xlu0 %v1464
    %v1466 = vpop.xlane.xlu0 %1465
    %v1467 = vsel %vm527, %v328, 0.0
    %1468 = vadd.xlane.f32.xlu0 %v1467
    %v1469 = vpop.xlane.xlu0 %1468
    %v1470 = vsel %vm527, %v329, 0.0
    %1471 = vadd.xlane.f32.xlu0 %v1470
    %v1472 = vpop.xlane.xlu0 %1471
    %v1473 = vsel %vm527, %v330, 0.0
    %1474 = vadd.xlane.f32.xlu0 %v1473
    %v1475 = vpop.xlane.xlu0 %1474
    %v1476 = vsel %vm527, %v331, 0.0
    %1477 = vadd.xlane.f32.xlu0 %v1476
    %v1478 = vpop.xlane.xlu0 %1477
    %v1479 = vsel %vm527, %v332, 0.0
    %1480 = vadd.xlane.f32.xlu0 %v1479
    %v1481 = vpop.xlane.xlu0 %1480
    %v1482 = vsel %vm527, %v333, 0.0
    %1483 = vadd.xlane.f32.xlu0 %v1482
    %v1484 = vpop.xlane.xlu0 %1483
    %v1485 = vsel %vm527, %v334, 0.0
    %1486 = vadd.xlane.f32.xlu0 %v1485
    %v1487 = vpop.xlane.xlu0 %1486
    %v1488 = vsel %vm527, %v335, 0.0
    %1489 = vadd.xlane.f32.xlu0 %v1488
    %v1490 = vpop.xlane.xlu0 %1489
    %v1491 = vsel %vm527, %v336, 0.0
    %1492 = vadd.xlane.f32.xlu0 %v1491
    %v1493 = vpop.xlane.xlu0 %1492
    %v1494 = vsel %vm527, %v337, 0.0
    %1495 = vadd.xlane.f32.xlu0 %v1494
    %v1496 = vpop.xlane.xlu0 %1495
    %v1497 = vsel %vm527, %v338, 0.0
    %1498 = vadd.xlane.f32.xlu0 %v1497
    %v1499 = vpop.xlane.xlu0 %1498
    %v1500 = vsel %vm527, %v339, 0.0
    %1501 = vadd.xlane.f32.xlu0 %v1500
    %v1502 = vpop.xlane.xlu0 %1501
    %v1503 = vsel %vm527, %v340, 0.0
    %1504 = vadd.xlane.f32.xlu0 %v1503
    %v1505 = vpop.xlane.xlu0 %1504
    %v1506 = vsel %vm527, %v341, 0.0
    %1507 = vadd.xlane.f32.xlu0 %v1506
    %v1508 = vpop.xlane.xlu0 %1507
    %v1509 = vsel %vm527, %v342, 0.0
    %1510 = vadd.xlane.f32.xlu0 %v1509
    %v1511 = vpop.xlane.xlu0 %1510
    %v1512 = vsel %vm527, %v343, 0.0
    %1513 = vadd.xlane.f32.xlu0 %v1512
    %v1514 = vpop.xlane.xlu0 %1513
    %v1515 = vsel %vm527, %v344, 0.0
    %1516 = vadd.xlane.f32.xlu0 %v1515
    %v1517 = vpop.xlane.xlu0 %1516
    %v1518 = vsel %vm527, %v345, 0.0
    %1519 = vadd.xlane.f32.xlu0 %v1518
    %v1520 = vpop.xlane.xlu0 %1519
    %v1521 = vsel %vm527, %v346, 0.0
    %1522 = vadd.xlane.f32.xlu0 %v1521
    %v1523 = vpop.xlane.xlu0 %1522
    %v1524 = vsel %vm527, %v347, 0.0
    %1525 = vadd.xlane.f32.xlu0 %v1524
    %v1526 = vpop.xlane.xlu0 %1525
    %v1527 = vsel %vm527, %v348, 0.0
    %1528 = vadd.xlane.f32.xlu0 %v1527
    %v1529 = vpop.xlane.xlu0 %1528
    %v1530 = vsel %vm527, %v349, 0.0
    %1531 = vadd.xlane.f32.xlu0 %v1530
    %v1532 = vpop.xlane.xlu0 %1531
    %v1533 = vsel %vm527, %v350, 0.0
    %1534 = vadd.xlane.f32.xlu0 %v1533
    %v1535 = vpop.xlane.xlu0 %1534
    %v1536 = vsel %vm527, %v351, 0.0
    %1537 = vadd.xlane.f32.xlu0 %v1536
    %v1538 = vpop.xlane.xlu0 %1537
    %v1539 = vsel %vm527, %v352, 0.0
    %1540 = vadd.xlane.f32.xlu0 %v1539
    %v1541 = vpop.xlane.xlu0 %1540
    %v1542 = vsel %vm527, %v353, 0.0
    %1543 = vadd.xlane.f32.xlu0 %v1542
    %v1544 = vpop.xlane.xlu0 %1543
    %v1545 = vsel %vm527, %v354, 0.0
    %1546 = vadd.xlane.f32.xlu0 %v1545
    %v1547 = vpop.xlane.xlu0 %1546
    %v1548 = vsel %vm527, %v355, 0.0
    %1549 = vadd.xlane.f32.xlu0 %v1548
    %v1550 = vpop.xlane.xlu0 %1549
    %v1551 = vsel %vm527, %v356, 0.0
    %1552 = vadd.xlane.f32.xlu0 %v1551
    %v1553 = vpop.xlane.xlu0 %1552
    %v1554 = vsel %vm527, %v357, 0.0
    %1555 = vadd.xlane.f32.xlu0 %v1554
    %v1556 = vpop.xlane.xlu0 %1555
    %v1557 = vsel %vm527, %v358, 0.0
    %1558 = vadd.xlane.f32.xlu0 %v1557
    %v1559 = vpop.xlane.xlu0 %1558
    %v1560 = vsel %vm527, %v359, 0.0
    %1561 = vadd.xlane.f32.xlu0 %v1560
    %v1562 = vpop.xlane.xlu0 %1561
    %v1563 = vsel %vm527, %v360, 0.0
    %1564 = vadd.xlane.f32.xlu0 %v1563
    %v1565 = vpop.xlane.xlu0 %1564
    %v1566 = vsel %vm527, %v361, 0.0
    %1567 = vadd.xlane.f32.xlu0 %v1566
    %v1568 = vpop.xlane.xlu0 %1567
    %v1569 = vsel %vm527, %v362, 0.0
    %1570 = vadd.xlane.f32.xlu0 %v1569
    %v1571 = vpop.xlane.xlu0 %1570
    %v1572 = vsel %vm527, %v363, 0.0
    %1573 = vadd.xlane.f32.xlu0 %v1572
    %v1574 = vpop.xlane.xlu0 %1573
    %v1575 = vsel %vm527, %v364, 0.0
    %1576 = vadd.xlane.f32.xlu0 %v1575
    %v1577 = vpop.xlane.xlu0 %1576
    %v1578 = vsel %vm527, %v365, 0.0
    %1579 = vadd.xlane.f32.xlu0 %v1578
    %v1580 = vpop.xlane.xlu0 %1579
    %v1581 = vsel %vm527, %v366, 0.0
    %1582 = vadd.xlane.f32.xlu0 %v1581
    %v1583 = vpop.xlane.xlu0 %1582
    %v1584 = vsel %vm527, %v367, 0.0
    %1585 = vadd.xlane.f32.xlu0 %v1584
    %v1586 = vpop.xlane.xlu0 %1585
    %v1587 = vsel %vm527, %v368, 0.0
    %1588 = vadd.xlane.f32.xlu0 %v1587
    %v1589 = vpop.xlane.xlu0 %1588
    %v1590 = vsel %vm527, %v369, 0.0
    %1591 = vadd.xlane.f32.xlu0 %v1590
    %v1592 = vpop.xlane.xlu0 %1591
    %v1593 = vsel %vm527, %v370, 0.0
    %1594 = vadd.xlane.f32.xlu0 %v1593
    %v1595 = vpop.xlane.xlu0 %1594
    %v1596 = vsel %vm527, %v371, 0.0
    %1597 = vadd.xlane.f32.xlu0 %v1596
    %v1598 = vpop.xlane.xlu0 %1597
    %v1599 = vsel %vm527, %v372, 0.0
    %1600 = vadd.xlane.f32.xlu0 %v1599
    %v1601 = vpop.xlane.xlu0 %1600
    %v1602 = vsel %vm527, %v373, 0.0
    %1603 = vadd.xlane.f32.xlu0 %v1602
    %v1604 = vpop.xlane.xlu0 %1603
    %v1605 = vsel %vm527, %v374, 0.0
    %1606 = vadd.xlane.f32.xlu0 %v1605
    %v1607 = vpop.xlane.xlu0 %1606
    %v1608 = vsel %vm527, %v375, 0.0
    %1609 = vadd.xlane.f32.xlu0 %v1608
    %v1610 = vpop.xlane.xlu0 %1609
    %v1611 = vsel %vm527, %v376, 0.0
    %1612 = vadd.xlane.f32.xlu0 %v1611
    %v1613 = vpop.xlane.xlu0 %1612
    %v1614 = vsel %vm527, %v377, 0.0
    %1615 = vadd.xlane.f32.xlu0 %v1614
    %v1616 = vpop.xlane.xlu0 %1615
    %v1617 = vsel %vm527, %v378, 0.0
    %1618 = vadd.xlane.f32.xlu0 %v1617
    %v1619 = vpop.xlane.xlu0 %1618
    %v1620 = vsel %vm527, %v379, 0.0
    %1621 = vadd.xlane.f32.xlu0 %v1620
    %v1622 = vpop.xlane.xlu0 %1621
    %v1623 = vsel %vm527, %v380, 0.0
    %1624 = vadd.xlane.f32.xlu0 %v1623
    %v1625 = vpop.xlane.xlu0 %1624
    %v1626 = vsel %vm527, %v381, 0.0
    %1627 = vadd.xlane.f32.xlu0 %v1626
    %v1628 = vpop.xlane.xlu0 %1627
    %v1629 = vsel %vm527, %v382, 0.0
    %1630 = vadd.xlane.f32.xlu0 %v1629
    %v1631 = vpop.xlane.xlu0 %1630
    %v1632 = vsel %vm527, %v383, 0.0
    %1633 = vadd.xlane.f32.xlu0 %v1632
    %v1634 = vpop.xlane.xlu0 %1633
    %v1635 = vsel %vm527, %v384, 0.0
    %1636 = vadd.xlane.f32.xlu0 %v1635
    %v1637 = vpop.xlane.xlu0 %1636
    %v1638 = vsel %vm527, %v385, 0.0
    %1639 = vadd.xlane.f32.xlu0 %v1638
    %v1640 = vpop.xlane.xlu0 %1639
    %v1641 = vsel %vm527, %v386, 0.0
    %1642 = vadd.xlane.f32.xlu0 %v1641
    %v1643 = vpop.xlane.xlu0 %1642
    %v1644 = vsel %vm527, %v387, 0.0
    %1645 = vadd.xlane.f32.xlu0 %v1644
    %v1646 = vpop.xlane.xlu0 %1645
    %v1647 = vsel %vm527, %v388, 0.0
    %1648 = vadd.xlane.f32.xlu0 %v1647
    %v1649 = vpop.xlane.xlu0 %1648
    %v1650 = vsel %vm527, %v389, 0.0
    %1651 = vadd.xlane.f32.xlu0 %v1650
    %v1652 = vpop.xlane.xlu0 %1651
    %v1653 = vsel %vm527, %v390, 0.0
    %1654 = vadd.xlane.f32.xlu0 %v1653
    %v1655 = vpop.xlane.xlu0 %1654
    %v1656 = vsel %vm527, %v391, 0.0
    %1657 = vadd.xlane.f32.xlu0 %v1656
    %v1658 = vpop.xlane.xlu0 %1657
    %v1659 = vsel %vm527, %v392, 0.0
    %1660 = vadd.xlane.f32.xlu0 %v1659
    %v1661 = vpop.xlane.xlu0 %1660
    %v1662 = vsel %vm527, %v393, 0.0
    %1663 = vadd.xlane.f32.xlu0 %v1662
    %v1664 = vpop.xlane.xlu0 %1663
    %v1665 = vsel %vm527, %v394, 0.0
    %1666 = vadd.xlane.f32.xlu0 %v1665
    %v1667 = vpop.xlane.xlu0 %1666
    %v1668 = vsel %vm527, %v395, 0.0
    %1669 = vadd.xlane.f32.xlu0 %v1668
    %v1670 = vpop.xlane.xlu0 %1669
    %v1671 = vsel %vm527, %v396, 0.0
    %1672 = vadd.xlane.f32.xlu0 %v1671
    %v1673 = vpop.xlane.xlu0 %1672
    %v1674 = vsel %vm527, %v397, 0.0
    %1675 = vadd.xlane.f32.xlu0 %v1674
    %v1676 = vpop.xlane.xlu0 %1675
    %v1677 = vsel %vm527, %v398, 0.0
    %1678 = vadd.xlane.f32.xlu0 %v1677
    %v1679 = vpop.xlane.xlu0 %1678
    %v1680 = vsel %vm527, %v399, 0.0
    %1681 = vadd.xlane.f32.xlu0 %v1680
    %v1682 = vpop.xlane.xlu0 %1681
    %v1683 = vsel %vm527, %v400, 0.0
    %1684 = vadd.xlane.f32.xlu0 %v1683
    %v1685 = vpop.xlane.xlu0 %1684
    %v1686 = vsel %vm527, %v401, 0.0
    %1687 = vadd.xlane.f32.xlu0 %v1686
    %v1688 = vpop.xlane.xlu0 %1687
    %v1689 = vsel %vm527, %v402, 0.0
    %1690 = vadd.xlane.f32.xlu0 %v1689
    %v1691 = vpop.xlane.xlu0 %1690
    %v1692 = vsel %vm527, %v403, 0.0
    %1693 = vadd.xlane.f32.xlu0 %v1692
    %v1694 = vpop.xlane.xlu0 %1693
    %v1695 = vsel %vm527, %v404, 0.0
    %1696 = vadd.xlane.f32.xlu0 %v1695
    %v1697 = vpop.xlane.xlu0 %1696
    %v1698 = vsel %vm527, %v405, 0.0
    %1699 = vadd.xlane.f32.xlu0 %v1698
    %v1700 = vpop.xlane.xlu0 %1699
    %v1701 = vsel %vm527, %v406, 0.0
    %1702 = vadd.xlane.f32.xlu0 %v1701
    %v1703 = vpop.xlane.xlu0 %1702
    %v1704 = vsel %vm527, %v407, 0.0
    %1705 = vadd.xlane.f32.xlu0 %v1704
    %v1706 = vpop.xlane.xlu0 %1705
    %v1707 = vsel %vm527, %v408, 0.0
    %1708 = vadd.xlane.f32.xlu0 %v1707
    %v1709 = vpop.xlane.xlu0 %1708
    %v1710 = vsel %vm527, %v409, 0.0
    %1711 = vadd.xlane.f32.xlu0 %v1710
    %v1712 = vpop.xlane.xlu0 %1711
    %v1713 = vsel %vm527, %v410, 0.0
    %1714 = vadd.xlane.f32.xlu0 %v1713
    %v1715 = vpop.xlane.xlu0 %1714
    %v1716 = vsel %vm527, %v411, 0.0
    %1717 = vadd.xlane.f32.xlu0 %v1716
    %v1718 = vpop.xlane.xlu0 %1717
    %v1719 = vsel %vm527, %v412, 0.0
    %1720 = vadd.xlane.f32.xlu0 %v1719
    %v1721 = vpop.xlane.xlu0 %1720
    %v1722 = vsel %vm527, %v413, 0.0
    %1723 = vadd.xlane.f32.xlu0 %v1722
    %v1724 = vpop.xlane.xlu0 %1723
    %v1725 = vsel %vm527, %v414, 0.0
    %1726 = vadd.xlane.f32.xlu0 %v1725
    %v1727 = vpop.xlane.xlu0 %1726
    %v1728 = vsel %vm527, %v415, 0.0
    %1729 = vadd.xlane.f32.xlu0 %v1728
    %v1730 = vpop.xlane.xlu0 %1729
    %v1731 = vsel %vm527, %v416, 0.0
    %1732 = vadd.xlane.f32.xlu0 %v1731
    %v1733 = vpop.xlane.xlu0 %1732
    %v1734 = vsel %vm527, %v417, 0.0
    %1735 = vadd.xlane.f32.xlu0 %v1734
    %v1736 = vpop.xlane.xlu0 %1735
    %v1737 = vsel %vm527, %v418, 0.0
    %1738 = vadd.xlane.f32.xlu0 %v1737
    %v1739 = vpop.xlane.xlu0 %1738
    %v1740 = vsel %vm527, %v419, 0.0
    %1741 = vadd.xlane.f32.xlu0 %v1740
    %v1742 = vpop.xlane.xlu0 %1741
    %v1743 = vsel %vm527, %v420, 0.0
    %1744 = vadd.xlane.f32.xlu0 %v1743
    %v1745 = vpop.xlane.xlu0 %1744
    %v1746 = vsel %vm527, %v421, 0.0
    %1747 = vadd.xlane.f32.xlu0 %v1746
    %v1748 = vpop.xlane.xlu0 %1747
    %v1749 = vsel %vm527, %v422, 0.0
    %1750 = vadd.xlane.f32.xlu0 %v1749
    %v1751 = vpop.xlane.xlu0 %1750
    %v1752 = vsel %vm527, %v423, 0.0
    %1753 = vadd.xlane.f32.xlu0 %v1752
    %v1754 = vpop.xlane.xlu0 %1753
    %v1755 = vsel %vm527, %v424, 0.0
    %1756 = vadd.xlane.f32.xlu0 %v1755
    %v1757 = vpop.xlane.xlu0 %1756
    %v1758 = vsel %vm527, %v425, 0.0
    %1759 = vadd.xlane.f32.xlu0 %v1758
    %v1760 = vpop.xlane.xlu0 %1759
    %v1761 = vsel %vm527, %v426, 0.0
    %1762 = vadd.xlane.f32.xlu0 %v1761
    %v1763 = vpop.xlane.xlu0 %1762
    %v1764 = vsel %vm527, %v427, 0.0
    %1765 = vadd.xlane.f32.xlu0 %v1764
    %v1766 = vpop.xlane.xlu0 %1765
    %v1767 = vsel %vm527, %v428, 0.0
    %1768 = vadd.xlane.f32.xlu0 %v1767
    %v1769 = vpop.xlane.xlu0 %1768
    %v1770 = vsel %vm527, %v429, 0.0
    %1771 = vadd.xlane.f32.xlu0 %v1770
    %v1772 = vpop.xlane.xlu0 %1771
    %v1773 = vsel %vm527, %v430, 0.0
    %1774 = vadd.xlane.f32.xlu0 %v1773
    %v1775 = vpop.xlane.xlu0 %1774
    %v1776 = vsel %vm527, %v431, 0.0
    %1777 = vadd.xlane.f32.xlu0 %v1776
    %v1778 = vpop.xlane.xlu0 %1777
    %v1779 = vsel %vm527, %v432, 0.0
    %1780 = vadd.xlane.f32.xlu0 %v1779
    %v1781 = vpop.xlane.xlu0 %1780
    %v1782 = vsel %vm527, %v433, 0.0
    %1783 = vadd.xlane.f32.xlu0 %v1782
    %v1784 = vpop.xlane.xlu0 %1783
    %v1785 = vsel %vm527, %v434, 0.0
    %1786 = vadd.xlane.f32.xlu0 %v1785
    %v1787 = vpop.xlane.xlu0 %1786
    %v1788 = vsel %vm527, %v435, 0.0
    %1789 = vadd.xlane.f32.xlu0 %v1788
    %v1790 = vpop.xlane.xlu0 %1789
    %v1791 = vsel %vm527, %v436, 0.0
    %1792 = vadd.xlane.f32.xlu0 %v1791
    %v1793 = vpop.xlane.xlu0 %1792
    %v1794 = vsel %vm527, %v437, 0.0
    %1795 = vadd.xlane.f32.xlu0 %v1794
    %v1796 = vpop.xlane.xlu0 %1795
    %v1797 = vsel %vm527, %v438, 0.0
    %1798 = vadd.xlane.f32.xlu0 %v1797
    %v1799 = vpop.xlane.xlu0 %1798
    %v1800 = vsel %vm527, %v439, 0.0
    %1801 = vadd.xlane.f32.xlu0 %v1800
    %v1802 = vpop.xlane.xlu0 %1801
    %v1803 = vsel %vm527, %v440, 0.0
    %1804 = vadd.xlane.f32.xlu0 %v1803
    %v1805 = vpop.xlane.xlu0 %1804
    %v1806 = vsel %vm527, %v441, 0.0
    %1807 = vadd.xlane.f32.xlu0 %v1806
    %v1808 = vpop.xlane.xlu0 %1807
    %v1809 = vsel %vm527, %v442, 0.0
    %1810 = vadd.xlane.f32.xlu0 %v1809
    %v1811 = vpop.xlane.xlu0 %1810
    %v1812 = vsel %vm527, %v443, 0.0
    %1813 = vadd.xlane.f32.xlu0 %v1812
    %v1814 = vpop.xlane.xlu0 %1813
    %v1815 = vsel %vm527, %v444, 0.0
    %1816 = vadd.xlane.f32.xlu0 %v1815
    %v1817 = vpop.xlane.xlu0 %1816
    %v1818 = vsel %vm527, %v445, 0.0
    %1819 = vadd.xlane.f32.xlu0 %v1818
    %v1820 = vpop.xlane.xlu0 %1819
    %v1821 = vsel %vm527, %v446, 0.0
    %1822 = vadd.xlane.f32.xlu0 %v1821
    %v1823 = vpop.xlane.xlu0 %1822
    %v1824 = vsel %vm527, %v447, 0.0
    %1825 = vadd.xlane.f32.xlu0 %v1824
    %v1826 = vpop.xlane.xlu0 %1825
    %v1827 = vsel %vm527, %v448, 0.0
    %1828 = vadd.xlane.f32.xlu0 %v1827
    %v1829 = vpop.xlane.xlu0 %1828
    %v1830 = vsel %vm527, %v449, 0.0
    %1831 = vadd.xlane.f32.xlu0 %v1830
    %v1832 = vpop.xlane.xlu0 %1831
    %v1833 = vsel %vm527, %v450, 0.0
    %1834 = vadd.xlane.f32.xlu0 %v1833
    %v1835 = vpop.xlane.xlu0 %1834
    %v1836 = vsel %vm527, %v451, 0.0
    %1837 = vadd.xlane.f32.xlu0 %v1836
    %v1838 = vpop.xlane.xlu0 %1837
    %v1839 = vsel %vm527, %v452, 0.0
    %1840 = vadd.xlane.f32.xlu0 %v1839
    %v1841 = vpop.xlane.xlu0 %1840
    %v1842 = vsel %vm527, %v453, 0.0
    %1843 = vadd.xlane.f32.xlu0 %v1842
    %v1844 = vpop.xlane.xlu0 %1843
    %v1845 = vsel %vm527, %v454, 0.0
    %1846 = vadd.xlane.f32.xlu0 %v1845
    %v1847 = vpop.xlane.xlu0 %1846
    %v1848 = vsel %vm527, %v455, 0.0
    %1849 = vadd.xlane.f32.xlu0 %v1848
    %v1850 = vpop.xlane.xlu0 %1849
    %v1851 = vsel %vm527, %v456, 0.0
    %1852 = vadd.xlane.f32.xlu0 %v1851
    %v1853 = vpop.xlane.xlu0 %1852
    %v1854 = vsel %vm527, %v457, 0.0
    %1855 = vadd.xlane.f32.xlu0 %v1854
    %v1856 = vpop.xlane.xlu0 %1855
    %v1857 = vsel %vm527, %v458, 0.0
    %1858 = vadd.xlane.f32.xlu0 %v1857
    %v1859 = vpop.xlane.xlu0 %1858
    %v1860 = vsel %vm527, %v459, 0.0
    %1861 = vadd.xlane.f32.xlu0 %v1860
    %v1862 = vpop.xlane.xlu0 %1861
    %v1863 = vsel %vm527, %v460, 0.0
    %1864 = vadd.xlane.f32.xlu0 %v1863
    %v1865 = vpop.xlane.xlu0 %1864
    %v1866 = vsel %vm527, %v461, 0.0
    %1867 = vadd.xlane.f32.xlu0 %v1866
    %v1868 = vpop.xlane.xlu0 %1867
    %v1869 = vsel %vm527, %v462, 0.0
    %1870 = vadd.xlane.f32.xlu0 %v1869
    %v1871 = vpop.xlane.xlu0 %1870
    %v1872 = vsel %vm527, %v463, 0.0
    %1873 = vadd.xlane.f32.xlu0 %v1872
    %v1874 = vpop.xlane.xlu0 %1873
    %v1875 = vsel %vm527, %v464, 0.0
    %1876 = vadd.xlane.f32.xlu0 %v1875
    %v1877 = vpop.xlane.xlu0 %1876
    %v1878 = vsel %vm527, %v465, 0.0
    %1879 = vadd.xlane.f32.xlu0 %v1878
    %v1880 = vpop.xlane.xlu0 %1879
    %v1881 = vsel %vm527, %v466, 0.0
    %1882 = vadd.xlane.f32.xlu0 %v1881
    %v1883 = vpop.xlane.xlu0 %1882
    %v1884 = vsel %vm527, %v467, 0.0
    %1885 = vadd.xlane.f32.xlu0 %v1884
    %v1886 = vpop.xlane.xlu0 %1885
    %v1887 = vsel %vm527, %v468, 0.0
    %1888 = vadd.xlane.f32.xlu0 %v1887
    %v1889 = vpop.xlane.xlu0 %1888
    %v1890 = vsel %vm527, %v469, 0.0
    %1891 = vadd.xlane.f32.xlu0 %v1890
    %v1892 = vpop.xlane.xlu0 %1891
    %v1893 = vsel %vm527, %v470, 0.0
    %1894 = vadd.xlane.f32.xlu0 %v1893
    %v1895 = vpop.xlane.xlu0 %1894
    %v1896 = vsel %vm527, %v471, 0.0
    %1897 = vadd.xlane.f32.xlu0 %v1896
    %v1898 = vpop.xlane.xlu0 %1897
    %v1899 = vsel %vm527, %v472, 0.0
    %1900 = vadd.xlane.f32.xlu0 %v1899
    %v1901 = vpop.xlane.xlu0 %1900
    %v1902 = vsel %vm527, %v473, 0.0
    %1903 = vadd.xlane.f32.xlu0 %v1902
    %v1904 = vpop.xlane.xlu0 %1903
    %v1905 = vsel %vm527, %v474, 0.0
    %1906 = vadd.xlane.f32.xlu0 %v1905
    %v1907 = vpop.xlane.xlu0 %1906
    %v1908 = vsel %vm527, %v475, 0.0
    %1909 = vadd.xlane.f32.xlu0 %v1908
    %v1910 = vpop.xlane.xlu0 %1909
    %v1911 = vsel %vm527, %v476, 0.0
    %1912 = vadd.xlane.f32.xlu0 %v1911
    %v1913 = vpop.xlane.xlu0 %1912
    %v1914 = vsel %vm527, %v477, 0.0
    %1915 = vadd.xlane.f32.xlu0 %v1914
    %v1916 = vpop.xlane.xlu0 %1915
    %v1917 = vsel %vm527, %v478, 0.0
    %1918 = vadd.xlane.f32.xlu0 %v1917
    %v1919 = vpop.xlane.xlu0 %1918
    %v1920 = vsel %vm527, %v479, 0.0
    %1921 = vadd.xlane.f32.xlu0 %v1920
    %v1922 = vpop.xlane.xlu0 %1921
    %v1923 = vsel %vm527, %v480, 0.0
    %1924 = vadd.xlane.f32.xlu0 %v1923
    %v1925 = vpop.xlane.xlu0 %1924
    %v1926 = vsel %vm527, %v481, 0.0
    %1927 = vadd.xlane.f32.xlu0 %v1926
    %v1928 = vpop.xlane.xlu0 %1927
    %v1929 = vsel %vm527, %v482, 0.0
    %1930 = vadd.xlane.f32.xlu0 %v1929
    %v1931 = vpop.xlane.xlu0 %1930
    %v1932 = vsel %vm527, %v483, 0.0
    %1933 = vadd.xlane.f32.xlu0 %v1932
    %v1934 = vpop.xlane.xlu0 %1933
    %v1935 = vsel %vm527, %v484, 0.0
    %1936 = vadd.xlane.f32.xlu0 %v1935
    %v1937 = vpop.xlane.xlu0 %1936
    %v1938 = vsel %vm527, %v485, 0.0
    %1939 = vadd.xlane.f32.xlu0 %v1938
    %v1940 = vpop.xlane.xlu0 %1939
    %v1941 = vsel %vm527, %v486, 0.0
    %1942 = vadd.xlane.f32.xlu0 %v1941
    %v1943 = vpop.xlane.xlu0 %1942
    %v1944 = vsel %vm527, %v487, 0.0
    %1945 = vadd.xlane.f32.xlu0 %v1944
    %v1946 = vpop.xlane.xlu0 %1945
    %v1947 = vsel %vm527, %v488, 0.0
    %1948 = vadd.xlane.f32.xlu0 %v1947
    %v1949 = vpop.xlane.xlu0 %1948
    %v1950 = vsel %vm527, %v489, 0.0
    %1951 = vadd.xlane.f32.xlu0 %v1950
    %v1952 = vpop.xlane.xlu0 %1951
    %v1953 = vsel %vm527, %v490, 0.0
    %1954 = vadd.xlane.f32.xlu0 %v1953
    %v1955 = vpop.xlane.xlu0 %1954
    %v1956 = vsel %vm527, %v491, 0.0
    %1957 = vadd.xlane.f32.xlu0 %v1956
    %v1958 = vpop.xlane.xlu0 %1957
    %v1959 = vsel %vm527, %v492, 0.0
    %1960 = vadd.xlane.f32.xlu0 %v1959
    %v1961 = vpop.xlane.xlu0 %1960
    %v1962 = vsel %vm527, %v493, 0.0
    %1963 = vadd.xlane.f32.xlu0 %v1962
    %v1964 = vpop.xlane.xlu0 %1963
    %v1965 = vsel %vm527, %v494, 0.0
    %1966 = vadd.xlane.f32.xlu0 %v1965
    %v1967 = vpop.xlane.xlu0 %1966
    %v1968 = vsel %vm527, %v495, 0.0
    %1969 = vadd.xlane.f32.xlu0 %v1968
    %v1970 = vpop.xlane.xlu0 %1969
    %v1971 = vsel %vm527, %v496, 0.0
    %1972 = vadd.xlane.f32.xlu0 %v1971
    %v1973 = vpop.xlane.xlu0 %1972
    %v1974 = vsel %vm527, %v497, 0.0
    %1975 = vadd.xlane.f32.xlu0 %v1974
    %v1976 = vpop.xlane.xlu0 %1975
    %v1977 = vsel %vm527, %v498, 0.0
    %1978 = vadd.xlane.f32.xlu0 %v1977
    %v1979 = vpop.xlane.xlu0 %1978
    %v1980 = vsel %vm527, %v499, 0.0
    %1981 = vadd.xlane.f32.xlu0 %v1980
    %v1982 = vpop.xlane.xlu0 %1981
    %v1983 = vsel %vm527, %v500, 0.0
    %1984 = vadd.xlane.f32.xlu0 %v1983
    %v1985 = vpop.xlane.xlu0 %1984
    %v1986 = vsel %vm527, %v501, 0.0
    %1987 = vadd.xlane.f32.xlu0 %v1986
    %v1988 = vpop.xlane.xlu0 %1987
    %v1989 = vsel %vm527, %v502, 0.0
    %1990 = vadd.xlane.f32.xlu0 %v1989
    %v1991 = vpop.xlane.xlu0 %1990
    %v1992 = vsel %vm527, %v503, 0.0
    %1993 = vadd.xlane.f32.xlu0 %v1992
    %v1994 = vpop.xlane.xlu0 %1993
    %v1995 = vsel %vm527, %v504, 0.0
    %1996 = vadd.xlane.f32.xlu0 %v1995
    %v1997 = vpop.xlane.xlu0 %1996
    %v1998 = vsel %vm527, %v505, 0.0
    %1999 = vadd.xlane.f32.xlu0 %v1998
    %v2000 = vpop.xlane.xlu0 %1999
    %v2001 = vsel %vm527, %v506, 0.0
    %2002 = vadd.xlane.f32.xlu0 %v2001
    %v2003 = vpop.xlane.xlu0 %2002
    %v2004 = vsel %vm527, %v507, 0.0
    %2005 = vadd.xlane.f32.xlu0 %v2004
    %v2006 = vpop.xlane.xlu0 %2005
    %v2007 = vsel %vm527, %v508, 0.0
    %2008 = vadd.xlane.f32.xlu0 %v2007
    %v2009 = vpop.xlane.xlu0 %2008
    %v2010 = vsel %vm527, %v509, 0.0
    %2011 = vadd.xlane.f32.xlu0 %v2010
    %v2012 = vpop.xlane.xlu0 %2011
    %v2013 = vsel %vm527, %v510, 0.0
    %2014 = vadd.xlane.f32.xlu0 %v2013
    %v2015 = vpop.xlane.xlu0 %2014
    %v2016 = vsel %vm527, %v511, 0.0
    %2017 = vadd.xlane.f32.xlu0 %v2016
    %v2018 = vpop.xlane.xlu0 %2017
    %v2019 = vsel %vm527, %v512, 0.0
    %2020 = vadd.xlane.f32.xlu0 %v2019
    %v2021 = vpop.xlane.xlu0 %2020
    %v2022 = vsel %vm527, %v513, 0.0
    %2023 = vadd.xlane.f32.xlu0 %v2022
    %v2024 = vpop.xlane.xlu0 %2023
    %v2025 = vsel %vm527, %v514, 0.0
    %2026 = vadd.xlane.f32.xlu0 %v2025
    %v2027 = vpop.xlane.xlu0 %2026
    %v2028 = vsel %vm527, %v515, 0.0
    %2029 = vadd.xlane.f32.xlu0 %v2028
    %v2030 = vpop.xlane.xlu0 %2029
    %v2031 = vsel %vm527, %v516, 0.0
    %2032 = vadd.xlane.f32.xlu0 %v2031
    %v2033 = vpop.xlane.xlu0 %2032
    %v2034 = vsel %vm527, %v517, 0.0
    %2035 = vadd.xlane.f32.xlu0 %v2034
    %v2036 = vpop.xlane.xlu0 %2035
    %v2037 = vsel %vm527, %v518, 0.0
    %2038 = vadd.xlane.f32.xlu0 %v2037
    %v2039 = vpop.xlane.xlu0 %2038
    %v2040 = vsel %vm527, %v519, 0.0
    %2041 = vadd.xlane.f32.xlu0 %v2040
    %v2042 = vpop.xlane.xlu0 %2041
    %v2043 = vsel %vm527, %v520, 0.0
    %2044 = vadd.xlane.f32.xlu0 %v2043
    %v2045 = vpop.xlane.xlu0 %2044
    %v2046 = vsel %vm527, %v521, 0.0
    %2047 = vadd.xlane.f32.xlu0 %v2046
    %v2048 = vpop.xlane.xlu0 %2047
    %v2049 = vsel %vm527, %v522, 0.0
    %2050 = vadd.xlane.f32.xlu0 %v2049
    %v2051 = vpop.xlane.xlu0 %2050
    %v2052 = vsel %vm527, %v523, 0.0
    %2053 = vadd.xlane.f32.xlu0 %v2052
    %v2054 = vpop.xlane.xlu0 %2053
    %v2055 = vsel %vm527, %v524, 0.0
    %2056 = vadd.xlane.f32.xlu0 %v2055
    %v2057 = vpop.xlane.xlu0 %2056
    %v2058 = vsel %vm527, %v525, 0.0
    %2059 = vadd.xlane.f32.xlu0 %v2058
    %v2060 = vpop.xlane.xlu0 %2059
    %v2061 = vsel %vm527, %v526, 0.0
    %2062 = vadd.xlane.f32.xlu0 %v2061
    %v2063 = vpop.xlane.xlu0 %2062
    %v2064 = vmul.f32 %v530, 0.0625
    %v2065 = vmul.f32 %v533, 0.0625
    %v2066 = vmul.f32 %v536, 0.0625
    %v2067 = vmul.f32 %v539, 0.0625
    %v2068 = vmul.f32 %v542, 0.0625
    %v2069 = vmul.f32 %v545, 0.0625
    %v2070 = vmul.f32 %v548, 0.0625
    %v2071 = vmul.f32 %v551, 0.0625
    %v2072 = vmul.f32 %v554, 0.0625
    %v2073 = vmul.f32 %v557, 0.0625
    %v2074 = vmul.f32 %v560, 0.0625
    %v2075 = vmul.f32 %v563, 0.0625
    %v2076 = vmul.f32 %v566, 0.0625
    %v2077 = vmul.f32 %v569, 0.0625
    %v2078 = vmul.f32 %v572, 0.0625
    %v2079 = vmul.f32 %v575, 0.0625
    %v2080 = vmul.f32 %v578, 0.0625
    %v2081 = vmul.f32 %v581, 0.0625
    %v2082 = vmul.f32 %v584, 0.0625
    %v2083 = vmul.f32 %v587, 0.0625
    %v2084 = vmul.f32 %v590, 0.0625
    %v2085 = vmul.f32 %v593, 0.0625
    %v2086 = vmul.f32 %v596, 0.0625
    %v2087 = vmul.f32 %v599, 0.0625
    %v2088 = vmul.f32 %v602, 0.0625
    %v2089 = vmul.f32 %v605, 0.0625
    %v2090 = vmul.f32 %v608, 0.0625
    %v2091 = vmul.f32 %v611, 0.0625
    %v2092 = vmul.f32 %v614, 0.0625
    %v2093 = vmul.f32 %v617, 0.0625
    %v2094 = vmul.f32 %v620, 0.0625
    %v2095 = vmul.f32 %v623, 0.0625
    %v2096 = vmul.f32 %v626, 0.0625
    %v2097 = vmul.f32 %v629, 0.0625
    %v2098 = vmul.f32 %v632, 0.0625
    %v2099 = vmul.f32 %v635, 0.0625
    %v2100 = vmul.f32 %v638, 0.0625
    %v2101 = vmul.f32 %v641, 0.0625
    %v2102 = vmul.f32 %v644, 0.0625
    %v2103 = vmul.f32 %v647, 0.0625
    %v2104 = vmul.f32 %v650, 0.0625
    %v2105 = vmul.f32 %v653, 0.0625
    %v2106 = vmul.f32 %v656, 0.0625
    %v2107 = vmul.f32 %v659, 0.0625
    %v2108 = vmul.f32 %v662, 0.0625
    %v2109 = vmul.f32 %v665, 0.0625
    %v2110 = vmul.f32 %v668, 0.0625
    %v2111 = vmul.f32 %v671, 0.0625
    %v2112 = vmul.f32 %v674, 0.0625
    %v2113 = vmul.f32 %v677, 0.0625
    %v2114 = vmul.f32 %v680, 0.0625
    %v2115 = vmul.f32 %v683, 0.0625
    %v2116 = vmul.f32 %v686, 0.0625
    %v2117 = vmul.f32 %v689, 0.0625
    %v2118 = vmul.f32 %v692, 0.0625
    %v2119 = vmul.f32 %v695, 0.0625
    %v2120 = vmul.f32 %v698, 0.0625
    %v2121 = vmul.f32 %v701, 0.0625
    %v2122 = vmul.f32 %v704, 0.0625
    %v2123 = vmul.f32 %v707, 0.0625
    %v2124 = vmul.f32 %v710, 0.0625
    %v2125 = vmul.f32 %v713, 0.0625
    %v2126 = vmul.f32 %v716, 0.0625
    %v2127 = vmul.f32 %v719, 0.0625
    %v2128 = vmul.f32 %v722, 0.0625
    %v2129 = vmul.f32 %v725, 0.0625
    %v2130 = vmul.f32 %v728, 0.0625
    %v2131 = vmul.f32 %v731, 0.0625
    %v2132 = vmul.f32 %v734, 0.0625
    %v2133 = vmul.f32 %v737, 0.0625
    %v2134 = vmul.f32 %v740, 0.0625
    %v2135 = vmul.f32 %v743, 0.0625
    %v2136 = vmul.f32 %v746, 0.0625
    %v2137 = vmul.f32 %v749, 0.0625
    %v2138 = vmul.f32 %v752, 0.0625
    %v2139 = vmul.f32 %v755, 0.0625
    %v2140 = vmul.f32 %v758, 0.0625
    %v2141 = vmul.f32 %v761, 0.0625
    %v2142 = vmul.f32 %v764, 0.0625
    %v2143 = vmul.f32 %v767, 0.0625
    %v2144 = vmul.f32 %v770, 0.0625
    %v2145 = vmul.f32 %v773, 0.0625
    %v2146 = vmul.f32 %v776, 0.0625
    %v2147 = vmul.f32 %v779, 0.0625
    %v2148 = vmul.f32 %v782, 0.0625
    %v2149 = vmul.f32 %v785, 0.0625
    %v2150 = vmul.f32 %v788, 0.0625
    %v2151 = vmul.f32 %v791, 0.0625
    %v2152 = vmul.f32 %v794, 0.0625
    %v2153 = vmul.f32 %v797, 0.0625
    %v2154 = vmul.f32 %v800, 0.0625
    %v2155 = vmul.f32 %v803, 0.0625
    %v2156 = vmul.f32 %v806, 0.0625
    %v2157 = vmul.f32 %v809, 0.0625
    %v2158 = vmul.f32 %v812, 0.0625
    %v2159 = vmul.f32 %v815, 0.0625
    %v2160 = vmul.f32 %v818, 0.0625
    %v2161 = vmul.f32 %v821, 0.0625
    %v2162 = vmul.f32 %v824, 0.0625
    %v2163 = vmul.f32 %v827, 0.0625
    %v2164 = vmul.f32 %v830, 0.0625
    %v2165 = vmul.f32 %v833, 0.0625
    %v2166 = vmul.f32 %v836, 0.0625
    %v2167 = vmul.f32 %v839, 0.0625
    %v2168 = vmul.f32 %v842, 0.0625
    %v2169 = vmul.f32 %v845, 0.0625
    %v2170 = vmul.f32 %v848, 0.0625
    %v2171 = vmul.f32 %v851, 0.0625
    %v2172 = vmul.f32 %v854, 0.0625
    %v2173 = vmul.f32 %v857, 0.0625
    %v2174 = vmul.f32 %v860, 0.0625
    %v2175 = vmul.f32 %v863, 0.0625
    %v2176 = vmul.f32 %v866, 0.0625
    %v2177 = vmul.f32 %v869, 0.0625
    %v2178 = vmul.f32 %v872, 0.0625
    %v2179 = vmul.f32 %v875, 0.0625
    %v2180 = vmul.f32 %v878, 0.0625
    %v2181 = vmul.f32 %v881, 0.0625
    %v2182 = vmul.f32 %v884, 0.0625
    %v2183 = vmul.f32 %v887, 0.0625
    %v2184 = vmul.f32 %v890, 0.0625
    %v2185 = vmul.f32 %v893, 0.0625
    %v2186 = vmul.f32 %v896, 0.0625
    %v2187 = vmul.f32 %v899, 0.0625
    %v2188 = vmul.f32 %v902, 0.0625
    %v2189 = vmul.f32 %v905, 0.0625
    %v2190 = vmul.f32 %v908, 0.0625
    %v2191 = vmul.f32 %v911, 0.0625
    %v2192 = vmul.f32 %v914, 0.0625
    %v2193 = vmul.f32 %v917, 0.0625
    %v2194 = vmul.f32 %v920, 0.0625
    %v2195 = vmul.f32 %v923, 0.0625
    %v2196 = vmul.f32 %v926, 0.0625
    %v2197 = vmul.f32 %v929, 0.0625
    %v2198 = vmul.f32 %v932, 0.0625
    %v2199 = vmul.f32 %v935, 0.0625
    %v2200 = vmul.f32 %v938, 0.0625
    %v2201 = vmul.f32 %v941, 0.0625
    %v2202 = vmul.f32 %v944, 0.0625
    %v2203 = vmul.f32 %v947, 0.0625
    %v2204 = vmul.f32 %v950, 0.0625
    %v2205 = vmul.f32 %v953, 0.0625
    %v2206 = vmul.f32 %v956, 0.0625
    %v2207 = vmul.f32 %v959, 0.0625
    %v2208 = vmul.f32 %v962, 0.0625
    %v2209 = vmul.f32 %v965, 0.0625
    %v2210 = vmul.f32 %v968, 0.0625
    %v2211 = vmul.f32 %v971, 0.0625
    %v2212 = vmul.f32 %v974, 0.0625
    %v2213 = vmul.f32 %v977, 0.0625
    %v2214 = vmul.f32 %v980, 0.0625
    %v2215 = vmul.f32 %v983, 0.0625
    %v2216 = vmul.f32 %v986, 0.0625
    %v2217 = vmul.f32 %v989, 0.0625
    %v2218 = vmul.f32 %v992, 0.0625
    %v2219 = vmul.f32 %v995, 0.0625
    %v2220 = vmul.f32 %v998, 0.0625
    %v2221 = vmul.f32 %v1001, 0.0625
    %v2222 = vmul.f32 %v1004, 0.0625
    %v2223 = vmul.f32 %v1007, 0.0625
    %v2224 = vmul.f32 %v1010, 0.0625
    %v2225 = vmul.f32 %v1013, 0.0625
    %v2226 = vmul.f32 %v1016, 0.0625
    %v2227 = vmul.f32 %v1019, 0.0625
    %v2228 = vmul.f32 %v1022, 0.0625
    %v2229 = vmul.f32 %v1025, 0.0625
    %v2230 = vmul.f32 %v1028, 0.0625
    %v2231 = vmul.f32 %v1031, 0.0625
    %v2232 = vmul.f32 %v1034, 0.0625
    %v2233 = vmul.f32 %v1037, 0.0625
    %v2234 = vmul.f32 %v1040, 0.0625
    %v2235 = vmul.f32 %v1043, 0.0625
    %v2236 = vmul.f32 %v1046, 0.0625
    %v2237 = vmul.f32 %v1049, 0.0625
    %v2238 = vmul.f32 %v1052, 0.0625
    %v2239 = vmul.f32 %v1055, 0.0625
    %v2240 = vmul.f32 %v1058, 0.0625
    %v2241 = vmul.f32 %v1061, 0.0625
    %v2242 = vmul.f32 %v1064, 0.0625
    %v2243 = vmul.f32 %v1067, 0.0625
    %v2244 = vmul.f32 %v1070, 0.0625
    %v2245 = vmul.f32 %v1073, 0.0625
    %v2246 = vmul.f32 %v1076, 0.0625
    %v2247 = vmul.f32 %v1079, 0.0625
    %v2248 = vmul.f32 %v1082, 0.0625
    %v2249 = vmul.f32 %v1085, 0.0625
    %v2250 = vmul.f32 %v1088, 0.0625
    %v2251 = vmul.f32 %v1091, 0.0625
    %v2252 = vmul.f32 %v1094, 0.0625
    %v2253 = vmul.f32 %v1097, 0.0625
    %v2254 = vmul.f32 %v1100, 0.0625
    %v2255 = vmul.f32 %v1103, 0.0625
    %v2256 = vmul.f32 %v1106, 0.0625
    %v2257 = vmul.f32 %v1109, 0.0625
    %v2258 = vmul.f32 %v1112, 0.0625
    %v2259 = vmul.f32 %v1115, 0.0625
    %v2260 = vmul.f32 %v1118, 0.0625
    %v2261 = vmul.f32 %v1121, 0.0625
    %v2262 = vmul.f32 %v1124, 0.0625
    %v2263 = vmul.f32 %v1127, 0.0625
    %v2264 = vmul.f32 %v1130, 0.0625
    %v2265 = vmul.f32 %v1133, 0.0625
    %v2266 = vmul.f32 %v1136, 0.0625
    %v2267 = vmul.f32 %v1139, 0.0625
    %v2268 = vmul.f32 %v1142, 0.0625
    %v2269 = vmul.f32 %v1145, 0.0625
    %v2270 = vmul.f32 %v1148, 0.0625
    %v2271 = vmul.f32 %v1151, 0.0625
    %v2272 = vmul.f32 %v1154, 0.0625
    %v2273 = vmul.f32 %v1157, 0.0625
    %v2274 = vmul.f32 %v1160, 0.0625
    %v2275 = vmul.f32 %v1163, 0.0625
    %v2276 = vmul.f32 %v1166, 0.0625
    %v2277 = vmul.f32 %v1169, 0.0625
    %v2278 = vmul.f32 %v1172, 0.0625
    %v2279 = vmul.f32 %v1175, 0.0625
    %v2280 = vmul.f32 %v1178, 0.0625
    %v2281 = vmul.f32 %v1181, 0.0625
    %v2282 = vmul.f32 %v1184, 0.0625
    %v2283 = vmul.f32 %v1187, 0.0625
    %v2284 = vmul.f32 %v1190, 0.0625
    %v2285 = vmul.f32 %v1193, 0.0625
    %v2286 = vmul.f32 %v1196, 0.0625
    %v2287 = vmul.f32 %v1199, 0.0625
    %v2288 = vmul.f32 %v1202, 0.0625
    %v2289 = vmul.f32 %v1205, 0.0625
    %v2290 = vmul.f32 %v1208, 0.0625
    %v2291 = vmul.f32 %v1211, 0.0625
    %v2292 = vmul.f32 %v1214, 0.0625
    %v2293 = vmul.f32 %v1217, 0.0625
    %v2294 = vmul.f32 %v1220, 0.0625
    %v2295 = vmul.f32 %v1223, 0.0625
    %v2296 = vmul.f32 %v1226, 0.0625
    %v2297 = vmul.f32 %v1229, 0.0625
    %v2298 = vmul.f32 %v1232, 0.0625
    %v2299 = vmul.f32 %v1235, 0.0625
    %v2300 = vmul.f32 %v1238, 0.0625
    %v2301 = vmul.f32 %v1241, 0.0625
    %v2302 = vmul.f32 %v1244, 0.0625
    %v2303 = vmul.f32 %v1247, 0.0625
    %v2304 = vmul.f32 %v1250, 0.0625
    %v2305 = vmul.f32 %v1253, 0.0625
    %v2306 = vmul.f32 %v1256, 0.0625
    %v2307 = vmul.f32 %v1259, 0.0625
    %v2308 = vmul.f32 %v1262, 0.0625
    %v2309 = vmul.f32 %v1265, 0.0625
    %v2310 = vmul.f32 %v1268, 0.0625
    %v2311 = vmul.f32 %v1271, 0.0625
    %v2312 = vmul.f32 %v1274, 0.0625
    %v2313 = vmul.f32 %v1277, 0.0625
    %v2314 = vmul.f32 %v1280, 0.0625
    %v2315 = vmul.f32 %v1283, 0.0625
    %v2316 = vmul.f32 %v1286, 0.0625
    %v2317 = vmul.f32 %v1289, 0.0625
    %v2318 = vmul.f32 %v1292, 0.0625
    %v2319 = vmul.f32 %v1295, 0.0625
    %v2320 = vmul.f32 %v1298, 0.0625
    %v2321 = vmul.f32 %v1301, 0.0625
    %v2322 = vmul.f32 %v1304, 0.0625
    %v2323 = vmul.f32 %v1307, 0.0625
    %v2324 = vmul.f32 %v1310, 0.0625
    %v2325 = vmul.f32 %v1313, 0.0625
    %v2326 = vmul.f32 %v1316, 0.0625
    %v2327 = vmul.f32 %v1319, 0.0625
    %v2328 = vmul.f32 %v1322, 0.0625
    %v2329 = vmul.f32 %v1325, 0.0625
    %v2330 = vmul.f32 %v1328, 0.0625
    %v2331 = vmul.f32 %v1331, 0.0625
    %v2332 = vmul.f32 %v1334, 0.0625
    %v2333 = vmul.f32 %v1337, 0.0625
    %v2334 = vmul.f32 %v1340, 0.0625
    %v2335 = vmul.f32 %v1343, 0.0625
    %v2336 = vmul.f32 %v1346, 0.0625
    %v2337 = vmul.f32 %v1349, 0.0625
    %v2338 = vmul.f32 %v1352, 0.0625
    %v2339 = vmul.f32 %v1355, 0.0625
    %v2340 = vmul.f32 %v1358, 0.0625
    %v2341 = vmul.f32 %v1361, 0.0625
    %v2342 = vmul.f32 %v1364, 0.0625
    %v2343 = vmul.f32 %v1367, 0.0625
    %v2344 = vmul.f32 %v1370, 0.0625
    %v2345 = vmul.f32 %v1373, 0.0625
    %v2346 = vmul.f32 %v1376, 0.0625
    %v2347 = vmul.f32 %v1379, 0.0625
    %v2348 = vmul.f32 %v1382, 0.0625
    %v2349 = vmul.f32 %v1385, 0.0625
    %v2350 = vmul.f32 %v1388, 0.0625
    %v2351 = vmul.f32 %v1391, 0.0625
    %v2352 = vmul.f32 %v1394, 0.0625
    %v2353 = vmul.f32 %v1397, 0.0625
    %v2354 = vmul.f32 %v1400, 0.0625
    %v2355 = vmul.f32 %v1403, 0.0625
    %v2356 = vmul.f32 %v1406, 0.0625
    %v2357 = vmul.f32 %v1409, 0.0625
    %v2358 = vmul.f32 %v1412, 0.0625
    %v2359 = vmul.f32 %v1415, 0.0625
    %v2360 = vmul.f32 %v1418, 0.0625
    %v2361 = vmul.f32 %v1421, 0.0625
    %v2362 = vmul.f32 %v1424, 0.0625
    %v2363 = vmul.f32 %v1427, 0.0625
    %v2364 = vmul.f32 %v1430, 0.0625
    %v2365 = vmul.f32 %v1433, 0.0625
    %v2366 = vmul.f32 %v1436, 0.0625
    %v2367 = vmul.f32 %v1439, 0.0625
    %v2368 = vmul.f32 %v1442, 0.0625
    %v2369 = vmul.f32 %v1445, 0.0625
    %v2370 = vmul.f32 %v1448, 0.0625
    %v2371 = vmul.f32 %v1451, 0.0625
    %v2372 = vmul.f32 %v1454, 0.0625
    %v2373 = vmul.f32 %v1457, 0.0625
    %v2374 = vmul.f32 %v1460, 0.0625
    %v2375 = vmul.f32 %v1463, 0.0625
    %v2376 = vmul.f32 %v1466, 0.0625
    %v2377 = vmul.f32 %v1469, 0.0625
    %v2378 = vmul.f32 %v1472, 0.0625
    %v2379 = vmul.f32 %v1475, 0.0625
    %v2380 = vmul.f32 %v1478, 0.0625
    %v2381 = vmul.f32 %v1481, 0.0625
    %v2382 = vmul.f32 %v1484, 0.0625
    %v2383 = vmul.f32 %v1487, 0.0625
    %v2384 = vmul.f32 %v1490, 0.0625
    %v2385 = vmul.f32 %v1493, 0.0625
    %v2386 = vmul.f32 %v1496, 0.0625
    %v2387 = vmul.f32 %v1499, 0.0625
    %v2388 = vmul.f32 %v1502, 0.0625
    %v2389 = vmul.f32 %v1505, 0.0625
    %v2390 = vmul.f32 %v1508, 0.0625
    %v2391 = vmul.f32 %v1511, 0.0625
    %v2392 = vmul.f32 %v1514, 0.0625
    %v2393 = vmul.f32 %v1517, 0.0625
    %v2394 = vmul.f32 %v1520, 0.0625
    %v2395 = vmul.f32 %v1523, 0.0625
    %v2396 = vmul.f32 %v1526, 0.0625
    %v2397 = vmul.f32 %v1529, 0.0625
    %v2398 = vmul.f32 %v1532, 0.0625
    %v2399 = vmul.f32 %v1535, 0.0625
    %v2400 = vmul.f32 %v1538, 0.0625
    %v2401 = vmul.f32 %v1541, 0.0625
    %v2402 = vmul.f32 %v1544, 0.0625
    %v2403 = vmul.f32 %v1547, 0.0625
    %v2404 = vmul.f32 %v1550, 0.0625
    %v2405 = vmul.f32 %v1553, 0.0625
    %v2406 = vmul.f32 %v1556, 0.0625
    %v2407 = vmul.f32 %v1559, 0.0625
    %v2408 = vmul.f32 %v1562, 0.0625
    %v2409 = vmul.f32 %v1565, 0.0625
    %v2410 = vmul.f32 %v1568, 0.0625
    %v2411 = vmul.f32 %v1571, 0.0625
    %v2412 = vmul.f32 %v1574, 0.0625
    %v2413 = vmul.f32 %v1577, 0.0625
    %v2414 = vmul.f32 %v1580, 0.0625
    %v2415 = vmul.f32 %v1583, 0.0625
    %v2416 = vmul.f32 %v1586, 0.0625
    %v2417 = vmul.f32 %v1589, 0.0625
    %v2418 = vmul.f32 %v1592, 0.0625
    %v2419 = vmul.f32 %v1595, 0.0625
    %v2420 = vmul.f32 %v1598, 0.0625
    %v2421 = vmul.f32 %v1601, 0.0625
    %v2422 = vmul.f32 %v1604, 0.0625
    %v2423 = vmul.f32 %v1607, 0.0625
    %v2424 = vmul.f32 %v1610, 0.0625
    %v2425 = vmul.f32 %v1613, 0.0625
    %v2426 = vmul.f32 %v1616, 0.0625
    %v2427 = vmul.f32 %v1619, 0.0625
    %v2428 = vmul.f32 %v1622, 0.0625
    %v2429 = vmul.f32 %v1625, 0.0625
    %v2430 = vmul.f32 %v1628, 0.0625
    %v2431 = vmul.f32 %v1631, 0.0625
    %v2432 = vmul.f32 %v1634, 0.0625
    %v2433 = vmul.f32 %v1637, 0.0625
    %v2434 = vmul.f32 %v1640, 0.0625
    %v2435 = vmul.f32 %v1643, 0.0625
    %v2436 = vmul.f32 %v1646, 0.0625
    %v2437 = vmul.f32 %v1649, 0.0625
    %v2438 = vmul.f32 %v1652, 0.0625
    %v2439 = vmul.f32 %v1655, 0.0625
    %v2440 = vmul.f32 %v1658, 0.0625
    %v2441 = vmul.f32 %v1661, 0.0625
    %v2442 = vmul.f32 %v1664, 0.0625
    %v2443 = vmul.f32 %v1667, 0.0625
    %v2444 = vmul.f32 %v1670, 0.0625
    %v2445 = vmul.f32 %v1673, 0.0625
    %v2446 = vmul.f32 %v1676, 0.0625
    %v2447 = vmul.f32 %v1679, 0.0625
    %v2448 = vmul.f32 %v1682, 0.0625
    %v2449 = vmul.f32 %v1685, 0.0625
    %v2450 = vmul.f32 %v1688, 0.0625
    %v2451 = vmul.f32 %v1691, 0.0625
    %v2452 = vmul.f32 %v1694, 0.0625
    %v2453 = vmul.f32 %v1697, 0.0625
    %v2454 = vmul.f32 %v1700, 0.0625
    %v2455 = vmul.f32 %v1703, 0.0625
    %v2456 = vmul.f32 %v1706, 0.0625
    %v2457 = vmul.f32 %v1709, 0.0625
    %v2458 = vmul.f32 %v1712, 0.0625
    %v2459 = vmul.f32 %v1715, 0.0625
    %v2460 = vmul.f32 %v1718, 0.0625
    %v2461 = vmul.f32 %v1721, 0.0625
    %v2462 = vmul.f32 %v1724, 0.0625
    %v2463 = vmul.f32 %v1727, 0.0625
    %v2464 = vmul.f32 %v1730, 0.0625
    %v2465 = vmul.f32 %v1733, 0.0625
    %v2466 = vmul.f32 %v1736, 0.0625
    %v2467 = vmul.f32 %v1739, 0.0625
    %v2468 = vmul.f32 %v1742, 0.0625
    %v2469 = vmul.f32 %v1745, 0.0625
    %v2470 = vmul.f32 %v1748, 0.0625
    %v2471 = vmul.f32 %v1751, 0.0625
    %v2472 = vmul.f32 %v1754, 0.0625
    %v2473 = vmul.f32 %v1757, 0.0625
    %v2474 = vmul.f32 %v1760, 0.0625
    %v2475 = vmul.f32 %v1763, 0.0625
    %v2476 = vmul.f32 %v1766, 0.0625
    %v2477 = vmul.f32 %v1769, 0.0625
    %v2478 = vmul.f32 %v1772, 0.0625
    %v2479 = vmul.f32 %v1775, 0.0625
    %v2480 = vmul.f32 %v1778, 0.0625
    %v2481 = vmul.f32 %v1781, 0.0625
    %v2482 = vmul.f32 %v1784, 0.0625
    %v2483 = vmul.f32 %v1787, 0.0625
    %v2484 = vmul.f32 %v1790, 0.0625
    %v2485 = vmul.f32 %v1793, 0.0625
    %v2486 = vmul.f32 %v1796, 0.0625
    %v2487 = vmul.f32 %v1799, 0.0625
    %v2488 = vmul.f32 %v1802, 0.0625
    %v2489 = vmul.f32 %v1805, 0.0625
    %v2490 = vmul.f32 %v1808, 0.0625
    %v2491 = vmul.f32 %v1811, 0.0625
    %v2492 = vmul.f32 %v1814, 0.0625
    %v2493 = vmul.f32 %v1817, 0.0625
    %v2494 = vmul.f32 %v1820, 0.0625
    %v2495 = vmul.f32 %v1823, 0.0625
    %v2496 = vmul.f32 %v1826, 0.0625
    %v2497 = vmul.f32 %v1829, 0.0625
    %v2498 = vmul.f32 %v1832, 0.0625
    %v2499 = vmul.f32 %v1835, 0.0625
    %v2500 = vmul.f32 %v1838, 0.0625
    %v2501 = vmul.f32 %v1841, 0.0625
    %v2502 = vmul.f32 %v1844, 0.0625
    %v2503 = vmul.f32 %v1847, 0.0625
    %v2504 = vmul.f32 %v1850, 0.0625
    %v2505 = vmul.f32 %v1853, 0.0625
    %v2506 = vmul.f32 %v1856, 0.0625
    %v2507 = vmul.f32 %v1859, 0.0625
    %v2508 = vmul.f32 %v1862, 0.0625
    %v2509 = vmul.f32 %v1865, 0.0625
    %v2510 = vmul.f32 %v1868, 0.0625
    %v2511 = vmul.f32 %v1871, 0.0625
    %v2512 = vmul.f32 %v1874, 0.0625
    %v2513 = vmul.f32 %v1877, 0.0625
    %v2514 = vmul.f32 %v1880, 0.0625
    %v2515 = vmul.f32 %v1883, 0.0625
    %v2516 = vmul.f32 %v1886, 0.0625
    %v2517 = vmul.f32 %v1889, 0.0625
    %v2518 = vmul.f32 %v1892, 0.0625
    %v2519 = vmul.f32 %v1895, 0.0625
    %v2520 = vmul.f32 %v1898, 0.0625
    %v2521 = vmul.f32 %v1901, 0.0625
    %v2522 = vmul.f32 %v1904, 0.0625
    %v2523 = vmul.f32 %v1907, 0.0625
    %v2524 = vmul.f32 %v1910, 0.0625
    %v2525 = vmul.f32 %v1913, 0.0625
    %v2526 = vmul.f32 %v1916, 0.0625
    %v2527 = vmul.f32 %v1919, 0.0625
    %v2528 = vmul.f32 %v1922, 0.0625
    %v2529 = vmul.f32 %v1925, 0.0625
    %v2530 = vmul.f32 %v1928, 0.0625
    %v2531 = vmul.f32 %v1931, 0.0625
    %v2532 = vmul.f32 %v1934, 0.0625
    %v2533 = vmul.f32 %v1937, 0.0625
    %v2534 = vmul.f32 %v1940, 0.0625
    %v2535 = vmul.f32 %v1943, 0.0625
    %v2536 = vmul.f32 %v1946, 0.0625
    %v2537 = vmul.f32 %v1949, 0.0625
    %v2538 = vmul.f32 %v1952, 0.0625
    %v2539 = vmul.f32 %v1955, 0.0625
    %v2540 = vmul.f32 %v1958, 0.0625
    %v2541 = vmul.f32 %v1961, 0.0625
    %v2542 = vmul.f32 %v1964, 0.0625
    %v2543 = vmul.f32 %v1967, 0.0625
    %v2544 = vmul.f32 %v1970, 0.0625
    %v2545 = vmul.f32 %v1973, 0.0625
    %v2546 = vmul.f32 %v1976, 0.0625
    %v2547 = vmul.f32 %v1979, 0.0625
    %v2548 = vmul.f32 %v1982, 0.0625
    %v2549 = vmul.f32 %v1985, 0.0625
    %v2550 = vmul.f32 %v1988, 0.0625
    %v2551 = vmul.f32 %v1991, 0.0625
    %v2552 = vmul.f32 %v1994, 0.0625
    %v2553 = vmul.f32 %v1997, 0.0625
    %v2554 = vmul.f32 %v2000, 0.0625
    %v2555 = vmul.f32 %v2003, 0.0625
    %v2556 = vmul.f32 %v2006, 0.0625
    %v2557 = vmul.f32 %v2009, 0.0625
    %v2558 = vmul.f32 %v2012, 0.0625
    %v2559 = vmul.f32 %v2015, 0.0625
    %v2560 = vmul.f32 %v2018, 0.0625
    %v2561 = vmul.f32 %v2021, 0.0625
    %v2562 = vmul.f32 %v2024, 0.0625
    %v2563 = vmul.f32 %v2027, 0.0625
    %v2564 = vmul.f32 %v2030, 0.0625
    %v2565 = vmul.f32 %v2033, 0.0625
    %v2566 = vmul.f32 %v2036, 0.0625
    %v2567 = vmul.f32 %v2039, 0.0625
    %v2568 = vmul.f32 %v2042, 0.0625
    %v2569 = vmul.f32 %v2045, 0.0625
    %v2570 = vmul.f32 %v2048, 0.0625
    %v2571 = vmul.f32 %v2051, 0.0625
    %v2572 = vmul.f32 %v2054, 0.0625
    %v2573 = vmul.f32 %v2057, 0.0625
    %v2574 = vmul.f32 %v2060, 0.0625
    %v2575 = vmul.f32 %v2063, 0.0625
    %v2576 = vpack.c.bf16 %v2065, %v2064
    %v2577 = vpack.c.bf16 %v2067, %v2066
    %v2578 = vpack.c.bf16 %v2069, %v2068
    %v2579 = vpack.c.bf16 %v2071, %v2070
    %v2580 = vpack.c.bf16 %v2073, %v2072
    %v2581 = vpack.c.bf16 %v2075, %v2074
    %v2582 = vpack.c.bf16 %v2077, %v2076
    %v2583 = vpack.c.bf16 %v2079, %v2078
    %v2584 = vpack.c.bf16 %v2081, %v2080
    %v2585 = vpack.c.bf16 %v2083, %v2082
    %v2586 = vpack.c.bf16 %v2085, %v2084
    %v2587 = vpack.c.bf16 %v2087, %v2086
    %v2588 = vpack.c.bf16 %v2089, %v2088
    %v2589 = vpack.c.bf16 %v2091, %v2090
    %v2590 = vpack.c.bf16 %v2093, %v2092
    %v2591 = vpack.c.bf16 %v2095, %v2094
    %v2592 = vpack.c.bf16 %v2097, %v2096
    %v2593 = vpack.c.bf16 %v2099, %v2098
    %v2594 = vpack.c.bf16 %v2101, %v2100
    %v2595 = vpack.c.bf16 %v2103, %v2102
    %v2596 = vpack.c.bf16 %v2105, %v2104
    %v2597 = vpack.c.bf16 %v2107, %v2106
    %v2598 = vpack.c.bf16 %v2109, %v2108
    %v2599 = vpack.c.bf16 %v2111, %v2110
    %v2600 = vpack.c.bf16 %v2113, %v2112
    %v2601 = vpack.c.bf16 %v2115, %v2114
    %v2602 = vpack.c.bf16 %v2117, %v2116
    %v2603 = vpack.c.bf16 %v2119, %v2118
    %v2604 = vpack.c.bf16 %v2121, %v2120
    %v2605 = vpack.c.bf16 %v2123, %v2122
    %v2606 = vpack.c.bf16 %v2125, %v2124
    %v2607 = vpack.c.bf16 %v2127, %v2126
    %v2608 = vpack.c.bf16 %v2129, %v2128
    %v2609 = vpack.c.bf16 %v2131, %v2130
    %v2610 = vpack.c.bf16 %v2133, %v2132
    %v2611 = vpack.c.bf16 %v2135, %v2134
    %v2612 = vpack.c.bf16 %v2137, %v2136
    %v2613 = vpack.c.bf16 %v2139, %v2138
    %v2614 = vpack.c.bf16 %v2141, %v2140
    %v2615 = vpack.c.bf16 %v2143, %v2142
    %v2616 = vpack.c.bf16 %v2145, %v2144
    %v2617 = vpack.c.bf16 %v2147, %v2146
    %v2618 = vpack.c.bf16 %v2149, %v2148
    %v2619 = vpack.c.bf16 %v2151, %v2150
    %v2620 = vpack.c.bf16 %v2153, %v2152
    %v2621 = vpack.c.bf16 %v2155, %v2154
    %v2622 = vpack.c.bf16 %v2157, %v2156
    %v2623 = vpack.c.bf16 %v2159, %v2158
    %v2624 = vpack.c.bf16 %v2161, %v2160
    %v2625 = vpack.c.bf16 %v2163, %v2162
    %v2626 = vpack.c.bf16 %v2165, %v2164
    %v2627 = vpack.c.bf16 %v2167, %v2166
    %v2628 = vpack.c.bf16 %v2169, %v2168
    %v2629 = vpack.c.bf16 %v2171, %v2170
    %v2630 = vpack.c.bf16 %v2173, %v2172
    %v2631 = vpack.c.bf16 %v2175, %v2174
    %v2632 = vpack.c.bf16 %v2177, %v2176
    %v2633 = vpack.c.bf16 %v2179, %v2178
    %v2634 = vpack.c.bf16 %v2181, %v2180
    %v2635 = vpack.c.bf16 %v2183, %v2182
    %v2636 = vpack.c.bf16 %v2185, %v2184
    %v2637 = vpack.c.bf16 %v2187, %v2186
    %v2638 = vpack.c.bf16 %v2189, %v2188
    %v2639 = vpack.c.bf16 %v2191, %v2190
    %v2640 = vpack.c.bf16 %v2193, %v2192
    %v2641 = vpack.c.bf16 %v2195, %v2194
    %v2642 = vpack.c.bf16 %v2197, %v2196
    %v2643 = vpack.c.bf16 %v2199, %v2198
    %v2644 = vpack.c.bf16 %v2201, %v2200
    %v2645 = vpack.c.bf16 %v2203, %v2202
    %v2646 = vpack.c.bf16 %v2205, %v2204
    %v2647 = vpack.c.bf16 %v2207, %v2206
    %v2648 = vpack.c.bf16 %v2209, %v2208
    %v2649 = vpack.c.bf16 %v2211, %v2210
    %v2650 = vpack.c.bf16 %v2213, %v2212
    %v2651 = vpack.c.bf16 %v2215, %v2214
    %v2652 = vpack.c.bf16 %v2217, %v2216
    %v2653 = vpack.c.bf16 %v2219, %v2218
    %v2654 = vpack.c.bf16 %v2221, %v2220
    %v2655 = vpack.c.bf16 %v2223, %v2222
    %v2656 = vpack.c.bf16 %v2225, %v2224
    %v2657 = vpack.c.bf16 %v2227, %v2226
    %v2658 = vpack.c.bf16 %v2229, %v2228
    %v2659 = vpack.c.bf16 %v2231, %v2230
    %v2660 = vpack.c.bf16 %v2233, %v2232
    %v2661 = vpack.c.bf16 %v2235, %v2234
    %v2662 = vpack.c.bf16 %v2237, %v2236
    %v2663 = vpack.c.bf16 %v2239, %v2238
    %v2664 = vpack.c.bf16 %v2241, %v2240
    %v2665 = vpack.c.bf16 %v2243, %v2242
    %v2666 = vpack.c.bf16 %v2245, %v2244
    %v2667 = vpack.c.bf16 %v2247, %v2246
    %v2668 = vpack.c.bf16 %v2249, %v2248
    %v2669 = vpack.c.bf16 %v2251, %v2250
    %v2670 = vpack.c.bf16 %v2253, %v2252
    %v2671 = vpack.c.bf16 %v2255, %v2254
    %v2672 = vpack.c.bf16 %v2257, %v2256
    %v2673 = vpack.c.bf16 %v2259, %v2258
    %v2674 = vpack.c.bf16 %v2261, %v2260
    %v2675 = vpack.c.bf16 %v2263, %v2262
    %v2676 = vpack.c.bf16 %v2265, %v2264
    %v2677 = vpack.c.bf16 %v2267, %v2266
    %v2678 = vpack.c.bf16 %v2269, %v2268
    %v2679 = vpack.c.bf16 %v2271, %v2270
    %v2680 = vpack.c.bf16 %v2273, %v2272
    %v2681 = vpack.c.bf16 %v2275, %v2274
    %v2682 = vpack.c.bf16 %v2277, %v2276
    %v2683 = vpack.c.bf16 %v2279, %v2278
    %v2684 = vpack.c.bf16 %v2281, %v2280
    %v2685 = vpack.c.bf16 %v2283, %v2282
    %v2686 = vpack.c.bf16 %v2285, %v2284
    %v2687 = vpack.c.bf16 %v2287, %v2286
    %v2688 = vpack.c.bf16 %v2289, %v2288
    %v2689 = vpack.c.bf16 %v2291, %v2290
    %v2690 = vpack.c.bf16 %v2293, %v2292
    %v2691 = vpack.c.bf16 %v2295, %v2294
    %v2692 = vpack.c.bf16 %v2297, %v2296
    %v2693 = vpack.c.bf16 %v2299, %v2298
    %v2694 = vpack.c.bf16 %v2301, %v2300
    %v2695 = vpack.c.bf16 %v2303, %v2302
    %v2696 = vpack.c.bf16 %v2305, %v2304
    %v2697 = vpack.c.bf16 %v2307, %v2306
    %v2698 = vpack.c.bf16 %v2309, %v2308
    %v2699 = vpack.c.bf16 %v2311, %v2310
    %v2700 = vpack.c.bf16 %v2313, %v2312
    %v2701 = vpack.c.bf16 %v2315, %v2314
    %v2702 = vpack.c.bf16 %v2317, %v2316
    %v2703 = vpack.c.bf16 %v2319, %v2318
    %v2704 = vpack.c.bf16 %v2321, %v2320
    %v2705 = vpack.c.bf16 %v2323, %v2322
    %v2706 = vpack.c.bf16 %v2325, %v2324
    %v2707 = vpack.c.bf16 %v2327, %v2326
    %v2708 = vpack.c.bf16 %v2329, %v2328
    %v2709 = vpack.c.bf16 %v2331, %v2330
    %v2710 = vpack.c.bf16 %v2333, %v2332
    %v2711 = vpack.c.bf16 %v2335, %v2334
    %v2712 = vpack.c.bf16 %v2337, %v2336
    %v2713 = vpack.c.bf16 %v2339, %v2338
    %v2714 = vpack.c.bf16 %v2341, %v2340
    %v2715 = vpack.c.bf16 %v2343, %v2342
    %v2716 = vpack.c.bf16 %v2345, %v2344
    %v2717 = vpack.c.bf16 %v2347, %v2346
    %v2718 = vpack.c.bf16 %v2349, %v2348
    %v2719 = vpack.c.bf16 %v2351, %v2350
    %v2720 = vpack.c.bf16 %v2353, %v2352
    %v2721 = vpack.c.bf16 %v2355, %v2354
    %v2722 = vpack.c.bf16 %v2357, %v2356
    %v2723 = vpack.c.bf16 %v2359, %v2358
    %v2724 = vpack.c.bf16 %v2361, %v2360
    %v2725 = vpack.c.bf16 %v2363, %v2362
    %v2726 = vpack.c.bf16 %v2365, %v2364
    %v2727 = vpack.c.bf16 %v2367, %v2366
    %v2728 = vpack.c.bf16 %v2369, %v2368
    %v2729 = vpack.c.bf16 %v2371, %v2370
    %v2730 = vpack.c.bf16 %v2373, %v2372
    %v2731 = vpack.c.bf16 %v2375, %v2374
    %v2732 = vpack.c.bf16 %v2377, %v2376
    %v2733 = vpack.c.bf16 %v2379, %v2378
    %v2734 = vpack.c.bf16 %v2381, %v2380
    %v2735 = vpack.c.bf16 %v2383, %v2382
    %v2736 = vpack.c.bf16 %v2385, %v2384
    %v2737 = vpack.c.bf16 %v2387, %v2386
    %v2738 = vpack.c.bf16 %v2389, %v2388
    %v2739 = vpack.c.bf16 %v2391, %v2390
    %v2740 = vpack.c.bf16 %v2393, %v2392
    %v2741 = vpack.c.bf16 %v2395, %v2394
    %v2742 = vpack.c.bf16 %v2397, %v2396
    %v2743 = vpack.c.bf16 %v2399, %v2398
    %v2744 = vpack.c.bf16 %v2401, %v2400
    %v2745 = vpack.c.bf16 %v2403, %v2402
    %v2746 = vpack.c.bf16 %v2405, %v2404
    %v2747 = vpack.c.bf16 %v2407, %v2406
    %v2748 = vpack.c.bf16 %v2409, %v2408
    %v2749 = vpack.c.bf16 %v2411, %v2410
    %v2750 = vpack.c.bf16 %v2413, %v2412
    %v2751 = vpack.c.bf16 %v2415, %v2414
    %v2752 = vpack.c.bf16 %v2417, %v2416
    %v2753 = vpack.c.bf16 %v2419, %v2418
    %v2754 = vpack.c.bf16 %v2421, %v2420
    %v2755 = vpack.c.bf16 %v2423, %v2422
    %v2756 = vpack.c.bf16 %v2425, %v2424
    %v2757 = vpack.c.bf16 %v2427, %v2426
    %v2758 = vpack.c.bf16 %v2429, %v2428
    %v2759 = vpack.c.bf16 %v2431, %v2430
    %v2760 = vpack.c.bf16 %v2433, %v2432
    %v2761 = vpack.c.bf16 %v2435, %v2434
    %v2762 = vpack.c.bf16 %v2437, %v2436
    %v2763 = vpack.c.bf16 %v2439, %v2438
    %v2764 = vpack.c.bf16 %v2441, %v2440
    %v2765 = vpack.c.bf16 %v2443, %v2442
    %v2766 = vpack.c.bf16 %v2445, %v2444
    %v2767 = vpack.c.bf16 %v2447, %v2446
    %v2768 = vpack.c.bf16 %v2449, %v2448
    %v2769 = vpack.c.bf16 %v2451, %v2450
    %v2770 = vpack.c.bf16 %v2453, %v2452
    %v2771 = vpack.c.bf16 %v2455, %v2454
    %v2772 = vpack.c.bf16 %v2457, %v2456
    %v2773 = vpack.c.bf16 %v2459, %v2458
    %v2774 = vpack.c.bf16 %v2461, %v2460
    %v2775 = vpack.c.bf16 %v2463, %v2462
    %v2776 = vpack.c.bf16 %v2465, %v2464
    %v2777 = vpack.c.bf16 %v2467, %v2466
    %v2778 = vpack.c.bf16 %v2469, %v2468
    %v2779 = vpack.c.bf16 %v2471, %v2470
    %v2780 = vpack.c.bf16 %v2473, %v2472
    %v2781 = vpack.c.bf16 %v2475, %v2474
    %v2782 = vpack.c.bf16 %v2477, %v2476
    %v2783 = vpack.c.bf16 %v2479, %v2478
    %v2784 = vpack.c.bf16 %v2481, %v2480
    %v2785 = vpack.c.bf16 %v2483, %v2482
    %v2786 = vpack.c.bf16 %v2485, %v2484
    %v2787 = vpack.c.bf16 %v2487, %v2486
    %v2788 = vpack.c.bf16 %v2489, %v2488
    %v2789 = vpack.c.bf16 %v2491, %v2490
    %v2790 = vpack.c.bf16 %v2493, %v2492
    %v2791 = vpack.c.bf16 %v2495, %v2494
    %v2792 = vpack.c.bf16 %v2497, %v2496
    %v2793 = vpack.c.bf16 %v2499, %v2498
    %v2794 = vpack.c.bf16 %v2501, %v2500
    %v2795 = vpack.c.bf16 %v2503, %v2502
    %v2796 = vpack.c.bf16 %v2505, %v2504
    %v2797 = vpack.c.bf16 %v2507, %v2506
    %v2798 = vpack.c.bf16 %v2509, %v2508
    %v2799 = vpack.c.bf16 %v2511, %v2510
    %v2800 = vpack.c.bf16 %v2513, %v2512
    %v2801 = vpack.c.bf16 %v2515, %v2514
    %v2802 = vpack.c.bf16 %v2517, %v2516
    %v2803 = vpack.c.bf16 %v2519, %v2518
    %v2804 = vpack.c.bf16 %v2521, %v2520
    %v2805 = vpack.c.bf16 %v2523, %v2522
    %v2806 = vpack.c.bf16 %v2525, %v2524
    %v2807 = vpack.c.bf16 %v2527, %v2526
    %v2808 = vpack.c.bf16 %v2529, %v2528
    %v2809 = vpack.c.bf16 %v2531, %v2530
    %v2810 = vpack.c.bf16 %v2533, %v2532
    %v2811 = vpack.c.bf16 %v2535, %v2534
    %v2812 = vpack.c.bf16 %v2537, %v2536
    %v2813 = vpack.c.bf16 %v2539, %v2538
    %v2814 = vpack.c.bf16 %v2541, %v2540
    %v2815 = vpack.c.bf16 %v2543, %v2542
    %v2816 = vpack.c.bf16 %v2545, %v2544
    %v2817 = vpack.c.bf16 %v2547, %v2546
    %v2818 = vpack.c.bf16 %v2549, %v2548
    %v2819 = vpack.c.bf16 %v2551, %v2550
    %v2820 = vpack.c.bf16 %v2553, %v2552
    %v2821 = vpack.c.bf16 %v2555, %v2554
    %v2822 = vpack.c.bf16 %v2557, %v2556
    %v2823 = vpack.c.bf16 %v2559, %v2558
    %v2824 = vpack.c.bf16 %v2561, %v2560
    %v2825 = vpack.c.bf16 %v2563, %v2562
    %v2826 = vpack.c.bf16 %v2565, %v2564
    %v2827 = vpack.c.bf16 %v2567, %v2566
    %v2828 = vpack.c.bf16 %v2569, %v2568
    %v2829 = vpack.c.bf16 %v2571, %v2570
    %v2830 = vpack.c.bf16 %v2573, %v2572
    %v2831 = vpack.c.bf16 %v2575, %v2574
    %v2832 = vld [vmem:[%s1] sm:$0xff]
    %v2833 = vld [vmem:[%s1 + $0x8] sm:$0xff]
    %v2834 = vld [vmem:[%s1 + $0x10] sm:$0xff]
    %v2835 = vld [vmem:[%s1 + $0x18] sm:$0xff]
    %v2836 = vld [vmem:[%s1 + $0x20] sm:$0xff]
    %v2837 = vld [vmem:[%s1 + $0x28] sm:$0xff]
    %v2838 = vld [vmem:[%s1 + $0x30] sm:$0xff]
    %v2839 = vld [vmem:[%s1 + $0x38] sm:$0xff]
    %v2840 = vld [vmem:[%s1 + $0x40] sm:$0xff]
    %v2841 = vld [vmem:[%s1 + $0x48] sm:$0xff]
    %v2842 = vld [vmem:[%s1 + $0x50] sm:$0xff]
    %v2843 = vld [vmem:[%s1 + $0x58] sm:$0xff]
    %v2844 = vld [vmem:[%s1 + $0x60] sm:$0xff]
    %v2845 = vld [vmem:[%s1 + $0x68] sm:$0xff]
    %v2846 = vld [vmem:[%s1 + $0x70] sm:$0xff]
    %v2847 = vld [vmem:[%s1 + $0x78] sm:$0xff]
    %v2848 = vld [vmem:[%s1 + $0x80] sm:$0xff]
    %v2849 = vld [vmem:[%s1 + $0x88] sm:$0xff]
    %v2850 = vld [vmem:[%s1 + $0x90] sm:$0xff]
    %v2851 = vld [vmem:[%s1 + $0x98] sm:$0xff]
    %v2852 = vld [vmem:[%s1 + $0xa0] sm:$0xff]
    %v2853 = vld [vmem:[%s1 + $0xa8] sm:$0xff]
    %v2854 = vld [vmem:[%s1 + $0xb0] sm:$0xff]
    %v2855 = vld [vmem:[%s1 + $0xb8] sm:$0xff]
    %v2856 = vld [vmem:[%s1 + $0xc0] sm:$0xff]
    %v2857 = vld [vmem:[%s1 + $0xc8] sm:$0xff]
    %v2858 = vld [vmem:[%s1 + $0xd0] sm:$0xff]
    %v2859 = vld [vmem:[%s1 + $0xd8] sm:$0xff]
    %v2860 = vld [vmem:[%s1 + $0xe0] sm:$0xff]
    %v2861 = vld [vmem:[%s1 + $0xe8] sm:$0xff]
    %v2862 = vld [vmem:[%s1 + $0xf0] sm:$0xff]
    %v2863 = vld [vmem:[%s1 + $0xf8] sm:$0xff]
    %v2864 = vld [vmem:[%s1 + $0x100] sm:$0xff]
    %v2865 = vld [vmem:[%s1 + $0x108] sm:$0xff]
    %v2866 = vld [vmem:[%s1 + $0x110] sm:$0xff]
    %v2867 = vld [vmem:[%s1 + $0x118] sm:$0xff]
    %v2868 = vld [vmem:[%s1 + $0x120] sm:$0xff]
    %v2869 = vld [vmem:[%s1 + $0x128] sm:$0xff]
    %v2870 = vld [vmem:[%s1 + $0x130] sm:$0xff]
    %v2871 = vld [vmem:[%s1 + $0x138] sm:$0xff]
    %v2872 = vld [vmem:[%s1 + $0x140] sm:$0xff]
    %v2873 = vld [vmem:[%s1 + $0x148] sm:$0xff]
    %v2874 = vld [vmem:[%s1 + $0x150] sm:$0xff]
    %v2875 = vld [vmem:[%s1 + $0x158] sm:$0xff]
    %v2876 = vld [vmem:[%s1 + $0x160] sm:$0xff]
    %v2877 = vld [vmem:[%s1 + $0x168] sm:$0xff]
    %v2878 = vld [vmem:[%s1 + $0x170] sm:$0xff]
    %v2879 = vld [vmem:[%s1 + $0x178] sm:$0xff]
    %v2880 = vld [vmem:[%s1 + $0x180] sm:$0xff]
    %v2881 = vld [vmem:[%s1 + $0x188] sm:$0xff]
    %v2882 = vld [vmem:[%s1 + $0x190] sm:$0xff]
    %v2883 = vld [vmem:[%s1 + $0x198] sm:$0xff]
    %v2884 = vld [vmem:[%s1 + $0x1a0] sm:$0xff]
    %v2885 = vld [vmem:[%s1 + $0x1a8] sm:$0xff]
    %v2886 = vld [vmem:[%s1 + $0x1b0] sm:$0xff]
    %v2887 = vld [vmem:[%s1 + $0x1b8] sm:$0xff]
    %v2888 = vld [vmem:[%s1 + $0x1c0] sm:$0xff]
    %v2889 = vld [vmem:[%s1 + $0x1c8] sm:$0xff]
    %v2890 = vld [vmem:[%s1 + $0x1d0] sm:$0xff]
    %v2891 = vld [vmem:[%s1 + $0x1d8] sm:$0xff]
    %v2892 = vld [vmem:[%s1 + $0x1e0] sm:$0xff]
    %v2893 = vld [vmem:[%s1 + $0x1e8] sm:$0xff]
    %v2894 = vld [vmem:[%s1 + $0x1f0] sm:$0xff]
    %v2895 = vld [vmem:[%s1 + $0x1f8] sm:$0xff]
    %v2896 = vld [vmem:[%s1 + $0x200] sm:$0xff]
    %v2897 = vld [vmem:[%s1 + $0x208] sm:$0xff]
    %v2898 = vld [vmem:[%s1 + $0x210] sm:$0xff]
    %v2899 = vld [vmem:[%s1 + $0x218] sm:$0xff]
    %v2900 = vld [vmem:[%s1 + $0x220] sm:$0xff]
    %v2901 = vld [vmem:[%s1 + $0x228] sm:$0xff]
    %v2902 = vld [vmem:[%s1 + $0x230] sm:$0xff]
    %v2903 = vld [vmem:[%s1 + $0x238] sm:$0xff]
    %v2904 = vld [vmem:[%s1 + $0x240] sm:$0xff]
    %v2905 = vld [vmem:[%s1 + $0x248] sm:$0xff]
    %v2906 = vld [vmem:[%s1 + $0x250] sm:$0xff]
    %v2907 = vld [vmem:[%s1 + $0x258] sm:$0xff]
    %v2908 = vld [vmem:[%s1 + $0x260] sm:$0xff]
    %v2909 = vld [vmem:[%s1 + $0x268] sm:$0xff]
    %v2910 = vld [vmem:[%s1 + $0x270] sm:$0xff]
    %v2911 = vld [vmem:[%s1 + $0x278] sm:$0xff]
    %v2912 = vld [vmem:[%s1 + $0x280] sm:$0xff]
    %v2913 = vld [vmem:[%s1 + $0x288] sm:$0xff]
    %v2914 = vld [vmem:[%s1 + $0x290] sm:$0xff]
    %v2915 = vld [vmem:[%s1 + $0x298] sm:$0xff]
    %v2916 = vld [vmem:[%s1 + $0x2a0] sm:$0xff]
    %v2917 = vld [vmem:[%s1 + $0x2a8] sm:$0xff]
    %v2918 = vld [vmem:[%s1 + $0x2b0] sm:$0xff]
    %v2919 = vld [vmem:[%s1 + $0x2b8] sm:$0xff]
    %v2920 = vld [vmem:[%s1 + $0x2c0] sm:$0xff]
    %v2921 = vld [vmem:[%s1 + $0x2c8] sm:$0xff]
    %v2922 = vld [vmem:[%s1 + $0x2d0] sm:$0xff]
    %v2923 = vld [vmem:[%s1 + $0x2d8] sm:$0xff]
    %v2924 = vld [vmem:[%s1 + $0x2e0] sm:$0xff]
    %v2925 = vld [vmem:[%s1 + $0x2e8] sm:$0xff]
    %v2926 = vld [vmem:[%s1 + $0x2f0] sm:$0xff]
    %v2927 = vld [vmem:[%s1 + $0x2f8] sm:$0xff]
    %v2928 = vld [vmem:[%s1 + $0x300] sm:$0xff]
    %v2929 = vld [vmem:[%s1 + $0x308] sm:$0xff]
    %v2930 = vld [vmem:[%s1 + $0x310] sm:$0xff]
    %v2931 = vld [vmem:[%s1 + $0x318] sm:$0xff]
    %v2932 = vld [vmem:[%s1 + $0x320] sm:$0xff]
    %v2933 = vld [vmem:[%s1 + $0x328] sm:$0xff]
    %v2934 = vld [vmem:[%s1 + $0x330] sm:$0xff]
    %v2935 = vld [vmem:[%s1 + $0x338] sm:$0xff]
    %v2936 = vld [vmem:[%s1 + $0x340] sm:$0xff]
    %v2937 = vld [vmem:[%s1 + $0x348] sm:$0xff]
    %v2938 = vld [vmem:[%s1 + $0x350] sm:$0xff]
    %v2939 = vld [vmem:[%s1 + $0x358] sm:$0xff]
    %v2940 = vld [vmem:[%s1 + $0x360] sm:$0xff]
    %v2941 = vld [vmem:[%s1 + $0x368] sm:$0xff]
    %v2942 = vld [vmem:[%s1 + $0x370] sm:$0xff]
    %v2943 = vld [vmem:[%s1 + $0x378] sm:$0xff]
    %v2944 = vld [vmem:[%s1 + $0x380] sm:$0xff]
    %v2945 = vld [vmem:[%s1 + $0x388] sm:$0xff]
    %v2946 = vld [vmem:[%s1 + $0x390] sm:$0xff]
    %v2947 = vld [vmem:[%s1 + $0x398] sm:$0xff]
    %v2948 = vld [vmem:[%s1 + $0x3a0] sm:$0xff]
    %v2949 = vld [vmem:[%s1 + $0x3a8] sm:$0xff]
    %v2950 = vld [vmem:[%s1 + $0x3b0] sm:$0xff]
    %v2951 = vld [vmem:[%s1 + $0x3b8] sm:$0xff]
    %v2952 = vld [vmem:[%s1 + $0x3c0] sm:$0xff]
    %v2953 = vld [vmem:[%s1 + $0x3c8] sm:$0xff]
    %v2954 = vld [vmem:[%s1 + $0x3d0] sm:$0xff]
    %v2955 = vld [vmem:[%s1 + $0x3d8] sm:$0xff]
    %v2956 = vld [vmem:[%s1 + $0x3e0] sm:$0xff]
    %v2957 = vld [vmem:[%s1 + $0x3e8] sm:$0xff]
    %v2958 = vld [vmem:[%s1 + $0x3f0] sm:$0xff]
    %v2959 = vld [vmem:[%s1 + $0x3f8] sm:$0xff]
    %v2960 = vld [vmem:[%s1 + $0x400] sm:$0xff]
    %v2961 = vld [vmem:[%s1 + $0x408] sm:$0xff]
    %v2962 = vld [vmem:[%s1 + $0x410] sm:$0xff]
    %v2963 = vld [vmem:[%s1 + $0x418] sm:$0xff]
    %v2964 = vld [vmem:[%s1 + $0x420] sm:$0xff]
    %v2965 = vld [vmem:[%s1 + $0x428] sm:$0xff]
    %v2966 = vld [vmem:[%s1 + $0x430] sm:$0xff]
    %v2967 = vld [vmem:[%s1 + $0x438] sm:$0xff]
    %v2968 = vld [vmem:[%s1 + $0x440] sm:$0xff]
    %v2969 = vld [vmem:[%s1 + $0x448] sm:$0xff]
    %v2970 = vld [vmem:[%s1 + $0x450] sm:$0xff]
    %v2971 = vld [vmem:[%s1 + $0x458] sm:$0xff]
    %v2972 = vld [vmem:[%s1 + $0x460] sm:$0xff]
    %v2973 = vld [vmem:[%s1 + $0x468] sm:$0xff]
    %v2974 = vld [vmem:[%s1 + $0x470] sm:$0xff]
    %v2975 = vld [vmem:[%s1 + $0x478] sm:$0xff]
    %v2976 = vld [vmem:[%s1 + $0x480] sm:$0xff]
    %v2977 = vld [vmem:[%s1 + $0x488] sm:$0xff]
    %v2978 = vld [vmem:[%s1 + $0x490] sm:$0xff]
    %v2979 = vld [vmem:[%s1 + $0x498] sm:$0xff]
    %v2980 = vld [vmem:[%s1 + $0x4a0] sm:$0xff]
    %v2981 = vld [vmem:[%s1 + $0x4a8] sm:$0xff]
    %v2982 = vld [vmem:[%s1 + $0x4b0] sm:$0xff]
    %v2983 = vld [vmem:[%s1 + $0x4b8] sm:$0xff]
    %v2984 = vld [vmem:[%s1 + $0x4c0] sm:$0xff]
    %v2985 = vld [vmem:[%s1 + $0x4c8] sm:$0xff]
    %v2986 = vld [vmem:[%s1 + $0x4d0] sm:$0xff]
    %v2987 = vld [vmem:[%s1 + $0x4d8] sm:$0xff]
    %v2988 = vld [vmem:[%s1 + $0x4e0] sm:$0xff]
    %v2989 = vld [vmem:[%s1 + $0x4e8] sm:$0xff]
    %v2990 = vld [vmem:[%s1 + $0x4f0] sm:$0xff]
    %v2991 = vld [vmem:[%s1 + $0x4f8] sm:$0xff]
    %v2992 = vld [vmem:[%s1 + $0x500] sm:$0xff]
    %v2993 = vld [vmem:[%s1 + $0x508] sm:$0xff]
    %v2994 = vld [vmem:[%s1 + $0x510] sm:$0xff]
    %v2995 = vld [vmem:[%s1 + $0x518] sm:$0xff]
    %v2996 = vld [vmem:[%s1 + $0x520] sm:$0xff]
    %v2997 = vld [vmem:[%s1 + $0x528] sm:$0xff]
    %v2998 = vld [vmem:[%s1 + $0x530] sm:$0xff]
    %v2999 = vld [vmem:[%s1 + $0x538] sm:$0xff]
    %v3000 = vld [vmem:[%s1 + $0x540] sm:$0xff]
    %v3001 = vld [vmem:[%s1 + $0x548] sm:$0xff]
    %v3002 = vld [vmem:[%s1 + $0x550] sm:$0xff]
    %v3003 = vld [vmem:[%s1 + $0x558] sm:$0xff]
    %v3004 = vld [vmem:[%s1 + $0x560] sm:$0xff]
    %v3005 = vld [vmem:[%s1 + $0x568] sm:$0xff]
    %v3006 = vld [vmem:[%s1 + $0x570] sm:$0xff]
    %v3007 = vld [vmem:[%s1 + $0x578] sm:$0xff]
    %v3008 = vld [vmem:[%s1 + $0x580] sm:$0xff]
    %v3009 = vld [vmem:[%s1 + $0x588] sm:$0xff]
    %v3010 = vld [vmem:[%s1 + $0x590] sm:$0xff]
    %v3011 = vld [vmem:[%s1 + $0x598] sm:$0xff]
    %v3012 = vld [vmem:[%s1 + $0x5a0] sm:$0xff]
    %v3013 = vld [vmem:[%s1 + $0x5a8] sm:$0xff]
    %v3014 = vld [vmem:[%s1 + $0x5b0] sm:$0xff]
    %v3015 = vld [vmem:[%s1 + $0x5b8] sm:$0xff]
    %v3016 = vld [vmem:[%s1 + $0x5c0] sm:$0xff]
    %v3017 = vld [vmem:[%s1 + $0x5c8] sm:$0xff]
    %v3018 = vld [vmem:[%s1 + $0x5d0] sm:$0xff]
    %v3019 = vld [vmem:[%s1 + $0x5d8] sm:$0xff]
    %v3020 = vld [vmem:[%s1 + $0x5e0] sm:$0xff]
    %v3021 = vld [vmem:[%s1 + $0x5e8] sm:$0xff]
    %v3022 = vld [vmem:[%s1 + $0x5f0] sm:$0xff]
    %v3023 = vld [vmem:[%s1 + $0x5f8] sm:$0xff]
    %v3024 = vld [vmem:[%s1 + $0x600] sm:$0xff]
    %v3025 = vld [vmem:[%s1 + $0x608] sm:$0xff]
    %v3026 = vld [vmem:[%s1 + $0x610] sm:$0xff]
    %v3027 = vld [vmem:[%s1 + $0x618] sm:$0xff]
    %v3028 = vld [vmem:[%s1 + $0x620] sm:$0xff]
    %v3029 = vld [vmem:[%s1 + $0x628] sm:$0xff]
    %v3030 = vld [vmem:[%s1 + $0x630] sm:$0xff]
    %v3031 = vld [vmem:[%s1 + $0x638] sm:$0xff]
    %v3032 = vld [vmem:[%s1 + $0x640] sm:$0xff]
    %v3033 = vld [vmem:[%s1 + $0x648] sm:$0xff]
    %v3034 = vld [vmem:[%s1 + $0x650] sm:$0xff]
    %v3035 = vld [vmem:[%s1 + $0x658] sm:$0xff]
    %v3036 = vld [vmem:[%s1 + $0x660] sm:$0xff]
    %v3037 = vld [vmem:[%s1 + $0x668] sm:$0xff]
    %v3038 = vld [vmem:[%s1 + $0x670] sm:$0xff]
    %v3039 = vld [vmem:[%s1 + $0x678] sm:$0xff]
    %v3040 = vld [vmem:[%s1 + $0x680] sm:$0xff]
    %v3041 = vld [vmem:[%s1 + $0x688] sm:$0xff]
    %v3042 = vld [vmem:[%s1 + $0x690] sm:$0xff]
    %v3043 = vld [vmem:[%s1 + $0x698] sm:$0xff]
    %v3044 = vld [vmem:[%s1 + $0x6a0] sm:$0xff]
    %v3045 = vld [vmem:[%s1 + $0x6a8] sm:$0xff]
    %v3046 = vld [vmem:[%s1 + $0x6b0] sm:$0xff]
    %v3047 = vld [vmem:[%s1 + $0x6b8] sm:$0xff]
    %v3048 = vld [vmem:[%s1 + $0x6c0] sm:$0xff]
    %v3049 = vld [vmem:[%s1 + $0x6c8] sm:$0xff]
    %v3050 = vld [vmem:[%s1 + $0x6d0] sm:$0xff]
    %v3051 = vld [vmem:[%s1 + $0x6d8] sm:$0xff]
    %v3052 = vld [vmem:[%s1 + $0x6e0] sm:$0xff]
    %v3053 = vld [vmem:[%s1 + $0x6e8] sm:$0xff]
    %v3054 = vld [vmem:[%s1 + $0x6f0] sm:$0xff]
    %v3055 = vld [vmem:[%s1 + $0x6f8] sm:$0xff]
    %v3056 = vld [vmem:[%s1 + $0x700] sm:$0xff]
    %v3057 = vld [vmem:[%s1 + $0x708] sm:$0xff]
    %v3058 = vld [vmem:[%s1 + $0x710] sm:$0xff]
    %v3059 = vld [vmem:[%s1 + $0x718] sm:$0xff]
    %v3060 = vld [vmem:[%s1 + $0x720] sm:$0xff]
    %v3061 = vld [vmem:[%s1 + $0x728] sm:$0xff]
    %v3062 = vld [vmem:[%s1 + $0x730] sm:$0xff]
    %v3063 = vld [vmem:[%s1 + $0x738] sm:$0xff]
    %v3064 = vld [vmem:[%s1 + $0x740] sm:$0xff]
    %v3065 = vld [vmem:[%s1 + $0x748] sm:$0xff]
    %v3066 = vld [vmem:[%s1 + $0x750] sm:$0xff]
    %v3067 = vld [vmem:[%s1 + $0x758] sm:$0xff]
    %v3068 = vld [vmem:[%s1 + $0x760] sm:$0xff]
    %v3069 = vld [vmem:[%s1 + $0x768] sm:$0xff]
    %v3070 = vld [vmem:[%s1 + $0x770] sm:$0xff]
    %v3071 = vld [vmem:[%s1 + $0x778] sm:$0xff]
    %v3072 = vld [vmem:[%s1 + $0x780] sm:$0xff]
    %v3073 = vld [vmem:[%s1 + $0x788] sm:$0xff]
    %v3074 = vld [vmem:[%s1 + $0x790] sm:$0xff]
    %v3075 = vld [vmem:[%s1 + $0x798] sm:$0xff]
    %v3076 = vld [vmem:[%s1 + $0x7a0] sm:$0xff]
    %v3077 = vld [vmem:[%s1 + $0x7a8] sm:$0xff]
    %v3078 = vld [vmem:[%s1 + $0x7b0] sm:$0xff]
    %v3079 = vld [vmem:[%s1 + $0x7b8] sm:$0xff]
    %v3080 = vld [vmem:[%s1 + $0x7c0] sm:$0xff]
    %v3081 = vld [vmem:[%s1 + $0x7c8] sm:$0xff]
    %v3082 = vld [vmem:[%s1 + $0x7d0] sm:$0xff]
    %v3083 = vld [vmem:[%s1 + $0x7d8] sm:$0xff]
    %v3084 = vld [vmem:[%s1 + $0x7e0] sm:$0xff]
    %v3085 = vld [vmem:[%s1 + $0x7e8] sm:$0xff]
    %v3086 = vld [vmem:[%s1 + $0x7f0] sm:$0xff]
    %v3087 = vld [vmem:[%s1 + $0x7f8] sm:$0xff]
    %v3088 = vld [vmem:[%s2] sm:$0xff]
    %v3090 = vlaneseq
    %v3091 = vshrl.u32 %v3090, 7
    %v3092 = vsub.s32 0, %v3091
    %v3093 = vrot.slane %v3088, %v3092
    %v3094 = vlaneseq
    %v3095 = vshrl.u32 %v3094, 7
    %v3096 = vsub.s32 1, %v3095
    %v3097 = vrot.slane %v3088, %v3096
    %v3098 = vlaneseq
    %v3099 = vshrl.u32 %v3098, 7
    %v3100 = vsub.s32 2, %v3099
    %v3101 = vrot.slane %v3088, %v3100
    %v3102 = vlaneseq
    %v3103 = vshrl.u32 %v3102, 7
    %v3104 = vsub.s32 3, %v3103
    %v3105 = vrot.slane %v3088, %v3104
    %v3106 = vlaneseq
    %v3107 = vshrl.u32 %v3106, 7
    %v3108 = vsub.s32 4, %v3107
    %v3109 = vrot.slane %v3088, %v3108
    %v3110 = vlaneseq
    %v3111 = vshrl.u32 %v3110, 7
    %v3112 = vsub.s32 5, %v3111
    %v3113 = vrot.slane %v3088, %v3112
    %v3114 = vlaneseq
    %v3115 = vshrl.u32 %v3114, 7
    %v3116 = vsub.s32 6, %v3115
    %v3117 = vrot.slane %v3088, %v3116
    %v3118 = vlaneseq
    %v3119 = vshrl.u32 %v3118, 7
    %v3120 = vsub.s32 7, %v3119
    %v3121 = vrot.slane %v3088, %v3120
    %v3386 = vunpack.c.l.b16 %v2576
    %v3387 = vunpack.c.h.b16 %v2576
    %v3388 = vunpack.c.l.b16 %v2577
    %v3389 = vunpack.c.h.b16 %v2577
    %v3390 = vunpack.c.l.b16 %v2578
    %v3391 = vunpack.c.h.b16 %v2578
    %v3392 = vunpack.c.l.b16 %v2579
    %v3393 = vunpack.c.h.b16 %v2579
    %v3394 = vunpack.c.l.b16 %v2580
    %v3395 = vunpack.c.h.b16 %v2580
    %v3396 = vunpack.c.l.b16 %v2581
    %v3397 = vunpack.c.h.b16 %v2581
    %v3398 = vunpack.c.l.b16 %v2582
    %v3399 = vunpack.c.h.b16 %v2582
    %v3400 = vunpack.c.l.b16 %v2583
    %v3401 = vunpack.c.h.b16 %v2583
    %v3402 = vunpack.c.l.b16 %v2584
    %v3403 = vunpack.c.h.b16 %v2584
    %v3404 = vunpack.c.l.b16 %v2585
    %v3405 = vunpack.c.h.b16 %v2585
    %v3406 = vunpack.c.l.b16 %v2586
    %v3407 = vunpack.c.h.b16 %v2586
    %v3408 = vunpack.c.l.b16 %v2587
    %v3409 = vunpack.c.h.b16 %v2587
    %v3410 = vunpack.c.l.b16 %v2588
    %v3411 = vunpack.c.h.b16 %v2588
    %v3412 = vunpack.c.l.b16 %v2589
    %v3413 = vunpack.c.h.b16 %v2589
    %v3414 = vunpack.c.l.b16 %v2590
    %v3415 = vunpack.c.h.b16 %v2590
    %v3416 = vunpack.c.l.b16 %v2591
    %v3417 = vunpack.c.h.b16 %v2591
    %v3418 = vunpack.c.l.b16 %v2592
    %v3419 = vunpack.c.h.b16 %v2592
    %v3420 = vunpack.c.l.b16 %v2593
    %v3421 = vunpack.c.h.b16 %v2593
    %v3422 = vunpack.c.l.b16 %v2594
    %v3423 = vunpack.c.h.b16 %v2594
    %v3424 = vunpack.c.l.b16 %v2595
    %v3425 = vunpack.c.h.b16 %v2595
    %v3426 = vunpack.c.l.b16 %v2596
    %v3427 = vunpack.c.h.b16 %v2596
    %v3428 = vunpack.c.l.b16 %v2597
    %v3429 = vunpack.c.h.b16 %v2597
    %v3430 = vunpack.c.l.b16 %v2598
    %v3431 = vunpack.c.h.b16 %v2598
    %v3432 = vunpack.c.l.b16 %v2599
    %v3433 = vunpack.c.h.b16 %v2599
    %v3434 = vunpack.c.l.b16 %v2600
    %v3435 = vunpack.c.h.b16 %v2600
    %v3436 = vunpack.c.l.b16 %v2601
    %v3437 = vunpack.c.h.b16 %v2601
    %v3438 = vunpack.c.l.b16 %v2602
    %v3439 = vunpack.c.h.b16 %v2602
    %v3440 = vunpack.c.l.b16 %v2603
    %v3441 = vunpack.c.h.b16 %v2603
    %v3442 = vunpack.c.l.b16 %v2604
    %v3443 = vunpack.c.h.b16 %v2604
    %v3444 = vunpack.c.l.b16 %v2605
    %v3445 = vunpack.c.h.b16 %v2605
    %v3446 = vunpack.c.l.b16 %v2606
    %v3447 = vunpack.c.h.b16 %v2606
    %v3448 = vunpack.c.l.b16 %v2607
    %v3449 = vunpack.c.h.b16 %v2607
    %v3450 = vunpack.c.l.b16 %v2608
    %v3451 = vunpack.c.h.b16 %v2608
    %v3452 = vunpack.c.l.b16 %v2609
    %v3453 = vunpack.c.h.b16 %v2609
    %v3454 = vunpack.c.l.b16 %v2610
    %v3455 = vunpack.c.h.b16 %v2610
    %v3456 = vunpack.c.l.b16 %v2611
    %v3457 = vunpack.c.h.b16 %v2611
    %v3458 = vunpack.c.l.b16 %v2612
    %v3459 = vunpack.c.h.b16 %v2612
    %v3460 = vunpack.c.l.b16 %v2613
    %v3461 = vunpack.c.h.b16 %v2613
    %v3462 = vunpack.c.l.b16 %v2614
    %v3463 = vunpack.c.h.b16 %v2614
    %v3464 = vunpack.c.l.b16 %v2615
    %v3465 = vunpack.c.h.b16 %v2615
    %v3466 = vunpack.c.l.b16 %v2616
    %v3467 = vunpack.c.h.b16 %v2616
    %v3468 = vunpack.c.l.b16 %v2617
    %v3469 = vunpack.c.h.b16 %v2617
    %v3470 = vunpack.c.l.b16 %v2618
    %v3471 = vunpack.c.h.b16 %v2618
    %v3472 = vunpack.c.l.b16 %v2619
    %v3473 = vunpack.c.h.b16 %v2619
    %v3474 = vunpack.c.l.b16 %v2620
    %v3475 = vunpack.c.h.b16 %v2620
    %v3476 = vunpack.c.l.b16 %v2621
    %v3477 = vunpack.c.h.b16 %v2621
    %v3478 = vunpack.c.l.b16 %v2622
    %v3479 = vunpack.c.h.b16 %v2622
    %v3480 = vunpack.c.l.b16 %v2623
    %v3481 = vunpack.c.h.b16 %v2623
    %v3482 = vunpack.c.l.b16 %v2624
    %v3483 = vunpack.c.h.b16 %v2624
    %v3484 = vunpack.c.l.b16 %v2625
    %v3485 = vunpack.c.h.b16 %v2625
    %v3486 = vunpack.c.l.b16 %v2626
    %v3487 = vunpack.c.h.b16 %v2626
    %v3488 = vunpack.c.l.b16 %v2627
    %v3489 = vunpack.c.h.b16 %v2627
    %v3490 = vunpack.c.l.b16 %v2628
    %v3491 = vunpack.c.h.b16 %v2628
    %v3492 = vunpack.c.l.b16 %v2629
    %v3493 = vunpack.c.h.b16 %v2629
    %v3494 = vunpack.c.l.b16 %v2630
    %v3495 = vunpack.c.h.b16 %v2630
    %v3496 = vunpack.c.l.b16 %v2631
    %v3497 = vunpack.c.h.b16 %v2631
    %v3498 = vunpack.c.l.b16 %v2632
    %v3499 = vunpack.c.h.b16 %v2632
    %v3500 = vunpack.c.l.b16 %v2633
    %v3501 = vunpack.c.h.b16 %v2633
    %v3502 = vunpack.c.l.b16 %v2634
    %v3503 = vunpack.c.h.b16 %v2634
    %v3504 = vunpack.c.l.b16 %v2635
    %v3505 = vunpack.c.h.b16 %v2635
    %v3506 = vunpack.c.l.b16 %v2636
    %v3507 = vunpack.c.h.b16 %v2636
    %v3508 = vunpack.c.l.b16 %v2637
    %v3509 = vunpack.c.h.b16 %v2637
    %v3510 = vunpack.c.l.b16 %v2638
    %v3511 = vunpack.c.h.b16 %v2638
    %v3512 = vunpack.c.l.b16 %v2639
    %v3513 = vunpack.c.h.b16 %v2639
    %v3514 = vunpack.c.l.b16 %v2640
    %v3515 = vunpack.c.h.b16 %v2640
    %v3516 = vunpack.c.l.b16 %v2641
    %v3517 = vunpack.c.h.b16 %v2641
    %v3518 = vunpack.c.l.b16 %v2642
    %v3519 = vunpack.c.h.b16 %v2642
    %v3520 = vunpack.c.l.b16 %v2643
    %v3521 = vunpack.c.h.b16 %v2643
    %v3522 = vunpack.c.l.b16 %v2644
    %v3523 = vunpack.c.h.b16 %v2644
    %v3524 = vunpack.c.l.b16 %v2645
    %v3525 = vunpack.c.h.b16 %v2645
    %v3526 = vunpack.c.l.b16 %v2646
    %v3527 = vunpack.c.h.b16 %v2646
    %v3528 = vunpack.c.l.b16 %v2647
    %v3529 = vunpack.c.h.b16 %v2647
    %v3530 = vunpack.c.l.b16 %v2648
    %v3531 = vunpack.c.h.b16 %v2648
    %v3532 = vunpack.c.l.b16 %v2649
    %v3533 = vunpack.c.h.b16 %v2649
    %v3534 = vunpack.c.l.b16 %v2650
    %v3535 = vunpack.c.h.b16 %v2650
    %v3536 = vunpack.c.l.b16 %v2651
    %v3537 = vunpack.c.h.b16 %v2651
    %v3538 = vunpack.c.l.b16 %v2652
    %v3539 = vunpack.c.h.b16 %v2652
    %v3540 = vunpack.c.l.b16 %v2653
    %v3541 = vunpack.c.h.b16 %v2653
    %v3542 = vunpack.c.l.b16 %v2654
    %v3543 = vunpack.c.h.b16 %v2654
    %v3544 = vunpack.c.l.b16 %v2655
    %v3545 = vunpack.c.h.b16 %v2655
    %v3546 = vunpack.c.l.b16 %v2656
    %v3547 = vunpack.c.h.b16 %v2656
    %v3548 = vunpack.c.l.b16 %v2657
    %v3549 = vunpack.c.h.b16 %v2657
    %v3550 = vunpack.c.l.b16 %v2658
    %v3551 = vunpack.c.h.b16 %v2658
    %v3552 = vunpack.c.l.b16 %v2659
    %v3553 = vunpack.c.h.b16 %v2659
    %v3554 = vunpack.c.l.b16 %v2660
    %v3555 = vunpack.c.h.b16 %v2660
    %v3556 = vunpack.c.l.b16 %v2661
    %v3557 = vunpack.c.h.b16 %v2661
    %v3558 = vunpack.c.l.b16 %v2662
    %v3559 = vunpack.c.h.b16 %v2662
    %v3560 = vunpack.c.l.b16 %v2663
    %v3561 = vunpack.c.h.b16 %v2663
    %v3562 = vunpack.c.l.b16 %v2664
    %v3563 = vunpack.c.h.b16 %v2664
    %v3564 = vunpack.c.l.b16 %v2665
    %v3565 = vunpack.c.h.b16 %v2665
    %v3566 = vunpack.c.l.b16 %v2666
    %v3567 = vunpack.c.h.b16 %v2666
    %v3568 = vunpack.c.l.b16 %v2667
    %v3569 = vunpack.c.h.b16 %v2667
    %v3570 = vunpack.c.l.b16 %v2668
    %v3571 = vunpack.c.h.b16 %v2668
    %v3572 = vunpack.c.l.b16 %v2669
    %v3573 = vunpack.c.h.b16 %v2669
    %v3574 = vunpack.c.l.b16 %v2670
    %v3575 = vunpack.c.h.b16 %v2670
    %v3576 = vunpack.c.l.b16 %v2671
    %v3577 = vunpack.c.h.b16 %v2671
    %v3578 = vunpack.c.l.b16 %v2672
    %v3579 = vunpack.c.h.b16 %v2672
    %v3580 = vunpack.c.l.b16 %v2673
    %v3581 = vunpack.c.h.b16 %v2673
    %v3582 = vunpack.c.l.b16 %v2674
    %v3583 = vunpack.c.h.b16 %v2674
    %v3584 = vunpack.c.l.b16 %v2675
    %v3585 = vunpack.c.h.b16 %v2675
    %v3586 = vunpack.c.l.b16 %v2676
    %v3587 = vunpack.c.h.b16 %v2676
    %v3588 = vunpack.c.l.b16 %v2677
    %v3589 = vunpack.c.h.b16 %v2677
    %v3590 = vunpack.c.l.b16 %v2678
    %v3591 = vunpack.c.h.b16 %v2678
    %v3592 = vunpack.c.l.b16 %v2679
    %v3593 = vunpack.c.h.b16 %v2679
    %v3594 = vunpack.c.l.b16 %v2680
    %v3595 = vunpack.c.h.b16 %v2680
    %v3596 = vunpack.c.l.b16 %v2681
    %v3597 = vunpack.c.h.b16 %v2681
    %v3598 = vunpack.c.l.b16 %v2682
    %v3599 = vunpack.c.h.b16 %v2682
    %v3600 = vunpack.c.l.b16 %v2683
    %v3601 = vunpack.c.h.b16 %v2683
    %v3602 = vunpack.c.l.b16 %v2684
    %v3603 = vunpack.c.h.b16 %v2684
    %v3604 = vunpack.c.l.b16 %v2685
    %v3605 = vunpack.c.h.b16 %v2685
    %v3606 = vunpack.c.l.b16 %v2686
    %v3607 = vunpack.c.h.b16 %v2686
    %v3608 = vunpack.c.l.b16 %v2687
    %v3609 = vunpack.c.h.b16 %v2687
    %v3610 = vunpack.c.l.b16 %v2688
    %v3611 = vunpack.c.h.b16 %v2688
    %v3612 = vunpack.c.l.b16 %v2689
    %v3613 = vunpack.c.h.b16 %v2689
    %v3614 = vunpack.c.l.b16 %v2690
    %v3615 = vunpack.c.h.b16 %v2690
    %v3616 = vunpack.c.l.b16 %v2691
    %v3617 = vunpack.c.h.b16 %v2691
    %v3618 = vunpack.c.l.b16 %v2692
    %v3619 = vunpack.c.h.b16 %v2692
    %v3620 = vunpack.c.l.b16 %v2693
    %v3621 = vunpack.c.h.b16 %v2693
    %v3622 = vunpack.c.l.b16 %v2694
    %v3623 = vunpack.c.h.b16 %v2694
    %v3624 = vunpack.c.l.b16 %v2695
    %v3625 = vunpack.c.h.b16 %v2695
    %v3626 = vunpack.c.l.b16 %v2696
    %v3627 = vunpack.c.h.b16 %v2696
    %v3628 = vunpack.c.l.b16 %v2697
    %v3629 = vunpack.c.h.b16 %v2697
    %v3630 = vunpack.c.l.b16 %v2698
    %v3631 = vunpack.c.h.b16 %v2698
    %v3632 = vunpack.c.l.b16 %v2699
    %v3633 = vunpack.c.h.b16 %v2699
    %v3634 = vunpack.c.l.b16 %v2700
    %v3635 = vunpack.c.h.b16 %v2700
    %v3636 = vunpack.c.l.b16 %v2701
    %v3637 = vunpack.c.h.b16 %v2701
    %v3638 = vunpack.c.l.b16 %v2702
    %v3639 = vunpack.c.h.b16 %v2702
    %v3640 = vunpack.c.l.b16 %v2703
    %v3641 = vunpack.c.h.b16 %v2703
    %v3642 = vunpack.c.l.b16 %v2704
    %v3643 = vunpack.c.h.b16 %v2704
    %v3644 = vunpack.c.l.b16 %v2705
    %v3645 = vunpack.c.h.b16 %v2705
    %v3646 = vunpack.c.l.b16 %v2706
    %v3647 = vunpack.c.h.b16 %v2706
    %v3648 = vunpack.c.l.b16 %v2707
    %v3649 = vunpack.c.h.b16 %v2707
    %v3650 = vunpack.c.l.b16 %v2708
    %v3651 = vunpack.c.h.b16 %v2708
    %v3652 = vunpack.c.l.b16 %v2709
    %v3653 = vunpack.c.h.b16 %v2709
    %v3654 = vunpack.c.l.b16 %v2710
    %v3655 = vunpack.c.h.b16 %v2710
    %v3656 = vunpack.c.l.b16 %v2711
    %v3657 = vunpack.c.h.b16 %v2711
    %v3658 = vunpack.c.l.b16 %v2712
    %v3659 = vunpack.c.h.b16 %v2712
    %v3660 = vunpack.c.l.b16 %v2713
    %v3661 = vunpack.c.h.b16 %v2713
    %v3662 = vunpack.c.l.b16 %v2714
    %v3663 = vunpack.c.h.b16 %v2714
    %v3664 = vunpack.c.l.b16 %v2715
    %v3665 = vunpack.c.h.b16 %v2715
    %v3666 = vunpack.c.l.b16 %v2716
    %v3667 = vunpack.c.h.b16 %v2716
    %v3668 = vunpack.c.l.b16 %v2717
    %v3669 = vunpack.c.h.b16 %v2717
    %v3670 = vunpack.c.l.b16 %v2718
    %v3671 = vunpack.c.h.b16 %v2718
    %v3672 = vunpack.c.l.b16 %v2719
    %v3673 = vunpack.c.h.b16 %v2719
    %v3674 = vunpack.c.l.b16 %v2720
    %v3675 = vunpack.c.h.b16 %v2720
    %v3676 = vunpack.c.l.b16 %v2721
    %v3677 = vunpack.c.h.b16 %v2721
    %v3678 = vunpack.c.l.b16 %v2722
    %v3679 = vunpack.c.h.b16 %v2722
    %v3680 = vunpack.c.l.b16 %v2723
    %v3681 = vunpack.c.h.b16 %v2723
    %v3682 = vunpack.c.l.b16 %v2724
    %v3683 = vunpack.c.h.b16 %v2724
    %v3684 = vunpack.c.l.b16 %v2725
    %v3685 = vunpack.c.h.b16 %v2725
    %v3686 = vunpack.c.l.b16 %v2726
    %v3687 = vunpack.c.h.b16 %v2726
    %v3688 = vunpack.c.l.b16 %v2727
    %v3689 = vunpack.c.h.b16 %v2727
    %v3690 = vunpack.c.l.b16 %v2728
    %v3691 = vunpack.c.h.b16 %v2728
    %v3692 = vunpack.c.l.b16 %v2729
    %v3693 = vunpack.c.h.b16 %v2729
    %v3694 = vunpack.c.l.b16 %v2730
    %v3695 = vunpack.c.h.b16 %v2730
    %v3696 = vunpack.c.l.b16 %v2731
    %v3697 = vunpack.c.h.b16 %v2731
    %v3698 = vunpack.c.l.b16 %v2732
    %v3699 = vunpack.c.h.b16 %v2732
    %v3700 = vunpack.c.l.b16 %v2733
    %v3701 = vunpack.c.h.b16 %v2733
    %v3702 = vunpack.c.l.b16 %v2734
    %v3703 = vunpack.c.h.b16 %v2734
    %v3704 = vunpack.c.l.b16 %v2735
    %v3705 = vunpack.c.h.b16 %v2735
    %v3706 = vunpack.c.l.b16 %v2736
    %v3707 = vunpack.c.h.b16 %v2736
    %v3708 = vunpack.c.l.b16 %v2737
    %v3709 = vunpack.c.h.b16 %v2737
    %v3710 = vunpack.c.l.b16 %v2738
    %v3711 = vunpack.c.h.b16 %v2738
    %v3712 = vunpack.c.l.b16 %v2739
    %v3713 = vunpack.c.h.b16 %v2739
    %v3714 = vunpack.c.l.b16 %v2740
    %v3715 = vunpack.c.h.b16 %v2740
    %v3716 = vunpack.c.l.b16 %v2741
    %v3717 = vunpack.c.h.b16 %v2741
    %v3718 = vunpack.c.l.b16 %v2742
    %v3719 = vunpack.c.h.b16 %v2742
    %v3720 = vunpack.c.l.b16 %v2743
    %v3721 = vunpack.c.h.b16 %v2743
    %v3722 = vunpack.c.l.b16 %v2744
    %v3723 = vunpack.c.h.b16 %v2744
    %v3724 = vunpack.c.l.b16 %v2745
    %v3725 = vunpack.c.h.b16 %v2745
    %v3726 = vunpack.c.l.b16 %v2746
    %v3727 = vunpack.c.h.b16 %v2746
    %v3728 = vunpack.c.l.b16 %v2747
    %v3729 = vunpack.c.h.b16 %v2747
    %v3730 = vunpack.c.l.b16 %v2748
    %v3731 = vunpack.c.h.b16 %v2748
    %v3732 = vunpack.c.l.b16 %v2749
    %v3733 = vunpack.c.h.b16 %v2749
    %v3734 = vunpack.c.l.b16 %v2750
    %v3735 = vunpack.c.h.b16 %v2750
    %v3736 = vunpack.c.l.b16 %v2751
    %v3737 = vunpack.c.h.b16 %v2751
    %v3738 = vunpack.c.l.b16 %v2752
    %v3739 = vunpack.c.h.b16 %v2752
    %v3740 = vunpack.c.l.b16 %v2753
    %v3741 = vunpack.c.h.b16 %v2753
    %v3742 = vunpack.c.l.b16 %v2754
    %v3743 = vunpack.c.h.b16 %v2754
    %v3744 = vunpack.c.l.b16 %v2755
    %v3745 = vunpack.c.h.b16 %v2755
    %v3746 = vunpack.c.l.b16 %v2756
    %v3747 = vunpack.c.h.b16 %v2756
    %v3748 = vunpack.c.l.b16 %v2757
    %v3749 = vunpack.c.h.b16 %v2757
    %v3750 = vunpack.c.l.b16 %v2758
    %v3751 = vunpack.c.h.b16 %v2758
    %v3752 = vunpack.c.l.b16 %v2759
    %v3753 = vunpack.c.h.b16 %v2759
    %v3754 = vunpack.c.l.b16 %v2760
    %v3755 = vunpack.c.h.b16 %v2760
    %v3756 = vunpack.c.l.b16 %v2761
    %v3757 = vunpack.c.h.b16 %v2761
    %v3758 = vunpack.c.l.b16 %v2762
    %v3759 = vunpack.c.h.b16 %v2762
    %v3760 = vunpack.c.l.b16 %v2763
    %v3761 = vunpack.c.h.b16 %v2763
    %v3762 = vunpack.c.l.b16 %v2764
    %v3763 = vunpack.c.h.b16 %v2764
    %v3764 = vunpack.c.l.b16 %v2765
    %v3765 = vunpack.c.h.b16 %v2765
    %v3766 = vunpack.c.l.b16 %v2766
    %v3767 = vunpack.c.h.b16 %v2766
    %v3768 = vunpack.c.l.b16 %v2767
    %v3769 = vunpack.c.h.b16 %v2767
    %v3770 = vunpack.c.l.b16 %v2768
    %v3771 = vunpack.c.h.b16 %v2768
    %v3772 = vunpack.c.l.b16 %v2769
    %v3773 = vunpack.c.h.b16 %v2769
    %v3774 = vunpack.c.l.b16 %v2770
    %v3775 = vunpack.c.h.b16 %v2770
    %v3776 = vunpack.c.l.b16 %v2771
    %v3777 = vunpack.c.h.b16 %v2771
    %v3778 = vunpack.c.l.b16 %v2772
    %v3779 = vunpack.c.h.b16 %v2772
    %v3780 = vunpack.c.l.b16 %v2773
    %v3781 = vunpack.c.h.b16 %v2773
    %v3782 = vunpack.c.l.b16 %v2774
    %v3783 = vunpack.c.h.b16 %v2774
    %v3784 = vunpack.c.l.b16 %v2775
    %v3785 = vunpack.c.h.b16 %v2775
    %v3786 = vunpack.c.l.b16 %v2776
    %v3787 = vunpack.c.h.b16 %v2776
    %v3788 = vunpack.c.l.b16 %v2777
    %v3789 = vunpack.c.h.b16 %v2777
    %v3790 = vunpack.c.l.b16 %v2778
    %v3791 = vunpack.c.h.b16 %v2778
    %v3792 = vunpack.c.l.b16 %v2779
    %v3793 = vunpack.c.h.b16 %v2779
    %v3794 = vunpack.c.l.b16 %v2780
    %v3795 = vunpack.c.h.b16 %v2780
    %v3796 = vunpack.c.l.b16 %v2781
    %v3797 = vunpack.c.h.b16 %v2781
    %v3798 = vunpack.c.l.b16 %v2782
    %v3799 = vunpack.c.h.b16 %v2782
    %v3800 = vunpack.c.l.b16 %v2783
    %v3801 = vunpack.c.h.b16 %v2783
    %v3802 = vunpack.c.l.b16 %v2784
    %v3803 = vunpack.c.h.b16 %v2784
    %v3804 = vunpack.c.l.b16 %v2785
    %v3805 = vunpack.c.h.b16 %v2785
    %v3806 = vunpack.c.l.b16 %v2786
    %v3807 = vunpack.c.h.b16 %v2786
    %v3808 = vunpack.c.l.b16 %v2787
    %v3809 = vunpack.c.h.b16 %v2787
    %v3810 = vunpack.c.l.b16 %v2788
    %v3811 = vunpack.c.h.b16 %v2788
    %v3812 = vunpack.c.l.b16 %v2789
    %v3813 = vunpack.c.h.b16 %v2789
    %v3814 = vunpack.c.l.b16 %v2790
    %v3815 = vunpack.c.h.b16 %v2790
    %v3816 = vunpack.c.l.b16 %v2791
    %v3817 = vunpack.c.h.b16 %v2791
    %v3818 = vunpack.c.l.b16 %v2792
    %v3819 = vunpack.c.h.b16 %v2792
    %v3820 = vunpack.c.l.b16 %v2793
    %v3821 = vunpack.c.h.b16 %v2793
    %v3822 = vunpack.c.l.b16 %v2794
    %v3823 = vunpack.c.h.b16 %v2794
    %v3824 = vunpack.c.l.b16 %v2795
    %v3825 = vunpack.c.h.b16 %v2795
    %v3826 = vunpack.c.l.b16 %v2796
    %v3827 = vunpack.c.h.b16 %v2796
    %v3828 = vunpack.c.l.b16 %v2797
    %v3829 = vunpack.c.h.b16 %v2797
    %v3830 = vunpack.c.l.b16 %v2798
    %v3831 = vunpack.c.h.b16 %v2798
    %v3832 = vunpack.c.l.b16 %v2799
    %v3833 = vunpack.c.h.b16 %v2799
    %v3834 = vunpack.c.l.b16 %v2800
    %v3835 = vunpack.c.h.b16 %v2800
    %v3836 = vunpack.c.l.b16 %v2801
    %v3837 = vunpack.c.h.b16 %v2801
    %v3838 = vunpack.c.l.b16 %v2802
    %v3839 = vunpack.c.h.b16 %v2802
    %v3840 = vunpack.c.l.b16 %v2803
    %v3841 = vunpack.c.h.b16 %v2803
    %v3842 = vunpack.c.l.b16 %v2804
    %v3843 = vunpack.c.h.b16 %v2804
    %v3844 = vunpack.c.l.b16 %v2805
    %v3845 = vunpack.c.h.b16 %v2805
    %v3846 = vunpack.c.l.b16 %v2806
    %v3847 = vunpack.c.h.b16 %v2806
    %v3848 = vunpack.c.l.b16 %v2807
    %v3849 = vunpack.c.h.b16 %v2807
    %v3850 = vunpack.c.l.b16 %v2808
    %v3851 = vunpack.c.h.b16 %v2808
    %v3852 = vunpack.c.l.b16 %v2809
    %v3853 = vunpack.c.h.b16 %v2809
    %v3854 = vunpack.c.l.b16 %v2810
    %v3855 = vunpack.c.h.b16 %v2810
    %v3856 = vunpack.c.l.b16 %v2811
    %v3857 = vunpack.c.h.b16 %v2811
    %v3858 = vunpack.c.l.b16 %v2812
    %v3859 = vunpack.c.h.b16 %v2812
    %v3860 = vunpack.c.l.b16 %v2813
    %v3861 = vunpack.c.h.b16 %v2813
    %v3862 = vunpack.c.l.b16 %v2814
    %v3863 = vunpack.c.h.b16 %v2814
    %v3864 = vunpack.c.l.b16 %v2815
    %v3865 = vunpack.c.h.b16 %v2815
    %v3866 = vunpack.c.l.b16 %v2816
    %v3867 = vunpack.c.h.b16 %v2816
    %v3868 = vunpack.c.l.b16 %v2817
    %v3869 = vunpack.c.h.b16 %v2817
    %v3870 = vunpack.c.l.b16 %v2818
    %v3871 = vunpack.c.h.b16 %v2818
    %v3872 = vunpack.c.l.b16 %v2819
    %v3873 = vunpack.c.h.b16 %v2819
    %v3874 = vunpack.c.l.b16 %v2820
    %v3875 = vunpack.c.h.b16 %v2820
    %v3876 = vunpack.c.l.b16 %v2821
    %v3877 = vunpack.c.h.b16 %v2821
    %v3878 = vunpack.c.l.b16 %v2822
    %v3879 = vunpack.c.h.b16 %v2822
    %v3880 = vunpack.c.l.b16 %v2823
    %v3881 = vunpack.c.h.b16 %v2823
    %v3882 = vunpack.c.l.b16 %v2824
    %v3883 = vunpack.c.h.b16 %v2824
    %v3884 = vunpack.c.l.b16 %v2825
    %v3885 = vunpack.c.h.b16 %v2825
    %v3886 = vunpack.c.l.b16 %v2826
    %v3887 = vunpack.c.h.b16 %v2826
    %v3888 = vunpack.c.l.b16 %v2827
    %v3889 = vunpack.c.h.b16 %v2827
    %v3890 = vunpack.c.l.b16 %v2828
    %v3891 = vunpack.c.h.b16 %v2828
    %v3892 = vunpack.c.l.b16 %v2829
    %v3893 = vunpack.c.h.b16 %v2829
    %v3894 = vunpack.c.l.b16 %v2830
    %v3895 = vunpack.c.h.b16 %v2830
    %v3896 = vunpack.c.l.b16 %v2831
    %v3897 = vunpack.c.h.b16 %v2831
    %v3898 = vlaneseq
    %v3899 = vand.u32 %v3898, 127
    %v3900 = vlaneseq
    %v3901 = vshrl.u32 %v3900, 7
    %v3902 = vsub.s32 %v3899, %v3901
    %v3903 = vrot.slane %v3386, %v3902
    %v3904 = vadd.s32 %v3899, 4294967288
    %v3905 = vlaneseq
    %v3906 = vshrl.u32 %v3905, 7
    %v3907 = vsub.s32 %v3904, %v3906
    %v3908 = vrot.slane %v3387, %v3907
    %vm3909 = vcmask 130112
    %v3910 = vsel %vm3909, %v3908, %v3903
    %v3911 = vadd.s32 %v3899, 4294967280
    %v3912 = vlaneseq
    %v3913 = vshrl.u32 %v3912, 7
    %v3914 = vsub.s32 %v3911, %v3913
    %v3915 = vrot.slane %v3388, %v3914
    %vm3916 = vcmask 195712
    %v3917 = vsel %vm3916, %v3915, %v3910
    %v3918 = vadd.s32 %v3899, 4294967272
    %v3919 = vlaneseq
    %v3920 = vshrl.u32 %v3919, 7
    %v3921 = vsub.s32 %v3918, %v3920
    %v3922 = vrot.slane %v3389, %v3921
    %vm3923 = vcmask 261312
    %v3924 = vsel %vm3923, %v3922, %v3917
    %v3925 = vadd.s32 %v3899, 4294967264
    %v3926 = vlaneseq
    %v3927 = vshrl.u32 %v3926, 7
    %v3928 = vsub.s32 %v3925, %v3927
    %v3929 = vrot.slane %v3390, %v3928
    %vm3930 = vcmask 326912
    %v3931 = vsel %vm3930, %v3929, %v3924
    %v3932 = vadd.s32 %v3899, 4294967256
    %v3933 = vlaneseq
    %v3934 = vshrl.u32 %v3933, 7
    %v3935 = vsub.s32 %v3932, %v3934
    %v3936 = vrot.slane %v3391, %v3935
    %vm3937 = vcmask 392512
    %v3938 = vsel %vm3937, %v3936, %v3931
    %v3939 = vadd.s32 %v3899, 4294967248
    %v3940 = vlaneseq
    %v3941 = vshrl.u32 %v3940, 7
    %v3942 = vsub.s32 %v3939, %v3941
    %v3943 = vrot.slane %v3392, %v3942
    %vm3944 = vcmask 458112
    %v3945 = vsel %vm3944, %v3943, %v3938
    %v3946 = vadd.s32 %v3899, 4294967240
    %v3947 = vlaneseq
    %v3948 = vshrl.u32 %v3947, 7
    %v3949 = vsub.s32 %v3946, %v3948
    %v3950 = vrot.slane %v3393, %v3949
    %vm3951 = vcmask 523712
    %v3952 = vsel %vm3951, %v3950, %v3945
    %v3953 = vadd.s32 %v3899, 4294967232
    %v3954 = vlaneseq
    %v3955 = vshrl.u32 %v3954, 7
    %v3956 = vsub.s32 %v3953, %v3955
    %v3957 = vrot.slane %v3394, %v3956
    %vm3958 = vcmask 589312
    %v3959 = vsel %vm3958, %v3957, %v3952
    %v3960 = vadd.s32 %v3899, 4294967224
    %v3961 = vlaneseq
    %v3962 = vshrl.u32 %v3961, 7
    %v3963 = vsub.s32 %v3960, %v3962
    %v3964 = vrot.slane %v3395, %v3963
    %vm3965 = vcmask 654912
    %v3966 = vsel %vm3965, %v3964, %v3959
    %v3967 = vadd.s32 %v3899, 4294967216
    %v3968 = vlaneseq
    %v3969 = vshrl.u32 %v3968, 7
    %v3970 = vsub.s32 %v3967, %v3969
    %v3971 = vrot.slane %v3396, %v3970
    %vm3972 = vcmask 720512
    %v3973 = vsel %vm3972, %v3971, %v3966
    %v3974 = vadd.s32 %v3899, 4294967208
    %v3975 = vlaneseq
    %v3976 = vshrl.u32 %v3975, 7
    %v3977 = vsub.s32 %v3974, %v3976
    %v3978 = vrot.slane %v3397, %v3977
    %vm3979 = vcmask 786112
    %v3980 = vsel %vm3979, %v3978, %v3973
    %v3981 = vadd.s32 %v3899, 4294967200
    %v3982 = vlaneseq
    %v3983 = vshrl.u32 %v3982, 7
    %v3984 = vsub.s32 %v3981, %v3983
    %v3985 = vrot.slane %v3398, %v3984
    %vm3986 = vcmask 851712
    %v3987 = vsel %vm3986, %v3985, %v3980
    %v3988 = vadd.s32 %v3899, 4294967192
    %v3989 = vlaneseq
    %v3990 = vshrl.u32 %v3989, 7
    %v3991 = vsub.s32 %v3988, %v3990
    %v3992 = vrot.slane %v3399, %v3991
    %vm3993 = vcmask 917312
    %v3994 = vsel %vm3993, %v3992, %v3987
    %v3995 = vadd.s32 %v3899, 4294967184
    %v3996 = vlaneseq
    %v3997 = vshrl.u32 %v3996, 7
    %v3998 = vsub.s32 %v3995, %v3997
    %v3999 = vrot.slane %v3400, %v3998
    %vm4000 = vcmask 982912
    %v4001 = vsel %vm4000, %v3999, %v3994
    %v4002 = vadd.s32 %v3899, 4294967176
    %v4003 = vlaneseq
    %v4004 = vshrl.u32 %v4003, 7
    %v4005 = vsub.s32 %v4002, %v4004
    %v4006 = vrot.slane %v3401, %v4005
    %vm4007 = vcmask 1048512
    %v4008 = vsel %vm4007, %v4006, %v4001
    %v4009 = vlaneseq
    %v4010 = vshrl.u32 %v4009, 7
    %v4011 = vsub.s32 %v3899, %v4010
    %v4012 = vrot.slane %v3402, %v4011
    %v4013 = vlaneseq
    %v4014 = vshrl.u32 %v4013, 7
    %v4015 = vsub.s32 %v3904, %v4014
    %v4016 = vrot.slane %v3403, %v4015
    %v4017 = vsel %vm3909, %v4016, %v4012
    %v4018 = vlaneseq
    %v4019 = vshrl.u32 %v4018, 7
    %v4020 = vsub.s32 %v3911, %v4019
    %v4021 = vrot.slane %v3404, %v4020
    %v4022 = vsel %vm3916, %v4021, %v4017
    %v4023 = vlaneseq
    %v4024 = vshrl.u32 %v4023, 7
    %v4025 = vsub.s32 %v3918, %v4024
    %v4026 = vrot.slane %v3405, %v4025
    %v4027 = vsel %vm3923, %v4026, %v4022
    %v4028 = vlaneseq
    %v4029 = vshrl.u32 %v4028, 7
    %v4030 = vsub.s32 %v3925, %v4029
    %v4031 = vrot.slane %v3406, %v4030
    %v4032 = vsel %vm3930, %v4031, %v4027
    %v4033 = vlaneseq
    %v4034 = vshrl.u32 %v4033, 7
    %v4035 = vsub.s32 %v3932, %v4034
    %v4036 = vrot.slane %v3407, %v4035
    %v4037 = vsel %vm3937, %v4036, %v4032
    %v4038 = vlaneseq
    %v4039 = vshrl.u32 %v4038, 7
    %v4040 = vsub.s32 %v3939, %v4039
    %v4041 = vrot.slane %v3408, %v4040
    %v4042 = vsel %vm3944, %v4041, %v4037
    %v4043 = vlaneseq
    %v4044 = vshrl.u32 %v4043, 7
    %v4045 = vsub.s32 %v3946, %v4044
    %v4046 = vrot.slane %v3409, %v4045
    %v4047 = vsel %vm3951, %v4046, %v4042
    %v4048 = vlaneseq
    %v4049 = vshrl.u32 %v4048, 7
    %v4050 = vsub.s32 %v3953, %v4049
    %v4051 = vrot.slane %v3410, %v4050
    %v4052 = vsel %vm3958, %v4051, %v4047
    %v4053 = vlaneseq
    %v4054 = vshrl.u32 %v4053, 7
    %v4055 = vsub.s32 %v3960, %v4054
    %v4056 = vrot.slane %v3411, %v4055
    %v4057 = vsel %vm3965, %v4056, %v4052
    %v4058 = vlaneseq
    %v4059 = vshrl.u32 %v4058, 7
    %v4060 = vsub.s32 %v3967, %v4059
    %v4061 = vrot.slane %v3412, %v4060
    %v4062 = vsel %vm3972, %v4061, %v4057
    %v4063 = vlaneseq
    %v4064 = vshrl.u32 %v4063, 7
    %v4065 = vsub.s32 %v3974, %v4064
    %v4066 = vrot.slane %v3413, %v4065
    %v4067 = vsel %vm3979, %v4066, %v4062
    %v4068 = vlaneseq
    %v4069 = vshrl.u32 %v4068, 7
    %v4070 = vsub.s32 %v3981, %v4069
    %v4071 = vrot.slane %v3414, %v4070
    %v4072 = vsel %vm3986, %v4071, %v4067
    %v4073 = vlaneseq
    %v4074 = vshrl.u32 %v4073, 7
    %v4075 = vsub.s32 %v3988, %v4074
    %v4076 = vrot.slane %v3415, %v4075
    %v4077 = vsel %vm3993, %v4076, %v4072
    %v4078 = vlaneseq
    %v4079 = vshrl.u32 %v4078, 7
    %v4080 = vsub.s32 %v3995, %v4079
    %v4081 = vrot.slane %v3416, %v4080
    %v4082 = vsel %vm4000, %v4081, %v4077
    %v4083 = vlaneseq
    %v4084 = vshrl.u32 %v4083, 7
    %v4085 = vsub.s32 %v4002, %v4084
    %v4086 = vrot.slane %v3417, %v4085
    %v4087 = vsel %vm4007, %v4086, %v4082
    %v4088 = vlaneseq
    %v4089 = vshrl.u32 %v4088, 7
    %v4090 = vsub.s32 %v3899, %v4089
    %v4091 = vrot.slane %v3418, %v4090
    %v4092 = vlaneseq
    %v4093 = vshrl.u32 %v4092, 7
    %v4094 = vsub.s32 %v3904, %v4093
    %v4095 = vrot.slane %v3419, %v4094
    %v4096 = vsel %vm3909, %v4095, %v4091
    %v4097 = vlaneseq
    %v4098 = vshrl.u32 %v4097, 7
    %v4099 = vsub.s32 %v3911, %v4098
    %v4100 = vrot.slane %v3420, %v4099
    %v4101 = vsel %vm3916, %v4100, %v4096
    %v4102 = vlaneseq
    %v4103 = vshrl.u32 %v4102, 7
    %v4104 = vsub.s32 %v3918, %v4103
    %v4105 = vrot.slane %v3421, %v4104
    %v4106 = vsel %vm3923, %v4105, %v4101
    %v4107 = vlaneseq
    %v4108 = vshrl.u32 %v4107, 7
    %v4109 = vsub.s32 %v3925, %v4108
    %v4110 = vrot.slane %v3422, %v4109
    %v4111 = vsel %vm3930, %v4110, %v4106
    %v4112 = vlaneseq
    %v4113 = vshrl.u32 %v4112, 7
    %v4114 = vsub.s32 %v3932, %v4113
    %v4115 = vrot.slane %v3423, %v4114
    %v4116 = vsel %vm3937, %v4115, %v4111
    %v4117 = vlaneseq
    %v4118 = vshrl.u32 %v4117, 7
    %v4119 = vsub.s32 %v3939, %v4118
    %v4120 = vrot.slane %v3424, %v4119
    %v4121 = vsel %vm3944, %v4120, %v4116
    %v4122 = vlaneseq
    %v4123 = vshrl.u32 %v4122, 7
    %v4124 = vsub.s32 %v3946, %v4123
    %v4125 = vrot.slane %v3425, %v4124
    %v4126 = vsel %vm3951, %v4125, %v4121
    %v4127 = vlaneseq
    %v4128 = vshrl.u32 %v4127, 7
    %v4129 = vsub.s32 %v3953, %v4128
    %v4130 = vrot.slane %v3426, %v4129
    %v4131 = vsel %vm3958, %v4130, %v4126
    %v4132 = vlaneseq
    %v4133 = vshrl.u32 %v4132, 7
    %v4134 = vsub.s32 %v3960, %v4133
    %v4135 = vrot.slane %v3427, %v4134
    %v4136 = vsel %vm3965, %v4135, %v4131
    %v4137 = vlaneseq
    %v4138 = vshrl.u32 %v4137, 7
    %v4139 = vsub.s32 %v3967, %v4138
    %v4140 = vrot.slane %v3428, %v4139
    %v4141 = vsel %vm3972, %v4140, %v4136
    %v4142 = vlaneseq
    %v4143 = vshrl.u32 %v4142, 7
    %v4144 = vsub.s32 %v3974, %v4143
    %v4145 = vrot.slane %v3429, %v4144
    %v4146 = vsel %vm3979, %v4145, %v4141
    %v4147 = vlaneseq
    %v4148 = vshrl.u32 %v4147, 7
    %v4149 = vsub.s32 %v3981, %v4148
    %v4150 = vrot.slane %v3430, %v4149
    %v4151 = vsel %vm3986, %v4150, %v4146
    %v4152 = vlaneseq
    %v4153 = vshrl.u32 %v4152, 7
    %v4154 = vsub.s32 %v3988, %v4153
    %v4155 = vrot.slane %v3431, %v4154
    %v4156 = vsel %vm3993, %v4155, %v4151
    %v4157 = vlaneseq
    %v4158 = vshrl.u32 %v4157, 7
    %v4159 = vsub.s32 %v3995, %v4158
    %v4160 = vrot.slane %v3432, %v4159
    %v4161 = vsel %vm4000, %v4160, %v4156
    %v4162 = vlaneseq
    %v4163 = vshrl.u32 %v4162, 7
    %v4164 = vsub.s32 %v4002, %v4163
    %v4165 = vrot.slane %v3433, %v4164
    %v4166 = vsel %vm4007, %v4165, %v4161
    %v4167 = vlaneseq
    %v4168 = vshrl.u32 %v4167, 7
    %v4169 = vsub.s32 %v3899, %v4168
    %v4170 = vrot.slane %v3434, %v4169
    %v4171 = vlaneseq
    %v4172 = vshrl.u32 %v4171, 7
    %v4173 = vsub.s32 %v3904, %v4172
    %v4174 = vrot.slane %v3435, %v4173
    %v4175 = vsel %vm3909, %v4174, %v4170
    %v4176 = vlaneseq
    %v4177 = vshrl.u32 %v4176, 7
    %v4178 = vsub.s32 %v3911, %v4177
    %v4179 = vrot.slane %v3436, %v4178
    %v4180 = vsel %vm3916, %v4179, %v4175
    %v4181 = vlaneseq
    %v4182 = vshrl.u32 %v4181, 7
    %v4183 = vsub.s32 %v3918, %v4182
    %v4184 = vrot.slane %v3437, %v4183
    %v4185 = vsel %vm3923, %v4184, %v4180
    %v4186 = vlaneseq
    %v4187 = vshrl.u32 %v4186, 7
    %v4188 = vsub.s32 %v3925, %v4187
    %v4189 = vrot.slane %v3438, %v4188
    %v4190 = vsel %vm3930, %v4189, %v4185
    %v4191 = vlaneseq
    %v4192 = vshrl.u32 %v4191, 7
    %v4193 = vsub.s32 %v3932, %v4192
    %v4194 = vrot.slane %v3439, %v4193
    %v4195 = vsel %vm3937, %v4194, %v4190
    %v4196 = vlaneseq
    %v4197 = vshrl.u32 %v4196, 7
    %v4198 = vsub.s32 %v3939, %v4197
    %v4199 = vrot.slane %v3440, %v4198
    %v4200 = vsel %vm3944, %v4199, %v4195
    %v4201 = vlaneseq
    %v4202 = vshrl.u32 %v4201, 7
    %v4203 = vsub.s32 %v3946, %v4202
    %v4204 = vrot.slane %v3441, %v4203
    %v4205 = vsel %vm3951, %v4204, %v4200
    %v4206 = vlaneseq
    %v4207 = vshrl.u32 %v4206, 7
    %v4208 = vsub.s32 %v3953, %v4207
    %v4209 = vrot.slane %v3442, %v4208
    %v4210 = vsel %vm3958, %v4209, %v4205
    %v4211 = vlaneseq
    %v4212 = vshrl.u32 %v4211, 7
    %v4213 = vsub.s32 %v3960, %v4212
    %v4214 = vrot.slane %v3443, %v4213
    %v4215 = vsel %vm3965, %v4214, %v4210
    %v4216 = vlaneseq
    %v4217 = vshrl.u32 %v4216, 7
    %v4218 = vsub.s32 %v3967, %v4217
    %v4219 = vrot.slane %v3444, %v4218
    %v4220 = vsel %vm3972, %v4219, %v4215
    %v4221 = vlaneseq
    %v4222 = vshrl.u32 %v4221, 7
    %v4223 = vsub.s32 %v3974, %v4222
    %v4224 = vrot.slane %v3445, %v4223
    %v4225 = vsel %vm3979, %v4224, %v4220
    %v4226 = vlaneseq
    %v4227 = vshrl.u32 %v4226, 7
    %v4228 = vsub.s32 %v3981, %v4227
    %v4229 = vrot.slane %v3446, %v4228
    %v4230 = vsel %vm3986, %v4229, %v4225
    %v4231 = vlaneseq
    %v4232 = vshrl.u32 %v4231, 7
    %v4233 = vsub.s32 %v3988, %v4232
    %v4234 = vrot.slane %v3447, %v4233
    %v4235 = vsel %vm3993, %v4234, %v4230
    %v4236 = vlaneseq
    %v4237 = vshrl.u32 %v4236, 7
    %v4238 = vsub.s32 %v3995, %v4237
    %v4239 = vrot.slane %v3448, %v4238
    %v4240 = vsel %vm4000, %v4239, %v4235
    %v4241 = vlaneseq
    %v4242 = vshrl.u32 %v4241, 7
    %v4243 = vsub.s32 %v4002, %v4242
    %v4244 = vrot.slane %v3449, %v4243
    %v4245 = vsel %vm4007, %v4244, %v4240
    %v4246 = vlaneseq
    %v4247 = vshrl.u32 %v4246, 7
    %v4248 = vsub.s32 %v3899, %v4247
    %v4249 = vrot.slane %v3450, %v4248
    %v4250 = vlaneseq
    %v4251 = vshrl.u32 %v4250, 7
    %v4252 = vsub.s32 %v3904, %v4251
    %v4253 = vrot.slane %v3451, %v4252
    %v4254 = vsel %vm3909, %v4253, %v4249
    %v4255 = vlaneseq
    %v4256 = vshrl.u32 %v4255, 7
    %v4257 = vsub.s32 %v3911, %v4256
    %v4258 = vrot.slane %v3452, %v4257
    %v4259 = vsel %vm3916, %v4258, %v4254
    %v4260 = vlaneseq
    %v4261 = vshrl.u32 %v4260, 7
    %v4262 = vsub.s32 %v3918, %v4261
    %v4263 = vrot.slane %v3453, %v4262
    %v4264 = vsel %vm3923, %v4263, %v4259
    %v4265 = vlaneseq
    %v4266 = vshrl.u32 %v4265, 7
    %v4267 = vsub.s32 %v3925, %v4266
    %v4268 = vrot.slane %v3454, %v4267
    %v4269 = vsel %vm3930, %v4268, %v4264
    %v4270 = vlaneseq
    %v4271 = vshrl.u32 %v4270, 7
    %v4272 = vsub.s32 %v3932, %v4271
    %v4273 = vrot.slane %v3455, %v4272
    %v4274 = vsel %vm3937, %v4273, %v4269
    %v4275 = vlaneseq
    %v4276 = vshrl.u32 %v4275, 7
    %v4277 = vsub.s32 %v3939, %v4276
    %v4278 = vrot.slane %v3456, %v4277
    %v4279 = vsel %vm3944, %v4278, %v4274
    %v4280 = vlaneseq
    %v4281 = vshrl.u32 %v4280, 7
    %v4282 = vsub.s32 %v3946, %v4281
    %v4283 = vrot.slane %v3457, %v4282
    %v4284 = vsel %vm3951, %v4283, %v4279
    %v4285 = vlaneseq
    %v4286 = vshrl.u32 %v4285, 7
    %v4287 = vsub.s32 %v3953, %v4286
    %v4288 = vrot.slane %v3458, %v4287
    %v4289 = vsel %vm3958, %v4288, %v4284
    %v4290 = vlaneseq
    %v4291 = vshrl.u32 %v4290, 7
    %v4292 = vsub.s32 %v3960, %v4291
    %v4293 = vrot.slane %v3459, %v4292
    %v4294 = vsel %vm3965, %v4293, %v4289
    %v4295 = vlaneseq
    %v4296 = vshrl.u32 %v4295, 7
    %v4297 = vsub.s32 %v3967, %v4296
    %v4298 = vrot.slane %v3460, %v4297
    %v4299 = vsel %vm3972, %v4298, %v4294
    %v4300 = vlaneseq
    %v4301 = vshrl.u32 %v4300, 7
    %v4302 = vsub.s32 %v3974, %v4301
    %v4303 = vrot.slane %v3461, %v4302
    %v4304 = vsel %vm3979, %v4303, %v4299
    %v4305 = vlaneseq
    %v4306 = vshrl.u32 %v4305, 7
    %v4307 = vsub.s32 %v3981, %v4306
    %v4308 = vrot.slane %v3462, %v4307
    %v4309 = vsel %vm3986, %v4308, %v4304
    %v4310 = vlaneseq
    %v4311 = vshrl.u32 %v4310, 7
    %v4312 = vsub.s32 %v3988, %v4311
    %v4313 = vrot.slane %v3463, %v4312
    %v4314 = vsel %vm3993, %v4313, %v4309
    %v4315 = vlaneseq
    %v4316 = vshrl.u32 %v4315, 7
    %v4317 = vsub.s32 %v3995, %v4316
    %v4318 = vrot.slane %v3464, %v4317
    %v4319 = vsel %vm4000, %v4318, %v4314
    %v4320 = vlaneseq
    %v4321 = vshrl.u32 %v4320, 7
    %v4322 = vsub.s32 %v4002, %v4321
    %v4323 = vrot.slane %v3465, %v4322
    %v4324 = vsel %vm4007, %v4323, %v4319
    %v4325 = vlaneseq
    %v4326 = vshrl.u32 %v4325, 7
    %v4327 = vsub.s32 %v3899, %v4326
    %v4328 = vrot.slane %v3466, %v4327
    %v4329 = vlaneseq
    %v4330 = vshrl.u32 %v4329, 7
    %v4331 = vsub.s32 %v3904, %v4330
    %v4332 = vrot.slane %v3467, %v4331
    %v4333 = vsel %vm3909, %v4332, %v4328
    %v4334 = vlaneseq
    %v4335 = vshrl.u32 %v4334, 7
    %v4336 = vsub.s32 %v3911, %v4335
    %v4337 = vrot.slane %v3468, %v4336
    %v4338 = vsel %vm3916, %v4337, %v4333
    %v4339 = vlaneseq
    %v4340 = vshrl.u32 %v4339, 7
    %v4341 = vsub.s32 %v3918, %v4340
    %v4342 = vrot.slane %v3469, %v4341
    %v4343 = vsel %vm3923, %v4342, %v4338
    %v4344 = vlaneseq
    %v4345 = vshrl.u32 %v4344, 7
    %v4346 = vsub.s32 %v3925, %v4345
    %v4347 = vrot.slane %v3470, %v4346
    %v4348 = vsel %vm3930, %v4347, %v4343
    %v4349 = vlaneseq
    %v4350 = vshrl.u32 %v4349, 7
    %v4351 = vsub.s32 %v3932, %v4350
    %v4352 = vrot.slane %v3471, %v4351
    %v4353 = vsel %vm3937, %v4352, %v4348
    %v4354 = vlaneseq
    %v4355 = vshrl.u32 %v4354, 7
    %v4356 = vsub.s32 %v3939, %v4355
    %v4357 = vrot.slane %v3472, %v4356
    %v4358 = vsel %vm3944, %v4357, %v4353
    %v4359 = vlaneseq
    %v4360 = vshrl.u32 %v4359, 7
    %v4361 = vsub.s32 %v3946, %v4360
    %v4362 = vrot.slane %v3473, %v4361
    %v4363 = vsel %vm3951, %v4362, %v4358
    %v4364 = vlaneseq
    %v4365 = vshrl.u32 %v4364, 7
    %v4366 = vsub.s32 %v3953, %v4365
    %v4367 = vrot.slane %v3474, %v4366
    %v4368 = vsel %vm3958, %v4367, %v4363
    %v4369 = vlaneseq
    %v4370 = vshrl.u32 %v4369, 7
    %v4371 = vsub.s32 %v3960, %v4370
    %v4372 = vrot.slane %v3475, %v4371
    %v4373 = vsel %vm3965, %v4372, %v4368
    %v4374 = vlaneseq
    %v4375 = vshrl.u32 %v4374, 7
    %v4376 = vsub.s32 %v3967, %v4375
    %v4377 = vrot.slane %v3476, %v4376
    %v4378 = vsel %vm3972, %v4377, %v4373
    %v4379 = vlaneseq
    %v4380 = vshrl.u32 %v4379, 7
    %v4381 = vsub.s32 %v3974, %v4380
    %v4382 = vrot.slane %v3477, %v4381
    %v4383 = vsel %vm3979, %v4382, %v4378
    %v4384 = vlaneseq
    %v4385 = vshrl.u32 %v4384, 7
    %v4386 = vsub.s32 %v3981, %v4385
    %v4387 = vrot.slane %v3478, %v4386
    %v4388 = vsel %vm3986, %v4387, %v4383
    %v4389 = vlaneseq
    %v4390 = vshrl.u32 %v4389, 7
    %v4391 = vsub.s32 %v3988, %v4390
    %v4392 = vrot.slane %v3479, %v4391
    %v4393 = vsel %vm3993, %v4392, %v4388
    %v4394 = vlaneseq
    %v4395 = vshrl.u32 %v4394, 7
    %v4396 = vsub.s32 %v3995, %v4395
    %v4397 = vrot.slane %v3480, %v4396
    %v4398 = vsel %vm4000, %v4397, %v4393
    %v4399 = vlaneseq
    %v4400 = vshrl.u32 %v4399, 7
    %v4401 = vsub.s32 %v4002, %v4400
    %v4402 = vrot.slane %v3481, %v4401
    %v4403 = vsel %vm4007, %v4402, %v4398
    %v4404 = vlaneseq
    %v4405 = vshrl.u32 %v4404, 7
    %v4406 = vsub.s32 %v3899, %v4405
    %v4407 = vrot.slane %v3482, %v4406
    %v4408 = vlaneseq
    %v4409 = vshrl.u32 %v4408, 7
    %v4410 = vsub.s32 %v3904, %v4409
    %v4411 = vrot.slane %v3483, %v4410
    %v4412 = vsel %vm3909, %v4411, %v4407
    %v4413 = vlaneseq
    %v4414 = vshrl.u32 %v4413, 7
    %v4415 = vsub.s32 %v3911, %v4414
    %v4416 = vrot.slane %v3484, %v4415
    %v4417 = vsel %vm3916, %v4416, %v4412
    %v4418 = vlaneseq
    %v4419 = vshrl.u32 %v4418, 7
    %v4420 = vsub.s32 %v3918, %v4419
    %v4421 = vrot.slane %v3485, %v4420
    %v4422 = vsel %vm3923, %v4421, %v4417
    %v4423 = vlaneseq
    %v4424 = vshrl.u32 %v4423, 7
    %v4425 = vsub.s32 %v3925, %v4424
    %v4426 = vrot.slane %v3486, %v4425
    %v4427 = vsel %vm3930, %v4426, %v4422
    %v4428 = vlaneseq
    %v4429 = vshrl.u32 %v4428, 7
    %v4430 = vsub.s32 %v3932, %v4429
    %v4431 = vrot.slane %v3487, %v4430
    %v4432 = vsel %vm3937, %v4431, %v4427
    %v4433 = vlaneseq
    %v4434 = vshrl.u32 %v4433, 7
    %v4435 = vsub.s32 %v3939, %v4434
    %v4436 = vrot.slane %v3488, %v4435
    %v4437 = vsel %vm3944, %v4436, %v4432
    %v4438 = vlaneseq
    %v4439 = vshrl.u32 %v4438, 7
    %v4440 = vsub.s32 %v3946, %v4439
    %v4441 = vrot.slane %v3489, %v4440
    %v4442 = vsel %vm3951, %v4441, %v4437
    %v4443 = vlaneseq
    %v4444 = vshrl.u32 %v4443, 7
    %v4445 = vsub.s32 %v3953, %v4444
    %v4446 = vrot.slane %v3490, %v4445
    %v4447 = vsel %vm3958, %v4446, %v4442
    %v4448 = vlaneseq
    %v4449 = vshrl.u32 %v4448, 7
    %v4450 = vsub.s32 %v3960, %v4449
    %v4451 = vrot.slane %v3491, %v4450
    %v4452 = vsel %vm3965, %v4451, %v4447
    %v4453 = vlaneseq
    %v4454 = vshrl.u32 %v4453, 7
    %v4455 = vsub.s32 %v3967, %v4454
    %v4456 = vrot.slane %v3492, %v4455
    %v4457 = vsel %vm3972, %v4456, %v4452
    %v4458 = vlaneseq
    %v4459 = vshrl.u32 %v4458, 7
    %v4460 = vsub.s32 %v3974, %v4459
    %v4461 = vrot.slane %v3493, %v4460
    %v4462 = vsel %vm3979, %v4461, %v4457
    %v4463 = vlaneseq
    %v4464 = vshrl.u32 %v4463, 7
    %v4465 = vsub.s32 %v3981, %v4464
    %v4466 = vrot.slane %v3494, %v4465
    %v4467 = vsel %vm3986, %v4466, %v4462
    %v4468 = vlaneseq
    %v4469 = vshrl.u32 %v4468, 7
    %v4470 = vsub.s32 %v3988, %v4469
    %v4471 = vrot.slane %v3495, %v4470
    %v4472 = vsel %vm3993, %v4471, %v4467
    %v4473 = vlaneseq
    %v4474 = vshrl.u32 %v4473, 7
    %v4475 = vsub.s32 %v3995, %v4474
    %v4476 = vrot.slane %v3496, %v4475
    %v4477 = vsel %vm4000, %v4476, %v4472
    %v4478 = vlaneseq
    %v4479 = vshrl.u32 %v4478, 7
    %v4480 = vsub.s32 %v4002, %v4479
    %v4481 = vrot.slane %v3497, %v4480
    %v4482 = vsel %vm4007, %v4481, %v4477
    %v4483 = vlaneseq
    %v4484 = vshrl.u32 %v4483, 7
    %v4485 = vsub.s32 %v3899, %v4484
    %v4486 = vrot.slane %v3498, %v4485
    %v4487 = vlaneseq
    %v4488 = vshrl.u32 %v4487, 7
    %v4489 = vsub.s32 %v3904, %v4488
    %v4490 = vrot.slane %v3499, %v4489
    %v4491 = vsel %vm3909, %v4490, %v4486
    %v4492 = vlaneseq
    %v4493 = vshrl.u32 %v4492, 7
    %v4494 = vsub.s32 %v3911, %v4493
    %v4495 = vrot.slane %v3500, %v4494
    %v4496 = vsel %vm3916, %v4495, %v4491
    %v4497 = vlaneseq
    %v4498 = vshrl.u32 %v4497, 7
    %v4499 = vsub.s32 %v3918, %v4498
    %v4500 = vrot.slane %v3501, %v4499
    %v4501 = vsel %vm3923, %v4500, %v4496
    %v4502 = vlaneseq
    %v4503 = vshrl.u32 %v4502, 7
    %v4504 = vsub.s32 %v3925, %v4503
    %v4505 = vrot.slane %v3502, %v4504
    %v4506 = vsel %vm3930, %v4505, %v4501
    %v4507 = vlaneseq
    %v4508 = vshrl.u32 %v4507, 7
    %v4509 = vsub.s32 %v3932, %v4508
    %v4510 = vrot.slane %v3503, %v4509
    %v4511 = vsel %vm3937, %v4510, %v4506
    %v4512 = vlaneseq
    %v4513 = vshrl.u32 %v4512, 7
    %v4514 = vsub.s32 %v3939, %v4513
    %v4515 = vrot.slane %v3504, %v4514
    %v4516 = vsel %vm3944, %v4515, %v4511
    %v4517 = vlaneseq
    %v4518 = vshrl.u32 %v4517, 7
    %v4519 = vsub.s32 %v3946, %v4518
    %v4520 = vrot.slane %v3505, %v4519
    %v4521 = vsel %vm3951, %v4520, %v4516
    %v4522 = vlaneseq
    %v4523 = vshrl.u32 %v4522, 7
    %v4524 = vsub.s32 %v3953, %v4523
    %v4525 = vrot.slane %v3506, %v4524
    %v4526 = vsel %vm3958, %v4525, %v4521
    %v4527 = vlaneseq
    %v4528 = vshrl.u32 %v4527, 7
    %v4529 = vsub.s32 %v3960, %v4528
    %v4530 = vrot.slane %v3507, %v4529
    %v4531 = vsel %vm3965, %v4530, %v4526
    %v4532 = vlaneseq
    %v4533 = vshrl.u32 %v4532, 7
    %v4534 = vsub.s32 %v3967, %v4533
    %v4535 = vrot.slane %v3508, %v4534
    %v4536 = vsel %vm3972, %v4535, %v4531
    %v4537 = vlaneseq
    %v4538 = vshrl.u32 %v4537, 7
    %v4539 = vsub.s32 %v3974, %v4538
    %v4540 = vrot.slane %v3509, %v4539
    %v4541 = vsel %vm3979, %v4540, %v4536
    %v4542 = vlaneseq
    %v4543 = vshrl.u32 %v4542, 7
    %v4544 = vsub.s32 %v3981, %v4543
    %v4545 = vrot.slane %v3510, %v4544
    %v4546 = vsel %vm3986, %v4545, %v4541
    %v4547 = vlaneseq
    %v4548 = vshrl.u32 %v4547, 7
    %v4549 = vsub.s32 %v3988, %v4548
    %v4550 = vrot.slane %v3511, %v4549
    %v4551 = vsel %vm3993, %v4550, %v4546
    %v4552 = vlaneseq
    %v4553 = vshrl.u32 %v4552, 7
    %v4554 = vsub.s32 %v3995, %v4553
    %v4555 = vrot.slane %v3512, %v4554
    %v4556 = vsel %vm4000, %v4555, %v4551
    %v4557 = vlaneseq
    %v4558 = vshrl.u32 %v4557, 7
    %v4559 = vsub.s32 %v4002, %v4558
    %v4560 = vrot.slane %v3513, %v4559
    %v4561 = vsel %vm4007, %v4560, %v4556
    %v4562 = vlaneseq
    %v4563 = vshrl.u32 %v4562, 7
    %v4564 = vsub.s32 %v3899, %v4563
    %v4565 = vrot.slane %v3514, %v4564
    %v4566 = vlaneseq
    %v4567 = vshrl.u32 %v4566, 7
    %v4568 = vsub.s32 %v3904, %v4567
    %v4569 = vrot.slane %v3515, %v4568
    %v4570 = vsel %vm3909, %v4569, %v4565
    %v4571 = vlaneseq
    %v4572 = vshrl.u32 %v4571, 7
    %v4573 = vsub.s32 %v3911, %v4572
    %v4574 = vrot.slane %v3516, %v4573
    %v4575 = vsel %vm3916, %v4574, %v4570
    %v4576 = vlaneseq
    %v4577 = vshrl.u32 %v4576, 7
    %v4578 = vsub.s32 %v3918, %v4577
    %v4579 = vrot.slane %v3517, %v4578
    %v4580 = vsel %vm3923, %v4579, %v4575
    %v4581 = vlaneseq
    %v4582 = vshrl.u32 %v4581, 7
    %v4583 = vsub.s32 %v3925, %v4582
    %v4584 = vrot.slane %v3518, %v4583
    %v4585 = vsel %vm3930, %v4584, %v4580
    %v4586 = vlaneseq
    %v4587 = vshrl.u32 %v4586, 7
    %v4588 = vsub.s32 %v3932, %v4587
    %v4589 = vrot.slane %v3519, %v4588
    %v4590 = vsel %vm3937, %v4589, %v4585
    %v4591 = vlaneseq
    %v4592 = vshrl.u32 %v4591, 7
    %v4593 = vsub.s32 %v3939, %v4592
    %v4594 = vrot.slane %v3520, %v4593
    %v4595 = vsel %vm3944, %v4594, %v4590
    %v4596 = vlaneseq
    %v4597 = vshrl.u32 %v4596, 7
    %v4598 = vsub.s32 %v3946, %v4597
    %v4599 = vrot.slane %v3521, %v4598
    %v4600 = vsel %vm3951, %v4599, %v4595
    %v4601 = vlaneseq
    %v4602 = vshrl.u32 %v4601, 7
    %v4603 = vsub.s32 %v3953, %v4602
    %v4604 = vrot.slane %v3522, %v4603
    %v4605 = vsel %vm3958, %v4604, %v4600
    %v4606 = vlaneseq
    %v4607 = vshrl.u32 %v4606, 7
    %v4608 = vsub.s32 %v3960, %v4607
    %v4609 = vrot.slane %v3523, %v4608
    %v4610 = vsel %vm3965, %v4609, %v4605
    %v4611 = vlaneseq
    %v4612 = vshrl.u32 %v4611, 7
    %v4613 = vsub.s32 %v3967, %v4612
    %v4614 = vrot.slane %v3524, %v4613
    %v4615 = vsel %vm3972, %v4614, %v4610
    %v4616 = vlaneseq
    %v4617 = vshrl.u32 %v4616, 7
    %v4618 = vsub.s32 %v3974, %v4617
    %v4619 = vrot.slane %v3525, %v4618
    %v4620 = vsel %vm3979, %v4619, %v4615
    %v4621 = vlaneseq
    %v4622 = vshrl.u32 %v4621, 7
    %v4623 = vsub.s32 %v3981, %v4622
    %v4624 = vrot.slane %v3526, %v4623
    %v4625 = vsel %vm3986, %v4624, %v4620
    %v4626 = vlaneseq
    %v4627 = vshrl.u32 %v4626, 7
    %v4628 = vsub.s32 %v3988, %v4627
    %v4629 = vrot.slane %v3527, %v4628
    %v4630 = vsel %vm3993, %v4629, %v4625
    %v4631 = vlaneseq
    %v4632 = vshrl.u32 %v4631, 7
    %v4633 = vsub.s32 %v3995, %v4632
    %v4634 = vrot.slane %v3528, %v4633
    %v4635 = vsel %vm4000, %v4634, %v4630
    %v4636 = vlaneseq
    %v4637 = vshrl.u32 %v4636, 7
    %v4638 = vsub.s32 %v4002, %v4637
    %v4639 = vrot.slane %v3529, %v4638
    %v4640 = vsel %vm4007, %v4639, %v4635
    %v4641 = vlaneseq
    %v4642 = vshrl.u32 %v4641, 7
    %v4643 = vsub.s32 %v3899, %v4642
    %v4644 = vrot.slane %v3530, %v4643
    %v4645 = vlaneseq
    %v4646 = vshrl.u32 %v4645, 7
    %v4647 = vsub.s32 %v3904, %v4646
    %v4648 = vrot.slane %v3531, %v4647
    %v4649 = vsel %vm3909, %v4648, %v4644
    %v4650 = vlaneseq
    %v4651 = vshrl.u32 %v4650, 7
    %v4652 = vsub.s32 %v3911, %v4651
    %v4653 = vrot.slane %v3532, %v4652
    %v4654 = vsel %vm3916, %v4653, %v4649
    %v4655 = vlaneseq
    %v4656 = vshrl.u32 %v4655, 7
    %v4657 = vsub.s32 %v3918, %v4656
    %v4658 = vrot.slane %v3533, %v4657
    %v4659 = vsel %vm3923, %v4658, %v4654
    %v4660 = vlaneseq
    %v4661 = vshrl.u32 %v4660, 7
    %v4662 = vsub.s32 %v3925, %v4661
    %v4663 = vrot.slane %v3534, %v4662
    %v4664 = vsel %vm3930, %v4663, %v4659
    %v4665 = vlaneseq
    %v4666 = vshrl.u32 %v4665, 7
    %v4667 = vsub.s32 %v3932, %v4666
    %v4668 = vrot.slane %v3535, %v4667
    %v4669 = vsel %vm3937, %v4668, %v4664
    %v4670 = vlaneseq
    %v4671 = vshrl.u32 %v4670, 7
    %v4672 = vsub.s32 %v3939, %v4671
    %v4673 = vrot.slane %v3536, %v4672
    %v4674 = vsel %vm3944, %v4673, %v4669
    %v4675 = vlaneseq
    %v4676 = vshrl.u32 %v4675, 7
    %v4677 = vsub.s32 %v3946, %v4676
    %v4678 = vrot.slane %v3537, %v4677
    %v4679 = vsel %vm3951, %v4678, %v4674
    %v4680 = vlaneseq
    %v4681 = vshrl.u32 %v4680, 7
    %v4682 = vsub.s32 %v3953, %v4681
    %v4683 = vrot.slane %v3538, %v4682
    %v4684 = vsel %vm3958, %v4683, %v4679
    %v4685 = vlaneseq
    %v4686 = vshrl.u32 %v4685, 7
    %v4687 = vsub.s32 %v3960, %v4686
    %v4688 = vrot.slane %v3539, %v4687
    %v4689 = vsel %vm3965, %v4688, %v4684
    %v4690 = vlaneseq
    %v4691 = vshrl.u32 %v4690, 7
    %v4692 = vsub.s32 %v3967, %v4691
    %v4693 = vrot.slane %v3540, %v4692
    %v4694 = vsel %vm3972, %v4693, %v4689
    %v4695 = vlaneseq
    %v4696 = vshrl.u32 %v4695, 7
    %v4697 = vsub.s32 %v3974, %v4696
    %v4698 = vrot.slane %v3541, %v4697
    %v4699 = vsel %vm3979, %v4698, %v4694
    %v4700 = vlaneseq
    %v4701 = vshrl.u32 %v4700, 7
    %v4702 = vsub.s32 %v3981, %v4701
    %v4703 = vrot.slane %v3542, %v4702
    %v4704 = vsel %vm3986, %v4703, %v4699
    %v4705 = vlaneseq
    %v4706 = vshrl.u32 %v4705, 7
    %v4707 = vsub.s32 %v3988, %v4706
    %v4708 = vrot.slane %v3543, %v4707
    %v4709 = vsel %vm3993, %v4708, %v4704
    %v4710 = vlaneseq
    %v4711 = vshrl.u32 %v4710, 7
    %v4712 = vsub.s32 %v3995, %v4711
    %v4713 = vrot.slane %v3544, %v4712
    %v4714 = vsel %vm4000, %v4713, %v4709
    %v4715 = vlaneseq
    %v4716 = vshrl.u32 %v4715, 7
    %v4717 = vsub.s32 %v4002, %v4716
    %v4718 = vrot.slane %v3545, %v4717
    %v4719 = vsel %vm4007, %v4718, %v4714
    %v4720 = vlaneseq
    %v4721 = vshrl.u32 %v4720, 7
    %v4722 = vsub.s32 %v3899, %v4721
    %v4723 = vrot.slane %v3546, %v4722
    %v4724 = vlaneseq
    %v4725 = vshrl.u32 %v4724, 7
    %v4726 = vsub.s32 %v3904, %v4725
    %v4727 = vrot.slane %v3547, %v4726
    %v4728 = vsel %vm3909, %v4727, %v4723
    %v4729 = vlaneseq
    %v4730 = vshrl.u32 %v4729, 7
    %v4731 = vsub.s32 %v3911, %v4730
    %v4732 = vrot.slane %v3548, %v4731
    %v4733 = vsel %vm3916, %v4732, %v4728
    %v4734 = vlaneseq
    %v4735 = vshrl.u32 %v4734, 7
    %v4736 = vsub.s32 %v3918, %v4735
    %v4737 = vrot.slane %v3549, %v4736
    %v4738 = vsel %vm3923, %v4737, %v4733
    %v4739 = vlaneseq
    %v4740 = vshrl.u32 %v4739, 7
    %v4741 = vsub.s32 %v3925, %v4740
    %v4742 = vrot.slane %v3550, %v4741
    %v4743 = vsel %vm3930, %v4742, %v4738
    %v4744 = vlaneseq
    %v4745 = vshrl.u32 %v4744, 7
    %v4746 = vsub.s32 %v3932, %v4745
    %v4747 = vrot.slane %v3551, %v4746
    %v4748 = vsel %vm3937, %v4747, %v4743
    %v4749 = vlaneseq
    %v4750 = vshrl.u32 %v4749, 7
    %v4751 = vsub.s32 %v3939, %v4750
    %v4752 = vrot.slane %v3552, %v4751
    %v4753 = vsel %vm3944, %v4752, %v4748
    %v4754 = vlaneseq
    %v4755 = vshrl.u32 %v4754, 7
    %v4756 = vsub.s32 %v3946, %v4755
    %v4757 = vrot.slane %v3553, %v4756
    %v4758 = vsel %vm3951, %v4757, %v4753
    %v4759 = vlaneseq
    %v4760 = vshrl.u32 %v4759, 7
    %v4761 = vsub.s32 %v3953, %v4760
    %v4762 = vrot.slane %v3554, %v4761
    %v4763 = vsel %vm3958, %v4762, %v4758
    %v4764 = vlaneseq
    %v4765 = vshrl.u32 %v4764, 7
    %v4766 = vsub.s32 %v3960, %v4765
    %v4767 = vrot.slane %v3555, %v4766
    %v4768 = vsel %vm3965, %v4767, %v4763
    %v4769 = vlaneseq
    %v4770 = vshrl.u32 %v4769, 7
    %v4771 = vsub.s32 %v3967, %v4770
    %v4772 = vrot.slane %v3556, %v4771
    %v4773 = vsel %vm3972, %v4772, %v4768
    %v4774 = vlaneseq
    %v4775 = vshrl.u32 %v4774, 7
    %v4776 = vsub.s32 %v3974, %v4775
    %v4777 = vrot.slane %v3557, %v4776
    %v4778 = vsel %vm3979, %v4777, %v4773
    %v4779 = vlaneseq
    %v4780 = vshrl.u32 %v4779, 7
    %v4781 = vsub.s32 %v3981, %v4780
    %v4782 = vrot.slane %v3558, %v4781
    %v4783 = vsel %vm3986, %v4782, %v4778
    %v4784 = vlaneseq
    %v4785 = vshrl.u32 %v4784, 7
    %v4786 = vsub.s32 %v3988, %v4785
    %v4787 = vrot.slane %v3559, %v4786
    %v4788 = vsel %vm3993, %v4787, %v4783
    %v4789 = vlaneseq
    %v4790 = vshrl.u32 %v4789, 7
    %v4791 = vsub.s32 %v3995, %v4790
    %v4792 = vrot.slane %v3560, %v4791
    %v4793 = vsel %vm4000, %v4792, %v4788
    %v4794 = vlaneseq
    %v4795 = vshrl.u32 %v4794, 7
    %v4796 = vsub.s32 %v4002, %v4795
    %v4797 = vrot.slane %v3561, %v4796
    %v4798 = vsel %vm4007, %v4797, %v4793
    %v4799 = vlaneseq
    %v4800 = vshrl.u32 %v4799, 7
    %v4801 = vsub.s32 %v3899, %v4800
    %v4802 = vrot.slane %v3562, %v4801
    %v4803 = vlaneseq
    %v4804 = vshrl.u32 %v4803, 7
    %v4805 = vsub.s32 %v3904, %v4804
    %v4806 = vrot.slane %v3563, %v4805
    %v4807 = vsel %vm3909, %v4806, %v4802
    %v4808 = vlaneseq
    %v4809 = vshrl.u32 %v4808, 7
    %v4810 = vsub.s32 %v3911, %v4809
    %v4811 = vrot.slane %v3564, %v4810
    %v4812 = vsel %vm3916, %v4811, %v4807
    %v4813 = vlaneseq
    %v4814 = vshrl.u32 %v4813, 7
    %v4815 = vsub.s32 %v3918, %v4814
    %v4816 = vrot.slane %v3565, %v4815
    %v4817 = vsel %vm3923, %v4816, %v4812
    %v4818 = vlaneseq
    %v4819 = vshrl.u32 %v4818, 7
    %v4820 = vsub.s32 %v3925, %v4819
    %v4821 = vrot.slane %v3566, %v4820
    %v4822 = vsel %vm3930, %v4821, %v4817
    %v4823 = vlaneseq
    %v4824 = vshrl.u32 %v4823, 7
    %v4825 = vsub.s32 %v3932, %v4824
    %v4826 = vrot.slane %v3567, %v4825
    %v4827 = vsel %vm3937, %v4826, %v4822
    %v4828 = vlaneseq
    %v4829 = vshrl.u32 %v4828, 7
    %v4830 = vsub.s32 %v3939, %v4829
    %v4831 = vrot.slane %v3568, %v4830
    %v4832 = vsel %vm3944, %v4831, %v4827
    %v4833 = vlaneseq
    %v4834 = vshrl.u32 %v4833, 7
    %v4835 = vsub.s32 %v3946, %v4834
    %v4836 = vrot.slane %v3569, %v4835
    %v4837 = vsel %vm3951, %v4836, %v4832
    %v4838 = vlaneseq
    %v4839 = vshrl.u32 %v4838, 7
    %v4840 = vsub.s32 %v3953, %v4839
    %v4841 = vrot.slane %v3570, %v4840
    %v4842 = vsel %vm3958, %v4841, %v4837
    %v4843 = vlaneseq
    %v4844 = vshrl.u32 %v4843, 7
    %v4845 = vsub.s32 %v3960, %v4844
    %v4846 = vrot.slane %v3571, %v4845
    %v4847 = vsel %vm3965, %v4846, %v4842
    %v4848 = vlaneseq
    %v4849 = vshrl.u32 %v4848, 7
    %v4850 = vsub.s32 %v3967, %v4849
    %v4851 = vrot.slane %v3572, %v4850
    %v4852 = vsel %vm3972, %v4851, %v4847
    %v4853 = vlaneseq
    %v4854 = vshrl.u32 %v4853, 7
    %v4855 = vsub.s32 %v3974, %v4854
    %v4856 = vrot.slane %v3573, %v4855
    %v4857 = vsel %vm3979, %v4856, %v4852
    %v4858 = vlaneseq
    %v4859 = vshrl.u32 %v4858, 7
    %v4860 = vsub.s32 %v3981, %v4859
    %v4861 = vrot.slane %v3574, %v4860
    %v4862 = vsel %vm3986, %v4861, %v4857
    %v4863 = vlaneseq
    %v4864 = vshrl.u32 %v4863, 7
    %v4865 = vsub.s32 %v3988, %v4864
    %v4866 = vrot.slane %v3575, %v4865
    %v4867 = vsel %vm3993, %v4866, %v4862
    %v4868 = vlaneseq
    %v4869 = vshrl.u32 %v4868, 7
    %v4870 = vsub.s32 %v3995, %v4869
    %v4871 = vrot.slane %v3576, %v4870
    %v4872 = vsel %vm4000, %v4871, %v4867
    %v4873 = vlaneseq
    %v4874 = vshrl.u32 %v4873, 7
    %v4875 = vsub.s32 %v4002, %v4874
    %v4876 = vrot.slane %v3577, %v4875
    %v4877 = vsel %vm4007, %v4876, %v4872
    %v4878 = vlaneseq
    %v4879 = vshrl.u32 %v4878, 7
    %v4880 = vsub.s32 %v3899, %v4879
    %v4881 = vrot.slane %v3578, %v4880
    %v4882 = vlaneseq
    %v4883 = vshrl.u32 %v4882, 7
    %v4884 = vsub.s32 %v3904, %v4883
    %v4885 = vrot.slane %v3579, %v4884
    %v4886 = vsel %vm3909, %v4885, %v4881
    %v4887 = vlaneseq
    %v4888 = vshrl.u32 %v4887, 7
    %v4889 = vsub.s32 %v3911, %v4888
    %v4890 = vrot.slane %v3580, %v4889
    %v4891 = vsel %vm3916, %v4890, %v4886
    %v4892 = vlaneseq
    %v4893 = vshrl.u32 %v4892, 7
    %v4894 = vsub.s32 %v3918, %v4893
    %v4895 = vrot.slane %v3581, %v4894
    %v4896 = vsel %vm3923, %v4895, %v4891
    %v4897 = vlaneseq
    %v4898 = vshrl.u32 %v4897, 7
    %v4899 = vsub.s32 %v3925, %v4898
    %v4900 = vrot.slane %v3582, %v4899
    %v4901 = vsel %vm3930, %v4900, %v4896
    %v4902 = vlaneseq
    %v4903 = vshrl.u32 %v4902, 7
    %v4904 = vsub.s32 %v3932, %v4903
    %v4905 = vrot.slane %v3583, %v4904
    %v4906 = vsel %vm3937, %v4905, %v4901
    %v4907 = vlaneseq
    %v4908 = vshrl.u32 %v4907, 7
    %v4909 = vsub.s32 %v3939, %v4908
    %v4910 = vrot.slane %v3584, %v4909
    %v4911 = vsel %vm3944, %v4910, %v4906
    %v4912 = vlaneseq
    %v4913 = vshrl.u32 %v4912, 7
    %v4914 = vsub.s32 %v3946, %v4913
    %v4915 = vrot.slane %v3585, %v4914
    %v4916 = vsel %vm3951, %v4915, %v4911
    %v4917 = vlaneseq
    %v4918 = vshrl.u32 %v4917, 7
    %v4919 = vsub.s32 %v3953, %v4918
    %v4920 = vrot.slane %v3586, %v4919
    %v4921 = vsel %vm3958, %v4920, %v4916
    %v4922 = vlaneseq
    %v4923 = vshrl.u32 %v4922, 7
    %v4924 = vsub.s32 %v3960, %v4923
    %v4925 = vrot.slane %v3587, %v4924
    %v4926 = vsel %vm3965, %v4925, %v4921
    %v4927 = vlaneseq
    %v4928 = vshrl.u32 %v4927, 7
    %v4929 = vsub.s32 %v3967, %v4928
    %v4930 = vrot.slane %v3588, %v4929
    %v4931 = vsel %vm3972, %v4930, %v4926
    %v4932 = vlaneseq
    %v4933 = vshrl.u32 %v4932, 7
    %v4934 = vsub.s32 %v3974, %v4933
    %v4935 = vrot.slane %v3589, %v4934
    %v4936 = vsel %vm3979, %v4935, %v4931
    %v4937 = vlaneseq
    %v4938 = vshrl.u32 %v4937, 7
    %v4939 = vsub.s32 %v3981, %v4938
    %v4940 = vrot.slane %v3590, %v4939
    %v4941 = vsel %vm3986, %v4940, %v4936
    %v4942 = vlaneseq
    %v4943 = vshrl.u32 %v4942, 7
    %v4944 = vsub.s32 %v3988, %v4943
    %v4945 = vrot.slane %v3591, %v4944
    %v4946 = vsel %vm3993, %v4945, %v4941
    %v4947 = vlaneseq
    %v4948 = vshrl.u32 %v4947, 7
    %v4949 = vsub.s32 %v3995, %v4948
    %v4950 = vrot.slane %v3592, %v4949
    %v4951 = vsel %vm4000, %v4950, %v4946
    %v4952 = vlaneseq
    %v4953 = vshrl.u32 %v4952, 7
    %v4954 = vsub.s32 %v4002, %v4953
    %v4955 = vrot.slane %v3593, %v4954
    %v4956 = vsel %vm4007, %v4955, %v4951
    %v4957 = vlaneseq
    %v4958 = vshrl.u32 %v4957, 7
    %v4959 = vsub.s32 %v3899, %v4958
    %v4960 = vrot.slane %v3594, %v4959
    %v4961 = vlaneseq
    %v4962 = vshrl.u32 %v4961, 7
    %v4963 = vsub.s32 %v3904, %v4962
    %v4964 = vrot.slane %v3595, %v4963
    %v4965 = vsel %vm3909, %v4964, %v4960
    %v4966 = vlaneseq
    %v4967 = vshrl.u32 %v4966, 7
    %v4968 = vsub.s32 %v3911, %v4967
    %v4969 = vrot.slane %v3596, %v4968
    %v4970 = vsel %vm3916, %v4969, %v4965
    %v4971 = vlaneseq
    %v4972 = vshrl.u32 %v4971, 7
    %v4973 = vsub.s32 %v3918, %v4972
    %v4974 = vrot.slane %v3597, %v4973
    %v4975 = vsel %vm3923, %v4974, %v4970
    %v4976 = vlaneseq
    %v4977 = vshrl.u32 %v4976, 7
    %v4978 = vsub.s32 %v3925, %v4977
    %v4979 = vrot.slane %v3598, %v4978
    %v4980 = vsel %vm3930, %v4979, %v4975
    %v4981 = vlaneseq
    %v4982 = vshrl.u32 %v4981, 7
    %v4983 = vsub.s32 %v3932, %v4982
    %v4984 = vrot.slane %v3599, %v4983
    %v4985 = vsel %vm3937, %v4984, %v4980
    %v4986 = vlaneseq
    %v4987 = vshrl.u32 %v4986, 7
    %v4988 = vsub.s32 %v3939, %v4987
    %v4989 = vrot.slane %v3600, %v4988
    %v4990 = vsel %vm3944, %v4989, %v4985
    %v4991 = vlaneseq
    %v4992 = vshrl.u32 %v4991, 7
    %v4993 = vsub.s32 %v3946, %v4992
    %v4994 = vrot.slane %v3601, %v4993
    %v4995 = vsel %vm3951, %v4994, %v4990
    %v4996 = vlaneseq
    %v4997 = vshrl.u32 %v4996, 7
    %v4998 = vsub.s32 %v3953, %v4997
    %v4999 = vrot.slane %v3602, %v4998
    %v5000 = vsel %vm3958, %v4999, %v4995
    %v5001 = vlaneseq
    %v5002 = vshrl.u32 %v5001, 7
    %v5003 = vsub.s32 %v3960, %v5002
    %v5004 = vrot.slane %v3603, %v5003
    %v5005 = vsel %vm3965, %v5004, %v5000
    %v5006 = vlaneseq
    %v5007 = vshrl.u32 %v5006, 7
    %v5008 = vsub.s32 %v3967, %v5007
    %v5009 = vrot.slane %v3604, %v5008
    %v5010 = vsel %vm3972, %v5009, %v5005
    %v5011 = vlaneseq
    %v5012 = vshrl.u32 %v5011, 7
    %v5013 = vsub.s32 %v3974, %v5012
    %v5014 = vrot.slane %v3605, %v5013
    %v5015 = vsel %vm3979, %v5014, %v5010
    %v5016 = vlaneseq
    %v5017 = vshrl.u32 %v5016, 7
    %v5018 = vsub.s32 %v3981, %v5017
    %v5019 = vrot.slane %v3606, %v5018
    %v5020 = vsel %vm3986, %v5019, %v5015
    %v5021 = vlaneseq
    %v5022 = vshrl.u32 %v5021, 7
    %v5023 = vsub.s32 %v3988, %v5022
    %v5024 = vrot.slane %v3607, %v5023
    %v5025 = vsel %vm3993, %v5024, %v5020
    %v5026 = vlaneseq
    %v5027 = vshrl.u32 %v5026, 7
    %v5028 = vsub.s32 %v3995, %v5027
    %v5029 = vrot.slane %v3608, %v5028
    %v5030 = vsel %vm4000, %v5029, %v5025
    %v5031 = vlaneseq
    %v5032 = vshrl.u32 %v5031, 7
    %v5033 = vsub.s32 %v4002, %v5032
    %v5034 = vrot.slane %v3609, %v5033
    %v5035 = vsel %vm4007, %v5034, %v5030
    %v5036 = vlaneseq
    %v5037 = vshrl.u32 %v5036, 7
    %v5038 = vsub.s32 %v3899, %v5037
    %v5039 = vrot.slane %v3610, %v5038
    %v5040 = vlaneseq
    %v5041 = vshrl.u32 %v5040, 7
    %v5042 = vsub.s32 %v3904, %v5041
    %v5043 = vrot.slane %v3611, %v5042
    %v5044 = vsel %vm3909, %v5043, %v5039
    %v5045 = vlaneseq
    %v5046 = vshrl.u32 %v5045, 7
    %v5047 = vsub.s32 %v3911, %v5046
    %v5048 = vrot.slane %v3612, %v5047
    %v5049 = vsel %vm3916, %v5048, %v5044
    %v5050 = vlaneseq
    %v5051 = vshrl.u32 %v5050, 7
    %v5052 = vsub.s32 %v3918, %v5051
    %v5053 = vrot.slane %v3613, %v5052
    %v5054 = vsel %vm3923, %v5053, %v5049
    %v5055 = vlaneseq
    %v5056 = vshrl.u32 %v5055, 7
    %v5057 = vsub.s32 %v3925, %v5056
    %v5058 = vrot.slane %v3614, %v5057
    %v5059 = vsel %vm3930, %v5058, %v5054
    %v5060 = vlaneseq
    %v5061 = vshrl.u32 %v5060, 7
    %v5062 = vsub.s32 %v3932, %v5061
    %v5063 = vrot.slane %v3615, %v5062
    %v5064 = vsel %vm3937, %v5063, %v5059
    %v5065 = vlaneseq
    %v5066 = vshrl.u32 %v5065, 7
    %v5067 = vsub.s32 %v3939, %v5066
    %v5068 = vrot.slane %v3616, %v5067
    %v5069 = vsel %vm3944, %v5068, %v5064
    %v5070 = vlaneseq
    %v5071 = vshrl.u32 %v5070, 7
    %v5072 = vsub.s32 %v3946, %v5071
    %v5073 = vrot.slane %v3617, %v5072
    %v5074 = vsel %vm3951, %v5073, %v5069
    %v5075 = vlaneseq
    %v5076 = vshrl.u32 %v5075, 7
    %v5077 = vsub.s32 %v3953, %v5076
    %v5078 = vrot.slane %v3618, %v5077
    %v5079 = vsel %vm3958, %v5078, %v5074
    %v5080 = vlaneseq
    %v5081 = vshrl.u32 %v5080, 7
    %v5082 = vsub.s32 %v3960, %v5081
    %v5083 = vrot.slane %v3619, %v5082
    %v5084 = vsel %vm3965, %v5083, %v5079
    %v5085 = vlaneseq
    %v5086 = vshrl.u32 %v5085, 7
    %v5087 = vsub.s32 %v3967, %v5086
    %v5088 = vrot.slane %v3620, %v5087
    %v5089 = vsel %vm3972, %v5088, %v5084
    %v5090 = vlaneseq
    %v5091 = vshrl.u32 %v5090, 7
    %v5092 = vsub.s32 %v3974, %v5091
    %v5093 = vrot.slane %v3621, %v5092
    %v5094 = vsel %vm3979, %v5093, %v5089
    %v5095 = vlaneseq
    %v5096 = vshrl.u32 %v5095, 7
    %v5097 = vsub.s32 %v3981, %v5096
    %v5098 = vrot.slane %v3622, %v5097
    %v5099 = vsel %vm3986, %v5098, %v5094
    %v5100 = vlaneseq
    %v5101 = vshrl.u32 %v5100, 7
    %v5102 = vsub.s32 %v3988, %v5101
    %v5103 = vrot.slane %v3623, %v5102
    %v5104 = vsel %vm3993, %v5103, %v5099
    %v5105 = vlaneseq
    %v5106 = vshrl.u32 %v5105, 7
    %v5107 = vsub.s32 %v3995, %v5106
    %v5108 = vrot.slane %v3624, %v5107
    %v5109 = vsel %vm4000, %v5108, %v5104
    %v5110 = vlaneseq
    %v5111 = vshrl.u32 %v5110, 7
    %v5112 = vsub.s32 %v4002, %v5111
    %v5113 = vrot.slane %v3625, %v5112
    %v5114 = vsel %vm4007, %v5113, %v5109
    %v5115 = vlaneseq
    %v5116 = vshrl.u32 %v5115, 7
    %v5117 = vsub.s32 %v3899, %v5116
    %v5118 = vrot.slane %v3626, %v5117
    %v5119 = vlaneseq
    %v5120 = vshrl.u32 %v5119, 7
    %v5121 = vsub.s32 %v3904, %v5120
    %v5122 = vrot.slane %v3627, %v5121
    %v5123 = vsel %vm3909, %v5122, %v5118
    %v5124 = vlaneseq
    %v5125 = vshrl.u32 %v5124, 7
    %v5126 = vsub.s32 %v3911, %v5125
    %v5127 = vrot.slane %v3628, %v5126
    %v5128 = vsel %vm3916, %v5127, %v5123
    %v5129 = vlaneseq
    %v5130 = vshrl.u32 %v5129, 7
    %v5131 = vsub.s32 %v3918, %v5130
    %v5132 = vrot.slane %v3629, %v5131
    %v5133 = vsel %vm3923, %v5132, %v5128
    %v5134 = vlaneseq
    %v5135 = vshrl.u32 %v5134, 7
    %v5136 = vsub.s32 %v3925, %v5135
    %v5137 = vrot.slane %v3630, %v5136
    %v5138 = vsel %vm3930, %v5137, %v5133
    %v5139 = vlaneseq
    %v5140 = vshrl.u32 %v5139, 7
    %v5141 = vsub.s32 %v3932, %v5140
    %v5142 = vrot.slane %v3631, %v5141
    %v5143 = vsel %vm3937, %v5142, %v5138
    %v5144 = vlaneseq
    %v5145 = vshrl.u32 %v5144, 7
    %v5146 = vsub.s32 %v3939, %v5145
    %v5147 = vrot.slane %v3632, %v5146
    %v5148 = vsel %vm3944, %v5147, %v5143
    %v5149 = vlaneseq
    %v5150 = vshrl.u32 %v5149, 7
    %v5151 = vsub.s32 %v3946, %v5150
    %v5152 = vrot.slane %v3633, %v5151
    %v5153 = vsel %vm3951, %v5152, %v5148
    %v5154 = vlaneseq
    %v5155 = vshrl.u32 %v5154, 7
    %v5156 = vsub.s32 %v3953, %v5155
    %v5157 = vrot.slane %v3634, %v5156
    %v5158 = vsel %vm3958, %v5157, %v5153
    %v5159 = vlaneseq
    %v5160 = vshrl.u32 %v5159, 7
    %v5161 = vsub.s32 %v3960, %v5160
    %v5162 = vrot.slane %v3635, %v5161
    %v5163 = vsel %vm3965, %v5162, %v5158
    %v5164 = vlaneseq
    %v5165 = vshrl.u32 %v5164, 7
    %v5166 = vsub.s32 %v3967, %v5165
    %v5167 = vrot.slane %v3636, %v5166
    %v5168 = vsel %vm3972, %v5167, %v5163
    %v5169 = vlaneseq
    %v5170 = vshrl.u32 %v5169, 7
    %v5171 = vsub.s32 %v3974, %v5170
    %v5172 = vrot.slane %v3637, %v5171
    %v5173 = vsel %vm3979, %v5172, %v5168
    %v5174 = vlaneseq
    %v5175 = vshrl.u32 %v5174, 7
    %v5176 = vsub.s32 %v3981, %v5175
    %v5177 = vrot.slane %v3638, %v5176
    %v5178 = vsel %vm3986, %v5177, %v5173
    %v5179 = vlaneseq
    %v5180 = vshrl.u32 %v5179, 7
    %v5181 = vsub.s32 %v3988, %v5180
    %v5182 = vrot.slane %v3639, %v5181
    %v5183 = vsel %vm3993, %v5182, %v5178
    %v5184 = vlaneseq
    %v5185 = vshrl.u32 %v5184, 7
    %v5186 = vsub.s32 %v3995, %v5185
    %v5187 = vrot.slane %v3640, %v5186
    %v5188 = vsel %vm4000, %v5187, %v5183
    %v5189 = vlaneseq
    %v5190 = vshrl.u32 %v5189, 7
    %v5191 = vsub.s32 %v4002, %v5190
    %v5192 = vrot.slane %v3641, %v5191
    %v5193 = vsel %vm4007, %v5192, %v5188
    %v5194 = vlaneseq
    %v5195 = vshrl.u32 %v5194, 7
    %v5196 = vsub.s32 %v3899, %v5195
    %v5197 = vrot.slane %v3642, %v5196
    %v5198 = vlaneseq
    %v5199 = vshrl.u32 %v5198, 7
    %v5200 = vsub.s32 %v3904, %v5199
    %v5201 = vrot.slane %v3643, %v5200
    %v5202 = vsel %vm3909, %v5201, %v5197
    %v5203 = vlaneseq
    %v5204 = vshrl.u32 %v5203, 7
    %v5205 = vsub.s32 %v3911, %v5204
    %v5206 = vrot.slane %v3644, %v5205
    %v5207 = vsel %vm3916, %v5206, %v5202
    %v5208 = vlaneseq
    %v5209 = vshrl.u32 %v5208, 7
    %v5210 = vsub.s32 %v3918, %v5209
    %v5211 = vrot.slane %v3645, %v5210
    %v5212 = vsel %vm3923, %v5211, %v5207
    %v5213 = vlaneseq
    %v5214 = vshrl.u32 %v5213, 7
    %v5215 = vsub.s32 %v3925, %v5214
    %v5216 = vrot.slane %v3646, %v5215
    %v5217 = vsel %vm3930, %v5216, %v5212
    %v5218 = vlaneseq
    %v5219 = vshrl.u32 %v5218, 7
    %v5220 = vsub.s32 %v3932, %v5219
    %v5221 = vrot.slane %v3647, %v5220
    %v5222 = vsel %vm3937, %v5221, %v5217
    %v5223 = vlaneseq
    %v5224 = vshrl.u32 %v5223, 7
    %v5225 = vsub.s32 %v3939, %v5224
    %v5226 = vrot.slane %v3648, %v5225
    %v5227 = vsel %vm3944, %v5226, %v5222
    %v5228 = vlaneseq
    %v5229 = vshrl.u32 %v5228, 7
    %v5230 = vsub.s32 %v3946, %v5229
    %v5231 = vrot.slane %v3649, %v5230
    %v5232 = vsel %vm3951, %v5231, %v5227
    %v5233 = vlaneseq
    %v5234 = vshrl.u32 %v5233, 7
    %v5235 = vsub.s32 %v3953, %v5234
    %v5236 = vrot.slane %v3650, %v5235
    %v5237 = vsel %vm3958, %v5236, %v5232
    %v5238 = vlaneseq
    %v5239 = vshrl.u32 %v5238, 7
    %v5240 = vsub.s32 %v3960, %v5239
    %v5241 = vrot.slane %v3651, %v5240
    %v5242 = vsel %vm3965, %v5241, %v5237
    %v5243 = vlaneseq
    %v5244 = vshrl.u32 %v5243, 7
    %v5245 = vsub.s32 %v3967, %v5244
    %v5246 = vrot.slane %v3652, %v5245
    %v5247 = vsel %vm3972, %v5246, %v5242
    %v5248 = vlaneseq
    %v5249 = vshrl.u32 %v5248, 7
    %v5250 = vsub.s32 %v3974, %v5249
    %v5251 = vrot.slane %v3653, %v5250
    %v5252 = vsel %vm3979, %v5251, %v5247
    %v5253 = vlaneseq
    %v5254 = vshrl.u32 %v5253, 7
    %v5255 = vsub.s32 %v3981, %v5254
    %v5256 = vrot.slane %v3654, %v5255
    %v5257 = vsel %vm3986, %v5256, %v5252
    %v5258 = vlaneseq
    %v5259 = vshrl.u32 %v5258, 7
    %v5260 = vsub.s32 %v3988, %v5259
    %v5261 = vrot.slane %v3655, %v5260
    %v5262 = vsel %vm3993, %v5261, %v5257
    %v5263 = vlaneseq
    %v5264 = vshrl.u32 %v5263, 7
    %v5265 = vsub.s32 %v3995, %v5264
    %v5266 = vrot.slane %v3656, %v5265
    %v5267 = vsel %vm4000, %v5266, %v5262
    %v5268 = vlaneseq
    %v5269 = vshrl.u32 %v5268, 7
    %v5270 = vsub.s32 %v4002, %v5269
    %v5271 = vrot.slane %v3657, %v5270
    %v5272 = vsel %vm4007, %v5271, %v5267
    %v5273 = vlaneseq
    %v5274 = vshrl.u32 %v5273, 7
    %v5275 = vsub.s32 %v3899, %v5274
    %v5276 = vrot.slane %v3658, %v5275
    %v5277 = vlaneseq
    %v5278 = vshrl.u32 %v5277, 7
    %v5279 = vsub.s32 %v3904, %v5278
    %v5280 = vrot.slane %v3659, %v5279
    %v5281 = vsel %vm3909, %v5280, %v5276
    %v5282 = vlaneseq
    %v5283 = vshrl.u32 %v5282, 7
    %v5284 = vsub.s32 %v3911, %v5283
    %v5285 = vrot.slane %v3660, %v5284
    %v5286 = vsel %vm3916, %v5285, %v5281
    %v5287 = vlaneseq
    %v5288 = vshrl.u32 %v5287, 7
    %v5289 = vsub.s32 %v3918, %v5288
    %v5290 = vrot.slane %v3661, %v5289
    %v5291 = vsel %vm3923, %v5290, %v5286
    %v5292 = vlaneseq
    %v5293 = vshrl.u32 %v5292, 7
    %v5294 = vsub.s32 %v3925, %v5293
    %v5295 = vrot.slane %v3662, %v5294
    %v5296 = vsel %vm3930, %v5295, %v5291
    %v5297 = vlaneseq
    %v5298 = vshrl.u32 %v5297, 7
    %v5299 = vsub.s32 %v3932, %v5298
    %v5300 = vrot.slane %v3663, %v5299
    %v5301 = vsel %vm3937, %v5300, %v5296
    %v5302 = vlaneseq
    %v5303 = vshrl.u32 %v5302, 7
    %v5304 = vsub.s32 %v3939, %v5303
    %v5305 = vrot.slane %v3664, %v5304
    %v5306 = vsel %vm3944, %v5305, %v5301
    %v5307 = vlaneseq
    %v5308 = vshrl.u32 %v5307, 7
    %v5309 = vsub.s32 %v3946, %v5308
    %v5310 = vrot.slane %v3665, %v5309
    %v5311 = vsel %vm3951, %v5310, %v5306
    %v5312 = vlaneseq
    %v5313 = vshrl.u32 %v5312, 7
    %v5314 = vsub.s32 %v3953, %v5313
    %v5315 = vrot.slane %v3666, %v5314
    %v5316 = vsel %vm3958, %v5315, %v5311
    %v5317 = vlaneseq
    %v5318 = vshrl.u32 %v5317, 7
    %v5319 = vsub.s32 %v3960, %v5318
    %v5320 = vrot.slane %v3667, %v5319
    %v5321 = vsel %vm3965, %v5320, %v5316
    %v5322 = vlaneseq
    %v5323 = vshrl.u32 %v5322, 7
    %v5324 = vsub.s32 %v3967, %v5323
    %v5325 = vrot.slane %v3668, %v5324
    %v5326 = vsel %vm3972, %v5325, %v5321
    %v5327 = vlaneseq
    %v5328 = vshrl.u32 %v5327, 7
    %v5329 = vsub.s32 %v3974, %v5328
    %v5330 = vrot.slane %v3669, %v5329
    %v5331 = vsel %vm3979, %v5330, %v5326
    %v5332 = vlaneseq
    %v5333 = vshrl.u32 %v5332, 7
    %v5334 = vsub.s32 %v3981, %v5333
    %v5335 = vrot.slane %v3670, %v5334
    %v5336 = vsel %vm3986, %v5335, %v5331
    %v5337 = vlaneseq
    %v5338 = vshrl.u32 %v5337, 7
    %v5339 = vsub.s32 %v3988, %v5338
    %v5340 = vrot.slane %v3671, %v5339
    %v5341 = vsel %vm3993, %v5340, %v5336
    %v5342 = vlaneseq
    %v5343 = vshrl.u32 %v5342, 7
    %v5344 = vsub.s32 %v3995, %v5343
    %v5345 = vrot.slane %v3672, %v5344
    %v5346 = vsel %vm4000, %v5345, %v5341
    %v5347 = vlaneseq
    %v5348 = vshrl.u32 %v5347, 7
    %v5349 = vsub.s32 %v4002, %v5348
    %v5350 = vrot.slane %v3673, %v5349
    %v5351 = vsel %vm4007, %v5350, %v5346
    %v5352 = vlaneseq
    %v5353 = vshrl.u32 %v5352, 7
    %v5354 = vsub.s32 %v3899, %v5353
    %v5355 = vrot.slane %v3674, %v5354
    %v5356 = vlaneseq
    %v5357 = vshrl.u32 %v5356, 7
    %v5358 = vsub.s32 %v3904, %v5357
    %v5359 = vrot.slane %v3675, %v5358
    %v5360 = vsel %vm3909, %v5359, %v5355
    %v5361 = vlaneseq
    %v5362 = vshrl.u32 %v5361, 7
    %v5363 = vsub.s32 %v3911, %v5362
    %v5364 = vrot.slane %v3676, %v5363
    %v5365 = vsel %vm3916, %v5364, %v5360
    %v5366 = vlaneseq
    %v5367 = vshrl.u32 %v5366, 7
    %v5368 = vsub.s32 %v3918, %v5367
    %v5369 = vrot.slane %v3677, %v5368
    %v5370 = vsel %vm3923, %v5369, %v5365
    %v5371 = vlaneseq
    %v5372 = vshrl.u32 %v5371, 7
    %v5373 = vsub.s32 %v3925, %v5372
    %v5374 = vrot.slane %v3678, %v5373
    %v5375 = vsel %vm3930, %v5374, %v5370
    %v5376 = vlaneseq
    %v5377 = vshrl.u32 %v5376, 7
    %v5378 = vsub.s32 %v3932, %v5377
    %v5379 = vrot.slane %v3679, %v5378
    %v5380 = vsel %vm3937, %v5379, %v5375
    %v5381 = vlaneseq
    %v5382 = vshrl.u32 %v5381, 7
    %v5383 = vsub.s32 %v3939, %v5382
    %v5384 = vrot.slane %v3680, %v5383
    %v5385 = vsel %vm3944, %v5384, %v5380
    %v5386 = vlaneseq
    %v5387 = vshrl.u32 %v5386, 7
    %v5388 = vsub.s32 %v3946, %v5387
    %v5389 = vrot.slane %v3681, %v5388
    %v5390 = vsel %vm3951, %v5389, %v5385
    %v5391 = vlaneseq
    %v5392 = vshrl.u32 %v5391, 7
    %v5393 = vsub.s32 %v3953, %v5392
    %v5394 = vrot.slane %v3682, %v5393
    %v5395 = vsel %vm3958, %v5394, %v5390
    %v5396 = vlaneseq
    %v5397 = vshrl.u32 %v5396, 7
    %v5398 = vsub.s32 %v3960, %v5397
    %v5399 = vrot.slane %v3683, %v5398
    %v5400 = vsel %vm3965, %v5399, %v5395
    %v5401 = vlaneseq
    %v5402 = vshrl.u32 %v5401, 7
    %v5403 = vsub.s32 %v3967, %v5402
    %v5404 = vrot.slane %v3684, %v5403
    %v5405 = vsel %vm3972, %v5404, %v5400
    %v5406 = vlaneseq
    %v5407 = vshrl.u32 %v5406, 7
    %v5408 = vsub.s32 %v3974, %v5407
    %v5409 = vrot.slane %v3685, %v5408
    %v5410 = vsel %vm3979, %v5409, %v5405
    %v5411 = vlaneseq
    %v5412 = vshrl.u32 %v5411, 7
    %v5413 = vsub.s32 %v3981, %v5412
    %v5414 = vrot.slane %v3686, %v5413
    %v5415 = vsel %vm3986, %v5414, %v5410
    %v5416 = vlaneseq
    %v5417 = vshrl.u32 %v5416, 7
    %v5418 = vsub.s32 %v3988, %v5417
    %v5419 = vrot.slane %v3687, %v5418
    %v5420 = vsel %vm3993, %v5419, %v5415
    %v5421 = vlaneseq
    %v5422 = vshrl.u32 %v5421, 7
    %v5423 = vsub.s32 %v3995, %v5422
    %v5424 = vrot.slane %v3688, %v5423
    %v5425 = vsel %vm4000, %v5424, %v5420
    %v5426 = vlaneseq
    %v5427 = vshrl.u32 %v5426, 7
    %v5428 = vsub.s32 %v4002, %v5427
    %v5429 = vrot.slane %v3689, %v5428
    %v5430 = vsel %vm4007, %v5429, %v5425
    %v5431 = vlaneseq
    %v5432 = vshrl.u32 %v5431, 7
    %v5433 = vsub.s32 %v3899, %v5432
    %v5434 = vrot.slane %v3690, %v5433
    %v5435 = vlaneseq
    %v5436 = vshrl.u32 %v5435, 7
    %v5437 = vsub.s32 %v3904, %v5436
    %v5438 = vrot.slane %v3691, %v5437
    %v5439 = vsel %vm3909, %v5438, %v5434
    %v5440 = vlaneseq
    %v5441 = vshrl.u32 %v5440, 7
    %v5442 = vsub.s32 %v3911, %v5441
    %v5443 = vrot.slane %v3692, %v5442
    %v5444 = vsel %vm3916, %v5443, %v5439
    %v5445 = vlaneseq
    %v5446 = vshrl.u32 %v5445, 7
    %v5447 = vsub.s32 %v3918, %v5446
    %v5448 = vrot.slane %v3693, %v5447
    %v5449 = vsel %vm3923, %v5448, %v5444
    %v5450 = vlaneseq
    %v5451 = vshrl.u32 %v5450, 7
    %v5452 = vsub.s32 %v3925, %v5451
    %v5453 = vrot.slane %v3694, %v5452
    %v5454 = vsel %vm3930, %v5453, %v5449
    %v5455 = vlaneseq
    %v5456 = vshrl.u32 %v5455, 7
    %v5457 = vsub.s32 %v3932, %v5456
    %v5458 = vrot.slane %v3695, %v5457
    %v5459 = vsel %vm3937, %v5458, %v5454
    %v5460 = vlaneseq
    %v5461 = vshrl.u32 %v5460, 7
    %v5462 = vsub.s32 %v3939, %v5461
    %v5463 = vrot.slane %v3696, %v5462
    %v5464 = vsel %vm3944, %v5463, %v5459
    %v5465 = vlaneseq
    %v5466 = vshrl.u32 %v5465, 7
    %v5467 = vsub.s32 %v3946, %v5466
    %v5468 = vrot.slane %v3697, %v5467
    %v5469 = vsel %vm3951, %v5468, %v5464
    %v5470 = vlaneseq
    %v5471 = vshrl.u32 %v5470, 7
    %v5472 = vsub.s32 %v3953, %v5471
    %v5473 = vrot.slane %v3698, %v5472
    %v5474 = vsel %vm3958, %v5473, %v5469
    %v5475 = vlaneseq
    %v5476 = vshrl.u32 %v5475, 7
    %v5477 = vsub.s32 %v3960, %v5476
    %v5478 = vrot.slane %v3699, %v5477
    %v5479 = vsel %vm3965, %v5478, %v5474
    %v5480 = vlaneseq
    %v5481 = vshrl.u32 %v5480, 7
    %v5482 = vsub.s32 %v3967, %v5481
    %v5483 = vrot.slane %v3700, %v5482
    %v5484 = vsel %vm3972, %v5483, %v5479
    %v5485 = vlaneseq
    %v5486 = vshrl.u32 %v5485, 7
    %v5487 = vsub.s32 %v3974, %v5486
    %v5488 = vrot.slane %v3701, %v5487
    %v5489 = vsel %vm3979, %v5488, %v5484
    %v5490 = vlaneseq
    %v5491 = vshrl.u32 %v5490, 7
    %v5492 = vsub.s32 %v3981, %v5491
    %v5493 = vrot.slane %v3702, %v5492
    %v5494 = vsel %vm3986, %v5493, %v5489
    %v5495 = vlaneseq
    %v5496 = vshrl.u32 %v5495, 7
    %v5497 = vsub.s32 %v3988, %v5496
    %v5498 = vrot.slane %v3703, %v5497
    %v5499 = vsel %vm3993, %v5498, %v5494
    %v5500 = vlaneseq
    %v5501 = vshrl.u32 %v5500, 7
    %v5502 = vsub.s32 %v3995, %v5501
    %v5503 = vrot.slane %v3704, %v5502
    %v5504 = vsel %vm4000, %v5503, %v5499
    %v5505 = vlaneseq
    %v5506 = vshrl.u32 %v5505, 7
    %v5507 = vsub.s32 %v4002, %v5506
    %v5508 = vrot.slane %v3705, %v5507
    %v5509 = vsel %vm4007, %v5508, %v5504
    %v5510 = vlaneseq
    %v5511 = vshrl.u32 %v5510, 7
    %v5512 = vsub.s32 %v3899, %v5511
    %v5513 = vrot.slane %v3706, %v5512
    %v5514 = vlaneseq
    %v5515 = vshrl.u32 %v5514, 7
    %v5516 = vsub.s32 %v3904, %v5515
    %v5517 = vrot.slane %v3707, %v5516
    %v5518 = vsel %vm3909, %v5517, %v5513
    %v5519 = vlaneseq
    %v5520 = vshrl.u32 %v5519, 7
    %v5521 = vsub.s32 %v3911, %v5520
    %v5522 = vrot.slane %v3708, %v5521
    %v5523 = vsel %vm3916, %v5522, %v5518
    %v5524 = vlaneseq
    %v5525 = vshrl.u32 %v5524, 7
    %v5526 = vsub.s32 %v3918, %v5525
    %v5527 = vrot.slane %v3709, %v5526
    %v5528 = vsel %vm3923, %v5527, %v5523
    %v5529 = vlaneseq
    %v5530 = vshrl.u32 %v5529, 7
    %v5531 = vsub.s32 %v3925, %v5530
    %v5532 = vrot.slane %v3710, %v5531
    %v5533 = vsel %vm3930, %v5532, %v5528
    %v5534 = vlaneseq
    %v5535 = vshrl.u32 %v5534, 7
    %v5536 = vsub.s32 %v3932, %v5535
    %v5537 = vrot.slane %v3711, %v5536
    %v5538 = vsel %vm3937, %v5537, %v5533
    %v5539 = vlaneseq
    %v5540 = vshrl.u32 %v5539, 7
    %v5541 = vsub.s32 %v3939, %v5540
    %v5542 = vrot.slane %v3712, %v5541
    %v5543 = vsel %vm3944, %v5542, %v5538
    %v5544 = vlaneseq
    %v5545 = vshrl.u32 %v5544, 7
    %v5546 = vsub.s32 %v3946, %v5545
    %v5547 = vrot.slane %v3713, %v5546
    %v5548 = vsel %vm3951, %v5547, %v5543
    %v5549 = vlaneseq
    %v5550 = vshrl.u32 %v5549, 7
    %v5551 = vsub.s32 %v3953, %v5550
    %v5552 = vrot.slane %v3714, %v5551
    %v5553 = vsel %vm3958, %v5552, %v5548
    %v5554 = vlaneseq
    %v5555 = vshrl.u32 %v5554, 7
    %v5556 = vsub.s32 %v3960, %v5555
    %v5557 = vrot.slane %v3715, %v5556
    %v5558 = vsel %vm3965, %v5557, %v5553
    %v5559 = vlaneseq
    %v5560 = vshrl.u32 %v5559, 7
    %v5561 = vsub.s32 %v3967, %v5560
    %v5562 = vrot.slane %v3716, %v5561
    %v5563 = vsel %vm3972, %v5562, %v5558
    %v5564 = vlaneseq
    %v5565 = vshrl.u32 %v5564, 7
    %v5566 = vsub.s32 %v3974, %v5565
    %v5567 = vrot.slane %v3717, %v5566
    %v5568 = vsel %vm3979, %v5567, %v5563
    %v5569 = vlaneseq
    %v5570 = vshrl.u32 %v5569, 7
    %v5571 = vsub.s32 %v3981, %v5570
    %v5572 = vrot.slane %v3718, %v5571
    %v5573 = vsel %vm3986, %v5572, %v5568
    %v5574 = vlaneseq
    %v5575 = vshrl.u32 %v5574, 7
    %v5576 = vsub.s32 %v3988, %v5575
    %v5577 = vrot.slane %v3719, %v5576
    %v5578 = vsel %vm3993, %v5577, %v5573
    %v5579 = vlaneseq
    %v5580 = vshrl.u32 %v5579, 7
    %v5581 = vsub.s32 %v3995, %v5580
    %v5582 = vrot.slane %v3720, %v5581
    %v5583 = vsel %vm4000, %v5582, %v5578
    %v5584 = vlaneseq
    %v5585 = vshrl.u32 %v5584, 7
    %v5586 = vsub.s32 %v4002, %v5585
    %v5587 = vrot.slane %v3721, %v5586
    %v5588 = vsel %vm4007, %v5587, %v5583
    %v5589 = vlaneseq
    %v5590 = vshrl.u32 %v5589, 7
    %v5591 = vsub.s32 %v3899, %v5590
    %v5592 = vrot.slane %v3722, %v5591
    %v5593 = vlaneseq
    %v5594 = vshrl.u32 %v5593, 7
    %v5595 = vsub.s32 %v3904, %v5594
    %v5596 = vrot.slane %v3723, %v5595
    %v5597 = vsel %vm3909, %v5596, %v5592
    %v5598 = vlaneseq
    %v5599 = vshrl.u32 %v5598, 7
    %v5600 = vsub.s32 %v3911, %v5599
    %v5601 = vrot.slane %v3724, %v5600
    %v5602 = vsel %vm3916, %v5601, %v5597
    %v5603 = vlaneseq
    %v5604 = vshrl.u32 %v5603, 7
    %v5605 = vsub.s32 %v3918, %v5604
    %v5606 = vrot.slane %v3725, %v5605
    %v5607 = vsel %vm3923, %v5606, %v5602
    %v5608 = vlaneseq
    %v5609 = vshrl.u32 %v5608, 7
    %v5610 = vsub.s32 %v3925, %v5609
    %v5611 = vrot.slane %v3726, %v5610
    %v5612 = vsel %vm3930, %v5611, %v5607
    %v5613 = vlaneseq
    %v5614 = vshrl.u32 %v5613, 7
    %v5615 = vsub.s32 %v3932, %v5614
    %v5616 = vrot.slane %v3727, %v5615
    %v5617 = vsel %vm3937, %v5616, %v5612
    %v5618 = vlaneseq
    %v5619 = vshrl.u32 %v5618, 7
    %v5620 = vsub.s32 %v3939, %v5619
    %v5621 = vrot.slane %v3728, %v5620
    %v5622 = vsel %vm3944, %v5621, %v5617
    %v5623 = vlaneseq
    %v5624 = vshrl.u32 %v5623, 7
    %v5625 = vsub.s32 %v3946, %v5624
    %v5626 = vrot.slane %v3729, %v5625
    %v5627 = vsel %vm3951, %v5626, %v5622
    %v5628 = vlaneseq
    %v5629 = vshrl.u32 %v5628, 7
    %v5630 = vsub.s32 %v3953, %v5629
    %v5631 = vrot.slane %v3730, %v5630
    %v5632 = vsel %vm3958, %v5631, %v5627
    %v5633 = vlaneseq
    %v5634 = vshrl.u32 %v5633, 7
    %v5635 = vsub.s32 %v3960, %v5634
    %v5636 = vrot.slane %v3731, %v5635
    %v5637 = vsel %vm3965, %v5636, %v5632
    %v5638 = vlaneseq
    %v5639 = vshrl.u32 %v5638, 7
    %v5640 = vsub.s32 %v3967, %v5639
    %v5641 = vrot.slane %v3732, %v5640
    %v5642 = vsel %vm3972, %v5641, %v5637
    %v5643 = vlaneseq
    %v5644 = vshrl.u32 %v5643, 7
    %v5645 = vsub.s32 %v3974, %v5644
    %v5646 = vrot.slane %v3733, %v5645
    %v5647 = vsel %vm3979, %v5646, %v5642
    %v5648 = vlaneseq
    %v5649 = vshrl.u32 %v5648, 7
    %v5650 = vsub.s32 %v3981, %v5649
    %v5651 = vrot.slane %v3734, %v5650
    %v5652 = vsel %vm3986, %v5651, %v5647
    %v5653 = vlaneseq
    %v5654 = vshrl.u32 %v5653, 7
    %v5655 = vsub.s32 %v3988, %v5654
    %v5656 = vrot.slane %v3735, %v5655
    %v5657 = vsel %vm3993, %v5656, %v5652
    %v5658 = vlaneseq
    %v5659 = vshrl.u32 %v5658, 7
    %v5660 = vsub.s32 %v3995, %v5659
    %v5661 = vrot.slane %v3736, %v5660
    %v5662 = vsel %vm4000, %v5661, %v5657
    %v5663 = vlaneseq
    %v5664 = vshrl.u32 %v5663, 7
    %v5665 = vsub.s32 %v4002, %v5664
    %v5666 = vrot.slane %v3737, %v5665
    %v5667 = vsel %vm4007, %v5666, %v5662
    %v5668 = vlaneseq
    %v5669 = vshrl.u32 %v5668, 7
    %v5670 = vsub.s32 %v3899, %v5669
    %v5671 = vrot.slane %v3738, %v5670
    %v5672 = vlaneseq
    %v5673 = vshrl.u32 %v5672, 7
    %v5674 = vsub.s32 %v3904, %v5673
    %v5675 = vrot.slane %v3739, %v5674
    %v5676 = vsel %vm3909, %v5675, %v5671
    %v5677 = vlaneseq
    %v5678 = vshrl.u32 %v5677, 7
    %v5679 = vsub.s32 %v3911, %v5678
    %v5680 = vrot.slane %v3740, %v5679
    %v5681 = vsel %vm3916, %v5680, %v5676
    %v5682 = vlaneseq
    %v5683 = vshrl.u32 %v5682, 7
    %v5684 = vsub.s32 %v3918, %v5683
    %v5685 = vrot.slane %v3741, %v5684
    %v5686 = vsel %vm3923, %v5685, %v5681
    %v5687 = vlaneseq
    %v5688 = vshrl.u32 %v5687, 7
    %v5689 = vsub.s32 %v3925, %v5688
    %v5690 = vrot.slane %v3742, %v5689
    %v5691 = vsel %vm3930, %v5690, %v5686
    %v5692 = vlaneseq
    %v5693 = vshrl.u32 %v5692, 7
    %v5694 = vsub.s32 %v3932, %v5693
    %v5695 = vrot.slane %v3743, %v5694
    %v5696 = vsel %vm3937, %v5695, %v5691
    %v5697 = vlaneseq
    %v5698 = vshrl.u32 %v5697, 7
    %v5699 = vsub.s32 %v3939, %v5698
    %v5700 = vrot.slane %v3744, %v5699
    %v5701 = vsel %vm3944, %v5700, %v5696
    %v5702 = vlaneseq
    %v5703 = vshrl.u32 %v5702, 7
    %v5704 = vsub.s32 %v3946, %v5703
    %v5705 = vrot.slane %v3745, %v5704
    %v5706 = vsel %vm3951, %v5705, %v5701
    %v5707 = vlaneseq
    %v5708 = vshrl.u32 %v5707, 7
    %v5709 = vsub.s32 %v3953, %v5708
    %v5710 = vrot.slane %v3746, %v5709
    %v5711 = vsel %vm3958, %v5710, %v5706
    %v5712 = vlaneseq
    %v5713 = vshrl.u32 %v5712, 7
    %v5714 = vsub.s32 %v3960, %v5713
    %v5715 = vrot.slane %v3747, %v5714
    %v5716 = vsel %vm3965, %v5715, %v5711
    %v5717 = vlaneseq
    %v5718 = vshrl.u32 %v5717, 7
    %v5719 = vsub.s32 %v3967, %v5718
    %v5720 = vrot.slane %v3748, %v5719
    %v5721 = vsel %vm3972, %v5720, %v5716
    %v5722 = vlaneseq
    %v5723 = vshrl.u32 %v5722, 7
    %v5724 = vsub.s32 %v3974, %v5723
    %v5725 = vrot.slane %v3749, %v5724
    %v5726 = vsel %vm3979, %v5725, %v5721
    %v5727 = vlaneseq
    %v5728 = vshrl.u32 %v5727, 7
    %v5729 = vsub.s32 %v3981, %v5728
    %v5730 = vrot.slane %v3750, %v5729
    %v5731 = vsel %vm3986, %v5730, %v5726
    %v5732 = vlaneseq
    %v5733 = vshrl.u32 %v5732, 7
    %v5734 = vsub.s32 %v3988, %v5733
    %v5735 = vrot.slane %v3751, %v5734
    %v5736 = vsel %vm3993, %v5735, %v5731
    %v5737 = vlaneseq
    %v5738 = vshrl.u32 %v5737, 7
    %v5739 = vsub.s32 %v3995, %v5738
    %v5740 = vrot.slane %v3752, %v5739
    %v5741 = vsel %vm4000, %v5740, %v5736
    %v5742 = vlaneseq
    %v5743 = vshrl.u32 %v5742, 7
    %v5744 = vsub.s32 %v4002, %v5743
    %v5745 = vrot.slane %v3753, %v5744
    %v5746 = vsel %vm4007, %v5745, %v5741
    %v5747 = vlaneseq
    %v5748 = vshrl.u32 %v5747, 7
    %v5749 = vsub.s32 %v3899, %v5748
    %v5750 = vrot.slane %v3754, %v5749
    %v5751 = vlaneseq
    %v5752 = vshrl.u32 %v5751, 7
    %v5753 = vsub.s32 %v3904, %v5752
    %v5754 = vrot.slane %v3755, %v5753
    %v5755 = vsel %vm3909, %v5754, %v5750
    %v5756 = vlaneseq
    %v5757 = vshrl.u32 %v5756, 7
    %v5758 = vsub.s32 %v3911, %v5757
    %v5759 = vrot.slane %v3756, %v5758
    %v5760 = vsel %vm3916, %v5759, %v5755
    %v5761 = vlaneseq
    %v5762 = vshrl.u32 %v5761, 7
    %v5763 = vsub.s32 %v3918, %v5762
    %v5764 = vrot.slane %v3757, %v5763
    %v5765 = vsel %vm3923, %v5764, %v5760
    %v5766 = vlaneseq
    %v5767 = vshrl.u32 %v5766, 7
    %v5768 = vsub.s32 %v3925, %v5767
    %v5769 = vrot.slane %v3758, %v5768
    %v5770 = vsel %vm3930, %v5769, %v5765
    %v5771 = vlaneseq
    %v5772 = vshrl.u32 %v5771, 7
    %v5773 = vsub.s32 %v3932, %v5772
    %v5774 = vrot.slane %v3759, %v5773
    %v5775 = vsel %vm3937, %v5774, %v5770
    %v5776 = vlaneseq
    %v5777 = vshrl.u32 %v5776, 7
    %v5778 = vsub.s32 %v3939, %v5777
    %v5779 = vrot.slane %v3760, %v5778
    %v5780 = vsel %vm3944, %v5779, %v5775
    %v5781 = vlaneseq
    %v5782 = vshrl.u32 %v5781, 7
    %v5783 = vsub.s32 %v3946, %v5782
    %v5784 = vrot.slane %v3761, %v5783
    %v5785 = vsel %vm3951, %v5784, %v5780
    %v5786 = vlaneseq
    %v5787 = vshrl.u32 %v5786, 7
    %v5788 = vsub.s32 %v3953, %v5787
    %v5789 = vrot.slane %v3762, %v5788
    %v5790 = vsel %vm3958, %v5789, %v5785
    %v5791 = vlaneseq
    %v5792 = vshrl.u32 %v5791, 7
    %v5793 = vsub.s32 %v3960, %v5792
    %v5794 = vrot.slane %v3763, %v5793
    %v5795 = vsel %vm3965, %v5794, %v5790
    %v5796 = vlaneseq
    %v5797 = vshrl.u32 %v5796, 7
    %v5798 = vsub.s32 %v3967, %v5797
    %v5799 = vrot.slane %v3764, %v5798
    %v5800 = vsel %vm3972, %v5799, %v5795
    %v5801 = vlaneseq
    %v5802 = vshrl.u32 %v5801, 7
    %v5803 = vsub.s32 %v3974, %v5802
    %v5804 = vrot.slane %v3765, %v5803
    %v5805 = vsel %vm3979, %v5804, %v5800
    %v5806 = vlaneseq
    %v5807 = vshrl.u32 %v5806, 7
    %v5808 = vsub.s32 %v3981, %v5807
    %v5809 = vrot.slane %v3766, %v5808
    %v5810 = vsel %vm3986, %v5809, %v5805
    %v5811 = vlaneseq
    %v5812 = vshrl.u32 %v5811, 7
    %v5813 = vsub.s32 %v3988, %v5812
    %v5814 = vrot.slane %v3767, %v5813
    %v5815 = vsel %vm3993, %v5814, %v5810
    %v5816 = vlaneseq
    %v5817 = vshrl.u32 %v5816, 7
    %v5818 = vsub.s32 %v3995, %v5817
    %v5819 = vrot.slane %v3768, %v5818
    %v5820 = vsel %vm4000, %v5819, %v5815
    %v5821 = vlaneseq
    %v5822 = vshrl.u32 %v5821, 7
    %v5823 = vsub.s32 %v4002, %v5822
    %v5824 = vrot.slane %v3769, %v5823
    %v5825 = vsel %vm4007, %v5824, %v5820
    %v5826 = vlaneseq
    %v5827 = vshrl.u32 %v5826, 7
    %v5828 = vsub.s32 %v3899, %v5827
    %v5829 = vrot.slane %v3770, %v5828
    %v5830 = vlaneseq
    %v5831 = vshrl.u32 %v5830, 7
    %v5832 = vsub.s32 %v3904, %v5831
    %v5833 = vrot.slane %v3771, %v5832
    %v5834 = vsel %vm3909, %v5833, %v5829
    %v5835 = vlaneseq
    %v5836 = vshrl.u32 %v5835, 7
    %v5837 = vsub.s32 %v3911, %v5836
    %v5838 = vrot.slane %v3772, %v5837
    %v5839 = vsel %vm3916, %v5838, %v5834
    %v5840 = vlaneseq
    %v5841 = vshrl.u32 %v5840, 7
    %v5842 = vsub.s32 %v3918, %v5841
    %v5843 = vrot.slane %v3773, %v5842
    %v5844 = vsel %vm3923, %v5843, %v5839
    %v5845 = vlaneseq
    %v5846 = vshrl.u32 %v5845, 7
    %v5847 = vsub.s32 %v3925, %v5846
    %v5848 = vrot.slane %v3774, %v5847
    %v5849 = vsel %vm3930, %v5848, %v5844
    %v5850 = vlaneseq
    %v5851 = vshrl.u32 %v5850, 7
    %v5852 = vsub.s32 %v3932, %v5851
    %v5853 = vrot.slane %v3775, %v5852
    %v5854 = vsel %vm3937, %v5853, %v5849
    %v5855 = vlaneseq
    %v5856 = vshrl.u32 %v5855, 7
    %v5857 = vsub.s32 %v3939, %v5856
    %v5858 = vrot.slane %v3776, %v5857
    %v5859 = vsel %vm3944, %v5858, %v5854
    %v5860 = vlaneseq
    %v5861 = vshrl.u32 %v5860, 7
    %v5862 = vsub.s32 %v3946, %v5861
    %v5863 = vrot.slane %v3777, %v5862
    %v5864 = vsel %vm3951, %v5863, %v5859
    %v5865 = vlaneseq
    %v5866 = vshrl.u32 %v5865, 7
    %v5867 = vsub.s32 %v3953, %v5866
    %v5868 = vrot.slane %v3778, %v5867
    %v5869 = vsel %vm3958, %v5868, %v5864
    %v5870 = vlaneseq
    %v5871 = vshrl.u32 %v5870, 7
    %v5872 = vsub.s32 %v3960, %v5871
    %v5873 = vrot.slane %v3779, %v5872
    %v5874 = vsel %vm3965, %v5873, %v5869
    %v5875 = vlaneseq
    %v5876 = vshrl.u32 %v5875, 7
    %v5877 = vsub.s32 %v3967, %v5876
    %v5878 = vrot.slane %v3780, %v5877
    %v5879 = vsel %vm3972, %v5878, %v5874
    %v5880 = vlaneseq
    %v5881 = vshrl.u32 %v5880, 7
    %v5882 = vsub.s32 %v3974, %v5881
    %v5883 = vrot.slane %v3781, %v5882
    %v5884 = vsel %vm3979, %v5883, %v5879
    %v5885 = vlaneseq
    %v5886 = vshrl.u32 %v5885, 7
    %v5887 = vsub.s32 %v3981, %v5886
    %v5888 = vrot.slane %v3782, %v5887
    %v5889 = vsel %vm3986, %v5888, %v5884
    %v5890 = vlaneseq
    %v5891 = vshrl.u32 %v5890, 7
    %v5892 = vsub.s32 %v3988, %v5891
    %v5893 = vrot.slane %v3783, %v5892
    %v5894 = vsel %vm3993, %v5893, %v5889
    %v5895 = vlaneseq
    %v5896 = vshrl.u32 %v5895, 7
    %v5897 = vsub.s32 %v3995, %v5896
    %v5898 = vrot.slane %v3784, %v5897
    %v5899 = vsel %vm4000, %v5898, %v5894
    %v5900 = vlaneseq
    %v5901 = vshrl.u32 %v5900, 7
    %v5902 = vsub.s32 %v4002, %v5901
    %v5903 = vrot.slane %v3785, %v5902
    %v5904 = vsel %vm4007, %v5903, %v5899
    %v5905 = vlaneseq
    %v5906 = vshrl.u32 %v5905, 7
    %v5907 = vsub.s32 %v3899, %v5906
    %v5908 = vrot.slane %v3786, %v5907
    %v5909 = vlaneseq
    %v5910 = vshrl.u32 %v5909, 7
    %v5911 = vsub.s32 %v3904, %v5910
    %v5912 = vrot.slane %v3787, %v5911
    %v5913 = vsel %vm3909, %v5912, %v5908
    %v5914 = vlaneseq
    %v5915 = vshrl.u32 %v5914, 7
    %v5916 = vsub.s32 %v3911, %v5915
    %v5917 = vrot.slane %v3788, %v5916
    %v5918 = vsel %vm3916, %v5917, %v5913
    %v5919 = vlaneseq
    %v5920 = vshrl.u32 %v5919, 7
    %v5921 = vsub.s32 %v3918, %v5920
    %v5922 = vrot.slane %v3789, %v5921
    %v5923 = vsel %vm3923, %v5922, %v5918
    %v5924 = vlaneseq
    %v5925 = vshrl.u32 %v5924, 7
    %v5926 = vsub.s32 %v3925, %v5925
    %v5927 = vrot.slane %v3790, %v5926
    %v5928 = vsel %vm3930, %v5927, %v5923
    %v5929 = vlaneseq
    %v5930 = vshrl.u32 %v5929, 7
    %v5931 = vsub.s32 %v3932, %v5930
    %v5932 = vrot.slane %v3791, %v5931
    %v5933 = vsel %vm3937, %v5932, %v5928
    %v5934 = vlaneseq
    %v5935 = vshrl.u32 %v5934, 7
    %v5936 = vsub.s32 %v3939, %v5935
    %v5937 = vrot.slane %v3792, %v5936
    %v5938 = vsel %vm3944, %v5937, %v5933
    %v5939 = vlaneseq
    %v5940 = vshrl.u32 %v5939, 7
    %v5941 = vsub.s32 %v3946, %v5940
    %v5942 = vrot.slane %v3793, %v5941
    %v5943 = vsel %vm3951, %v5942, %v5938
    %v5944 = vlaneseq
    %v5945 = vshrl.u32 %v5944, 7
    %v5946 = vsub.s32 %v3953, %v5945
    %v5947 = vrot.slane %v3794, %v5946
    %v5948 = vsel %vm3958, %v5947, %v5943
    %v5949 = vlaneseq
    %v5950 = vshrl.u32 %v5949, 7
    %v5951 = vsub.s32 %v3960, %v5950
    %v5952 = vrot.slane %v3795, %v5951
    %v5953 = vsel %vm3965, %v5952, %v5948
    %v5954 = vlaneseq
    %v5955 = vshrl.u32 %v5954, 7
    %v5956 = vsub.s32 %v3967, %v5955
    %v5957 = vrot.slane %v3796, %v5956
    %v5958 = vsel %vm3972, %v5957, %v5953
    %v5959 = vlaneseq
    %v5960 = vshrl.u32 %v5959, 7
    %v5961 = vsub.s32 %v3974, %v5960
    %v5962 = vrot.slane %v3797, %v5961
    %v5963 = vsel %vm3979, %v5962, %v5958
    %v5964 = vlaneseq
    %v5965 = vshrl.u32 %v5964, 7
    %v5966 = vsub.s32 %v3981, %v5965
    %v5967 = vrot.slane %v3798, %v5966
    %v5968 = vsel %vm3986, %v5967, %v5963
    %v5969 = vlaneseq
    %v5970 = vshrl.u32 %v5969, 7
    %v5971 = vsub.s32 %v3988, %v5970
    %v5972 = vrot.slane %v3799, %v5971
    %v5973 = vsel %vm3993, %v5972, %v5968
    %v5974 = vlaneseq
    %v5975 = vshrl.u32 %v5974, 7
    %v5976 = vsub.s32 %v3995, %v5975
    %v5977 = vrot.slane %v3800, %v5976
    %v5978 = vsel %vm4000, %v5977, %v5973
    %v5979 = vlaneseq
    %v5980 = vshrl.u32 %v5979, 7
    %v5981 = vsub.s32 %v4002, %v5980
    %v5982 = vrot.slane %v3801, %v5981
    %v5983 = vsel %vm4007, %v5982, %v5978
    %v5984 = vlaneseq
    %v5985 = vshrl.u32 %v5984, 7
    %v5986 = vsub.s32 %v3899, %v5985
    %v5987 = vrot.slane %v3802, %v5986
    %v5988 = vlaneseq
    %v5989 = vshrl.u32 %v5988, 7
    %v5990 = vsub.s32 %v3904, %v5989
    %v5991 = vrot.slane %v3803, %v5990
    %v5992 = vsel %vm3909, %v5991, %v5987
    %v5993 = vlaneseq
    %v5994 = vshrl.u32 %v5993, 7
    %v5995 = vsub.s32 %v3911, %v5994
    %v5996 = vrot.slane %v3804, %v5995
    %v5997 = vsel %vm3916, %v5996, %v5992
    %v5998 = vlaneseq
    %v5999 = vshrl.u32 %v5998, 7
    %v6000 = vsub.s32 %v3918, %v5999
    %v6001 = vrot.slane %v3805, %v6000
    %v6002 = vsel %vm3923, %v6001, %v5997
    %v6003 = vlaneseq
    %v6004 = vshrl.u32 %v6003, 7
    %v6005 = vsub.s32 %v3925, %v6004
    %v6006 = vrot.slane %v3806, %v6005
    %v6007 = vsel %vm3930, %v6006, %v6002
    %v6008 = vlaneseq
    %v6009 = vshrl.u32 %v6008, 7
    %v6010 = vsub.s32 %v3932, %v6009
    %v6011 = vrot.slane %v3807, %v6010
    %v6012 = vsel %vm3937, %v6011, %v6007
    %v6013 = vlaneseq
    %v6014 = vshrl.u32 %v6013, 7
    %v6015 = vsub.s32 %v3939, %v6014
    %v6016 = vrot.slane %v3808, %v6015
    %v6017 = vsel %vm3944, %v6016, %v6012
    %v6018 = vlaneseq
    %v6019 = vshrl.u32 %v6018, 7
    %v6020 = vsub.s32 %v3946, %v6019
    %v6021 = vrot.slane %v3809, %v6020
    %v6022 = vsel %vm3951, %v6021, %v6017
    %v6023 = vlaneseq
    %v6024 = vshrl.u32 %v6023, 7
    %v6025 = vsub.s32 %v3953, %v6024
    %v6026 = vrot.slane %v3810, %v6025
    %v6027 = vsel %vm3958, %v6026, %v6022
    %v6028 = vlaneseq
    %v6029 = vshrl.u32 %v6028, 7
    %v6030 = vsub.s32 %v3960, %v6029
    %v6031 = vrot.slane %v3811, %v6030
    %v6032 = vsel %vm3965, %v6031, %v6027
    %v6033 = vlaneseq
    %v6034 = vshrl.u32 %v6033, 7
    %v6035 = vsub.s32 %v3967, %v6034
    %v6036 = vrot.slane %v3812, %v6035
    %v6037 = vsel %vm3972, %v6036, %v6032
    %v6038 = vlaneseq
    %v6039 = vshrl.u32 %v6038, 7
    %v6040 = vsub.s32 %v3974, %v6039
    %v6041 = vrot.slane %v3813, %v6040
    %v6042 = vsel %vm3979, %v6041, %v6037
    %v6043 = vlaneseq
    %v6044 = vshrl.u32 %v6043, 7
    %v6045 = vsub.s32 %v3981, %v6044
    %v6046 = vrot.slane %v3814, %v6045
    %v6047 = vsel %vm3986, %v6046, %v6042
    %v6048 = vlaneseq
    %v6049 = vshrl.u32 %v6048, 7
    %v6050 = vsub.s32 %v3988, %v6049
    %v6051 = vrot.slane %v3815, %v6050
    %v6052 = vsel %vm3993, %v6051, %v6047
    %v6053 = vlaneseq
    %v6054 = vshrl.u32 %v6053, 7
    %v6055 = vsub.s32 %v3995, %v6054
    %v6056 = vrot.slane %v3816, %v6055
    %v6057 = vsel %vm4000, %v6056, %v6052
    %v6058 = vlaneseq
    %v6059 = vshrl.u32 %v6058, 7
    %v6060 = vsub.s32 %v4002, %v6059
    %v6061 = vrot.slane %v3817, %v6060
    %v6062 = vsel %vm4007, %v6061, %v6057
    %v6063 = vlaneseq
    %v6064 = vshrl.u32 %v6063, 7
    %v6065 = vsub.s32 %v3899, %v6064
    %v6066 = vrot.slane %v3818, %v6065
    %v6067 = vlaneseq
    %v6068 = vshrl.u32 %v6067, 7
    %v6069 = vsub.s32 %v3904, %v6068
    %v6070 = vrot.slane %v3819, %v6069
    %v6071 = vsel %vm3909, %v6070, %v6066
    %v6072 = vlaneseq
    %v6073 = vshrl.u32 %v6072, 7
    %v6074 = vsub.s32 %v3911, %v6073
    %v6075 = vrot.slane %v3820, %v6074
    %v6076 = vsel %vm3916, %v6075, %v6071
    %v6077 = vlaneseq
    %v6078 = vshrl.u32 %v6077, 7
    %v6079 = vsub.s32 %v3918, %v6078
    %v6080 = vrot.slane %v3821, %v6079
    %v6081 = vsel %vm3923, %v6080, %v6076
    %v6082 = vlaneseq
    %v6083 = vshrl.u32 %v6082, 7
    %v6084 = vsub.s32 %v3925, %v6083
    %v6085 = vrot.slane %v3822, %v6084
    %v6086 = vsel %vm3930, %v6085, %v6081
    %v6087 = vlaneseq
    %v6088 = vshrl.u32 %v6087, 7
    %v6089 = vsub.s32 %v3932, %v6088
    %v6090 = vrot.slane %v3823, %v6089
    %v6091 = vsel %vm3937, %v6090, %v6086
    %v6092 = vlaneseq
    %v6093 = vshrl.u32 %v6092, 7
    %v6094 = vsub.s32 %v3939, %v6093
    %v6095 = vrot.slane %v3824, %v6094
    %v6096 = vsel %vm3944, %v6095, %v6091
    %v6097 = vlaneseq
    %v6098 = vshrl.u32 %v6097, 7
    %v6099 = vsub.s32 %v3946, %v6098
    %v6100 = vrot.slane %v3825, %v6099
    %v6101 = vsel %vm3951, %v6100, %v6096
    %v6102 = vlaneseq
    %v6103 = vshrl.u32 %v6102, 7
    %v6104 = vsub.s32 %v3953, %v6103
    %v6105 = vrot.slane %v3826, %v6104
    %v6106 = vsel %vm3958, %v6105, %v6101
    %v6107 = vlaneseq
    %v6108 = vshrl.u32 %v6107, 7
    %v6109 = vsub.s32 %v3960, %v6108
    %v6110 = vrot.slane %v3827, %v6109
    %v6111 = vsel %vm3965, %v6110, %v6106
    %v6112 = vlaneseq
    %v6113 = vshrl.u32 %v6112, 7
    %v6114 = vsub.s32 %v3967, %v6113
    %v6115 = vrot.slane %v3828, %v6114
    %v6116 = vsel %vm3972, %v6115, %v6111
    %v6117 = vlaneseq
    %v6118 = vshrl.u32 %v6117, 7
    %v6119 = vsub.s32 %v3974, %v6118
    %v6120 = vrot.slane %v3829, %v6119
    %v6121 = vsel %vm3979, %v6120, %v6116
    %v6122 = vlaneseq
    %v6123 = vshrl.u32 %v6122, 7
    %v6124 = vsub.s32 %v3981, %v6123
    %v6125 = vrot.slane %v3830, %v6124
    %v6126 = vsel %vm3986, %v6125, %v6121
    %v6127 = vlaneseq
    %v6128 = vshrl.u32 %v6127, 7
    %v6129 = vsub.s32 %v3988, %v6128
    %v6130 = vrot.slane %v3831, %v6129
    %v6131 = vsel %vm3993, %v6130, %v6126
    %v6132 = vlaneseq
    %v6133 = vshrl.u32 %v6132, 7
    %v6134 = vsub.s32 %v3995, %v6133
    %v6135 = vrot.slane %v3832, %v6134
    %v6136 = vsel %vm4000, %v6135, %v6131
    %v6137 = vlaneseq
    %v6138 = vshrl.u32 %v6137, 7
    %v6139 = vsub.s32 %v4002, %v6138
    %v6140 = vrot.slane %v3833, %v6139
    %v6141 = vsel %vm4007, %v6140, %v6136
    %v6142 = vlaneseq
    %v6143 = vshrl.u32 %v6142, 7
    %v6144 = vsub.s32 %v3899, %v6143
    %v6145 = vrot.slane %v3834, %v6144
    %v6146 = vlaneseq
    %v6147 = vshrl.u32 %v6146, 7
    %v6148 = vsub.s32 %v3904, %v6147
    %v6149 = vrot.slane %v3835, %v6148
    %v6150 = vsel %vm3909, %v6149, %v6145
    %v6151 = vlaneseq
    %v6152 = vshrl.u32 %v6151, 7
    %v6153 = vsub.s32 %v3911, %v6152
    %v6154 = vrot.slane %v3836, %v6153
    %v6155 = vsel %vm3916, %v6154, %v6150
    %v6156 = vlaneseq
    %v6157 = vshrl.u32 %v6156, 7
    %v6158 = vsub.s32 %v3918, %v6157
    %v6159 = vrot.slane %v3837, %v6158
    %v6160 = vsel %vm3923, %v6159, %v6155
    %v6161 = vlaneseq
    %v6162 = vshrl.u32 %v6161, 7
    %v6163 = vsub.s32 %v3925, %v6162
    %v6164 = vrot.slane %v3838, %v6163
    %v6165 = vsel %vm3930, %v6164, %v6160
    %v6166 = vlaneseq
    %v6167 = vshrl.u32 %v6166, 7
    %v6168 = vsub.s32 %v3932, %v6167
    %v6169 = vrot.slane %v3839, %v6168
    %v6170 = vsel %vm3937, %v6169, %v6165
    %v6171 = vlaneseq
    %v6172 = vshrl.u32 %v6171, 7
    %v6173 = vsub.s32 %v3939, %v6172
    %v6174 = vrot.slane %v3840, %v6173
    %v6175 = vsel %vm3944, %v6174, %v6170
    %v6176 = vlaneseq
    %v6177 = vshrl.u32 %v6176, 7
    %v6178 = vsub.s32 %v3946, %v6177
    %v6179 = vrot.slane %v3841, %v6178
    %v6180 = vsel %vm3951, %v6179, %v6175
    %v6181 = vlaneseq
    %v6182 = vshrl.u32 %v6181, 7
    %v6183 = vsub.s32 %v3953, %v6182
    %v6184 = vrot.slane %v3842, %v6183
    %v6185 = vsel %vm3958, %v6184, %v6180
    %v6186 = vlaneseq
    %v6187 = vshrl.u32 %v6186, 7
    %v6188 = vsub.s32 %v3960, %v6187
    %v6189 = vrot.slane %v3843, %v6188
    %v6190 = vsel %vm3965, %v6189, %v6185
    %v6191 = vlaneseq
    %v6192 = vshrl.u32 %v6191, 7
    %v6193 = vsub.s32 %v3967, %v6192
    %v6194 = vrot.slane %v3844, %v6193
    %v6195 = vsel %vm3972, %v6194, %v6190
    %v6196 = vlaneseq
    %v6197 = vshrl.u32 %v6196, 7
    %v6198 = vsub.s32 %v3974, %v6197
    %v6199 = vrot.slane %v3845, %v6198
    %v6200 = vsel %vm3979, %v6199, %v6195
    %v6201 = vlaneseq
    %v6202 = vshrl.u32 %v6201, 7
    %v6203 = vsub.s32 %v3981, %v6202
    %v6204 = vrot.slane %v3846, %v6203
    %v6205 = vsel %vm3986, %v6204, %v6200
    %v6206 = vlaneseq
    %v6207 = vshrl.u32 %v6206, 7
    %v6208 = vsub.s32 %v3988, %v6207
    %v6209 = vrot.slane %v3847, %v6208
    %v6210 = vsel %vm3993, %v6209, %v6205
    %v6211 = vlaneseq
    %v6212 = vshrl.u32 %v6211, 7
    %v6213 = vsub.s32 %v3995, %v6212
    %v6214 = vrot.slane %v3848, %v6213
    %v6215 = vsel %vm4000, %v6214, %v6210
    %v6216 = vlaneseq
    %v6217 = vshrl.u32 %v6216, 7
    %v6218 = vsub.s32 %v4002, %v6217
    %v6219 = vrot.slane %v3849, %v6218
    %v6220 = vsel %vm4007, %v6219, %v6215
    %v6221 = vlaneseq
    %v6222 = vshrl.u32 %v6221, 7
    %v6223 = vsub.s32 %v3899, %v6222
    %v6224 = vrot.slane %v3850, %v6223
    %v6225 = vlaneseq
    %v6226 = vshrl.u32 %v6225, 7
    %v6227 = vsub.s32 %v3904, %v6226
    %v6228 = vrot.slane %v3851, %v6227
    %v6229 = vsel %vm3909, %v6228, %v6224
    %v6230 = vlaneseq
    %v6231 = vshrl.u32 %v6230, 7
    %v6232 = vsub.s32 %v3911, %v6231
    %v6233 = vrot.slane %v3852, %v6232
    %v6234 = vsel %vm3916, %v6233, %v6229
    %v6235 = vlaneseq
    %v6236 = vshrl.u32 %v6235, 7
    %v6237 = vsub.s32 %v3918, %v6236
    %v6238 = vrot.slane %v3853, %v6237
    %v6239 = vsel %vm3923, %v6238, %v6234
    %v6240 = vlaneseq
    %v6241 = vshrl.u32 %v6240, 7
    %v6242 = vsub.s32 %v3925, %v6241
    %v6243 = vrot.slane %v3854, %v6242
    %v6244 = vsel %vm3930, %v6243, %v6239
    %v6245 = vlaneseq
    %v6246 = vshrl.u32 %v6245, 7
    %v6247 = vsub.s32 %v3932, %v6246
    %v6248 = vrot.slane %v3855, %v6247
    %v6249 = vsel %vm3937, %v6248, %v6244
    %v6250 = vlaneseq
    %v6251 = vshrl.u32 %v6250, 7
    %v6252 = vsub.s32 %v3939, %v6251
    %v6253 = vrot.slane %v3856, %v6252
    %v6254 = vsel %vm3944, %v6253, %v6249
    %v6255 = vlaneseq
    %v6256 = vshrl.u32 %v6255, 7
    %v6257 = vsub.s32 %v3946, %v6256
    %v6258 = vrot.slane %v3857, %v6257
    %v6259 = vsel %vm3951, %v6258, %v6254
    %v6260 = vlaneseq
    %v6261 = vshrl.u32 %v6260, 7
    %v6262 = vsub.s32 %v3953, %v6261
    %v6263 = vrot.slane %v3858, %v6262
    %v6264 = vsel %vm3958, %v6263, %v6259
    %v6265 = vlaneseq
    %v6266 = vshrl.u32 %v6265, 7
    %v6267 = vsub.s32 %v3960, %v6266
    %v6268 = vrot.slane %v3859, %v6267
    %v6269 = vsel %vm3965, %v6268, %v6264
    %v6270 = vlaneseq
    %v6271 = vshrl.u32 %v6270, 7
    %v6272 = vsub.s32 %v3967, %v6271
    %v6273 = vrot.slane %v3860, %v6272
    %v6274 = vsel %vm3972, %v6273, %v6269
    %v6275 = vlaneseq
    %v6276 = vshrl.u32 %v6275, 7
    %v6277 = vsub.s32 %v3974, %v6276
    %v6278 = vrot.slane %v3861, %v6277
    %v6279 = vsel %vm3979, %v6278, %v6274
    %v6280 = vlaneseq
    %v6281 = vshrl.u32 %v6280, 7
    %v6282 = vsub.s32 %v3981, %v6281
    %v6283 = vrot.slane %v3862, %v6282
    %v6284 = vsel %vm3986, %v6283, %v6279
    %v6285 = vlaneseq
    %v6286 = vshrl.u32 %v6285, 7
    %v6287 = vsub.s32 %v3988, %v6286
    %v6288 = vrot.slane %v3863, %v6287
    %v6289 = vsel %vm3993, %v6288, %v6284
    %v6290 = vlaneseq
    %v6291 = vshrl.u32 %v6290, 7
    %v6292 = vsub.s32 %v3995, %v6291
    %v6293 = vrot.slane %v3864, %v6292
    %v6294 = vsel %vm4000, %v6293, %v6289
    %v6295 = vlaneseq
    %v6296 = vshrl.u32 %v6295, 7
    %v6297 = vsub.s32 %v4002, %v6296
    %v6298 = vrot.slane %v3865, %v6297
    %v6299 = vsel %vm4007, %v6298, %v6294
    %v6300 = vlaneseq
    %v6301 = vshrl.u32 %v6300, 7
    %v6302 = vsub.s32 %v3899, %v6301
    %v6303 = vrot.slane %v3866, %v6302
    %v6304 = vlaneseq
    %v6305 = vshrl.u32 %v6304, 7
    %v6306 = vsub.s32 %v3904, %v6305
    %v6307 = vrot.slane %v3867, %v6306
    %v6308 = vsel %vm3909, %v6307, %v6303
    %v6309 = vlaneseq
    %v6310 = vshrl.u32 %v6309, 7
    %v6311 = vsub.s32 %v3911, %v6310
    %v6312 = vrot.slane %v3868, %v6311
    %v6313 = vsel %vm3916, %v6312, %v6308
    %v6314 = vlaneseq
    %v6315 = vshrl.u32 %v6314, 7
    %v6316 = vsub.s32 %v3918, %v6315
    %v6317 = vrot.slane %v3869, %v6316
    %v6318 = vsel %vm3923, %v6317, %v6313
    %v6319 = vlaneseq
    %v6320 = vshrl.u32 %v6319, 7
    %v6321 = vsub.s32 %v3925, %v6320
    %v6322 = vrot.slane %v3870, %v6321
    %v6323 = vsel %vm3930, %v6322, %v6318
    %v6324 = vlaneseq
    %v6325 = vshrl.u32 %v6324, 7
    %v6326 = vsub.s32 %v3932, %v6325
    %v6327 = vrot.slane %v3871, %v6326
    %v6328 = vsel %vm3937, %v6327, %v6323
    %v6329 = vlaneseq
    %v6330 = vshrl.u32 %v6329, 7
    %v6331 = vsub.s32 %v3939, %v6330
    %v6332 = vrot.slane %v3872, %v6331
    %v6333 = vsel %vm3944, %v6332, %v6328
    %v6334 = vlaneseq
    %v6335 = vshrl.u32 %v6334, 7
    %v6336 = vsub.s32 %v3946, %v6335
    %v6337 = vrot.slane %v3873, %v6336
    %v6338 = vsel %vm3951, %v6337, %v6333
    %v6339 = vlaneseq
    %v6340 = vshrl.u32 %v6339, 7
    %v6341 = vsub.s32 %v3953, %v6340
    %v6342 = vrot.slane %v3874, %v6341
    %v6343 = vsel %vm3958, %v6342, %v6338
    %v6344 = vlaneseq
    %v6345 = vshrl.u32 %v6344, 7
    %v6346 = vsub.s32 %v3960, %v6345
    %v6347 = vrot.slane %v3875, %v6346
    %v6348 = vsel %vm3965, %v6347, %v6343
    %v6349 = vlaneseq
    %v6350 = vshrl.u32 %v6349, 7
    %v6351 = vsub.s32 %v3967, %v6350
    %v6352 = vrot.slane %v3876, %v6351
    %v6353 = vsel %vm3972, %v6352, %v6348
    %v6354 = vlaneseq
    %v6355 = vshrl.u32 %v6354, 7
    %v6356 = vsub.s32 %v3974, %v6355
    %v6357 = vrot.slane %v3877, %v6356
    %v6358 = vsel %vm3979, %v6357, %v6353
    %v6359 = vlaneseq
    %v6360 = vshrl.u32 %v6359, 7
    %v6361 = vsub.s32 %v3981, %v6360
    %v6362 = vrot.slane %v3878, %v6361
    %v6363 = vsel %vm3986, %v6362, %v6358
    %v6364 = vlaneseq
    %v6365 = vshrl.u32 %v6364, 7
    %v6366 = vsub.s32 %v3988, %v6365
    %v6367 = vrot.slane %v3879, %v6366
    %v6368 = vsel %vm3993, %v6367, %v6363
    %v6369 = vlaneseq
    %v6370 = vshrl.u32 %v6369, 7
    %v6371 = vsub.s32 %v3995, %v6370
    %v6372 = vrot.slane %v3880, %v6371
    %v6373 = vsel %vm4000, %v6372, %v6368
    %v6374 = vlaneseq
    %v6375 = vshrl.u32 %v6374, 7
    %v6376 = vsub.s32 %v4002, %v6375
    %v6377 = vrot.slane %v3881, %v6376
    %v6378 = vsel %vm4007, %v6377, %v6373
    %v6379 = vlaneseq
    %v6380 = vshrl.u32 %v6379, 7
    %v6381 = vsub.s32 %v3899, %v6380
    %v6382 = vrot.slane %v3882, %v6381
    %v6383 = vlaneseq
    %v6384 = vshrl.u32 %v6383, 7
    %v6385 = vsub.s32 %v3904, %v6384
    %v6386 = vrot.slane %v3883, %v6385
    %v6387 = vsel %vm3909, %v6386, %v6382
    %v6388 = vlaneseq
    %v6389 = vshrl.u32 %v6388, 7
    %v6390 = vsub.s32 %v3911, %v6389
    %v6391 = vrot.slane %v3884, %v6390
    %v6392 = vsel %vm3916, %v6391, %v6387
    %v6393 = vlaneseq
    %v6394 = vshrl.u32 %v6393, 7
    %v6395 = vsub.s32 %v3918, %v6394
    %v6396 = vrot.slane %v3885, %v6395
    %v6397 = vsel %vm3923, %v6396, %v6392
    %v6398 = vlaneseq
    %v6399 = vshrl.u32 %v6398, 7
    %v6400 = vsub.s32 %v3925, %v6399
    %v6401 = vrot.slane %v3886, %v6400
    %v6402 = vsel %vm3930, %v6401, %v6397
    %v6403 = vlaneseq
    %v6404 = vshrl.u32 %v6403, 7
    %v6405 = vsub.s32 %v3932, %v6404
    %v6406 = vrot.slane %v3887, %v6405
    %v6407 = vsel %vm3937, %v6406, %v6402
    %v6408 = vlaneseq
    %v6409 = vshrl.u32 %v6408, 7
    %v6410 = vsub.s32 %v3939, %v6409
    %v6411 = vrot.slane %v3888, %v6410
    %v6412 = vsel %vm3944, %v6411, %v6407
    %v6413 = vlaneseq
    %v6414 = vshrl.u32 %v6413, 7
    %v6415 = vsub.s32 %v3946, %v6414
    %v6416 = vrot.slane %v3889, %v6415
    %v6417 = vsel %vm3951, %v6416, %v6412
    %v6418 = vlaneseq
    %v6419 = vshrl.u32 %v6418, 7
    %v6420 = vsub.s32 %v3953, %v6419
    %v6421 = vrot.slane %v3890, %v6420
    %v6422 = vsel %vm3958, %v6421, %v6417
    %v6423 = vlaneseq
    %v6424 = vshrl.u32 %v6423, 7
    %v6425 = vsub.s32 %v3960, %v6424
    %v6426 = vrot.slane %v3891, %v6425
    %v6427 = vsel %vm3965, %v6426, %v6422
    %v6428 = vlaneseq
    %v6429 = vshrl.u32 %v6428, 7
    %v6430 = vsub.s32 %v3967, %v6429
    %v6431 = vrot.slane %v3892, %v6430
    %v6432 = vsel %vm3972, %v6431, %v6427
    %v6433 = vlaneseq
    %v6434 = vshrl.u32 %v6433, 7
    %v6435 = vsub.s32 %v3974, %v6434
    %v6436 = vrot.slane %v3893, %v6435
    %v6437 = vsel %vm3979, %v6436, %v6432
    %v6438 = vlaneseq
    %v6439 = vshrl.u32 %v6438, 7
    %v6440 = vsub.s32 %v3981, %v6439
    %v6441 = vrot.slane %v3894, %v6440
    %v6442 = vsel %vm3986, %v6441, %v6437
    %v6443 = vlaneseq
    %v6444 = vshrl.u32 %v6443, 7
    %v6445 = vsub.s32 %v3988, %v6444
    %v6446 = vrot.slane %v3895, %v6445
    %v6447 = vsel %vm3993, %v6446, %v6442
    %v6448 = vlaneseq
    %v6449 = vshrl.u32 %v6448, 7
    %v6450 = vsub.s32 %v3995, %v6449
    %v6451 = vrot.slane %v3896, %v6450
    %v6452 = vsel %vm4000, %v6451, %v6447
    %v6453 = vlaneseq
    %v6454 = vshrl.u32 %v6453, 7
    %v6455 = vsub.s32 %v4002, %v6454
    %v6456 = vrot.slane %v3897, %v6455
    %v6457 = vsel %vm4007, %v6456, %v6452
    %vm6458 = vcmask 1041409
    %v6459 = vsel %vm6458, %v4324, %v4008
    %vm6460 = vcmask 1042434
    %v6461 = vsel %vm6460, %v4640, %v6459
    %vm6462 = vcmask 1043459
    %v6463 = vsel %vm6462, %v4956, %v6461
    %vm6464 = vcmask 1044484
    %v6465 = vsel %vm6464, %v5272, %v6463
    %vm6466 = vcmask 1045509
    %v6467 = vsel %vm6466, %v5588, %v6465
    %vm6468 = vcmask 1046534
    %v6469 = vsel %vm6468, %v5904, %v6467
    %vm6470 = vcmask 1047559
    %v6471 = vsel %vm6470, %v6220, %v6469
    %v6472 = vsel %vm6458, %v4403, %v4087
    %v6473 = vsel %vm6460, %v4719, %v6472
    %v6474 = vsel %vm6462, %v5035, %v6473
    %v6475 = vsel %vm6464, %v5351, %v6474
    %v6476 = vsel %vm6466, %v5667, %v6475
    %v6477 = vsel %vm6468, %v5983, %v6476
    %v6478 = vsel %vm6470, %v6299, %v6477
    %v6479 = vsel %vm6458, %v4482, %v4166
    %v6480 = vsel %vm6460, %v4798, %v6479
    %v6481 = vsel %vm6462, %v5114, %v6480
    %v6482 = vsel %vm6464, %v5430, %v6481
    %v6483 = vsel %vm6466, %v5746, %v6482
    %v6484 = vsel %vm6468, %v6062, %v6483
    %v6485 = vsel %vm6470, %v6378, %v6484
    %v6486 = vsel %vm6458, %v4561, %v4245
    %v6487 = vsel %vm6460, %v4877, %v6486
    %v6488 = vsel %vm6462, %v5193, %v6487
    %v6489 = vsel %vm6464, %v5509, %v6488
    %v6490 = vsel %vm6466, %v5825, %v6489
    %v6491 = vsel %vm6468, %v6141, %v6490
    %v6492 = vsel %vm6470, %v6457, %v6491
    %v6493 = vpack.c.b16 %v6471, %v6471
    %v6494 = vpack.c.b16 %v6478, %v6478
    %v6495 = vpack.c.b16 %v6485, %v6485
    %v6496 = vpack.c.b16 %v6492, %v6492
    %v6757 = vunpack.c.l.b16 %v2832
    %v6758 = vunpack.c.h.b16 %v2832
    %v6759 = vunpack.c.l.b16 %v2833
    %v6760 = vunpack.c.h.b16 %v2833
    %v6761 = vunpack.c.l.b16 %v2834
    %v6762 = vunpack.c.h.b16 %v2834
    %v6763 = vunpack.c.l.b16 %v2835
    %v6764 = vunpack.c.h.b16 %v2835
    %v6765 = vunpack.c.l.b16 %v2836
    %v6766 = vunpack.c.h.b16 %v2836
    %v6767 = vunpack.c.l.b16 %v2837
    %v6768 = vunpack.c.h.b16 %v2837
    %v6769 = vunpack.c.l.b16 %v2838
    %v6770 = vunpack.c.h.b16 %v2838
    %v6771 = vunpack.c.l.b16 %v2839
    %v6772 = vunpack.c.h.b16 %v2839
    %v6773 = vunpack.c.l.b16 %v2840
    %v6774 = vunpack.c.h.b16 %v2840
    %v6775 = vunpack.c.l.b16 %v2841
    %v6776 = vunpack.c.h.b16 %v2841
    %v6777 = vunpack.c.l.b16 %v2842
    %v6778 = vunpack.c.h.b16 %v2842
    %v6779 = vunpack.c.l.b16 %v2843
    %v6780 = vunpack.c.h.b16 %v2843
    %v6781 = vunpack.c.l.b16 %v2844
    %v6782 = vunpack.c.h.b16 %v2844
    %v6783 = vunpack.c.l.b16 %v2845
    %v6784 = vunpack.c.h.b16 %v2845
    %v6785 = vunpack.c.l.b16 %v2846
    %v6786 = vunpack.c.h.b16 %v2846
    %v6787 = vunpack.c.l.b16 %v2847
    %v6788 = vunpack.c.h.b16 %v2847
    %v6789 = vunpack.c.l.b16 %v2848
    %v6790 = vunpack.c.h.b16 %v2848
    %v6791 = vunpack.c.l.b16 %v2849
    %v6792 = vunpack.c.h.b16 %v2849
    %v6793 = vunpack.c.l.b16 %v2850
    %v6794 = vunpack.c.h.b16 %v2850
    %v6795 = vunpack.c.l.b16 %v2851
    %v6796 = vunpack.c.h.b16 %v2851
    %v6797 = vunpack.c.l.b16 %v2852
    %v6798 = vunpack.c.h.b16 %v2852
    %v6799 = vunpack.c.l.b16 %v2853
    %v6800 = vunpack.c.h.b16 %v2853
    %v6801 = vunpack.c.l.b16 %v2854
    %v6802 = vunpack.c.h.b16 %v2854
    %v6803 = vunpack.c.l.b16 %v2855
    %v6804 = vunpack.c.h.b16 %v2855
    %v6805 = vunpack.c.l.b16 %v2856
    %v6806 = vunpack.c.h.b16 %v2856
    %v6807 = vunpack.c.l.b16 %v2857
    %v6808 = vunpack.c.h.b16 %v2857
    %v6809 = vunpack.c.l.b16 %v2858
    %v6810 = vunpack.c.h.b16 %v2858
    %v6811 = vunpack.c.l.b16 %v2859
    %v6812 = vunpack.c.h.b16 %v2859
    %v6813 = vunpack.c.l.b16 %v2860
    %v6814 = vunpack.c.h.b16 %v2860
    %v6815 = vunpack.c.l.b16 %v2861
    %v6816 = vunpack.c.h.b16 %v2861
    %v6817 = vunpack.c.l.b16 %v2862
    %v6818 = vunpack.c.h.b16 %v2862
    %v6819 = vunpack.c.l.b16 %v2863
    %v6820 = vunpack.c.h.b16 %v2863
    %v6821 = vunpack.c.l.b16 %v2864
    %v6822 = vunpack.c.h.b16 %v2864
    %v6823 = vunpack.c.l.b16 %v2865
    %v6824 = vunpack.c.h.b16 %v2865
    %v6825 = vunpack.c.l.b16 %v2866
    %v6826 = vunpack.c.h.b16 %v2866
    %v6827 = vunpack.c.l.b16 %v2867
    %v6828 = vunpack.c.h.b16 %v2867
    %v6829 = vunpack.c.l.b16 %v2868
    %v6830 = vunpack.c.h.b16 %v2868
    %v6831 = vunpack.c.l.b16 %v2869
    %v6832 = vunpack.c.h.b16 %v2869
    %v6833 = vunpack.c.l.b16 %v2870
    %v6834 = vunpack.c.h.b16 %v2870
    %v6835 = vunpack.c.l.b16 %v2871
    %v6836 = vunpack.c.h.b16 %v2871
    %v6837 = vunpack.c.l.b16 %v2872
    %v6838 = vunpack.c.h.b16 %v2872
    %v6839 = vunpack.c.l.b16 %v2873
    %v6840 = vunpack.c.h.b16 %v2873
    %v6841 = vunpack.c.l.b16 %v2874
    %v6842 = vunpack.c.h.b16 %v2874
    %v6843 = vunpack.c.l.b16 %v2875
    %v6844 = vunpack.c.h.b16 %v2875
    %v6845 = vunpack.c.l.b16 %v2876
    %v6846 = vunpack.c.h.b16 %v2876
    %v6847 = vunpack.c.l.b16 %v2877
    %v6848 = vunpack.c.h.b16 %v2877
    %v6849 = vunpack.c.l.b16 %v2878
    %v6850 = vunpack.c.h.b16 %v2878
    %v6851 = vunpack.c.l.b16 %v2879
    %v6852 = vunpack.c.h.b16 %v2879
    %v6853 = vunpack.c.l.b16 %v2880
    %v6854 = vunpack.c.h.b16 %v2880
    %v6855 = vunpack.c.l.b16 %v2881
    %v6856 = vunpack.c.h.b16 %v2881
    %v6857 = vunpack.c.l.b16 %v2882
    %v6858 = vunpack.c.h.b16 %v2882
    %v6859 = vunpack.c.l.b16 %v2883
    %v6860 = vunpack.c.h.b16 %v2883
    %v6861 = vunpack.c.l.b16 %v2884
    %v6862 = vunpack.c.h.b16 %v2884
    %v6863 = vunpack.c.l.b16 %v2885
    %v6864 = vunpack.c.h.b16 %v2885
    %v6865 = vunpack.c.l.b16 %v2886
    %v6866 = vunpack.c.h.b16 %v2886
    %v6867 = vunpack.c.l.b16 %v2887
    %v6868 = vunpack.c.h.b16 %v2887
    %v6869 = vunpack.c.l.b16 %v2888
    %v6870 = vunpack.c.h.b16 %v2888
    %v6871 = vunpack.c.l.b16 %v2889
    %v6872 = vunpack.c.h.b16 %v2889
    %v6873 = vunpack.c.l.b16 %v2890
    %v6874 = vunpack.c.h.b16 %v2890
    %v6875 = vunpack.c.l.b16 %v2891
    %v6876 = vunpack.c.h.b16 %v2891
    %v6877 = vunpack.c.l.b16 %v2892
    %v6878 = vunpack.c.h.b16 %v2892
    %v6879 = vunpack.c.l.b16 %v2893
    %v6880 = vunpack.c.h.b16 %v2893
    %v6881 = vunpack.c.l.b16 %v2894
    %v6882 = vunpack.c.h.b16 %v2894
    %v6883 = vunpack.c.l.b16 %v2895
    %v6884 = vunpack.c.h.b16 %v2895
    %v6885 = vunpack.c.l.b16 %v2896
    %v6886 = vunpack.c.h.b16 %v2896
    %v6887 = vunpack.c.l.b16 %v2897
    %v6888 = vunpack.c.h.b16 %v2897
    %v6889 = vunpack.c.l.b16 %v2898
    %v6890 = vunpack.c.h.b16 %v2898
    %v6891 = vunpack.c.l.b16 %v2899
    %v6892 = vunpack.c.h.b16 %v2899
    %v6893 = vunpack.c.l.b16 %v2900
    %v6894 = vunpack.c.h.b16 %v2900
    %v6895 = vunpack.c.l.b16 %v2901
    %v6896 = vunpack.c.h.b16 %v2901
    %v6897 = vunpack.c.l.b16 %v2902
    %v6898 = vunpack.c.h.b16 %v2902
    %v6899 = vunpack.c.l.b16 %v2903
    %v6900 = vunpack.c.h.b16 %v2903
    %v6901 = vunpack.c.l.b16 %v2904
    %v6902 = vunpack.c.h.b16 %v2904
    %v6903 = vunpack.c.l.b16 %v2905
    %v6904 = vunpack.c.h.b16 %v2905
    %v6905 = vunpack.c.l.b16 %v2906
    %v6906 = vunpack.c.h.b16 %v2906
    %v6907 = vunpack.c.l.b16 %v2907
    %v6908 = vunpack.c.h.b16 %v2907
    %v6909 = vunpack.c.l.b16 %v2908
    %v6910 = vunpack.c.h.b16 %v2908
    %v6911 = vunpack.c.l.b16 %v2909
    %v6912 = vunpack.c.h.b16 %v2909
    %v6913 = vunpack.c.l.b16 %v2910
    %v6914 = vunpack.c.h.b16 %v2910
    %v6915 = vunpack.c.l.b16 %v2911
    %v6916 = vunpack.c.h.b16 %v2911
    %v6917 = vunpack.c.l.b16 %v2912
    %v6918 = vunpack.c.h.b16 %v2912
    %v6919 = vunpack.c.l.b16 %v2913
    %v6920 = vunpack.c.h.b16 %v2913
    %v6921 = vunpack.c.l.b16 %v2914
    %v6922 = vunpack.c.h.b16 %v2914
    %v6923 = vunpack.c.l.b16 %v2915
    %v6924 = vunpack.c.h.b16 %v2915
    %v6925 = vunpack.c.l.b16 %v2916
    %v6926 = vunpack.c.h.b16 %v2916
    %v6927 = vunpack.c.l.b16 %v2917
    %v6928 = vunpack.c.h.b16 %v2917
    %v6929 = vunpack.c.l.b16 %v2918
    %v6930 = vunpack.c.h.b16 %v2918
    %v6931 = vunpack.c.l.b16 %v2919
    %v6932 = vunpack.c.h.b16 %v2919
    %v6933 = vunpack.c.l.b16 %v2920
    %v6934 = vunpack.c.h.b16 %v2920
    %v6935 = vunpack.c.l.b16 %v2921
    %v6936 = vunpack.c.h.b16 %v2921
    %v6937 = vunpack.c.l.b16 %v2922
    %v6938 = vunpack.c.h.b16 %v2922
    %v6939 = vunpack.c.l.b16 %v2923
    %v6940 = vunpack.c.h.b16 %v2923
    %v6941 = vunpack.c.l.b16 %v2924
    %v6942 = vunpack.c.h.b16 %v2924
    %v6943 = vunpack.c.l.b16 %v2925
    %v6944 = vunpack.c.h.b16 %v2925
    %v6945 = vunpack.c.l.b16 %v2926
    %v6946 = vunpack.c.h.b16 %v2926
    %v6947 = vunpack.c.l.b16 %v2927
    %v6948 = vunpack.c.h.b16 %v2927
    %v6949 = vunpack.c.l.b16 %v2928
    %v6950 = vunpack.c.h.b16 %v2928
    %v6951 = vunpack.c.l.b16 %v2929
    %v6952 = vunpack.c.h.b16 %v2929
    %v6953 = vunpack.c.l.b16 %v2930
    %v6954 = vunpack.c.h.b16 %v2930
    %v6955 = vunpack.c.l.b16 %v2931
    %v6956 = vunpack.c.h.b16 %v2931
    %v6957 = vunpack.c.l.b16 %v2932
    %v6958 = vunpack.c.h.b16 %v2932
    %v6959 = vunpack.c.l.b16 %v2933
    %v6960 = vunpack.c.h.b16 %v2933
    %v6961 = vunpack.c.l.b16 %v2934
    %v6962 = vunpack.c.h.b16 %v2934
    %v6963 = vunpack.c.l.b16 %v2935
    %v6964 = vunpack.c.h.b16 %v2935
    %v6965 = vunpack.c.l.b16 %v2936
    %v6966 = vunpack.c.h.b16 %v2936
    %v6967 = vunpack.c.l.b16 %v2937
    %v6968 = vunpack.c.h.b16 %v2937
    %v6969 = vunpack.c.l.b16 %v2938
    %v6970 = vunpack.c.h.b16 %v2938
    %v6971 = vunpack.c.l.b16 %v2939
    %v6972 = vunpack.c.h.b16 %v2939
    %v6973 = vunpack.c.l.b16 %v2940
    %v6974 = vunpack.c.h.b16 %v2940
    %v6975 = vunpack.c.l.b16 %v2941
    %v6976 = vunpack.c.h.b16 %v2941
    %v6977 = vunpack.c.l.b16 %v2942
    %v6978 = vunpack.c.h.b16 %v2942
    %v6979 = vunpack.c.l.b16 %v2943
    %v6980 = vunpack.c.h.b16 %v2943
    %v6981 = vunpack.c.l.b16 %v2944
    %v6982 = vunpack.c.h.b16 %v2944
    %v6983 = vunpack.c.l.b16 %v2945
    %v6984 = vunpack.c.h.b16 %v2945
    %v6985 = vunpack.c.l.b16 %v2946
    %v6986 = vunpack.c.h.b16 %v2946
    %v6987 = vunpack.c.l.b16 %v2947
    %v6988 = vunpack.c.h.b16 %v2947
    %v6989 = vunpack.c.l.b16 %v2948
    %v6990 = vunpack.c.h.b16 %v2948
    %v6991 = vunpack.c.l.b16 %v2949
    %v6992 = vunpack.c.h.b16 %v2949
    %v6993 = vunpack.c.l.b16 %v2950
    %v6994 = vunpack.c.h.b16 %v2950
    %v6995 = vunpack.c.l.b16 %v2951
    %v6996 = vunpack.c.h.b16 %v2951
    %v6997 = vunpack.c.l.b16 %v2952
    %v6998 = vunpack.c.h.b16 %v2952
    %v6999 = vunpack.c.l.b16 %v2953
    %v7000 = vunpack.c.h.b16 %v2953
    %v7001 = vunpack.c.l.b16 %v2954
    %v7002 = vunpack.c.h.b16 %v2954
    %v7003 = vunpack.c.l.b16 %v2955
    %v7004 = vunpack.c.h.b16 %v2955
    %v7005 = vunpack.c.l.b16 %v2956
    %v7006 = vunpack.c.h.b16 %v2956
    %v7007 = vunpack.c.l.b16 %v2957
    %v7008 = vunpack.c.h.b16 %v2957
    %v7009 = vunpack.c.l.b16 %v2958
    %v7010 = vunpack.c.h.b16 %v2958
    %v7011 = vunpack.c.l.b16 %v2959
    %v7012 = vunpack.c.h.b16 %v2959
    %v7013 = vunpack.c.l.b16 %v2960
    %v7014 = vunpack.c.h.b16 %v2960
    %v7015 = vunpack.c.l.b16 %v2961
    %v7016 = vunpack.c.h.b16 %v2961
    %v7017 = vunpack.c.l.b16 %v2962
    %v7018 = vunpack.c.h.b16 %v2962
    %v7019 = vunpack.c.l.b16 %v2963
    %v7020 = vunpack.c.h.b16 %v2963
    %v7021 = vunpack.c.l.b16 %v2964
    %v7022 = vunpack.c.h.b16 %v2964
    %v7023 = vunpack.c.l.b16 %v2965
    %v7024 = vunpack.c.h.b16 %v2965
    %v7025 = vunpack.c.l.b16 %v2966
    %v7026 = vunpack.c.h.b16 %v2966
    %v7027 = vunpack.c.l.b16 %v2967
    %v7028 = vunpack.c.h.b16 %v2967
    %v7029 = vunpack.c.l.b16 %v2968
    %v7030 = vunpack.c.h.b16 %v2968
    %v7031 = vunpack.c.l.b16 %v2969
    %v7032 = vunpack.c.h.b16 %v2969
    %v7033 = vunpack.c.l.b16 %v2970
    %v7034 = vunpack.c.h.b16 %v2970
    %v7035 = vunpack.c.l.b16 %v2971
    %v7036 = vunpack.c.h.b16 %v2971
    %v7037 = vunpack.c.l.b16 %v2972
    %v7038 = vunpack.c.h.b16 %v2972
    %v7039 = vunpack.c.l.b16 %v2973
    %v7040 = vunpack.c.h.b16 %v2973
    %v7041 = vunpack.c.l.b16 %v2974
    %v7042 = vunpack.c.h.b16 %v2974
    %v7043 = vunpack.c.l.b16 %v2975
    %v7044 = vunpack.c.h.b16 %v2975
    %v7045 = vunpack.c.l.b16 %v2976
    %v7046 = vunpack.c.h.b16 %v2976
    %v7047 = vunpack.c.l.b16 %v2977
    %v7048 = vunpack.c.h.b16 %v2977
    %v7049 = vunpack.c.l.b16 %v2978
    %v7050 = vunpack.c.h.b16 %v2978
    %v7051 = vunpack.c.l.b16 %v2979
    %v7052 = vunpack.c.h.b16 %v2979
    %v7053 = vunpack.c.l.b16 %v2980
    %v7054 = vunpack.c.h.b16 %v2980
    %v7055 = vunpack.c.l.b16 %v2981
    %v7056 = vunpack.c.h.b16 %v2981
    %v7057 = vunpack.c.l.b16 %v2982
    %v7058 = vunpack.c.h.b16 %v2982
    %v7059 = vunpack.c.l.b16 %v2983
    %v7060 = vunpack.c.h.b16 %v2983
    %v7061 = vunpack.c.l.b16 %v2984
    %v7062 = vunpack.c.h.b16 %v2984
    %v7063 = vunpack.c.l.b16 %v2985
    %v7064 = vunpack.c.h.b16 %v2985
    %v7065 = vunpack.c.l.b16 %v2986
    %v7066 = vunpack.c.h.b16 %v2986
    %v7067 = vunpack.c.l.b16 %v2987
    %v7068 = vunpack.c.h.b16 %v2987
    %v7069 = vunpack.c.l.b16 %v2988
    %v7070 = vunpack.c.h.b16 %v2988
    %v7071 = vunpack.c.l.b16 %v2989
    %v7072 = vunpack.c.h.b16 %v2989
    %v7073 = vunpack.c.l.b16 %v2990
    %v7074 = vunpack.c.h.b16 %v2990
    %v7075 = vunpack.c.l.b16 %v2991
    %v7076 = vunpack.c.h.b16 %v2991
    %v7077 = vunpack.c.l.b16 %v2992
    %v7078 = vunpack.c.h.b16 %v2992
    %v7079 = vunpack.c.l.b16 %v2993
    %v7080 = vunpack.c.h.b16 %v2993
    %v7081 = vunpack.c.l.b16 %v2994
    %v7082 = vunpack.c.h.b16 %v2994
    %v7083 = vunpack.c.l.b16 %v2995
    %v7084 = vunpack.c.h.b16 %v2995
    %v7085 = vunpack.c.l.b16 %v2996
    %v7086 = vunpack.c.h.b16 %v2996
    %v7087 = vunpack.c.l.b16 %v2997
    %v7088 = vunpack.c.h.b16 %v2997
    %v7089 = vunpack.c.l.b16 %v2998
    %v7090 = vunpack.c.h.b16 %v2998
    %v7091 = vunpack.c.l.b16 %v2999
    %v7092 = vunpack.c.h.b16 %v2999
    %v7093 = vunpack.c.l.b16 %v3000
    %v7094 = vunpack.c.h.b16 %v3000
    %v7095 = vunpack.c.l.b16 %v3001
    %v7096 = vunpack.c.h.b16 %v3001
    %v7097 = vunpack.c.l.b16 %v3002
    %v7098 = vunpack.c.h.b16 %v3002
    %v7099 = vunpack.c.l.b16 %v3003
    %v7100 = vunpack.c.h.b16 %v3003
    %v7101 = vunpack.c.l.b16 %v3004
    %v7102 = vunpack.c.h.b16 %v3004
    %v7103 = vunpack.c.l.b16 %v3005
    %v7104 = vunpack.c.h.b16 %v3005
    %v7105 = vunpack.c.l.b16 %v3006
    %v7106 = vunpack.c.h.b16 %v3006
    %v7107 = vunpack.c.l.b16 %v3007
    %v7108 = vunpack.c.h.b16 %v3007
    %v7109 = vunpack.c.l.b16 %v3008
    %v7110 = vunpack.c.h.b16 %v3008
    %v7111 = vunpack.c.l.b16 %v3009
    %v7112 = vunpack.c.h.b16 %v3009
    %v7113 = vunpack.c.l.b16 %v3010
    %v7114 = vunpack.c.h.b16 %v3010
    %v7115 = vunpack.c.l.b16 %v3011
    %v7116 = vunpack.c.h.b16 %v3011
    %v7117 = vunpack.c.l.b16 %v3012
    %v7118 = vunpack.c.h.b16 %v3012
    %v7119 = vunpack.c.l.b16 %v3013
    %v7120 = vunpack.c.h.b16 %v3013
    %v7121 = vunpack.c.l.b16 %v3014
    %v7122 = vunpack.c.h.b16 %v3014
    %v7123 = vunpack.c.l.b16 %v3015
    %v7124 = vunpack.c.h.b16 %v3015
    %v7125 = vunpack.c.l.b16 %v3016
    %v7126 = vunpack.c.h.b16 %v3016
    %v7127 = vunpack.c.l.b16 %v3017
    %v7128 = vunpack.c.h.b16 %v3017
    %v7129 = vunpack.c.l.b16 %v3018
    %v7130 = vunpack.c.h.b16 %v3018
    %v7131 = vunpack.c.l.b16 %v3019
    %v7132 = vunpack.c.h.b16 %v3019
    %v7133 = vunpack.c.l.b16 %v3020
    %v7134 = vunpack.c.h.b16 %v3020
    %v7135 = vunpack.c.l.b16 %v3021
    %v7136 = vunpack.c.h.b16 %v3021
    %v7137 = vunpack.c.l.b16 %v3022
    %v7138 = vunpack.c.h.b16 %v3022
    %v7139 = vunpack.c.l.b16 %v3023
    %v7140 = vunpack.c.h.b16 %v3023
    %v7141 = vunpack.c.l.b16 %v3024
    %v7142 = vunpack.c.h.b16 %v3024
    %v7143 = vunpack.c.l.b16 %v3025
    %v7144 = vunpack.c.h.b16 %v3025
    %v7145 = vunpack.c.l.b16 %v3026
    %v7146 = vunpack.c.h.b16 %v3026
    %v7147 = vunpack.c.l.b16 %v3027
    %v7148 = vunpack.c.h.b16 %v3027
    %v7149 = vunpack.c.l.b16 %v3028
    %v7150 = vunpack.c.h.b16 %v3028
    %v7151 = vunpack.c.l.b16 %v3029
    %v7152 = vunpack.c.h.b16 %v3029
    %v7153 = vunpack.c.l.b16 %v3030
    %v7154 = vunpack.c.h.b16 %v3030
    %v7155 = vunpack.c.l.b16 %v3031
    %v7156 = vunpack.c.h.b16 %v3031
    %v7157 = vunpack.c.l.b16 %v3032
    %v7158 = vunpack.c.h.b16 %v3032
    %v7159 = vunpack.c.l.b16 %v3033
    %v7160 = vunpack.c.h.b16 %v3033
    %v7161 = vunpack.c.l.b16 %v3034
    %v7162 = vunpack.c.h.b16 %v3034
    %v7163 = vunpack.c.l.b16 %v3035
    %v7164 = vunpack.c.h.b16 %v3035
    %v7165 = vunpack.c.l.b16 %v3036
    %v7166 = vunpack.c.h.b16 %v3036
    %v7167 = vunpack.c.l.b16 %v3037
    %v7168 = vunpack.c.h.b16 %v3037
    %v7169 = vunpack.c.l.b16 %v3038
    %v7170 = vunpack.c.h.b16 %v3038
    %v7171 = vunpack.c.l.b16 %v3039
    %v7172 = vunpack.c.h.b16 %v3039
    %v7173 = vunpack.c.l.b16 %v3040
    %v7174 = vunpack.c.h.b16 %v3040
    %v7175 = vunpack.c.l.b16 %v3041
    %v7176 = vunpack.c.h.b16 %v3041
    %v7177 = vunpack.c.l.b16 %v3042
    %v7178 = vunpack.c.h.b16 %v3042
    %v7179 = vunpack.c.l.b16 %v3043
    %v7180 = vunpack.c.h.b16 %v3043
    %v7181 = vunpack.c.l.b16 %v3044
    %v7182 = vunpack.c.h.b16 %v3044
    %v7183 = vunpack.c.l.b16 %v3045
    %v7184 = vunpack.c.h.b16 %v3045
    %v7185 = vunpack.c.l.b16 %v3046
    %v7186 = vunpack.c.h.b16 %v3046
    %v7187 = vunpack.c.l.b16 %v3047
    %v7188 = vunpack.c.h.b16 %v3047
    %v7189 = vunpack.c.l.b16 %v3048
    %v7190 = vunpack.c.h.b16 %v3048
    %v7191 = vunpack.c.l.b16 %v3049
    %v7192 = vunpack.c.h.b16 %v3049
    %v7193 = vunpack.c.l.b16 %v3050
    %v7194 = vunpack.c.h.b16 %v3050
    %v7195 = vunpack.c.l.b16 %v3051
    %v7196 = vunpack.c.h.b16 %v3051
    %v7197 = vunpack.c.l.b16 %v3052
    %v7198 = vunpack.c.h.b16 %v3052
    %v7199 = vunpack.c.l.b16 %v3053
    %v7200 = vunpack.c.h.b16 %v3053
    %v7201 = vunpack.c.l.b16 %v3054
    %v7202 = vunpack.c.h.b16 %v3054
    %v7203 = vunpack.c.l.b16 %v3055
    %v7204 = vunpack.c.h.b16 %v3055
    %v7205 = vunpack.c.l.b16 %v3056
    %v7206 = vunpack.c.h.b16 %v3056
    %v7207 = vunpack.c.l.b16 %v3057
    %v7208 = vunpack.c.h.b16 %v3057
    %v7209 = vunpack.c.l.b16 %v3058
    %v7210 = vunpack.c.h.b16 %v3058
    %v7211 = vunpack.c.l.b16 %v3059
    %v7212 = vunpack.c.h.b16 %v3059
    %v7213 = vunpack.c.l.b16 %v3060
    %v7214 = vunpack.c.h.b16 %v3060
    %v7215 = vunpack.c.l.b16 %v3061
    %v7216 = vunpack.c.h.b16 %v3061
    %v7217 = vunpack.c.l.b16 %v3062
    %v7218 = vunpack.c.h.b16 %v3062
    %v7219 = vunpack.c.l.b16 %v3063
    %v7220 = vunpack.c.h.b16 %v3063
    %v7221 = vunpack.c.l.b16 %v3064
    %v7222 = vunpack.c.h.b16 %v3064
    %v7223 = vunpack.c.l.b16 %v3065
    %v7224 = vunpack.c.h.b16 %v3065
    %v7225 = vunpack.c.l.b16 %v3066
    %v7226 = vunpack.c.h.b16 %v3066
    %v7227 = vunpack.c.l.b16 %v3067
    %v7228 = vunpack.c.h.b16 %v3067
    %v7229 = vunpack.c.l.b16 %v3068
    %v7230 = vunpack.c.h.b16 %v3068
    %v7231 = vunpack.c.l.b16 %v3069
    %v7232 = vunpack.c.h.b16 %v3069
    %v7233 = vunpack.c.l.b16 %v3070
    %v7234 = vunpack.c.h.b16 %v3070
    %v7235 = vunpack.c.l.b16 %v3071
    %v7236 = vunpack.c.h.b16 %v3071
    %v7237 = vunpack.c.l.b16 %v3072
    %v7238 = vunpack.c.h.b16 %v3072
    %v7239 = vunpack.c.l.b16 %v3073
    %v7240 = vunpack.c.h.b16 %v3073
    %v7241 = vunpack.c.l.b16 %v3074
    %v7242 = vunpack.c.h.b16 %v3074
    %v7243 = vunpack.c.l.b16 %v3075
    %v7244 = vunpack.c.h.b16 %v3075
    %v7245 = vunpack.c.l.b16 %v3076
    %v7246 = vunpack.c.h.b16 %v3076
    %v7247 = vunpack.c.l.b16 %v3077
    %v7248 = vunpack.c.h.b16 %v3077
    %v7249 = vunpack.c.l.b16 %v3078
    %v7250 = vunpack.c.h.b16 %v3078
    %v7251 = vunpack.c.l.b16 %v3079
    %v7252 = vunpack.c.h.b16 %v3079
    %v7253 = vunpack.c.l.b16 %v3080
    %v7254 = vunpack.c.h.b16 %v3080
    %v7255 = vunpack.c.l.b16 %v3081
    %v7256 = vunpack.c.h.b16 %v3081
    %v7257 = vunpack.c.l.b16 %v3082
    %v7258 = vunpack.c.h.b16 %v3082
    %v7259 = vunpack.c.l.b16 %v3083
    %v7260 = vunpack.c.h.b16 %v3083
    %v7261 = vunpack.c.l.b16 %v3084
    %v7262 = vunpack.c.h.b16 %v3084
    %v7263 = vunpack.c.l.b16 %v3085
    %v7264 = vunpack.c.h.b16 %v3085
    %v7265 = vunpack.c.l.b16 %v3086
    %v7266 = vunpack.c.h.b16 %v3086
    %v7267 = vunpack.c.l.b16 %v3087
    %v7268 = vunpack.c.h.b16 %v3087
    %v7269 = vpack.c.b16 %v6765, %v6757
    %v7270 = vpack.c.b16 %v6766, %v6758
    %v7271 = vpack.c.b16 %v6767, %v6759
    %v7272 = vpack.c.b16 %v6768, %v6760
    %v7273 = vpack.c.b16 %v6769, %v6761
    %v7274 = vpack.c.b16 %v6770, %v6762
    %v7275 = vpack.c.b16 %v6771, %v6763
    %v7276 = vpack.c.b16 %v6772, %v6764
    %v7277 = vpack.c.b16 %v6781, %v6773
    %v7278 = vpack.c.b16 %v6782, %v6774
    %v7279 = vpack.c.b16 %v6783, %v6775
    %v7280 = vpack.c.b16 %v6784, %v6776
    %v7281 = vpack.c.b16 %v6785, %v6777
    %v7282 = vpack.c.b16 %v6786, %v6778
    %v7283 = vpack.c.b16 %v6787, %v6779
    %v7284 = vpack.c.b16 %v6788, %v6780
    %v7285 = vpack.c.b16 %v6797, %v6789
    %v7286 = vpack.c.b16 %v6798, %v6790
    %v7287 = vpack.c.b16 %v6799, %v6791
    %v7288 = vpack.c.b16 %v6800, %v6792
    %v7289 = vpack.c.b16 %v6801, %v6793
    %v7290 = vpack.c.b16 %v6802, %v6794
    %v7291 = vpack.c.b16 %v6803, %v6795
    %v7292 = vpack.c.b16 %v6804, %v6796
    %v7293 = vpack.c.b16 %v6813, %v6805
    %v7294 = vpack.c.b16 %v6814, %v6806
    %v7295 = vpack.c.b16 %v6815, %v6807
    %v7296 = vpack.c.b16 %v6816, %v6808
    %v7297 = vpack.c.b16 %v6817, %v6809
    %v7298 = vpack.c.b16 %v6818, %v6810
    %v7299 = vpack.c.b16 %v6819, %v6811
    %v7300 = vpack.c.b16 %v6820, %v6812
    %v7301 = vpack.c.b16 %v6829, %v6821
    %v7302 = vpack.c.b16 %v6830, %v6822
    %v7303 = vpack.c.b16 %v6831, %v6823
    %v7304 = vpack.c.b16 %v6832, %v6824
    %v7305 = vpack.c.b16 %v6833, %v6825
    %v7306 = vpack.c.b16 %v6834, %v6826
    %v7307 = vpack.c.b16 %v6835, %v6827
    %v7308 = vpack.c.b16 %v6836, %v6828
    %v7309 = vpack.c.b16 %v6845, %v6837
    %v7310 = vpack.c.b16 %v6846, %v6838
    %v7311 = vpack.c.b16 %v6847, %v6839
    %v7312 = vpack.c.b16 %v6848, %v6840
    %v7313 = vpack.c.b16 %v6849, %v6841
    %v7314 = vpack.c.b16 %v6850, %v6842
    %v7315 = vpack.c.b16 %v6851, %v6843
    %v7316 = vpack.c.b16 %v6852, %v6844
    %v7317 = vpack.c.b16 %v6861, %v6853
    %v7318 = vpack.c.b16 %v6862, %v6854
    %v7319 = vpack.c.b16 %v6863, %v6855
    %v7320 = vpack.c.b16 %v6864, %v6856
    %v7321 = vpack.c.b16 %v6865, %v6857
    %v7322 = vpack.c.b16 %v6866, %v6858
    %v7323 = vpack.c.b16 %v6867, %v6859
    %v7324 = vpack.c.b16 %v6868, %v6860
    %v7325 = vpack.c.b16 %v6877, %v6869
    %v7326 = vpack.c.b16 %v6878, %v6870
    %v7327 = vpack.c.b16 %v6879, %v6871
    %v7328 = vpack.c.b16 %v6880, %v6872
    %v7329 = vpack.c.b16 %v6881, %v6873
    %v7330 = vpack.c.b16 %v6882, %v6874
    %v7331 = vpack.c.b16 %v6883, %v6875
    %v7332 = vpack.c.b16 %v6884, %v6876
    %v7333 = vpack.c.b16 %v6893, %v6885
    %v7334 = vpack.c.b16 %v6894, %v6886
    %v7335 = vpack.c.b16 %v6895, %v6887
    %v7336 = vpack.c.b16 %v6896, %v6888
    %v7337 = vpack.c.b16 %v6897, %v6889
    %v7338 = vpack.c.b16 %v6898, %v6890
    %v7339 = vpack.c.b16 %v6899, %v6891
    %v7340 = vpack.c.b16 %v6900, %v6892
    %v7341 = vpack.c.b16 %v6909, %v6901
    %v7342 = vpack.c.b16 %v6910, %v6902
    %v7343 = vpack.c.b16 %v6911, %v6903
    %v7344 = vpack.c.b16 %v6912, %v6904
    %v7345 = vpack.c.b16 %v6913, %v6905
    %v7346 = vpack.c.b16 %v6914, %v6906
    %v7347 = vpack.c.b16 %v6915, %v6907
    %v7348 = vpack.c.b16 %v6916, %v6908
    %v7349 = vpack.c.b16 %v6925, %v6917
    %v7350 = vpack.c.b16 %v6926, %v6918
    %v7351 = vpack.c.b16 %v6927, %v6919
    %v7352 = vpack.c.b16 %v6928, %v6920
    %v7353 = vpack.c.b16 %v6929, %v6921
    %v7354 = vpack.c.b16 %v6930, %v6922
    %v7355 = vpack.c.b16 %v6931, %v6923
    %v7356 = vpack.c.b16 %v6932, %v6924
    %v7357 = vpack.c.b16 %v6941, %v6933
    %v7358 = vpack.c.b16 %v6942, %v6934
    %v7359 = vpack.c.b16 %v6943, %v6935
    %v7360 = vpack.c.b16 %v6944, %v6936
    %v7361 = vpack.c.b16 %v6945, %v6937
    %v7362 = vpack.c.b16 %v6946, %v6938
    %v7363 = vpack.c.b16 %v6947, %v6939
    %v7364 = vpack.c.b16 %v6948, %v6940
    %v7365 = vpack.c.b16 %v6957, %v6949
    %v7366 = vpack.c.b16 %v6958, %v6950
    %v7367 = vpack.c.b16 %v6959, %v6951
    %v7368 = vpack.c.b16 %v6960, %v6952
    %v7369 = vpack.c.b16 %v6961, %v6953
    %v7370 = vpack.c.b16 %v6962, %v6954
    %v7371 = vpack.c.b16 %v6963, %v6955
    %v7372 = vpack.c.b16 %v6964, %v6956
    %v7373 = vpack.c.b16 %v6973, %v6965
    %v7374 = vpack.c.b16 %v6974, %v6966
    %v7375 = vpack.c.b16 %v6975, %v6967
    %v7376 = vpack.c.b16 %v6976, %v6968
    %v7377 = vpack.c.b16 %v6977, %v6969
    %v7378 = vpack.c.b16 %v6978, %v6970
    %v7379 = vpack.c.b16 %v6979, %v6971
    %v7380 = vpack.c.b16 %v6980, %v6972
    %v7381 = vpack.c.b16 %v6989, %v6981
    %v7382 = vpack.c.b16 %v6990, %v6982
    %v7383 = vpack.c.b16 %v6991, %v6983
    %v7384 = vpack.c.b16 %v6992, %v6984
    %v7385 = vpack.c.b16 %v6993, %v6985
    %v7386 = vpack.c.b16 %v6994, %v6986
    %v7387 = vpack.c.b16 %v6995, %v6987
    %v7388 = vpack.c.b16 %v6996, %v6988
    %v7389 = vpack.c.b16 %v7005, %v6997
    %v7390 = vpack.c.b16 %v7006, %v6998
    %v7391 = vpack.c.b16 %v7007, %v6999
    %v7392 = vpack.c.b16 %v7008, %v7000
    %v7393 = vpack.c.b16 %v7009, %v7001
    %v7394 = vpack.c.b16 %v7010, %v7002
    %v7395 = vpack.c.b16 %v7011, %v7003
    %v7396 = vpack.c.b16 %v7012, %v7004
    %v7397 = vpack.c.b16 %v7021, %v7013
    %v7398 = vpack.c.b16 %v7022, %v7014
    %v7399 = vpack.c.b16 %v7023, %v7015
    %v7400 = vpack.c.b16 %v7024, %v7016
    %v7401 = vpack.c.b16 %v7025, %v7017
    %v7402 = vpack.c.b16 %v7026, %v7018
    %v7403 = vpack.c.b16 %v7027, %v7019
    %v7404 = vpack.c.b16 %v7028, %v7020
    %v7405 = vpack.c.b16 %v7037, %v7029
    %v7406 = vpack.c.b16 %v7038, %v7030
    %v7407 = vpack.c.b16 %v7039, %v7031
    %v7408 = vpack.c.b16 %v7040, %v7032
    %v7409 = vpack.c.b16 %v7041, %v7033
    %v7410 = vpack.c.b16 %v7042, %v7034
    %v7411 = vpack.c.b16 %v7043, %v7035
    %v7412 = vpack.c.b16 %v7044, %v7036
    %v7413 = vpack.c.b16 %v7053, %v7045
    %v7414 = vpack.c.b16 %v7054, %v7046
    %v7415 = vpack.c.b16 %v7055, %v7047
    %v7416 = vpack.c.b16 %v7056, %v7048
    %v7417 = vpack.c.b16 %v7057, %v7049
    %v7418 = vpack.c.b16 %v7058, %v7050
    %v7419 = vpack.c.b16 %v7059, %v7051
    %v7420 = vpack.c.b16 %v7060, %v7052
    %v7421 = vpack.c.b16 %v7069, %v7061
    %v7422 = vpack.c.b16 %v7070, %v7062
    %v7423 = vpack.c.b16 %v7071, %v7063
    %v7424 = vpack.c.b16 %v7072, %v7064
    %v7425 = vpack.c.b16 %v7073, %v7065
    %v7426 = vpack.c.b16 %v7074, %v7066
    %v7427 = vpack.c.b16 %v7075, %v7067
    %v7428 = vpack.c.b16 %v7076, %v7068
    %v7429 = vpack.c.b16 %v7085, %v7077
    %v7430 = vpack.c.b16 %v7086, %v7078
    %v7431 = vpack.c.b16 %v7087, %v7079
    %v7432 = vpack.c.b16 %v7088, %v7080
    %v7433 = vpack.c.b16 %v7089, %v7081
    %v7434 = vpack.c.b16 %v7090, %v7082
    %v7435 = vpack.c.b16 %v7091, %v7083
    %v7436 = vpack.c.b16 %v7092, %v7084
    %v7437 = vpack.c.b16 %v7101, %v7093
    %v7438 = vpack.c.b16 %v7102, %v7094
    %v7439 = vpack.c.b16 %v7103, %v7095
    %v7440 = vpack.c.b16 %v7104, %v7096
    %v7441 = vpack.c.b16 %v7105, %v7097
    %v7442 = vpack.c.b16 %v7106, %v7098
    %v7443 = vpack.c.b16 %v7107, %v7099
    %v7444 = vpack.c.b16 %v7108, %v7100
    %v7445 = vpack.c.b16 %v7117, %v7109
    %v7446 = vpack.c.b16 %v7118, %v7110
    %v7447 = vpack.c.b16 %v7119, %v7111
    %v7448 = vpack.c.b16 %v7120, %v7112
    %v7449 = vpack.c.b16 %v7121, %v7113
    %v7450 = vpack.c.b16 %v7122, %v7114
    %v7451 = vpack.c.b16 %v7123, %v7115
    %v7452 = vpack.c.b16 %v7124, %v7116
    %v7453 = vpack.c.b16 %v7133, %v7125
    %v7454 = vpack.c.b16 %v7134, %v7126
    %v7455 = vpack.c.b16 %v7135, %v7127
    %v7456 = vpack.c.b16 %v7136, %v7128
    %v7457 = vpack.c.b16 %v7137, %v7129
    %v7458 = vpack.c.b16 %v7138, %v7130
    %v7459 = vpack.c.b16 %v7139, %v7131
    %v7460 = vpack.c.b16 %v7140, %v7132
    %v7461 = vpack.c.b16 %v7149, %v7141
    %v7462 = vpack.c.b16 %v7150, %v7142
    %v7463 = vpack.c.b16 %v7151, %v7143
    %v7464 = vpack.c.b16 %v7152, %v7144
    %v7465 = vpack.c.b16 %v7153, %v7145
    %v7466 = vpack.c.b16 %v7154, %v7146
    %v7467 = vpack.c.b16 %v7155, %v7147
    %v7468 = vpack.c.b16 %v7156, %v7148
    %v7469 = vpack.c.b16 %v7165, %v7157
    %v7470 = vpack.c.b16 %v7166, %v7158
    %v7471 = vpack.c.b16 %v7167, %v7159
    %v7472 = vpack.c.b16 %v7168, %v7160
    %v7473 = vpack.c.b16 %v7169, %v7161
    %v7474 = vpack.c.b16 %v7170, %v7162
    %v7475 = vpack.c.b16 %v7171, %v7163
    %v7476 = vpack.c.b16 %v7172, %v7164
    %v7477 = vpack.c.b16 %v7181, %v7173
    %v7478 = vpack.c.b16 %v7182, %v7174
    %v7479 = vpack.c.b16 %v7183, %v7175
    %v7480 = vpack.c.b16 %v7184, %v7176
    %v7481 = vpack.c.b16 %v7185, %v7177
    %v7482 = vpack.c.b16 %v7186, %v7178
    %v7483 = vpack.c.b16 %v7187, %v7179
    %v7484 = vpack.c.b16 %v7188, %v7180
    %v7485 = vpack.c.b16 %v7197, %v7189
    %v7486 = vpack.c.b16 %v7198, %v7190
    %v7487 = vpack.c.b16 %v7199, %v7191
    %v7488 = vpack.c.b16 %v7200, %v7192
    %v7489 = vpack.c.b16 %v7201, %v7193
    %v7490 = vpack.c.b16 %v7202, %v7194
    %v7491 = vpack.c.b16 %v7203, %v7195
    %v7492 = vpack.c.b16 %v7204, %v7196
    %v7493 = vpack.c.b16 %v7213, %v7205
    %v7494 = vpack.c.b16 %v7214, %v7206
    %v7495 = vpack.c.b16 %v7215, %v7207
    %v7496 = vpack.c.b16 %v7216, %v7208
    %v7497 = vpack.c.b16 %v7217, %v7209
    %v7498 = vpack.c.b16 %v7218, %v7210
    %v7499 = vpack.c.b16 %v7219, %v7211
    %v7500 = vpack.c.b16 %v7220, %v7212
    %v7501 = vpack.c.b16 %v7229, %v7221
    %v7502 = vpack.c.b16 %v7230, %v7222
    %v7503 = vpack.c.b16 %v7231, %v7223
    %v7504 = vpack.c.b16 %v7232, %v7224
    %v7505 = vpack.c.b16 %v7233, %v7225
    %v7506 = vpack.c.b16 %v7234, %v7226
    %v7507 = vpack.c.b16 %v7235, %v7227
    %v7508 = vpack.c.b16 %v7236, %v7228
    %v7509 = vpack.c.b16 %v7245, %v7237
    %v7510 = vpack.c.b16 %v7246, %v7238
    %v7511 = vpack.c.b16 %v7247, %v7239
    %v7512 = vpack.c.b16 %v7248, %v7240
    %v7513 = vpack.c.b16 %v7249, %v7241
    %v7514 = vpack.c.b16 %v7250, %v7242
    %v7515 = vpack.c.b16 %v7251, %v7243
    %v7516 = vpack.c.b16 %v7252, %v7244
    %v7517 = vpack.c.b16 %v7261, %v7253
    %v7518 = vpack.c.b16 %v7262, %v7254
    %v7519 = vpack.c.b16 %v7263, %v7255
    %v7520 = vpack.c.b16 %v7264, %v7256
    %v7521 = vpack.c.b16 %v7265, %v7257
    %v7522 = vpack.c.b16 %v7266, %v7258
    %v7523 = vpack.c.b16 %v7267, %v7259
    %v7524 = vpack.c.b16 %v7268, %v7260
    %7781 = vmatprep.subr.bf16.mxu0 %v7270
    %7782 = vmatpush1.bf16.msra.mxu0 %v7269
    %7783 = vmatprep.subr.bf16.mxu0 %v7278
    %7784 = vmatpush1.bf16.msra.mxu0 %v7277
    %7785 = vmatprep.subr.bf16.mxu0 %v7286
    %7786 = vmatpush1.bf16.msra.mxu0 %v7285
    %7787 = vmatprep.subr.bf16.mxu0 %v7294
    %7788 = vmatpush1.bf16.msra.mxu0 %v7293
    %7789 = vmatprep.subr.bf16.mxu0 %v7302
    %7790 = vmatpush1.bf16.msra.mxu0 %v7301
    %7791 = vmatprep.subr.bf16.mxu0 %v7310
    %7792 = vmatpush1.bf16.msra.mxu0 %v7309
    %7793 = vmatprep.subr.bf16.mxu0 %v7318
    %7794 = vmatpush1.bf16.msra.mxu0 %v7317
    %7795 = vmatprep.subr.bf16.mxu0 %v7326
    %7796 = vmatpush1.bf16.msra.mxu0 %v7325
    %7797 = vmatprep.subr.bf16.mxu0 %v7334
    %7798 = vmatpush1.bf16.msra.mxu0 %v7333
    %7799 = vmatprep.subr.bf16.mxu0 %v7342
    %7800 = vmatpush1.bf16.msra.mxu0 %v7341
    %7801 = vmatprep.subr.bf16.mxu0 %v7350
    %7802 = vmatpush1.bf16.msra.mxu0 %v7349
    %7803 = vmatprep.subr.bf16.mxu0 %v7358
    %7804 = vmatpush1.bf16.msra.mxu0 %v7357
    %7805 = vmatprep.subr.bf16.mxu0 %v7366
    %7806 = vmatpush1.bf16.msra.mxu0 %v7365
    %7807 = vmatprep.subr.bf16.mxu0 %v7374
    %7808 = vmatpush1.bf16.msra.mxu0 %v7373
    %7809 = vmatprep.subr.bf16.mxu0 %v7382
    %7810 = vmatpush1.bf16.msra.mxu0 %v7381
    %7811 = vmatprep.subr.bf16.mxu0 %v7390
    %7812 = vmatpush1.bf16.msra.mxu0 %v7389
    %7813 = vmatprep.mubr.bf16.mxu0 %v6494
    %7814 = vmatmul.mubr.bf16.gmra.mrb[0].mxu0 %v6493
    %v7815 = vpop.f32.mrb[0].mxu0
    %v7816 = vadd.f32 %v3093, %v7815
    %v7817 = vpop.f32.mrb[0].mxu0
    %v7818 = vadd.f32 %v3097, %v7817
    %v7819 = vpop.f32.mrb[0].mxu0
    %v7820 = vpop.f32.mrb[0].mxu0
    %7821 = vdwg.mxu0
    %7822 = vmatprep.subr.bf16.mxu0 %v7398
    %7823 = vmatpush1.bf16.msra.mxu0 %v7397
    %7824 = vmatprep.subr.bf16.mxu0 %v7406
    %7825 = vmatpush1.bf16.msra.mxu0 %v7405
    %7826 = vmatprep.subr.bf16.mxu0 %v7414
    %7827 = vmatpush1.bf16.msra.mxu0 %v7413
    %7828 = vmatprep.subr.bf16.mxu0 %v7422
    %7829 = vmatpush1.bf16.msra.mxu0 %v7421
    %7830 = vmatprep.subr.bf16.mxu0 %v7430
    %7831 = vmatpush1.bf16.msra.mxu0 %v7429
    %7832 = vmatprep.subr.bf16.mxu0 %v7438
    %7833 = vmatpush1.bf16.msra.mxu0 %v7437
    %7834 = vmatprep.subr.bf16.mxu0 %v7446
    %7835 = vmatpush1.bf16.msra.mxu0 %v7445
    %7836 = vmatprep.subr.bf16.mxu0 %v7454
    %7837 = vmatpush1.bf16.msra.mxu0 %v7453
    %7838 = vmatprep.subr.bf16.mxu0 %v7462
    %7839 = vmatpush1.bf16.msra.mxu0 %v7461
    %7840 = vmatprep.subr.bf16.mxu0 %v7470
    %7841 = vmatpush1.bf16.msra.mxu0 %v7469
    %7842 = vmatprep.subr.bf16.mxu0 %v7478
    %7843 = vmatpush1.bf16.msra.mxu0 %v7477
    %7844 = vmatprep.subr.bf16.mxu0 %v7486
    %7845 = vmatpush1.bf16.msra.mxu0 %v7485
    %7846 = vmatprep.subr.bf16.mxu0 %v7494
    %7847 = vmatpush1.bf16.msra.mxu0 %v7493
    %7848 = vmatprep.subr.bf16.mxu0 %v7502
    %7849 = vmatpush1.bf16.msra.mxu0 %v7501
    %7850 = vmatprep.subr.bf16.mxu0 %v7510
    %7851 = vmatpush1.bf16.msra.mxu0 %v7509
    %7852 = vmatprep.subr.bf16.mxu0 %v7518
    %7853 = vmatpush1.bf16.msra.mxu0 %v7517
    %7854 = vmatprep.mubr.bf16.mxu0 %v6496
    %7855 = vmatmul.mubr.bf16.gmra.mrb[0].mxu0 %v6495
    %v7856 = vpop.f32.mrb[0].mxu0
    %v7857 = vadd.f32 %v7816, %v7856
    %v7858 = vpop.f32.mrb[0].mxu0
    %v7859 = vadd.f32 %v7818, %v7858
    %v7860 = vpop.f32.mrb[0].mxu0
    %v7861 = vpop.f32.mrb[0].mxu0
    %7862 = vdwg.mxu0
    %7863 = vmatprep.subr.bf16.mxu0 %v7272
    %7864 = vmatpush1.bf16.msra.mxu0 %v7271
    %7865 = vmatprep.subr.bf16.mxu0 %v7280
    %7866 = vmatpush1.bf16.msra.mxu0 %v7279
    %7867 = vmatprep.subr.bf16.mxu0 %v7288
    %7868 = vmatpush1.bf16.msra.mxu0 %v7287
    %7869 = vmatprep.subr.bf16.mxu0 %v7296
    %7870 = vmatpush1.bf16.msra.mxu0 %v7295
    %7871 = vmatprep.subr.bf16.mxu0 %v7304
    %7872 = vmatpush1.bf16.msra.mxu0 %v7303
    %7873 = vmatprep.subr.bf16.mxu0 %v7312
    %7874 = vmatpush1.bf16.msra.mxu0 %v7311
    %7875 = vmatprep.subr.bf16.mxu0 %v7320
    %7876 = vmatpush1.bf16.msra.mxu0 %v7319
    %7877 = vmatprep.subr.bf16.mxu0 %v7328
    %7878 = vmatpush1.bf16.msra.mxu0 %v7327
    %7879 = vmatprep.subr.bf16.mxu0 %v7336
    %7880 = vmatpush1.bf16.msra.mxu0 %v7335
    %7881 = vmatprep.subr.bf16.mxu0 %v7344
    %7882 = vmatpush1.bf16.msra.mxu0 %v7343
    %7883 = vmatprep.subr.bf16.mxu0 %v7352
    %7884 = vmatpush1.bf16.msra.mxu0 %v7351
    %7885 = vmatprep.subr.bf16.mxu0 %v7360
    %7886 = vmatpush1.bf16.msra.mxu0 %v7359
    %7887 = vmatprep.subr.bf16.mxu0 %v7368
    %7888 = vmatpush1.bf16.msra.mxu0 %v7367
    %7889 = vmatprep.subr.bf16.mxu0 %v7376
    %7890 = vmatpush1.bf16.msra.mxu0 %v7375
    %7891 = vmatprep.subr.bf16.mxu0 %v7384
    %7892 = vmatpush1.bf16.msra.mxu0 %v7383
    %7893 = vmatprep.subr.bf16.mxu0 %v7392
    %7894 = vmatpush1.bf16.msra.mxu0 %v7391
    %7895 = vmatprep.mubr.bf16.mxu0 %v6494
    %7896 = vmatmul.mubr.bf16.gmra.mrb[0].mxu0 %v6493
    %v7897 = vpop.f32.mrb[0].mxu0
    %v7898 = vadd.f32 %v3101, %v7897
    %v7899 = vpop.f32.mrb[0].mxu0
    %v7900 = vadd.f32 %v3105, %v7899
    %v7901 = vpop.f32.mrb[0].mxu0
    %v7902 = vpop.f32.mrb[0].mxu0
    %7903 = vdwg.mxu0
    %7904 = vmatprep.subr.bf16.mxu0 %v7400
    %7905 = vmatpush1.bf16.msra.mxu0 %v7399
    %7906 = vmatprep.subr.bf16.mxu0 %v7408
    %7907 = vmatpush1.bf16.msra.mxu0 %v7407
    %7908 = vmatprep.subr.bf16.mxu0 %v7416
    %7909 = vmatpush1.bf16.msra.mxu0 %v7415
    %7910 = vmatprep.subr.bf16.mxu0 %v7424
    %7911 = vmatpush1.bf16.msra.mxu0 %v7423
    %7912 = vmatprep.subr.bf16.mxu0 %v7432
    %7913 = vmatpush1.bf16.msra.mxu0 %v7431
    %7914 = vmatprep.subr.bf16.mxu0 %v7440
    %7915 = vmatpush1.bf16.msra.mxu0 %v7439
    %7916 = vmatprep.subr.bf16.mxu0 %v7448
    %7917 = vmatpush1.bf16.msra.mxu0 %v7447
    %7918 = vmatprep.subr.bf16.mxu0 %v7456
    %7919 = vmatpush1.bf16.msra.mxu0 %v7455
    %7920 = vmatprep.subr.bf16.mxu0 %v7464
    %7921 = vmatpush1.bf16.msra.mxu0 %v7463
    %7922 = vmatprep.subr.bf16.mxu0 %v7472
    %7923 = vmatpush1.bf16.msra.mxu0 %v7471
    %7924 = vmatprep.subr.bf16.mxu0 %v7480
    %7925 = vmatpush1.bf16.msra.mxu0 %v7479
    %7926 = vmatprep.subr.bf16.mxu0 %v7488
    %7927 = vmatpush1.bf16.msra.mxu0 %v7487
    %7928 = vmatprep.subr.bf16.mxu0 %v7496
    %7929 = vmatpush1.bf16.msra.mxu0 %v7495
    %7930 = vmatprep.subr.bf16.mxu0 %v7504
    %7931 = vmatpush1.bf16.msra.mxu0 %v7503
    %7932 = vmatprep.subr.bf16.mxu0 %v7512
    %7933 = vmatpush1.bf16.msra.mxu0 %v7511
    %7934 = vmatprep.subr.bf16.mxu0 %v7520
    %7935 = vmatpush1.bf16.msra.mxu0 %v7519
    %7936 = vmatprep.mubr.bf16.mxu0 %v6496
    %7937 = vmatmul.mubr.bf16.gmra.mrb[0].mxu0 %v6495
    %v7938 = vpop.f32.mrb[0].mxu0
    %v7939 = vadd.f32 %v7898, %v7938
    %v7940 = vpop.f32.mrb[0].mxu0
    %v7941 = vadd.f32 %v7900, %v7940
    %v7942 = vpop.f32.mrb[0].mxu0
    %v7943 = vpop.f32.mrb[0].mxu0
    %7944 = vdwg.mxu0
    %7945 = vmatprep.subr.bf16.mxu0 %v7274
    %7946 = vmatpush1.bf16.msra.mxu0 %v7273
    %7947 = vmatprep.subr.bf16.mxu0 %v7282
    %7948 = vmatpush1.bf16.msra.mxu0 %v7281
    %7949 = vmatprep.subr.bf16.mxu0 %v7290
    %7950 = vmatpush1.bf16.msra.mxu0 %v7289
    %7951 = vmatprep.subr.bf16.mxu0 %v7298
    %7952 = vmatpush1.bf16.msra.mxu0 %v7297
    %7953 = vmatprep.subr.bf16.mxu0 %v7306
    %7954 = vmatpush1.bf16.msra.mxu0 %v7305
    %7955 = vmatprep.subr.bf16.mxu0 %v7314
    %7956 = vmatpush1.bf16.msra.mxu0 %v7313
    %7957 = vmatprep.subr.bf16.mxu0 %v7322
    %7958 = vmatpush1.bf16.msra.mxu0 %v7321
    %7959 = vmatprep.subr.bf16.mxu0 %v7330
    %7960 = vmatpush1.bf16.msra.mxu0 %v7329
    %7961 = vmatprep.subr.bf16.mxu0 %v7338
    %7962 = vmatpush1.bf16.msra.mxu0 %v7337
    %7963 = vmatprep.subr.bf16.mxu0 %v7346
    %7964 = vmatpush1.bf16.msra.mxu0 %v7345
    %7965 = vmatprep.subr.bf16.mxu0 %v7354
    %7966 = vmatpush1.bf16.msra.mxu0 %v7353
    %7967 = vmatprep.subr.bf16.mxu0 %v7362
    %7968 = vmatpush1.bf16.msra.mxu0 %v7361
    %7969 = vmatprep.subr.bf16.mxu0 %v7370
    %7970 = vmatpush1.bf16.msra.mxu0 %v7369
    %7971 = vmatprep.subr.bf16.mxu0 %v7378
    %7972 = vmatpush1.bf16.msra.mxu0 %v7377
    %7973 = vmatprep.subr.bf16.mxu0 %v7386
    %7974 = vmatpush1.bf16.msra.mxu0 %v7385
    %7975 = vmatprep.subr.bf16.mxu0 %v7394
    %7976 = vmatpush1.bf16.msra.mxu0 %v7393
    %7977 = vmatprep.mubr.bf16.mxu0 %v6494
    %7978 = vmatmul.mubr.bf16.gmra.mrb[0].mxu0 %v6493
    %v7979 = vpop.f32.mrb[0].mxu0
    %v7980 = vadd.f32 %v3109, %v7979
    %v7981 = vpop.f32.mrb[0].mxu0
    %v7982 = vadd.f32 %v3113, %v7981
    %v7983 = vpop.f32.mrb[0].mxu0
    %v7984 = vpop.f32.mrb[0].mxu0
    %7985 = vdwg.mxu0
    %7986 = vmatprep.subr.bf16.mxu0 %v7402
    %7987 = vmatpush1.bf16.msra.mxu0 %v7401
    %7988 = vmatprep.subr.bf16.mxu0 %v7410
    %7989 = vmatpush1.bf16.msra.mxu0 %v7409
    %7990 = vmatprep.subr.bf16.mxu0 %v7418
    %7991 = vmatpush1.bf16.msra.mxu0 %v7417
    %7992 = vmatprep.subr.bf16.mxu0 %v7426
    %7993 = vmatpush1.bf16.msra.mxu0 %v7425
    %7994 = vmatprep.subr.bf16.mxu0 %v7434
    %7995 = vmatpush1.bf16.msra.mxu0 %v7433
    %7996 = vmatprep.subr.bf16.mxu0 %v7442
    %7997 = vmatpush1.bf16.msra.mxu0 %v7441
    %7998 = vmatprep.subr.bf16.mxu0 %v7450
    %7999 = vmatpush1.bf16.msra.mxu0 %v7449
    %8000 = vmatprep.subr.bf16.mxu0 %v7458
    %8001 = vmatpush1.bf16.msra.mxu0 %v7457
    %8002 = vmatprep.subr.bf16.mxu0 %v7466
    %8003 = vmatpush1.bf16.msra.mxu0 %v7465
    %8004 = vmatprep.subr.bf16.mxu0 %v7474
    %8005 = vmatpush1.bf16.msra.mxu0 %v7473
    %8006 = vmatprep.subr.bf16.mxu0 %v7482
    %8007 = vmatpush1.bf16.msra.mxu0 %v7481
    %8008 = vmatprep.subr.bf16.mxu0 %v7490
    %8009 = vmatpush1.bf16.msra.mxu0 %v7489
    %8010 = vmatprep.subr.bf16.mxu0 %v7498
    %8011 = vmatpush1.bf16.msra.mxu0 %v7497
    %8012 = vmatprep.subr.bf16.mxu0 %v7506
    %8013 = vmatpush1.bf16.msra.mxu0 %v7505
    %8014 = vmatprep.subr.bf16.mxu0 %v7514
    %8015 = vmatpush1.bf16.msra.mxu0 %v7513
    %8016 = vmatprep.subr.bf16.mxu0 %v7522
    %8017 = vmatpush1.bf16.msra.mxu0 %v7521
    %8018 = vmatprep.mubr.bf16.mxu0 %v6496
    %8019 = vmatmul.mubr.bf16.gmra.mrb[0].mxu0 %v6495
    %v8020 = vpop.f32.mrb[0].mxu0
    %v8021 = vadd.f32 %v7980, %v8020
    %v8022 = vpop.f32.mrb[0].mxu0
    %v8023 = vadd.f32 %v7982, %v8022
    %v8024 = vpop.f32.mrb[0].mxu0
    %v8025 = vpop.f32.mrb[0].mxu0
    %8026 = vdwg.mxu0
    %8027 = vmatprep.subr.bf16.mxu0 %v7276
    %8028 = vmatpush1.bf16.msra.mxu0 %v7275
    %8029 = vmatprep.subr.bf16.mxu0 %v7284
    %8030 = vmatpush1.bf16.msra.mxu0 %v7283
    %8031 = vmatprep.subr.bf16.mxu0 %v7292
    %8032 = vmatpush1.bf16.msra.mxu0 %v7291
    %8033 = vmatprep.subr.bf16.mxu0 %v7300
    %8034 = vmatpush1.bf16.msra.mxu0 %v7299
    %8035 = vmatprep.subr.bf16.mxu0 %v7308
    %8036 = vmatpush1.bf16.msra.mxu0 %v7307
    %8037 = vmatprep.subr.bf16.mxu0 %v7316
    %8038 = vmatpush1.bf16.msra.mxu0 %v7315
    %8039 = vmatprep.subr.bf16.mxu0 %v7324
    %8040 = vmatpush1.bf16.msra.mxu0 %v7323
    %8041 = vmatprep.subr.bf16.mxu0 %v7332
    %8042 = vmatpush1.bf16.msra.mxu0 %v7331
    %8043 = vmatprep.subr.bf16.mxu0 %v7340
    %8044 = vmatpush1.bf16.msra.mxu0 %v7339
    %8045 = vmatprep.subr.bf16.mxu0 %v7348
    %8046 = vmatpush1.bf16.msra.mxu0 %v7347
    %8047 = vmatprep.subr.bf16.mxu0 %v7356
    %8048 = vmatpush1.bf16.msra.mxu0 %v7355
    %8049 = vmatprep.subr.bf16.mxu0 %v7364
    %8050 = vmatpush1.bf16.msra.mxu0 %v7363
    %8051 = vmatprep.subr.bf16.mxu0 %v7372
    %8052 = vmatpush1.bf16.msra.mxu0 %v7371
    %8053 = vmatprep.subr.bf16.mxu0 %v7380
    %8054 = vmatpush1.bf16.msra.mxu0 %v7379
    %8055 = vmatprep.subr.bf16.mxu0 %v7388
    %8056 = vmatpush1.bf16.msra.mxu0 %v7387
    %8057 = vmatprep.subr.bf16.mxu0 %v7396
    %8058 = vmatpush1.bf16.msra.mxu0 %v7395
    %8059 = vmatprep.mubr.bf16.mxu0 %v6494
    %8060 = vmatmul.mubr.bf16.gmra.mrb[0].mxu0 %v6493
    %v8061 = vpop.f32.mrb[0].mxu0
    %v8062 = vadd.f32 %v3117, %v8061
    %v8063 = vpop.f32.mrb[0].mxu0
    %v8064 = vadd.f32 %v3121, %v8063
    %v8065 = vpop.f32.mrb[0].mxu0
    %v8066 = vpop.f32.mrb[0].mxu0
    %8067 = vdwg.mxu0
    %8068 = vmatprep.subr.bf16.mxu0 %v7404
    %8069 = vmatpush1.bf16.msra.mxu0 %v7403
    %8070 = vmatprep.subr.bf16.mxu0 %v7412
    %8071 = vmatpush1.bf16.msra.mxu0 %v7411
    %8072 = vmatprep.subr.bf16.mxu0 %v7420
    %8073 = vmatpush1.bf16.msra.mxu0 %v7419
    %8074 = vmatprep.subr.bf16.mxu0 %v7428
    %8075 = vmatpush1.bf16.msra.mxu0 %v7427
    %8076 = vmatprep.subr.bf16.mxu0 %v7436
    %8077 = vmatpush1.bf16.msra.mxu0 %v7435
    %8078 = vmatprep.subr.bf16.mxu0 %v7444
    %8079 = vmatpush1.bf16.msra.mxu0 %v7443
    %8080 = vmatprep.subr.bf16.mxu0 %v7452
    %8081 = vmatpush1.bf16.msra.mxu0 %v7451
    %8082 = vmatprep.subr.bf16.mxu0 %v7460
    %8083 = vmatpush1.bf16.msra.mxu0 %v7459
    %8084 = vmatprep.subr.bf16.mxu0 %v7468
    %8085 = vmatpush1.bf16.msra.mxu0 %v7467
    %8086 = vmatprep.subr.bf16.mxu0 %v7476
    %8087 = vmatpush1.bf16.msra.mxu0 %v7475
    %8088 = vmatprep.subr.bf16.mxu0 %v7484
    %8089 = vmatpush1.bf16.msra.mxu0 %v7483
    %8090 = vmatprep.subr.bf16.mxu0 %v7492
    %8091 = vmatpush1.bf16.msra.mxu0 %v7491
    %8092 = vmatprep.subr.bf16.mxu0 %v7500
    %8093 = vmatpush1.bf16.msra.mxu0 %v7499
    %8094 = vmatprep.subr.bf16.mxu0 %v7508
    %8095 = vmatpush1.bf16.msra.mxu0 %v7507
    %8096 = vmatprep.subr.bf16.mxu0 %v7516
    %8097 = vmatpush1.bf16.msra.mxu0 %v7515
    %8098 = vmatprep.subr.bf16.mxu0 %v7524
    %8099 = vmatpush1.bf16.msra.mxu0 %v7523
    %8100 = vmatprep.mubr.bf16.mxu0 %v6496
    %8101 = vmatmul.mubr.bf16.gmra.mrb[0].mxu0 %v6495
    %v8102 = vpop.f32.mrb[0].mxu0
    %v8103 = vadd.f32 %v8062, %v8102
    %v8104 = vpop.f32.mrb[0].mxu0
    %v8105 = vadd.f32 %v8064, %v8104
    %v8106 = vpop.f32.mrb[0].mxu0
    %v8107 = vpop.f32.mrb[0].mxu0
    %8108 = vdwg.mxu0
    %8109 = vst [vmem:[#allocation2] sm:$0xff] %v7857
    %8110 = vst [vmem:[#allocation2 + $0x8] sm:$0xff] %v7859
    %8111 = vst [vmem:[#allocation2 + $0x10] sm:$0xff] %v7939
    %8112 = vst [vmem:[#allocation2 + $0x18] sm:$0xff] %v7941
    %8113 = vst [vmem:[#allocation2 + $0x20] sm:$0xff] %v8021
    %8114 = vst [vmem:[#allocation2 + $0x28] sm:$0xff] %v8023
    %8115 = vst [vmem:[#allocation2 + $0x30] sm:$0xff] %v8103
    %8116 = vst [vmem:[#allocation2 + $0x38] sm:$0xff] %v8105
    // Predicated region
    $region14: #{tpu_custom_call.1} parent=1 // pred_check
      _
    $region15: #{tpu_custom_call.1} parent=1 // pred_check_branch
      %8118 = sbr.rel (0) target = $region17
    $region16: #{tpu_custom_call.1} parent=1 // pred_region
      %s8120 = ssub.s32 1024, 1024
      %8121 = vsyncadd [#allocation3], %s8120
      %s8123 = sshll.u32 [#allocation2], 4
      %s8124 = int_to_ptr.vmem [resolvable:$true] %s8123
      %8126 = dma.vmem_to_hbm [thread:$0]  %s8124, 1024, %s3, [#allocation3]
    $region17: #{tpu_custom_call.1} parent=1 // pred_fallthru
      _
    // Predicated region
    $region18: #{tpu_custom_call.1} parent=1 // pred_check
      _
    $region19: #{tpu_custom_call.1} parent=1 // pred_check_branch
      %8128 = sbr.rel (0) target = $region21
    $region20: #{tpu_custom_call.1} parent=1 // pred_region
      %8129 = dma.done [#allocation3], 1024
    $region21: #{tpu_custom_call.1} parent=1 // pred_fallthru
      _
    %8130 = vsyncpa [#allocation3], 1

</llo_original>
